<compile_context>
chip_gen: v7x
topology: tpu7x:2x2x1
jax: 0.10.0
libtpu: 0.0.40
codegen_flags: <defaults>
</compile_context>

<pallas_src>
import functools
import math

import jax
import jax.numpy as jnp
from jax import random
from jax.experimental import pallas as pl
from jax.experimental.pallas import tpu as pltpu

LN_EPS_INITIAL = 1e-5   # nn.LayerNorm default (initial_norm_seq / initial_norm_smiles)
LN_EPS_BERT = 1e-12     # BertConfig.layer_norm_eps default (BertSelfOutput / BertOutput)
MASK_MIN = float(jnp.finfo(jnp.float32).min)  # get_extended_attention_mask constant


def _device_kind():
    try:
        return jax.devices()[0].device_kind.lower()
    except Exception:
        return ""


_KIND = _device_kind()
_BIG_VMEM = ("v5" in _KIND) or ("v6" in _KIND)          # 128 MiB VMEM generations
MM_TM, MM_TN, MM_TK = (512, 512, 512) if _BIG_VMEM else (256, 256, 512)
VMEM_LIMIT = (64 << 20) if _BIG_VMEM else (48 << 20)    # scoped limit, headroom on v7x


def _cparams(sem):
    return pltpu.CompilerParams(dimension_semantics=sem, vmem_limit_bytes=VMEM_LIMIT)


def _pick_tile(dim, target, mult):
    """Largest divisor of `dim` <= target that is a multiple of `mult`; else full dim."""
    if dim <= target:
        return dim
    for t in range(min(target, dim), 0, -1):
        if dim % t == 0 and t % mult == 0:
            return t
    return dim


def _pick_head_group(num_heads, head_dim):
    """Smallest head-group whose lane width (th*head_dim) is a 128 multiple; else all heads."""
    for th in range(1, num_heads + 1):
        if num_heads % th == 0 and (th * head_dim) % 128 == 0:
            return th
    return num_heads


def _maybe_cast(x, dtype):
    return x if x.dtype == dtype else x.astype(dtype)


def _gelu_exact(x):
    """Exact-erf GELU; erf via Abramowitz&Stegun 7.1.26 (|err|<=1.5e-7), VPU/EUP ops only."""
    z = x * 0.7071067811865476
    sgn = jnp.where(z >= 0.0, 1.0, -1.0)
    az = z * sgn
    t = 1.0 / (1.0 + 0.3275911 * az)
    poly = ((((1.061405429 * t - 1.453152027) * t + 1.421413741) * t
             - 0.284496736) * t + 0.254829592) * t
    erf = sgn * (1.0 - poly * jnp.exp(-az * az))
    return 0.5 * x * (1.0 + erf)


# ----------------------------------------------------------------------------
# Tiled matmul kernels
# ----------------------------------------------------------------------------
def _matmul_kernel(x_ref, w_ref, o_ref, acc_ref):
    k = pl.program_id(2)

    @pl.when(k == 0)
    def _():
        acc_ref[...] = jnp.zeros_like(acc_ref)

    acc_ref[...] += jnp.dot(x_ref[...], w_ref[...], preferred_element_type=jnp.float32)

    @pl.when(k == pl.num_programs(2) - 1)
    def _():
        o_ref[...] = acc_ref[...].astype(o_ref.dtype)


def _matmul_bias_gelu_kernel(x_ref, w_ref, b_ref, o_ref, acc_ref):
    k = pl.program_id(2)

    @pl.when(k == 0)
    def _():
        acc_ref[...] = jnp.zeros_like(acc_ref)

    acc_ref[...] += jnp.dot(x_ref[...], w_ref[...], preferred_element_type=jnp.float32)

    @pl.when(k == pl.num_programs(2) - 1)
    def _():
        o_ref[...] = _gelu_exact(acc_ref[...] + b_ref[...]).astype(o_ref.dtype)


def _pallas_matmul(kernel, extra_ins, x, w, out_dtype, tm, tn, tk):
    M, K = x.shape
    N = w.shape[1]
    tm = _pick_tile(M, tm, 8)
    tn = _pick_tile(N, tn, 128)
    tk = _pick_tile(K, tk, 128)
    grid = (M // tm, N // tn, K // tk)
    in_specs = [
        pl.BlockSpec((tm, tk), lambda i, j, k: (i, k)),
        pl.BlockSpec((tk, tn), lambda i, j, k: (k, j)),
    ]
    args = [_maybe_cast(x, jnp.bfloat16), _maybe_cast(w, jnp.bfloat16)]
    for e in extra_ins:                                   # (1, N) bias
        in_specs.append(pl.BlockSpec((1, tn), lambda i, j, k: (0, j)))
        args.append(_maybe_cast(e, jnp.float32))
    return pl.pallas_call(
        kernel,
        out_shape=jax.ShapeDtypeStruct((M, N), out_dtype),
        grid_spec=pltpu.PrefetchScalarGridSpec(
            num_scalar_prefetch=0,
            grid=grid,
            in_specs=in_specs,
            out_specs=pl.BlockSpec((tm, tn), lambda i, j, k: (i, j)),
            scratch_shapes=[pltpu.VMEM((tm, tn), jnp.float32)],
        ),
        compiler_params=_cparams(("parallel", "parallel", "arbitrary")),
    )(*args)


def pallas_linear(x, w, out_dtype=jnp.bfloat16, tm=MM_TM, tn=MM_TN, tk=MM_TK):
    """Bias-free projection: x (M,K) @ w (K,N) -> (M,N)."""
    return _pallas_matmul(_matmul_kernel, [], x, w, out_dtype, tm, tn, tk)


def pallas_linear_bias_gelu(x, w, b, out_dtype=jnp.bfloat16, tm=MM_TM, tn=MM_TN, tk=MM_TK):
    """BertIntermediate: gelu(x @ w + b), GELU fused into the matmul epilogue."""
    return _pallas_matmul(_matmul_bias_gelu_kernel, [b], x, w, out_dtype, tm, tn, tk)


# ----------------------------------------------------------------------------
# Tiled matmul + bias + residual + LayerNorm (fused BertSelfOutput / BertOutput)
# Dual f32 + bf16 output: f32 feeds residuals / final outputs, bf16 feeds matmuls.
# ----------------------------------------------------------------------------
def _matmul_res_ln_kernel(eps, x_ref, w_ref, b_ref, r_ref, g_ref, beta_ref,
                          o32_ref, o16_ref, acc_ref):
    k = pl.program_id(1)

    @pl.when(k == 0)
    def _():
        acc_ref[...] = jnp.zeros_like(acc_ref)

    acc_ref[...] += jnp.dot(x_ref[...], w_ref[...], preferred_element_type=jnp.float32)

    @pl.when(k == pl.num_programs(1) - 1)
    def _():
        y = acc_ref[...] + b_ref[...] + r_ref[...]
        mu = jnp.mean(y, axis=-1, keepdims=True)
        var = jnp.mean((y - mu) ** 2, axis=-1, keepdims=True)   # biased var (torch LN)
        inv = jax.lax.rsqrt(var + eps)
        out = (y - mu) * inv * g_ref[...] + beta_ref[...]
        o32_ref[...] = out
        o16_ref[...] = out.astype(jnp.bfloat16)


def pallas_linear_residual_ln(x, w, b, residual, gamma, beta, eps, tm=MM_TM, tk=MM_TK):
    """LayerNorm(x @ w + b + residual); full-width N (LN rows). Returns (f32, bf16)."""
    M, K = x.shape
    N = w.shape[1]
    tm = _pick_tile(M, tm, 8)
    tk = _pick_tile(K, tk, 128)
    grid = (M // tm, K // tk)
    return pl.pallas_call(
        functools.partial(_matmul_res_ln_kernel, eps),
        out_shape=(jax.ShapeDtypeStruct((M, N), jnp.float32),
                   jax.ShapeDtypeStruct((M, N), jnp.bfloat16)),
        grid_spec=pltpu.PrefetchScalarGridSpec(
            num_scalar_prefetch=0,
            grid=grid,
            in_specs=[
                pl.BlockSpec((tm, tk), lambda i, k: (i, k)),
                pl.BlockSpec((tk, N), lambda i, k: (k, 0)),
                pl.BlockSpec((1, N), lambda i, k: (0, 0)),    # bias
                pl.BlockSpec((tm, N), lambda i, k: (i, 0)),   # residual
                pl.BlockSpec((1, N), lambda i, k: (0, 0)),    # gamma
                pl.BlockSpec((1, N), lambda i, k: (0, 0)),    # beta
            ],
            out_specs=[pl.BlockSpec((tm, N), lambda i, k: (i, 0)),
                       pl.BlockSpec((tm, N), lambda i, k: (i, 0))],
            scratch_shapes=[pltpu.VMEM((tm, N), jnp.float32)],
        ),
        compiler_params=_cparams(("parallel", "arbitrary")),
    )(
        _maybe_cast(x, jnp.bfloat16),
        _maybe_cast(w, jnp.bfloat16),
        _maybe_cast(b.reshape(1, N), jnp.float32),
        _maybe_cast(residual, jnp.float32),
        _maybe_cast(gamma.reshape(1, N), jnp.float32),
        _maybe_cast(beta.reshape(1, N), jnp.float32),
    )


# ----------------------------------------------------------------------------
# Row-tiled LayerNorm (initial norms), dual f32 + bf16 output
# ----------------------------------------------------------------------------
def _layernorm_kernel(eps, x_ref, g_ref, b_ref, o32_ref, o16_ref):
    x = x_ref[...]
    mu = jnp.mean(x, axis=-1, keepdims=True)
    var = jnp.mean((x - mu) ** 2, axis=-1, keepdims=True)
    inv = jax.lax.rsqrt(var + eps)
    out = (x - mu) * inv * g_ref[...] + b_ref[...]
    o32_ref[...] = out
    o16_ref[...] = out.astype(jnp.bfloat16)


def pallas_layernorm(x, gamma, beta, eps, tm=512):
    M, D = x.shape
    tm = _pick_tile(M, tm, 8)
    return pl.pallas_call(
        functools.partial(_layernorm_kernel, eps),
        out_shape=(jax.ShapeDtypeStruct((M, D), jnp.float32),
                   jax.ShapeDtypeStruct((M, D), jnp.bfloat16)),
        grid_spec=pltpu.PrefetchScalarGridSpec(
            num_scalar_prefetch=0,
            grid=(M // tm,),
            in_specs=[
                pl.BlockSpec((tm, D), lambda i: (i, 0)),
                pl.BlockSpec((1, D), lambda i: (0, 0)),
                pl.BlockSpec((1, D), lambda i: (0, 0)),
            ],
            out_specs=[pl.BlockSpec((tm, D), lambda i: (i, 0)),
                       pl.BlockSpec((tm, D), lambda i: (i, 0))],
        ),
        compiler_params=_cparams(("parallel",)),
    )(_maybe_cast(x, jnp.float32),
      _maybe_cast(gamma.reshape(1, D), jnp.float32),
      _maybe_cast(beta.reshape(1, D), jnp.float32))


# ----------------------------------------------------------------------------
# Cross-attention: grid = (batch, head-group, q-tile), head-interleaved I/O.
#   q  : (B, Sq, D)            heads contiguous along D
#   kv : (B, Sk, H*2*Dh)       per-head [K_h | V_h] interleaving (built at init)
#   ctx: (B, Sq, D)            lane-dense store, feeds BertSelfOutput directly
#   scores: (B,H,Sq,Sk) or, with transpose_scores, (B,H,Sk,Sq) (pre-mask, scaled)
# ----------------------------------------------------------------------------
def _cross_attn_kernel(scale, th, dh, transpose_scores,
                       q_ref, kv_ref, bias_ref, ctx_ref, score_ref):
    q = q_ref[0]          # (tq, th*dh)   bf16
    kv = kv_ref[0]        # (Sk, th*2*dh) bf16
    bias = bias_ref[0]    # (1, Sk)       f32 additive mask (softmax only)
    ctx_cols = []
    for i in range(th):   # static unroll over the heads of this group
        qh = q[:, i * dh:(i + 1) * dh]
        kh = kv[:, i * 2 * dh: i * 2 * dh + dh]
        vh = kv[:, i * 2 * dh + dh: (i + 1) * 2 * dh]
        # (tq, Sk) = qh @ kh^T, f32 accumulation, then the torch 1/sqrt(dh) scale.
        s = jax.lax.dot_general(qh, kh, (((1,), (1,)), ((), ())),
                                preferred_element_type=jnp.float32) * scale
        # torch returns the scaled, PRE-mask scores; the mask only enters softmax.
        if transpose_scores:
            score_ref[0, i] = s.T
        else:
            score_ref[0, i] = s
        sm = s + bias
        m = jnp.max(sm, axis=-1, keepdims=True)
        p = jnp.exp(sm - m)
        denom = jnp.sum(p, axis=-1, keepdims=True)            # >= 1 (max term is 1)
        p = p * pl.reciprocal(denom, approx=True)              # EUP slot
        ctx_cols.append(jnp.dot(p.astype(vh.dtype), vh,
                                preferred_element_type=jnp.float32))
    ctx_ref[0] = jnp.concatenate(ctx_cols, axis=-1).astype(ctx_ref.dtype)


def pallas_cross_attention(q, kv, bias, scale, num_heads, *,
                           transpose_scores=False, tq_target=256):
    B, Sq, D = q.shape
    Sk = kv.shape[1]
    dh = D // num_heads
    th = _pick_head_group(num_heads, dh)
    # Score stores need tq % 128 == 0 (or full Sq) when transposed; 8-aligned otherwise.
    tq = _pick_tile(Sq, tq_target, 128 if transpose_scores else 8)
    grid = (B, num_heads // th, Sq // tq)

    if transpose_scores:
        score_shape = (B, num_heads, Sk, Sq)
        score_spec = pl.BlockSpec((1, th, Sk, tq), lambda b, hb, qi: (b, hb, 0, qi))
    else:
        score_shape = (B, num_heads, Sq, Sk)
        score_spec = pl.BlockSpec((1, th, tq, Sk), lambda b, hb, qi: (b, hb, qi, 0))

    return pl.pallas_call(
        functools.partial(_cross_attn_kernel, scale, th, dh, transpose_scores),
        out_shape=(jax.ShapeDtypeStruct((B, Sq, D), jnp.bfloat16),
                   jax.ShapeDtypeStruct(score_shape, jnp.float32)),
        grid_spec=pltpu.PrefetchScalarGridSpec(
            num_scalar_prefetch=0,
            grid=grid,
            in_specs=[
                pl.BlockSpec((1, tq, th * dh), lambda b, hb, qi: (b, qi, hb)),
                pl.BlockSpec((1, Sk, th * 2 * dh), lambda b, hb, qi: (b, 0, hb)),
                pl.BlockSpec((1, 1, Sk), lambda b, hb, qi: (b, 0, 0)),
            ],
            out_specs=[
                pl.BlockSpec((1, tq, th * dh), lambda b, hb, qi: (b, qi, hb)),
                score_spec,
            ],
        ),
        compiler_params=_cparams(("parallel", "parallel", "parallel")),
    )(q, kv, bias)


# ----------------------------------------------------------------------------
# Module forward (JAX glue calling the Pallas kernels)
# ----------------------------------------------------------------------------
def attention_block_forward(p, hid_self_f32, hid_self_bf16, hid_other_bf16,
                            enc_bias, num_heads, B, Ss, So, transpose_scores):
    """One AttentionBlock in cross-attention mode (AttentionWithScoreOutput path)."""
    D = hid_self_bf16.shape[-1]
    head_dim = D // num_heads

    q = pallas_linear(hid_self_bf16, p["wq"]).reshape(B, Ss, D)          # bias=False
    kv = pallas_linear(hid_other_bf16, p["wkv"]).reshape(B, So, 2 * D)   # fused K|V

    ctx, scores = pallas_cross_attention(
        q, kv, enc_bias, 1.0 / math.sqrt(head_dim), num_heads,
        transpose_scores=transpose_scores)
    ctx2d = ctx.reshape(B * Ss, D)                                        # lane-dense

    # BertSelfOutput (cross_output): dense + bias + residual + LayerNorm fused.
    attn_f32, attn_bf16 = pallas_linear_residual_ln(
        ctx2d, p["wo"], p["bo"], hid_self_f32, p["ln1_g"], p["ln1_b"], LN_EPS_BERT)

    # BertIntermediate: dense + bias + exact-erf GELU fused, bf16 activation.
    inter = pallas_linear_bias_gelu(attn_bf16, p["wi"], p["bi"])

    # BertOutput: dense + bias + residual + LayerNorm fused.
    out_f32, out_bf16 = pallas_linear_residual_ln(
        inter, p["wout"], p["bout"], attn_f32, p["ln2_g"], p["ln2_b"], LN_EPS_BERT)

    return out_f32, out_bf16, scores


def cross_pair_forward(cfg, params, hidden_states_1, hidden_states_2,
                       attention_mask_1, attention_mask_2):
    B, S1, D1 = hidden_states_1.shape
    _, S2, D2 = hidden_states_2.shape

    seq_f32, seq_bf16 = pallas_layernorm(
        hidden_states_1.reshape(B * S1, D1),
        params["init_ln_seq_g"], params["init_ln_seq_b"], LN_EPS_INITIAL)
    smi_f32, smi_bf16 = pallas_layernorm(
        hidden_states_2.reshape(B * S2, D2),
        params["init_ln_smiles_g"], params["init_ln_smiles_b"], LN_EPS_INITIAL)

    # get_extended_attention_mask: (1 - mask) * finfo(float32).min, one row per batch.
    bias_1 = ((1.0 - attention_mask_1.astype(jnp.float32)) * MASK_MIN).reshape(B, 1, S1)
    bias_2 = ((1.0 - attention_mask_2.astype(jnp.float32)) * MASK_MIN).reshape(B, 1, S2)

    score_1 = None
    score_2 = None
    # cross(): both blocks of a layer read the SAME (pre-update) hidden states.
    for p_seq, p_smi in zip(params["attn_seq"], params["attn_smiles"]):
        new_seq_f32, new_seq_bf16, score_1 = attention_block_forward(
            p_seq, seq_f32, seq_bf16, smi_bf16, bias_2,
            cfg["heads_seq"], B, S1, S2, transpose_scores=False)
        new_smi_f32, new_smi_bf16, score_2 = attention_block_forward(
            p_smi, smi_f32, smi_bf16, seq_bf16, bias_1,
            cfg["heads_smiles"], B, S2, S1, transpose_scores=True)
        seq_f32, seq_bf16 = new_seq_f32, new_seq_bf16
        smi_f32, smi_bf16 = new_smi_f32, new_smi_bf16

    # score_2 is already stored as (B, H_smiles, S1, S2) by the kernel -> no swapaxes.
    pair_representation_cross = jnp.concatenate([score_1, score_2], axis=1)
    return (pair_representation_cross,
            seq_f32.reshape(B, S1, D1),
            smi_f32.reshape(B, S2, D2))


# ----------------------------------------------------------------------------
# Parameter init (f32, torch-like shapes) and one-time device preparation
# (bf16 weight casts, per-head K|V interleaving, (1,N) bias/LN vectors).
# ----------------------------------------------------------------------------
def init_attention_block_params(key, hidden_self, hidden_other, intermediate):
    ks = random.split(key, 6)
    std = 0.02
    return {
        # weights stored as (in, out) == torch_weight.T
        "wq": std * random.normal(ks[0], (hidden_self, hidden_self), jnp.float32),
        "wk": std * random.normal(ks[1], (hidden_other, hidden_self), jnp.float32),
        "wv": std * random.normal(ks[2], (hidden_other, hidden_self), jnp.float32),
        "wo": std * random.normal(ks[3], (hidden_self, hidden_self), jnp.float32),
        "bo": jnp.zeros((hidden_self,), jnp.float32),
        "ln1_g": jnp.ones((hidden_self,), jnp.float32),
        "ln1_b": jnp.zeros((hidden_self,), jnp.float32),
        "wi": std * random.normal(ks[4], (hidden_self, intermediate), jnp.float32),
        "bi": jnp.zeros((intermediate,), jnp.float32),
        "wout": std * random.normal(ks[5], (intermediate, hidden_self), jnp.float32),
        "bout": jnp.zeros((hidden_self,), jnp.float32),
        "ln2_g": jnp.ones((hidden_self,), jnp.float32),
        "ln2_b": jnp.zeros((hidden_self,), jnp.float32),
    }


def init_cross_pair_params(key, cfg):
    n = cfg["n_cross_attention"]
    keys = random.split(key, 2 * n)
    return {
        "init_ln_seq_g": jnp.ones((cfg["d_seq"],), jnp.float32),
        "init_ln_seq_b": jnp.zeros((cfg["d_seq"],), jnp.float32),
        "init_ln_smiles_g": jnp.ones((cfg["d_smiles"],), jnp.float32),
        "init_ln_smiles_b": jnp.zeros((cfg["d_smiles"],), jnp.float32),
        "attn_seq": [
            init_attention_block_params(keys[i], cfg["d_seq"], cfg["d_smiles"],
                                        cfg["inter_seq"]) for i in range(n)
        ],
        "attn_smiles": [
            init_attention_block_params(keys[n + i], cfg["d_smiles"], cfg["d_seq"],
                                        cfg["inter_smiles"]) for i in range(n)
        ],
    }


def prepare_attention_block_params(p, num_heads):
    D = p["wq"].shape[1]
    Do = p["wk"].shape[0]
    dh = D // num_heads
    # Interleave K/V weights per head -> attention kernel reads one contiguous
    # [K_h | V_h] column group per head; built ONCE here, outside any jit.
    wk_h = p["wk"].reshape(Do, num_heads, dh)
    wv_h = p["wv"].reshape(Do, num_heads, dh)
    wkv = jnp.stack([wk_h, wv_h], axis=2).reshape(Do, num_heads * 2 * dh)
    return {
        "wq": p["wq"].astype(jnp.bfloat16),
        "wkv": wkv.astype(jnp.bfloat16),
        "wo": p["wo"].astype(jnp.bfloat16),
        "bo": p["bo"].reshape(1, -1).astype(jnp.float32),
        "ln1_g": p["ln1_g"].reshape(1, -1).astype(jnp.float32),
        "ln1_b": p["ln1_b"].reshape(1, -1).astype(jnp.float32),
        "wi": p["wi"].astype(jnp.bfloat16),
        "bi": p["bi"].reshape(1, -1).astype(jnp.float32),
        "wout": p["wout"].astype(jnp.bfloat16),
        "bout": p["bout"].reshape(1, -1).astype(jnp.float32),
        "ln2_g": p["ln2_g"].reshape(1, -1).astype(jnp.float32),
        "ln2_b": p["ln2_b"].reshape(1, -1).astype(jnp.float32),
    }


def prepare_cross_pair_params(params, cfg):
    return {
        "init_ln_seq_g": params["init_ln_seq_g"].reshape(1, -1).astype(jnp.float32),
        "init_ln_seq_b": params["init_ln_seq_b"].reshape(1, -1).astype(jnp.float32),
        "init_ln_smiles_g": params["init_ln_smiles_g"].reshape(1, -1).astype(jnp.float32),
        "init_ln_smiles_b": params["init_ln_smiles_b"].reshape(1, -1).astype(jnp.float32),
        "attn_seq": [prepare_attention_block_params(p, cfg["heads_seq"])
                     for p in params["attn_seq"]],
        "attn_smiles": [prepare_attention_block_params(p, cfg["heads_smiles"])
                        for p in params["attn_smiles"]],
    }


# TODO(synk): gradient_checkpointing / dropout and the chunked linear-mem attention
# path (query_chunk_size / key_chunk_size) are training / memory-only variants and
# are not reproduced; this implements the dense AttentionWithScoreOutput forward.

if __name__ == "__main__":
    cfg = dict(
        n_cross_attention=2,
        d_seq=32, heads_seq=4, inter_seq=64,
        d_smiles=32, heads_smiles=4, inter_smiles=64,
    )
    B, S_SEQ, S_SMILES = 2, 16, 8

    key = random.PRNGKey(0)
    k1, k2, k3 = random.split(key, 3)
    hidden_states_1 = random.normal(k1, (B, S_SEQ, cfg["d_seq"]), jnp.float32)
    hidden_states_2 = random.normal(k2, (B, S_SMILES, cfg["d_smiles"]), jnp.float32)
    # integer (non-float) masks with some padding, as expected by the torch module
    attention_mask_1 = jnp.concatenate(
        [jnp.ones((B, S_SEQ - 2), jnp.int32), jnp.zeros((B, 2), jnp.int32)], axis=1)
    attention_mask_2 = jnp.concatenate(
        [jnp.ones((B, S_SMILES - 1), jnp.int32), jnp.zeros((B, 1), jnp.int32)], axis=1)

    raw_params = init_cross_pair_params(k3, cfg)
    params = prepare_cross_pair_params(raw_params, cfg)   # one-time bf16 / interleave

    fwd = jax.jit(functools.partial(cross_pair_forward, cfg))
    pair_rep, hidden_seq, hidden_smiles = fwd(
        params, hidden_states_1, hidden_states_2, attention_mask_1, attention_mask_2)
    jax.block_until_ready((pair_rep, hidden_seq, hidden_smiles))

    assert pair_rep.shape == (B, cfg["heads_seq"] + cfg["heads_smiles"], S_SEQ, S_SMILES)
    assert hidden_seq.shape == (B, S_SEQ, cfg["d_seq"])
    assert hidden_smiles.shape == (B, S_SMILES, cfg["d_smiles"])
    assert bool(jnp.all(jnp.isfinite(pair_rep)))
    assert bool(jnp.all(jnp.isfinite(hidden_seq)))
    assert bool(jnp.all(jnp.isfinite(hidden_smiles)))

    print("KERNEL_OK")
</pallas_src>

<mosaic_0001>
module attributes {stable_mosaic.version = 11 : i64} {
  func.func @_matmul_kernel(%arg0: i32, %arg1: i32, %arg2: i32, %arg3: memref<16x32xbf16, #tpu.memory_space<vmem>>, %arg4: memref<32x32xbf16, #tpu.memory_space<vmem>>, %arg5: memref<16x32xbf16, #tpu.memory_space<vmem>>, %arg6: memref<16x32xf32, #tpu.memory_space<vmem>>) attributes {dimension_semantics = [#tpu.dimension_semantics<parallel>, #tpu.dimension_semantics<parallel>, #tpu.dimension_semantics<arbitrary>], iteration_bounds = array<i64: 1, 1, 1>, scalar_prefetch = 0 : i64, scratch_operands = 1 : i64, tpu.core_type = #tpu.core_type<tc>, window_params = [{transform_indices = @transform_0, window_bounds = array<i64: 16, 32>}, {transform_indices = @transform_1, window_bounds = array<i64: 32, 32>}, {transform_indices = @transform_2, window_bounds = array<i64: 16, 32>}]} {
    %c0_i32 = arith.constant 0 : i32
    %0 = arith.cmpi eq, %arg2, %c0_i32 : i32
    %1 = arith.extui %0 : i1 to i32
    %c0_i32_0 = arith.constant 0 : i32
    %2 = arith.cmpi ne, %1, %c0_i32_0 : i32
    scf.if %2 {
      %cst_10 = arith.constant 0.000000e+00 : f32
      %12 = vector.broadcast %cst_10 : f32 to vector<16x32xf32>
      %c0_11 = arith.constant 0 : index
      %c0_12 = arith.constant 0 : index
      %13 = vector.load %arg6[%c0_11, %c0_12] : memref<16x32xf32, #tpu.memory_space<vmem>>, vector<16x32xf32>
      tpu.vector_store %arg6[%c0_11, %c0_12], %12 {strides = array<i32>} : memref<16x32xf32, #tpu.memory_space<vmem>>, vector<16x32xf32>,
    } else {
    }
    %c0 = arith.constant 0 : index
    %c0_1 = arith.constant 0 : index
    %3 = vector.load %arg6[%c0, %c0_1] : memref<16x32xf32, #tpu.memory_space<vmem>>, vector<16x32xf32>
    %c0_2 = arith.constant 0 : index
    %c0_3 = arith.constant 0 : index
    %4 = vector.load %arg3[%c0_2, %c0_3] : memref<16x32xbf16, #tpu.memory_space<vmem>>, vector<16x32xbf16>
    %c0_4 = arith.constant 0 : index
    %c0_5 = arith.constant 0 : index
    %5 = vector.load %arg4[%c0_4, %c0_5] : memref<32x32xbf16, #tpu.memory_space<vmem>>, vector<32x32xbf16>
    %cst = arith.constant dense<0.000000e+00> : vector<16x32xf32>
    %6 = tpu.matmul %4, %5, %cst {dimension_numbers = #tpu.dot_dimension_numbers<[1], [0], [0], [1], [0, 0, 1, 1], [], []>} : vector<16x32xbf16>, vector<32x32xbf16>, vector<16x32xf32> -> vector<16x32xf32>
    %7 = arith.addf %3, %6 : vector<16x32xf32>
    %c0_6 = arith.constant 0 : index
    %c0_7 = arith.constant 0 : index
    %8 = vector.load %arg6[%c0_6, %c0_7] : memref<16x32xf32, #tpu.memory_space<vmem>>, vector<16x32xf32>
    tpu.vector_store %arg6[%c0_6, %c0_7], %7 {strides = array<i32>} : memref<16x32xf32, #tpu.memory_space<vmem>>, vector<16x32xf32>,
    %c0_i32_8 = arith.constant 0 : i32
    %9 = arith.cmpi eq, %arg2, %c0_i32_8 : i32
    %10 = arith.extui %9 : i1 to i32
    %c0_i32_9 = arith.constant 0 : i32
    %11 = arith.cmpi ne, %10, %c0_i32_9 : i32
    scf.if %11 {
      %c0_10 = arith.constant 0 : index
      %c0_11 = arith.constant 0 : index
      %12 = vector.load %arg6[%c0_10, %c0_11] : memref<16x32xf32, #tpu.memory_space<vmem>>, vector<16x32xf32>
      %13 = arith.truncf %12 : vector<16x32xf32> to vector<16x32xbf16>
      %c0_12 = arith.constant 0 : index
      %c0_13 = arith.constant 0 : index
      %14 = vector.load %arg5[%c0_12, %c0_13] : memref<16x32xbf16, #tpu.memory_space<vmem>>, vector<16x32xbf16>
      tpu.vector_store %arg5[%c0_12, %c0_13], %13 {strides = array<i32>} : memref<16x32xbf16, #tpu.memory_space<vmem>>, vector<16x32xbf16>,
    } else {
    }
    return
  }
  func.func @transform_0(%arg0: i32, %arg1: i32, %arg2: i32) -> (i32, i32) {
    %c0_i32 = arith.constant 0 : i32
    return %arg0, %arg2 : i32, i32
  }
  func.func @transform_1(%arg0: i32, %arg1: i32, %arg2: i32) -> (i32, i32) {
    %c0_i32 = arith.constant 0 : i32
    return %arg2, %arg1 : i32, i32
  }
  func.func @transform_2(%arg0: i32, %arg1: i32, %arg2: i32) -> (i32, i32) {
    %c0_i32 = arith.constant 0 : i32
    return %arg0, %arg1 : i32, i32
  }
}

module attributes {stable_mosaic.version = 11 : i64} {
  func.func @_layernorm_kernel(%arg0: i32, %arg1: memref<16x32xf32, #tpu.memory_space<vmem>>, %arg2: memref<1x32xf32, #tpu.memory_space<vmem>>, %arg3: memref<1x32xf32, #tpu.memory_space<vmem>>, %arg4: memref<16x32xf32, #tpu.memory_space<vmem>>, %arg5: memref<16x32xbf16, #tpu.memory_space<vmem>>) attributes {dimension_semantics = [#tpu.dimension_semantics<parallel>], iteration_bounds = array<i64: 1>, scalar_prefetch = 0 : i64, scratch_operands = 0 : i64, tpu.core_type = #tpu.core_type<tc>, window_params = [{transform_indices = @transform_0, window_bounds = array<i64: 16, 32>}, {pipeline_mode = #tpu.pipeline_mode<synchronous>, transform_indices = @transform_1, window_bounds = array<i64: 1, 32>}, {pipeline_mode = #tpu.pipeline_mode<synchronous>, transform_indices = @transform_2, window_bounds = array<i64: 1, 32>}, {transform_indices = @transform_3, window_bounds = array<i64: 16, 32>}, {transform_indices = @transform_4, window_bounds = array<i64: 16, 32>}]} {
    %c0 = arith.constant 0 : index
    %c0_0 = arith.constant 0 : index
    %0 = vector.load %arg1[%c0, %c0_0] : memref<16x32xf32, #tpu.memory_space<vmem>>, vector<16x32xf32>
    %cst = arith.constant dense<0.000000e+00> : vector<16xf32>
    %1 = vector.multi_reduction <add>, %0, %cst [1] : vector<16x32xf32> to vector<16xf32>
    %2 = vector.shape_cast %1 : vector<16xf32> to vector<16x1xf32>
    %cst_1 = arith.constant 3.200000e+01 : f32
    %3 = vector.broadcast %cst_1 : f32 to vector<16x1xf32>
    %4 = arith.divf %2, %3 : vector<16x1xf32>
    %5 = vector.broadcast %4 : vector<16x1xf32> to vector<16x32xf32>
    %6 = arith.subf %0, %5 : vector<16x32xf32>
    %7 = arith.mulf %6, %6 : vector<16x32xf32>
    %cst_2 = arith.constant dense<0.000000e+00> : vector<16xf32>
    %8 = vector.multi_reduction <add>, %7, %cst_2 [1] : vector<16x32xf32> to vector<16xf32>
    %9 = vector.shape_cast %8 : vector<16xf32> to vector<16x1xf32>
    %cst_3 = arith.constant 3.200000e+01 : f32
    %10 = vector.broadcast %cst_3 : f32 to vector<16x1xf32>
    %11 = arith.divf %9, %10 : vector<16x1xf32>
    %cst_4 = arith.constant 9.99999974E-6 : f32
    %12 = vector.broadcast %cst_4 : f32 to vector<16x1xf32>
    %13 = arith.addf %11, %12 : vector<16x1xf32>
    %14 = math.rsqrt %13 : vector<16x1xf32>
    %15 = vector.broadcast %4 : vector<16x1xf32> to vector<16x32xf32>
    %16 = arith.subf %0, %15 : vector<16x32xf32>
    %17 = vector.broadcast %14 : vector<16x1xf32> to vector<16x32xf32>
    %18 = arith.mulf %16, %17 : vector<16x32xf32>
    %c0_5 = arith.constant 0 : index
    %c0_6 = arith.constant 0 : index
    %19 = vector.load %arg2[%c0_5, %c0_6] : memref<1x32xf32, #tpu.memory_space<vmem>>, vector<1x32xf32>
    %20 = vector.broadcast %19 : vector<1x32xf32> to vector<16x32xf32>
    %21 = arith.mulf %18, %20 : vector<16x32xf32>
    %c0_7 = arith.constant 0 : index
    %c0_8 = arith.constant 0 : index
    %22 = vector.load %arg3[%c0_7, %c0_8] : memref<1x32xf32, #tpu.memory_space<vmem>>, vector<1x32xf32>
    %23 = vector.broadcast %22 : vector<1x32xf32> to vector<16x32xf32>
    %24 = arith.addf %21, %23 : vector<16x32xf32>
    %c0_9 = arith.constant 0 : index
    %c0_10 = arith.constant 0 : index
    %25 = vector.load %arg4[%c0_9, %c0_10] : memref<16x32xf32, #tpu.memory_space<vmem>>, vector<16x32xf32>
    tpu.vector_store %arg4[%c0_9, %c0_10], %24 {strides = array<i32>} : memref<16x32xf32, #tpu.memory_space<vmem>>, vector<16x32xf32>,
    %26 = arith.truncf %24 : vector<16x32xf32> to vector<16x32xbf16>
    %c0_11 = arith.constant 0 : index
    %c0_12 = arith.constant 0 : index
    %27 = vector.load %arg5[%c0_11, %c0_12] : memref<16x32xbf16, #tpu.memory_space<vmem>>, vector<16x32xbf16>
    tpu.vector_store %arg5[%c0_11, %c0_12], %26 {strides = array<i32>} : memref<16x32xbf16, #tpu.memory_space<vmem>>, vector<16x32xbf16>,
    return
  }
  func.func @transform_0(%arg0: i32) -> (i32, i32) {
    %c0_i32 = arith.constant 0 : i32
    %c0_i32_0 = arith.constant 0 : i32
    return %arg0, %c0_i32 : i32, i32
  }
  func.func @transform_1(%arg0: i32) -> (i32, i32) {
    %c0_i32 = arith.constant 0 : i32
    %c0_i32_0 = arith.constant 0 : i32
    %c0_i32_1 = arith.constant 0 : i32
    return %c0_i32, %c0_i32_0 : i32, i32
  }
  func.func @transform_2(%arg0: i32) -> (i32, i32) {
    %c0_i32 = arith.constant 0 : i32
    %c0_i32_0 = arith.constant 0 : i32
    %c0_i32_1 = arith.constant 0 : i32
    return %c0_i32, %c0_i32_0 : i32, i32
  }
  func.func @transform_3(%arg0: i32) -> (i32, i32) {
    %c0_i32 = arith.constant 0 : i32
    %c0_i32_0 = arith.constant 0 : i32
    return %arg0, %c0_i32 : i32, i32
  }
  func.func @transform_4(%arg0: i32) -> (i32, i32) {
    %c0_i32 = arith.constant 0 : i32
    %c0_i32_0 = arith.constant 0 : i32
    return %arg0, %c0_i32 : i32, i32
  }
}

module attributes {stable_mosaic.version = 11 : i64} {
  func.func @_matmul_kernel(%arg0: i32, %arg1: i32, %arg2: i32, %arg3: memref<16x32xbf16, #tpu.memory_space<vmem>>, %arg4: memref<32x64xbf16, #tpu.memory_space<vmem>>, %arg5: memref<16x64xbf16, #tpu.memory_space<vmem>>, %arg6: memref<16x64xf32, #tpu.memory_space<vmem>>) attributes {dimension_semantics = [#tpu.dimension_semantics<parallel>, #tpu.dimension_semantics<parallel>, #tpu.dimension_semantics<arbitrary>], iteration_bounds = array<i64: 1, 1, 1>, scalar_prefetch = 0 : i64, scratch_operands = 1 : i64, tpu.core_type = #tpu.core_type<tc>, window_params = [{transform_indices = @transform_0, window_bounds = array<i64: 16, 32>}, {transform_indices = @transform_1, window_bounds = array<i64: 32, 64>}, {transform_indices = @transform_2, window_bounds = array<i64: 16, 64>}]} {
    %c0_i32 = arith.constant 0 : i32
    %0 = arith.cmpi eq, %arg2, %c0_i32 : i32
    %1 = arith.extui %0 : i1 to i32
    %c0_i32_0 = arith.constant 0 : i32
    %2 = arith.cmpi ne, %1, %c0_i32_0 : i32
    scf.if %2 {
      %cst_10 = arith.constant 0.000000e+00 : f32
      %12 = vector.broadcast %cst_10 : f32 to vector<16x64xf32>
      %c0_11 = arith.constant 0 : index
      %c0_12 = arith.constant 0 : index
      %13 = vector.load %arg6[%c0_11, %c0_12] : memref<16x64xf32, #tpu.memory_space<vmem>>, vector<16x64xf32>
      tpu.vector_store %arg6[%c0_11, %c0_12], %12 {strides = array<i32>} : memref<16x64xf32, #tpu.memory_space<vmem>>, vector<16x64xf32>,
    } else {
    }
    %c0 = arith.constant 0 : index
    %c0_1 = arith.constant 0 : index
    %3 = vector.load %arg6[%c0, %c0_1] : memref<16x64xf32, #tpu.memory_space<vmem>>, vector<16x64xf32>
    %c0_2 = arith.constant 0 : index
    %c0_3 = arith.constant 0 : index
    %4 = vector.load %arg3[%c0_2, %c0_3] : memref<16x32xbf16, #tpu.memory_space<vmem>>, vector<16x32xbf16>
    %c0_4 = arith.constant 0 : index
    %c0_5 = arith.constant 0 : index
    %5 = vector.load %arg4[%c0_4, %c0_5] : memref<32x64xbf16, #tpu.memory_space<vmem>>, vector<32x64xbf16>
    %cst = arith.constant dense<0.000000e+00> : vector<16x64xf32>
    %6 = tpu.matmul %4, %5, %cst {dimension_numbers = #tpu.dot_dimension_numbers<[1], [0], [0], [1], [0, 0, 1, 1], [], []>} : vector<16x32xbf16>, vector<32x64xbf16>, vector<16x64xf32> -> vector<16x64xf32>
    %7 = arith.addf %3, %6 : vector<16x64xf32>
    %c0_6 = arith.constant 0 : index
    %c0_7 = arith.constant 0 : index
    %8 = vector.load %arg6[%c0_6, %c0_7] : memref<16x64xf32, #tpu.memory_space<vmem>>, vector<16x64xf32>
    tpu.vector_store %arg6[%c0_6, %c0_7], %7 {strides = array<i32>} : memref<16x64xf32, #tpu.memory_space<vmem>>, vector<16x64xf32>,
    %c0_i32_8 = arith.constant 0 : i32
    %9 = arith.cmpi eq, %arg2, %c0_i32_8 : i32
    %10 = arith.extui %9 : i1 to i32
    %c0_i32_9 = arith.constant 0 : i32
    %11 = arith.cmpi ne, %10, %c0_i32_9 : i32
    scf.if %11 {
      %c0_10 = arith.constant 0 : index
      %c0_11 = arith.constant 0 : index
      %12 = vector.load %arg6[%c0_10, %c0_11] : memref<16x64xf32, #tpu.memory_space<vmem>>, vector<16x64xf32>
      %13 = arith.truncf %12 : vector<16x64xf32> to vector<16x64xbf16>
      %c0_12 = arith.constant 0 : index
      %c0_13 = arith.constant 0 : index
      %14 = vector.load %arg5[%c0_12, %c0_13] : memref<16x64xbf16, #tpu.memory_space<vmem>>, vector<16x64xbf16>
      tpu.vector_store %arg5[%c0_12, %c0_13], %13 {strides = array<i32>} : memref<16x64xbf16, #tpu.memory_space<vmem>>, vector<16x64xbf16>,
    } else {
    }
    return
  }
  func.func @transform_0(%arg0: i32, %arg1: i32, %arg2: i32) -> (i32, i32) {
    %c0_i32 = arith.constant 0 : i32
    return %arg0, %arg2 : i32, i32
  }
  func.func @transform_1(%arg0: i32, %arg1: i32, %arg2: i32) -> (i32, i32) {
    %c0_i32 = arith.constant 0 : i32
    return %arg2, %arg1 : i32, i32
  }
  func.func @transform_2(%arg0: i32, %arg1: i32, %arg2: i32) -> (i32, i32) {
    %c0_i32 = arith.constant 0 : i32
    return %arg0, %arg1 : i32, i32
  }
}

module attributes {stable_mosaic.version = 11 : i64} {
  func.func @_layernorm_kernel(%arg0: i32, %arg1: memref<32x32xf32, #tpu.memory_space<vmem>>, %arg2: memref<1x32xf32, #tpu.memory_space<vmem>>, %arg3: memref<1x32xf32, #tpu.memory_space<vmem>>, %arg4: memref<32x32xf32, #tpu.memory_space<vmem>>, %arg5: memref<32x32xbf16, #tpu.memory_space<vmem>>) attributes {dimension_semantics = [#tpu.dimension_semantics<parallel>], iteration_bounds = array<i64: 1>, scalar_prefetch = 0 : i64, scratch_operands = 0 : i64, tpu.core_type = #tpu.core_type<tc>, window_params = [{transform_indices = @transform_0, window_bounds = array<i64: 32, 32>}, {pipeline_mode = #tpu.pipeline_mode<synchronous>, transform_indices = @transform_1, window_bounds = array<i64: 1, 32>}, {pipeline_mode = #tpu.pipeline_mode<synchronous>, transform_indices = @transform_2, window_bounds = array<i64: 1, 32>}, {transform_indices = @transform_3, window_bounds = array<i64: 32, 32>}, {transform_indices = @transform_4, window_bounds = array<i64: 32, 32>}]} {
    %c0 = arith.constant 0 : index
    %c0_0 = arith.constant 0 : index
    %0 = vector.load %arg1[%c0, %c0_0] : memref<32x32xf32, #tpu.memory_space<vmem>>, vector<32x32xf32>
    %cst = arith.constant dense<0.000000e+00> : vector<32xf32>
    %1 = vector.multi_reduction <add>, %0, %cst [1] : vector<32x32xf32> to vector<32xf32>
    %2 = vector.shape_cast %1 : vector<32xf32> to vector<32x1xf32>
    %cst_1 = arith.constant 3.200000e+01 : f32
    %3 = vector.broadcast %cst_1 : f32 to vector<32x1xf32>
    %4 = arith.divf %2, %3 : vector<32x1xf32>
    %5 = vector.broadcast %4 : vector<32x1xf32> to vector<32x32xf32>
    %6 = arith.subf %0, %5 : vector<32x32xf32>
    %7 = arith.mulf %6, %6 : vector<32x32xf32>
    %cst_2 = arith.constant dense<0.000000e+00> : vector<32xf32>
    %8 = vector.multi_reduction <add>, %7, %cst_2 [1] : vector<32x32xf32> to vector<32xf32>
    %9 = vector.shape_cast %8 : vector<32xf32> to vector<32x1xf32>
    %cst_3 = arith.constant 3.200000e+01 : f32
    %10 = vector.broadcast %cst_3 : f32 to vector<32x1xf32>
    %11 = arith.divf %9, %10 : vector<32x1xf32>
    %cst_4 = arith.constant 9.99999974E-6 : f32
    %12 = vector.broadcast %cst_4 : f32 to vector<32x1xf32>
    %13 = arith.addf %11, %12 : vector<32x1xf32>
    %14 = math.rsqrt %13 : vector<32x1xf32>
    %15 = vector.broadcast %4 : vector<32x1xf32> to vector<32x32xf32>
    %16 = arith.subf %0, %15 : vector<32x32xf32>
    %17 = vector.broadcast %14 : vector<32x1xf32> to vector<32x32xf32>
    %18 = arith.mulf %16, %17 : vector<32x32xf32>
    %c0_5 = arith.constant 0 : index
    %c0_6 = arith.constant 0 : index
    %19 = vector.load %arg2[%c0_5, %c0_6] : memref<1x32xf32, #tpu.memory_space<vmem>>, vector<1x32xf32>
    %20 = vector.broadcast %19 : vector<1x32xf32> to vector<32x32xf32>
    %21 = arith.mulf %18, %20 : vector<32x32xf32>
    %c0_7 = arith.constant 0 : index
    %c0_8 = arith.constant 0 : index
    %22 = vector.load %arg3[%c0_7, %c0_8] : memref<1x32xf32, #tpu.memory_space<vmem>>, vector<1x32xf32>
    %23 = vector.broadcast %22 : vector<1x32xf32> to vector<32x32xf32>
    %24 = arith.addf %21, %23 : vector<32x32xf32>
    %c0_9 = arith.constant 0 : index
    %c0_10 = arith.constant 0 : index
    %25 = vector.load %arg4[%c0_9, %c0_10] : memref<32x32xf32, #tpu.memory_space<vmem>>, vector<32x32xf32>
    tpu.vector_store %arg4[%c0_9, %c0_10], %24 {strides = array<i32>} : memref<32x32xf32, #tpu.memory_space<vmem>>, vector<32x32xf32>,
    %26 = arith.truncf %24 : vector<32x32xf32> to vector<32x32xbf16>
    %c0_11 = arith.constant 0 : index
    %c0_12 = arith.constant 0 : index
    %27 = vector.load %arg5[%c0_11, %c0_12] : memref<32x32xbf16, #tpu.memory_space<vmem>>, vector<32x32xbf16>
    tpu.vector_store %arg5[%c0_11, %c0_12], %26 {strides = array<i32>} : memref<32x32xbf16, #tpu.memory_space<vmem>>, vector<32x32xbf16>,
    return
  }
  func.func @transform_0(%arg0: i32) -> (i32, i32) {
    %c0_i32 = arith.constant 0 : i32
    %c0_i32_0 = arith.constant 0 : i32
    return %arg0, %c0_i32 : i32, i32
  }
  func.func @transform_1(%arg0: i32) -> (i32, i32) {
    %c0_i32 = arith.constant 0 : i32
    %c0_i32_0 = arith.constant 0 : i32
    %c0_i32_1 = arith.constant 0 : i32
    return %c0_i32, %c0_i32_0 : i32, i32
  }
  func.func @transform_2(%arg0: i32) -> (i32, i32) {
    %c0_i32 = arith.constant 0 : i32
    %c0_i32_0 = arith.constant 0 : i32
    %c0_i32_1 = arith.constant 0 : i32
    return %c0_i32, %c0_i32_0 : i32, i32
  }
  func.func @transform_3(%arg0: i32) -> (i32, i32) {
    %c0_i32 = arith.constant 0 : i32
    %c0_i32_0 = arith.constant 0 : i32
    return %arg0, %c0_i32 : i32, i32
  }
  func.func @transform_4(%arg0: i32) -> (i32, i32) {
    %c0_i32 = arith.constant 0 : i32
    %c0_i32_0 = arith.constant 0 : i32
    return %arg0, %c0_i32 : i32, i32
  }
}

module attributes {stable_mosaic.version = 11 : i64} {
  func.func @_matmul_kernel(%arg0: i32, %arg1: i32, %arg2: i32, %arg3: memref<32x32xbf16, #tpu.memory_space<vmem>>, %arg4: memref<32x32xbf16, #tpu.memory_space<vmem>>, %arg5: memref<32x32xbf16, #tpu.memory_space<vmem>>, %arg6: memref<32x32xf32, #tpu.memory_space<vmem>>) attributes {dimension_semantics = [#tpu.dimension_semantics<parallel>, #tpu.dimension_semantics<parallel>, #tpu.dimension_semantics<arbitrary>], iteration_bounds = array<i64: 1, 1, 1>, scalar_prefetch = 0 : i64, scratch_operands = 1 : i64, tpu.core_type = #tpu.core_type<tc>, window_params = [{transform_indices = @transform_0, window_bounds = array<i64: 32, 32>}, {transform_indices = @transform_1, window_bounds = array<i64: 32, 32>}, {transform_indices = @transform_2, window_bounds = array<i64: 32, 32>}]} {
    %c0_i32 = arith.constant 0 : i32
    %0 = arith.cmpi eq, %arg2, %c0_i32 : i32
    %1 = arith.extui %0 : i1 to i32
    %c0_i32_0 = arith.constant 0 : i32
    %2 = arith.cmpi ne, %1, %c0_i32_0 : i32
    scf.if %2 {
      %cst_10 = arith.constant 0.000000e+00 : f32
      %12 = vector.broadcast %cst_10 : f32 to vector<32x32xf32>
      %c0_11 = arith.constant 0 : index
      %c0_12 = arith.constant 0 : index
      %13 = vector.load %arg6[%c0_11, %c0_12] : memref<32x32xf32, #tpu.memory_space<vmem>>, vector<32x32xf32>
      tpu.vector_store %arg6[%c0_11, %c0_12], %12 {strides = array<i32>} : memref<32x32xf32, #tpu.memory_space<vmem>>, vector<32x32xf32>,
    } else {
    }
    %c0 = arith.constant 0 : index
    %c0_1 = arith.constant 0 : index
    %3 = vector.load %arg6[%c0, %c0_1] : memref<32x32xf32, #tpu.memory_space<vmem>>, vector<32x32xf32>
    %c0_2 = arith.constant 0 : index
    %c0_3 = arith.constant 0 : index
    %4 = vector.load %arg3[%c0_2, %c0_3] : memref<32x32xbf16, #tpu.memory_space<vmem>>, vector<32x32xbf16>
    %c0_4 = arith.constant 0 : index
    %c0_5 = arith.constant 0 : index
    %5 = vector.load %arg4[%c0_4, %c0_5] : memref<32x32xbf16, #tpu.memory_space<vmem>>, vector<32x32xbf16>
    %cst = arith.constant dense<0.000000e+00> : vector<32x32xf32>
    %6 = tpu.matmul %4, %5, %cst {dimension_numbers = #tpu.dot_dimension_numbers<[1], [0], [0], [1], [0, 0, 1, 1], [], []>} : vector<32x32xbf16>, vector<32x32xbf16>, vector<32x32xf32> -> vector<32x32xf32>
    %7 = arith.addf %3, %6 : vector<32x32xf32>
    %c0_6 = arith.constant 0 : index
    %c0_7 = arith.constant 0 : index
    %8 = vector.load %arg6[%c0_6, %c0_7] : memref<32x32xf32, #tpu.memory_space<vmem>>, vector<32x32xf32>
    tpu.vector_store %arg6[%c0_6, %c0_7], %7 {strides = array<i32>} : memref<32x32xf32, #tpu.memory_space<vmem>>, vector<32x32xf32>,
    %c0_i32_8 = arith.constant 0 : i32
    %9 = arith.cmpi eq, %arg2, %c0_i32_8 : i32
    %10 = arith.extui %9 : i1 to i32
    %c0_i32_9 = arith.constant 0 : i32
    %11 = arith.cmpi ne, %10, %c0_i32_9 : i32
    scf.if %11 {
      %c0_10 = arith.constant 0 : index
      %c0_11 = arith.constant 0 : index
      %12 = vector.load %arg6[%c0_10, %c0_11] : memref<32x32xf32, #tpu.memory_space<vmem>>, vector<32x32xf32>
      %13 = arith.truncf %12 : vector<32x32xf32> to vector<32x32xbf16>
      %c0_12 = arith.constant 0 : index
      %c0_13 = arith.constant 0 : index
      %14 = vector.load %arg5[%c0_12, %c0_13] : memref<32x32xbf16, #tpu.memory_space<vmem>>, vector<32x32xbf16>
      tpu.vector_store %arg5[%c0_12, %c0_13], %13 {strides = array<i32>} : memref<32x32xbf16, #tpu.memory_space<vmem>>, vector<32x32xbf16>,
    } else {
    }
    return
  }
  func.func @transform_0(%arg0: i32, %arg1: i32, %arg2: i32) -> (i32, i32) {
    %c0_i32 = arith.constant 0 : i32
    return %arg0, %arg2 : i32, i32
  }
  func.func @transform_1(%arg0: i32, %arg1: i32, %arg2: i32) -> (i32, i32) {
    %c0_i32 = arith.constant 0 : i32
    return %arg2, %arg1 : i32, i32
  }
  func.func @transform_2(%arg0: i32, %arg1: i32, %arg2: i32) -> (i32, i32) {
    %c0_i32 = arith.constant 0 : i32
    return %arg0, %arg1 : i32, i32
  }
}

module attributes {stable_mosaic.version = 11 : i64} {
  func.func @_matmul_kernel(%arg0: i32, %arg1: i32, %arg2: i32, %arg3: memref<32x32xbf16, #tpu.memory_space<vmem>>, %arg4: memref<32x64xbf16, #tpu.memory_space<vmem>>, %arg5: memref<32x64xbf16, #tpu.memory_space<vmem>>, %arg6: memref<32x64xf32, #tpu.memory_space<vmem>>) attributes {dimension_semantics = [#tpu.dimension_semantics<parallel>, #tpu.dimension_semantics<parallel>, #tpu.dimension_semantics<arbitrary>], iteration_bounds = array<i64: 1, 1, 1>, scalar_prefetch = 0 : i64, scratch_operands = 1 : i64, tpu.core_type = #tpu.core_type<tc>, window_params = [{transform_indices = @transform_0, window_bounds = array<i64: 32, 32>}, {transform_indices = @transform_1, window_bounds = array<i64: 32, 64>}, {transform_indices = @transform_2, window_bounds = array<i64: 32, 64>}]} {
    %c0_i32 = arith.constant 0 : i32
    %0 = arith.cmpi eq, %arg2, %c0_i32 : i32
    %1 = arith.extui %0 : i1 to i32
    %c0_i32_0 = arith.constant 0 : i32
    %2 = arith.cmpi ne, %1, %c0_i32_0 : i32
    scf.if %2 {
      %cst_10 = arith.constant 0.000000e+00 : f32
      %12 = vector.broadcast %cst_10 : f32 to vector<32x64xf32>
      %c0_11 = arith.constant 0 : index
      %c0_12 = arith.constant 0 : index
      %13 = vector.load %arg6[%c0_11, %c0_12] : memref<32x64xf32, #tpu.memory_space<vmem>>, vector<32x64xf32>
      tpu.vector_store %arg6[%c0_11, %c0_12], %12 {strides = array<i32>} : memref<32x64xf32, #tpu.memory_space<vmem>>, vector<32x64xf32>,
    } else {
    }
    %c0 = arith.constant 0 : index
    %c0_1 = arith.constant 0 : index
    %3 = vector.load %arg6[%c0, %c0_1] : memref<32x64xf32, #tpu.memory_space<vmem>>, vector<32x64xf32>
    %c0_2 = arith.constant 0 : index
    %c0_3 = arith.constant 0 : index
    %4 = vector.load %arg3[%c0_2, %c0_3] : memref<32x32xbf16, #tpu.memory_space<vmem>>, vector<32x32xbf16>
    %c0_4 = arith.constant 0 : index
    %c0_5 = arith.constant 0 : index
    %5 = vector.load %arg4[%c0_4, %c0_5] : memref<32x64xbf16, #tpu.memory_space<vmem>>, vector<32x64xbf16>
    %cst = arith.constant dense<0.000000e+00> : vector<32x64xf32>
    %6 = tpu.matmul %4, %5, %cst {dimension_numbers = #tpu.dot_dimension_numbers<[1], [0], [0], [1], [0, 0, 1, 1], [], []>} : vector<32x32xbf16>, vector<32x64xbf16>, vector<32x64xf32> -> vector<32x64xf32>
    %7 = arith.addf %3, %6 : vector<32x64xf32>
    %c0_6 = arith.constant 0 : index
    %c0_7 = arith.constant 0 : index
    %8 = vector.load %arg6[%c0_6, %c0_7] : memref<32x64xf32, #tpu.memory_space<vmem>>, vector<32x64xf32>
    tpu.vector_store %arg6[%c0_6, %c0_7], %7 {strides = array<i32>} : memref<32x64xf32, #tpu.memory_space<vmem>>, vector<32x64xf32>,
    %c0_i32_8 = arith.constant 0 : i32
    %9 = arith.cmpi eq, %arg2, %c0_i32_8 : i32
    %10 = arith.extui %9 : i1 to i32
    %c0_i32_9 = arith.constant 0 : i32
    %11 = arith.cmpi ne, %10, %c0_i32_9 : i32
    scf.if %11 {
      %c0_10 = arith.constant 0 : index
      %c0_11 = arith.constant 0 : index
      %12 = vector.load %arg6[%c0_10, %c0_11] : memref<32x64xf32, #tpu.memory_space<vmem>>, vector<32x64xf32>
      %13 = arith.truncf %12 : vector<32x64xf32> to vector<32x64xbf16>
      %c0_12 = arith.constant 0 : index
      %c0_13 = arith.constant 0 : index
      %14 = vector.load %arg5[%c0_12, %c0_13] : memref<32x64xbf16, #tpu.memory_space<vmem>>, vector<32x64xbf16>
      tpu.vector_store %arg5[%c0_12, %c0_13], %13 {strides = array<i32>} : memref<32x64xbf16, #tpu.memory_space<vmem>>, vector<32x64xbf16>,
    } else {
    }
    return
  }
  func.func @transform_0(%arg0: i32, %arg1: i32, %arg2: i32) -> (i32, i32) {
    %c0_i32 = arith.constant 0 : i32
    return %arg0, %arg2 : i32, i32
  }
  func.func @transform_1(%arg0: i32, %arg1: i32, %arg2: i32) -> (i32, i32) {
    %c0_i32 = arith.constant 0 : i32
    return %arg2, %arg1 : i32, i32
  }
  func.func @transform_2(%arg0: i32, %arg1: i32, %arg2: i32) -> (i32, i32) {
    %c0_i32 = arith.constant 0 : i32
    return %arg0, %arg1 : i32, i32
  }
}

module attributes {stable_mosaic.version = 11 : i64} {
  func.func @_cross_attn_kernel(%arg0: i32, %arg1: i32, %arg2: i32, %arg3: memref<1x8x32xbf16, #tpu.memory_space<vmem>>, %arg4: memref<1x16x64xbf16, #tpu.memory_space<vmem>>, %arg5: memref<1x1x16xf32, #tpu.memory_space<vmem>>, %arg6: memref<1x8x32xbf16, #tpu.memory_space<vmem>>, %arg7: memref<1x4x16x8xf32, #tpu.memory_space<vmem>>) attributes {dimension_semantics = [#tpu.dimension_semantics<parallel>, #tpu.dimension_semantics<parallel>, #tpu.dimension_semantics<parallel>], iteration_bounds = array<i64: 2, 1, 1>, scalar_prefetch = 0 : i64, scratch_operands = 0 : i64, tpu.core_type = #tpu.core_type<tc>, window_params = [{transform_indices = @transform_0, window_bounds = array<i64: 1, 8, 32>}, {transform_indices = @transform_1, window_bounds = array<i64: 1, 16, 64>}, {transform_indices = @transform_2, window_bounds = array<i64: 1, 1, 16>}, {transform_indices = @transform_3, window_bounds = array<i64: 1, 8, 32>}, {transform_indices = @transform_4, window_bounds = array<i64: 1, 4, 16, 8>}]} {
    %c0 = arith.constant 0 : index
    %c0_0 = arith.constant 0 : index
    %c0_1 = arith.constant 0 : index
    %0 = vector.load %arg3[%c0, %c0_0, %c0_1] : memref<1x8x32xbf16, #tpu.memory_space<vmem>>, vector<1x8x32xbf16>
    %1 = vector.shape_cast %0 : vector<1x8x32xbf16> to vector<8x32xbf16>
    %c0_2 = arith.constant 0 : index
    %c0_3 = arith.constant 0 : index
    %c0_4 = arith.constant 0 : index
    %2 = vector.load %arg4[%c0_2, %c0_3, %c0_4] : memref<1x16x64xbf16, #tpu.memory_space<vmem>>, vector<1x16x64xbf16>
    %3 = vector.shape_cast %2 : vector<1x16x64xbf16> to vector<16x64xbf16>
    %c0_5 = arith.constant 0 : index
    %c0_6 = arith.constant 0 : index
    %c0_7 = arith.constant 0 : index
    %4 = vector.load %arg5[%c0_5, %c0_6, %c0_7] : memref<1x1x16xf32, #tpu.memory_space<vmem>>, vector<1x1x16xf32>
    %5 = vector.shape_cast %4 : vector<1x1x16xf32> to vector<1x16xf32>
    %6 = vector.extract_strided_slice %1 {offsets = [0, 0], sizes = [8, 8], strides = [1, 1]} : vector<8x32xbf16> to vector<8x8xbf16>
    %7 = vector.extract_strided_slice %3 {offsets = [0, 0], sizes = [16, 8], strides = [1, 1]} : vector<16x64xbf16> to vector<16x8xbf16>
    %8 = vector.extract_strided_slice %3 {offsets = [0, 8], sizes = [16, 8], strides = [1, 1]} : vector<16x64xbf16> to vector<16x8xbf16>
    %cst = arith.constant dense<0.000000e+00> : vector<8x16xf32>
    %9 = tpu.matmul %6, %7, %cst {dimension_numbers = #tpu.dot_dimension_numbers<[1], [1], [0], [0], [0, 0, 1, 0], [], []>} : vector<8x8xbf16>, vector<16x8xbf16>, vector<8x16xf32> -> vector<8x16xf32>
    %cst_8 = arith.constant 0.353553385 : f32
    %10 = vector.broadcast %cst_8 : f32 to vector<8x16xf32>
    %11 = arith.mulf %9, %10 : vector<8x16xf32>
    %12 = tpu.transpose %11, [1, 0] : vector<8x16xf32> -> vector<16x8xf32>
    %c0_9 = arith.constant 0 : index
    %c0_10 = arith.constant 0 : index
    %c0_11 = arith.constant 0 : index
    %c0_12 = arith.constant 0 : index
    %13 = vector.load %arg7[%c0_9, %c0_10, %c0_11, %c0_12] : memref<1x4x16x8xf32, #tpu.memory_space<vmem>>, vector<1x1x16x8xf32>
    %14 = vector.shape_cast %13 : vector<1x1x16x8xf32> to vector<16x8xf32>
    %15 = vector.shape_cast %12 : vector<16x8xf32> to vector<1x1x16x8xf32>
    tpu.vector_store %arg7[%c0_9, %c0_10, %c0_11, %c0_12], %15 {strides = array<i32>} : memref<1x4x16x8xf32, #tpu.memory_space<vmem>>, vector<1x1x16x8xf32>,
    %16 = vector.broadcast %5 : vector<1x16xf32> to vector<8x16xf32>
    %17 = arith.addf %11, %16 : vector<8x16xf32>
    %cst_13 = arith.constant dense<0xFF800000> : vector<8xf32>
    %18 = vector.multi_reduction <maximumf>, %17, %cst_13 [1] : vector<8x16xf32> to vector<8xf32>
    %19 = vector.shape_cast %18 : vector<8xf32> to vector<8x1xf32>
    %20 = vector.broadcast %19 : vector<8x1xf32> to vector<8x16xf32>
    %21 = arith.subf %17, %20 : vector<8x16xf32>
    %22 = math.exp %21 : vector<8x16xf32>
    %cst_14 = arith.constant dense<0.000000e+00> : vector<8xf32>
    %23 = vector.multi_reduction <add>, %22, %cst_14 [1] : vector<8x16xf32> to vector<8xf32>
    %24 = vector.shape_cast %23 : vector<8xf32> to vector<8x1xf32>
    %25 = tpu.reciprocal %24 {approx = true} : vector<8x1xf32> -> vector<8x1xf32>
    %26 = vector.broadcast %25 : vector<8x1xf32> to vector<8x16xf32>
    %27 = arith.mulf %22, %26 : vector<8x16xf32>
    %28 = arith.truncf %27 : vector<8x16xf32> to vector<8x16xbf16>
    %cst_15 = arith.constant dense<0.000000e+00> : vector<8x8xf32>
    %29 = tpu.matmul %28, %8, %cst_15 {dimension_numbers = #tpu.dot_dimension_numbers<[1], [0], [0], [1], [0, 0, 1, 1], [], []>} : vector<8x16xbf16>, vector<16x8xbf16>, vector<8x8xf32> -> vector<8x8xf32>
    %30 = vector.extract_strided_slice %1 {offsets = [0, 8], sizes = [8, 8], strides = [1, 1]} : vector<8x32xbf16> to vector<8x8xbf16>
    %31 = vector.extract_strided_slice %3 {offsets = [0, 16], sizes = [16, 8], strides = [1, 1]} : vector<16x64xbf16> to vector<16x8xbf16>
    %32 = vector.extract_strided_slice %3 {offsets = [0, 24], sizes = [16, 8], strides = [1, 1]} : vector<16x64xbf16> to vector<16x8xbf16>
    %cst_16 = arith.constant dense<0.000000e+00> : vector<8x16xf32>
    %33 = tpu.matmul %30, %31, %cst_16 {dimension_numbers = #tpu.dot_dimension_numbers<[1], [1], [0], [0], [0, 0, 1, 0], [], []>} : vector<8x8xbf16>, vector<16x8xbf16>, vector<8x16xf32> -> vector<8x16xf32>
    %cst_17 = arith.constant 0.353553385 : f32
    %34 = vector.broadcast %cst_17 : f32 to vector<8x16xf32>
    %35 = arith.mulf %33, %34 : vector<8x16xf32>
    %36 = tpu.transpose %35, [1, 0] : vector<8x16xf32> -> vector<16x8xf32>
    %c0_18 = arith.constant 0 : index
    %c1 = arith.constant 1 : index
    %c0_19 = arith.constant 0 : index
    %c0_20 = arith.constant 0 : index
    %37 = vector.load %arg7[%c0_18, %c1, %c0_19, %c0_20] : memref<1x4x16x8xf32, #tpu.memory_space<vmem>>, vector<1x1x16x8xf32>
    %38 = vector.shape_cast %37 : vector<1x1x16x8xf32> to vector<16x8xf32>
    %39 = vector.shape_cast %36 : vector<16x8xf32> to vector<1x1x16x8xf32>
    tpu.vector_store %arg7[%c0_18, %c1, %c0_19, %c0_20], %39 {strides = array<i32>} : memref<1x4x16x8xf32, #tpu.memory_space<vmem>>, vector<1x1x16x8xf32>,
    %40 = vector.broadcast %5 : vector<1x16xf32> to vector<8x16xf32>
    %41 = arith.addf %35, %40 : vector<8x16xf32>
    %cst_21 = arith.constant dense<0xFF800000> : vector<8xf32>
    %42 = vector.multi_reduction <maximumf>, %41, %cst_21 [1] : vector<8x16xf32> to vector<8xf32>
    %43 = vector.shape_cast %42 : vector<8xf32> to vector<8x1xf32>
    %44 = vector.broadcast %43 : vector<8x1xf32> to vector<8x16xf32>
    %45 = arith.subf %41, %44 : vector<8x16xf32>
    %46 = math.exp %45 : vector<8x16xf32>
    %cst_22 = arith.constant dense<0.000000e+00> : vector<8xf32>
    %47 = vector.multi_reduction <add>, %46, %cst_22 [1] : vector<8x16xf32> to vector<8xf32>
    %48 = vector.shape_cast %47 : vector<8xf32> to vector<8x1xf32>
    %49 = tpu.reciprocal %48 {approx = true} : vector<8x1xf32> -> vector<8x1xf32>
    %50 = vector.broadcast %49 : vector<8x1xf32> to vector<8x16xf32>
    %51 = arith.mulf %46, %50 : vector<8x16xf32>
    %52 = arith.truncf %51 : vector<8x16xf32> to vector<8x16xbf16>
    %cst_23 = arith.constant dense<0.000000e+00> : vector<8x8xf32>
    %53 = tpu.matmul %52, %32, %cst_23 {dimension_numbers = #tpu.dot_dimension_numbers<[1], [0], [0], [1], [0, 0, 1, 1], [], []>} : vector<8x16xbf16>, vector<16x8xbf16>, vector<8x8xf32> -> vector<8x8xf32>
    %54 = vector.extract_strided_slice %1 {offsets = [0, 16], sizes = [8, 8], strides = [1, 1]} : vector<8x32xbf16> to vector<8x8xbf16>
    %55 = vector.extract_strided_slice %3 {offsets = [0, 32], sizes = [16, 8], strides = [1, 1]} : vector<16x64xbf16> to vector<16x8xbf16>
    %56 = vector.extract_strided_slice %3 {offsets = [0, 40], sizes = [16, 8], strides = [1, 1]} : vector<16x64xbf16> to vector<16x8xbf16>
    %cst_24 = arith.constant dense<0.000000e+00> : vector<8x16xf32>
    %57 = tpu.matmul %54, %55, %cst_24 {dimension_numbers = #tpu.dot_dimension_numbers<[1], [1], [0], [0], [0, 0, 1, 0], [], []>} : vector<8x8xbf16>, vector<16x8xbf16>, vector<8x16xf32> -> vector<8x16xf32>
    %cst_25 = arith.constant 0.353553385 : f32
    %58 = vector.broadcast %cst_25 : f32 to vector<8x16xf32>
    %59 = arith.mulf %57, %58 : vector<8x16xf32>
    %60 = tpu.transpose %59, [1, 0] : vector<8x16xf32> -> vector<16x8xf32>
    %c0_26 = arith.constant 0 : index
    %c2 = arith.constant 2 : index
    %c0_27 = arith.constant 0 : index
    %c0_28 = arith.constant 0 : index
    %61 = vector.load %arg7[%c0_26, %c2, %c0_27, %c0_28] : memref<1x4x16x8xf32, #tpu.memory_space<vmem>>, vector<1x1x16x8xf32>
    %62 = vector.shape_cast %61 : vector<1x1x16x8xf32> to vector<16x8xf32>
    %63 = vector.shape_cast %60 : vector<16x8xf32> to vector<1x1x16x8xf32>
    tpu.vector_store %arg7[%c0_26, %c2, %c0_27, %c0_28], %63 {strides = array<i32>} : memref<1x4x16x8xf32, #tpu.memory_space<vmem>>, vector<1x1x16x8xf32>,
    %64 = vector.broadcast %5 : vector<1x16xf32> to vector<8x16xf32>
    %65 = arith.addf %59, %64 : vector<8x16xf32>
    %cst_29 = arith.constant dense<0xFF800000> : vector<8xf32>
    %66 = vector.multi_reduction <maximumf>, %65, %cst_29 [1] : vector<8x16xf32> to vector<8xf32>
    %67 = vector.shape_cast %66 : vector<8xf32> to vector<8x1xf32>
    %68 = vector.broadcast %67 : vector<8x1xf32> to vector<8x16xf32>
    %69 = arith.subf %65, %68 : vector<8x16xf32>
    %70 = math.exp %69 : vector<8x16xf32>
    %cst_30 = arith.constant dense<0.000000e+00> : vector<8xf32>
    %71 = vector.multi_reduction <add>, %70, %cst_30 [1] : vector<8x16xf32> to vector<8xf32>
    %72 = vector.shape_cast %71 : vector<8xf32> to vector<8x1xf32>
    %73 = tpu.reciprocal %72 {approx = true} : vector<8x1xf32> -> vector<8x1xf32>
    %74 = vector.broadcast %73 : vector<8x1xf32> to vector<8x16xf32>
    %75 = arith.mulf %70, %74 : vector<8x16xf32>
    %76 = arith.truncf %75 : vector<8x16xf32> to vector<8x16xbf16>
    %cst_31 = arith.constant dense<0.000000e+00> : vector<8x8xf32>
    %77 = tpu.matmul %76, %56, %cst_31 {dimension_numbers = #tpu.dot_dimension_numbers<[1], [0], [0], [1], [0, 0, 1, 1], [], []>} : vector<8x16xbf16>, vector<16x8xbf16>, vector<8x8xf32> -> vector<8x8xf32>
    %78 = vector.extract_strided_slice %1 {offsets = [0, 24], sizes = [8, 8], strides = [1, 1]} : vector<8x32xbf16> to vector<8x8xbf16>
    %79 = vector.extract_strided_slice %3 {offsets = [0, 48], sizes = [16, 8], strides = [1, 1]} : vector<16x64xbf16> to vector<16x8xbf16>
    %80 = vector.extract_strided_slice %3 {offsets = [0, 56], sizes = [16, 8], strides = [1, 1]} : vector<16x64xbf16> to vector<16x8xbf16>
    %cst_32 = arith.constant dense<0.000000e+00> : vector<8x16xf32>
    %81 = tpu.matmul %78, %79, %cst_32 {dimension_numbers = #tpu.dot_dimension_numbers<[1], [1], [0], [0], [0, 0, 1, 0], [], []>} : vector<8x8xbf16>, vector<16x8xbf16>, vector<8x16xf32> -> vector<8x16xf32>
    %cst_33 = arith.constant 0.353553385 : f32
    %82 = vector.broadcast %cst_33 : f32 to vector<8x16xf32>
    %83 = arith.mulf %81, %82 : vector<8x16xf32>
    %84 = tpu.transpose %83, [1, 0] : vector<8x16xf32> -> vector<16x8xf32>
    %c0_34 = arith.constant 0 : index
    %c3 = arith.constant 3 : index
    %c0_35 = arith.constant 0 : index
    %c0_36 = arith.constant 0 : index
    %85 = vector.load %arg7[%c0_34, %c3, %c0_35, %c0_36] : memref<1x4x16x8xf32, #tpu.memory_space<vmem>>, vector<1x1x16x8xf32>
    %86 = vector.shape_cast %85 : vector<1x1x16x8xf32> to vector<16x8xf32>
    %87 = vector.shape_cast %84 : vector<16x8xf32> to vector<1x1x16x8xf32>
    tpu.vector_store %arg7[%c0_34, %c3, %c0_35, %c0_36], %87 {strides = array<i32>} : memref<1x4x16x8xf32, #tpu.memory_space<vmem>>, vector<1x1x16x8xf32>,
    %88 = vector.broadcast %5 : vector<1x16xf32> to vector<8x16xf32>
    %89 = arith.addf %83, %88 : vector<8x16xf32>
    %cst_37 = arith.constant dense<0xFF800000> : vector<8xf32>
    %90 = vector.multi_reduction <maximumf>, %89, %cst_37 [1] : vector<8x16xf32> to vector<8xf32>
    %91 = vector.shape_cast %90 : vector<8xf32> to vector<8x1xf32>
    %92 = vector.broadcast %91 : vector<8x1xf32> to vector<8x16xf32>
    %93 = arith.subf %89, %92 : vector<8x16xf32>
    %94 = math.exp %93 : vector<8x16xf32>
    %cst_38 = arith.constant dense<0.000000e+00> : vector<8xf32>
    %95 = vector.multi_reduction <add>, %94, %cst_38 [1] : vector<8x16xf32> to vector<8xf32>
    %96 = vector.shape_cast %95 : vector<8xf32> to vector<8x1xf32>
    %97 = tpu.reciprocal %96 {approx = true} : vector<8x1xf32> -> vector<8x1xf32>
    %98 = vector.broadcast %97 : vector<8x1xf32> to vector<8x16xf32>
    %99 = arith.mulf %94, %98 : vector<8x16xf32>
    %100 = arith.truncf %99 : vector<8x16xf32> to vector<8x16xbf16>
    %cst_39 = arith.constant dense<0.000000e+00> : vector<8x8xf32>
    %101 = tpu.matmul %100, %80, %cst_39 {dimension_numbers = #tpu.dot_dimension_numbers<[1], [0], [0], [1], [0, 0, 1, 1], [], []>} : vector<8x16xbf16>, vector<16x8xbf16>, vector<8x8xf32> -> vector<8x8xf32>
    %102 = tpu.concatenate %29, %53, %77, %101 in 1 : vector<8x8xf32>, vector<8x8xf32>, vector<8x8xf32>, vector<8x8xf32> -> vector<8x32xf32>
    %103 = arith.truncf %102 : vector<8x32xf32> to vector<8x32xbf16>
    %c0_40 = arith.constant 0 : index
    %c0_41 = arith.constant 0 : index
    %c0_42 = arith.constant 0 : index
    %104 = vector.load %arg6[%c0_40, %c0_41, %c0_42] : memref<1x8x32xbf16, #tpu.memory_space<vmem>>, vector<1x8x32xbf16>
    %105 = vector.shape_cast %104 : vector<1x8x32xbf16> to vector<8x32xbf16>
    %106 = vector.shape_cast %103 : vector<8x32xbf16> to vector<1x8x32xbf16>
    tpu.vector_store %arg6[%c0_40, %c0_41, %c0_42], %106 {strides = array<i32>} : memref<1x8x32xbf16, #tpu.memory_space<vmem>>, vector<1x8x32xbf16>,
    return
  }
  func.func @transform_0(%arg0: i32, %arg1: i32, %arg2: i32) -> (i32, i32, i32) {
    %c0_i32 = arith.constant 0 : i32
    return %arg0, %arg2, %arg1 : i32, i32, i32
  }
  func.func @transform_1(%arg0: i32, %arg1: i32, %arg2: i32) -> (i32, i32, i32) {
    %c0_i32 = arith.constant 0 : i32
    %c0_i32_0 = arith.constant 0 : i32
    return %arg0, %c0_i32, %arg1 : i32, i32, i32
  }
  func.func @transform_2(%arg0: i32, %arg1: i32, %arg2: i32) -> (i32, i32, i32) {
    %c0_i32 = arith.constant 0 : i32
    %c0_i32_0 = arith.constant 0 : i32
    %c0_i32_1 = arith.constant 0 : i32
    return %arg0, %c0_i32, %c0_i32_0 : i32, i32, i32
  }
  func.func @transform_3(%arg0: i32, %arg1: i32, %arg2: i32) -> (i32, i32, i32) {
    %c0_i32 = arith.constant 0 : i32
    return %arg0, %arg2, %arg1 : i32, i32, i32
  }
  func.func @transform_4(%arg0: i32, %arg1: i32, %arg2: i32) -> (i32, i32, i32, i32) {
    %c0_i32 = arith.constant 0 : i32
    %c0_i32_0 = arith.constant 0 : i32
    return %arg0, %arg1, %c0_i32, %arg2 : i32, i32, i32, i32
  }
}

module attributes {stable_mosaic.version = 11 : i64} {
  func.func @_matmul_res_ln_kernel(%arg0: i32, %arg1: i32, %arg2: memref<16x32xbf16, #tpu.memory_space<vmem>>, %arg3: memref<32x32xbf16, #tpu.memory_space<vmem>>, %arg4: memref<1x32xf32, #tpu.memory_space<vmem>>, %arg5: memref<16x32xf32, #tpu.memory_space<vmem>>, %arg6: memref<1x32xf32, #tpu.memory_space<vmem>>, %arg7: memref<1x32xf32, #tpu.memory_space<vmem>>, %arg8: memref<16x32xf32, #tpu.memory_space<vmem>>, %arg9: memref<16x32xbf16, #tpu.memory_space<vmem>>, %arg10: memref<16x32xf32, #tpu.memory_space<vmem>>) attributes {dimension_semantics = [#tpu.dimension_semantics<parallel>, #tpu.dimension_semantics<arbitrary>], iteration_bounds = array<i64: 1, 1>, scalar_prefetch = 0 : i64, scratch_operands = 1 : i64, tpu.core_type = #tpu.core_type<tc>, window_params = [{transform_indices = @transform_0, window_bounds = array<i64: 16, 32>}, {transform_indices = @transform_1, window_bounds = array<i64: 32, 32>}, {pipeline_mode = #tpu.pipeline_mode<synchronous>, transform_indices = @transform_2, window_bounds = array<i64: 1, 32>}, {transform_indices = @transform_3, window_bounds = array<i64: 16, 32>}, {pipeline_mode = #tpu.pipeline_mode<synchronous>, transform_indices = @transform_4, window_bounds = array<i64: 1, 32>}, {pipeline_mode = #tpu.pipeline_mode<synchronous>, transform_indices = @transform_5, window_bounds = array<i64: 1, 32>}, {transform_indices = @transform_6, window_bounds = array<i64: 16, 32>}, {transform_indices = @transform_7, window_bounds = array<i64: 16, 32>}]} {
    %c0_i32 = arith.constant 0 : i32
    %0 = arith.cmpi eq, %arg1, %c0_i32 : i32
    %1 = arith.extui %0 : i1 to i32
    %c0_i32_0 = arith.constant 0 : i32
    %2 = arith.cmpi ne, %1, %c0_i32_0 : i32
    scf.if %2 {
      %cst_10 = arith.constant 0.000000e+00 : f32
      %12 = vector.broadcast %cst_10 : f32 to vector<16x32xf32>
      %c0_11 = arith.constant 0 : index
      %c0_12 = arith.constant 0 : index
      %13 = vector.load %arg10[%c0_11, %c0_12] : memref<16x32xf32, #tpu.memory_space<vmem>>, vector<16x32xf32>
      tpu.vector_store %arg10[%c0_11, %c0_12], %12 {strides = array<i32>} : memref<16x32xf32, #tpu.memory_space<vmem>>, vector<16x32xf32>,
    } else {
    }
    %c0 = arith.constant 0 : index
    %c0_1 = arith.constant 0 : index
    %3 = vector.load %arg10[%c0, %c0_1] : memref<16x32xf32, #tpu.memory_space<vmem>>, vector<16x32xf32>
    %c0_2 = arith.constant 0 : index
    %c0_3 = arith.constant 0 : index
    %4 = vector.load %arg2[%c0_2, %c0_3] : memref<16x32xbf16, #tpu.memory_space<vmem>>, vector<16x32xbf16>
    %c0_4 = arith.constant 0 : index
    %c0_5 = arith.constant 0 : index
    %5 = vector.load %arg3[%c0_4, %c0_5] : memref<32x32xbf16, #tpu.memory_space<vmem>>, vector<32x32xbf16>
    %cst = arith.constant dense<0.000000e+00> : vector<16x32xf32>
    %6 = tpu.matmul %4, %5, %cst {dimension_numbers = #tpu.dot_dimension_numbers<[1], [0], [0], [1], [0, 0, 1, 1], [], []>} : vector<16x32xbf16>, vector<32x32xbf16>, vector<16x32xf32> -> vector<16x32xf32>
    %7 = arith.addf %3, %6 : vector<16x32xf32>
    %c0_6 = arith.constant 0 : index
    %c0_7 = arith.constant 0 : index
    %8 = vector.load %arg10[%c0_6, %c0_7] : memref<16x32xf32, #tpu.memory_space<vmem>>, vector<16x32xf32>
    tpu.vector_store %arg10[%c0_6, %c0_7], %7 {strides = array<i32>} : memref<16x32xf32, #tpu.memory_space<vmem>>, vector<16x32xf32>,
    %c0_i32_8 = arith.constant 0 : i32
    %9 = arith.cmpi eq, %arg1, %c0_i32_8 : i32
    %10 = arith.extui %9 : i1 to i32
    %c0_i32_9 = arith.constant 0 : i32
    %11 = arith.cmpi ne, %10, %c0_i32_9 : i32
    scf.if %11 {
      %c0_10 = arith.constant 0 : index
      %c0_11 = arith.constant 0 : index
      %12 = vector.load %arg10[%c0_10, %c0_11] : memref<16x32xf32, #tpu.memory_space<vmem>>, vector<16x32xf32>
      %c0_12 = arith.constant 0 : index
      %c0_13 = arith.constant 0 : index
      %13 = vector.load %arg4[%c0_12, %c0_13] : memref<1x32xf32, #tpu.memory_space<vmem>>, vector<1x32xf32>
      %14 = vector.broadcast %13 : vector<1x32xf32> to vector<16x32xf32>
      %15 = arith.addf %12, %14 : vector<16x32xf32>
      %c0_14 = arith.constant 0 : index
      %c0_15 = arith.constant 0 : index
      %16 = vector.load %arg5[%c0_14, %c0_15] : memref<16x32xf32, #tpu.memory_space<vmem>>, vector<16x32xf32>
      %17 = arith.addf %15, %16 : vector<16x32xf32>
      %cst_16 = arith.constant dense<0.000000e+00> : vector<16xf32>
      %18 = vector.multi_reduction <add>, %17, %cst_16 [1] : vector<16x32xf32> to vector<16xf32>
      %19 = vector.shape_cast %18 : vector<16xf32> to vector<16x1xf32>
      %cst_17 = arith.constant 3.200000e+01 : f32
      %20 = vector.broadcast %cst_17 : f32 to vector<16x1xf32>
      %21 = arith.divf %19, %20 : vector<16x1xf32>
      %22 = vector.broadcast %21 : vector<16x1xf32> to vector<16x32xf32>
      %23 = arith.subf %17, %22 : vector<16x32xf32>
      %24 = arith.mulf %23, %23 : vector<16x32xf32>
      %cst_18 = arith.constant dense<0.000000e+00> : vector<16xf32>
      %25 = vector.multi_reduction <add>, %24, %cst_18 [1] : vector<16x32xf32> to vector<16xf32>
      %26 = vector.shape_cast %25 : vector<16xf32> to vector<16x1xf32>
      %cst_19 = arith.constant 3.200000e+01 : f32
      %27 = vector.broadcast %cst_19 : f32 to vector<16x1xf32>
      %28 = arith.divf %26, %27 : vector<16x1xf32>
      %cst_20 = arith.constant 9.99999996E-13 : f32
      %29 = vector.broadcast %cst_20 : f32 to vector<16x1xf32>
      %30 = arith.addf %28, %29 : vector<16x1xf32>
      %31 = math.rsqrt %30 : vector<16x1xf32>
      %32 = vector.broadcast %21 : vector<16x1xf32> to vector<16x32xf32>
      %33 = arith.subf %17, %32 : vector<16x32xf32>
      %34 = vector.broadcast %31 : vector<16x1xf32> to vector<16x32xf32>
      %35 = arith.mulf %33, %34 : vector<16x32xf32>
      %c0_21 = arith.constant 0 : index
      %c0_22 = arith.constant 0 : index
      %36 = vector.load %arg6[%c0_21, %c0_22] : memref<1x32xf32, #tpu.memory_space<vmem>>, vector<1x32xf32>
      %37 = vector.broadcast %36 : vector<1x32xf32> to vector<16x32xf32>
      %38 = arith.mulf %35, %37 : vector<16x32xf32>
      %c0_23 = arith.constant 0 : index
      %c0_24 = arith.constant 0 : index
      %39 = vector.load %arg7[%c0_23, %c0_24] : memref<1x32xf32, #tpu.memory_space<vmem>>, vector<1x32xf32>
      %40 = vector.broadcast %39 : vector<1x32xf32> to vector<16x32xf32>
      %41 = arith.addf %38, %40 : vector<16x32xf32>
      %c0_25 = arith.constant 0 : index
      %c0_26 = arith.constant 0 : index
      %42 = vector.load %arg8[%c0_25, %c0_26] : memref<16x32xf32, #tpu.memory_space<vmem>>, vector<16x32xf32>
      tpu.vector_store %arg8[%c0_25, %c0_26], %41 {strides = array<i32>} : memref<16x32xf32, #tpu.memory_space<vmem>>, vector<16x32xf32>,
      %43 = arith.truncf %41 : vector<16x32xf32> to vector<16x32xbf16>
      %c0_27 = arith.constant 0 : index
      %c0_28 = arith.constant 0 : index
      %44 = vector.load %arg9[%c0_27, %c0_28] : memref<16x32xbf16, #tpu.memory_space<vmem>>, vector<16x32xbf16>
      tpu.vector_store %arg9[%c0_27, %c0_28], %43 {strides = array<i32>} : memref<16x32xbf16, #tpu.memory_space<vmem>>, vector<16x32xbf16>,
    } else {
    }
    return
  }
  func.func @transform_0(%arg0: i32, %arg1: i32) -> (i32, i32) {
    %c0_i32 = arith.constant 0 : i32
    return %arg0, %arg1 : i32, i32
  }
  func.func @transform_1(%arg0: i32, %arg1: i32) -> (i32, i32) {
    %c0_i32 = arith.constant 0 : i32
    %c0_i32_0 = arith.constant 0 : i32
    return %arg1, %c0_i32 : i32, i32
  }
  func.func @transform_2(%arg0: i32, %arg1: i32) -> (i32, i32) {
    %c0_i32 = arith.constant 0 : i32
    %c0_i32_0 = arith.constant 0 : i32
    %c0_i32_1 = arith.constant 0 : i32
    return %c0_i32, %c0_i32_0 : i32, i32
  }
  func.func @transform_3(%arg0: i32, %arg1: i32) -> (i32, i32) {
    %c0_i32 = arith.constant 0 : i32
    %c0_i32_0 = arith.constant 0 : i32
    return %arg0, %c0_i32 : i32, i32
  }
  func.func @transform_4(%arg0: i32, %arg1: i32) -> (i32, i32) {
    %c0_i32 = arith.constant 0 : i32
    %c0_i32_0 = arith.constant 0 : i32
    %c0_i32_1 = arith.constant 0 : i32
    return %c0_i32, %c0_i32_0 : i32, i32
  }
  func.func @transform_5(%arg0: i32, %arg1: i32) -> (i32, i32) {
    %c0_i32 = arith.constant 0 : i32
    %c0_i32_0 = arith.constant 0 : i32
    %c0_i32_1 = arith.constant 0 : i32
    return %c0_i32, %c0_i32_0 : i32, i32
  }
  func.func @transform_6(%arg0: i32, %arg1: i32) -> (i32, i32) {
    %c0_i32 = arith.constant 0 : i32
    %c0_i32_0 = arith.constant 0 : i32
    return %arg0, %c0_i32 : i32, i32
  }
  func.func @transform_7(%arg0: i32, %arg1: i32) -> (i32, i32) {
    %c0_i32 = arith.constant 0 : i32
    %c0_i32_0 = arith.constant 0 : i32
    return %arg0, %c0_i32 : i32, i32
  }
}

module attributes {stable_mosaic.version = 11 : i64} {
  func.func @_matmul_bias_gelu_kernel(%arg0: i32, %arg1: i32, %arg2: i32, %arg3: memref<16x32xbf16, #tpu.memory_space<vmem>>, %arg4: memref<32x64xbf16, #tpu.memory_space<vmem>>, %arg5: memref<1x64xf32, #tpu.memory_space<vmem>>, %arg6: memref<16x64xbf16, #tpu.memory_space<vmem>>, %arg7: memref<16x64xf32, #tpu.memory_space<vmem>>) attributes {dimension_semantics = [#tpu.dimension_semantics<parallel>, #tpu.dimension_semantics<parallel>, #tpu.dimension_semantics<arbitrary>], iteration_bounds = array<i64: 1, 1, 1>, scalar_prefetch = 0 : i64, scratch_operands = 1 : i64, tpu.core_type = #tpu.core_type<tc>, window_params = [{transform_indices = @transform_0, window_bounds = array<i64: 16, 32>}, {transform_indices = @transform_1, window_bounds = array<i64: 32, 64>}, {transform_indices = @transform_2, window_bounds = array<i64: 1, 64>}, {transform_indices = @transform_3, window_bounds = array<i64: 16, 64>}]} {
    %c0_i32 = arith.constant 0 : i32
    %0 = arith.cmpi eq, %arg2, %c0_i32 : i32
    %1 = arith.extui %0 : i1 to i32
    %c0_i32_0 = arith.constant 0 : i32
    %2 = arith.cmpi ne, %1, %c0_i32_0 : i32
    scf.if %2 {
      %cst_10 = arith.constant 0.000000e+00 : f32
      %12 = vector.broadcast %cst_10 : f32 to vector<16x64xf32>
      %c0_11 = arith.constant 0 : index
      %c0_12 = arith.constant 0 : index
      %13 = vector.load %arg7[%c0_11, %c0_12] : memref<16x64xf32, #tpu.memory_space<vmem>>, vector<16x64xf32>
      tpu.vector_store %arg7[%c0_11, %c0_12], %12 {strides = array<i32>} : memref<16x64xf32, #tpu.memory_space<vmem>>, vector<16x64xf32>,
    } else {
    }
    %c0 = arith.constant 0 : index
    %c0_1 = arith.constant 0 : index
    %3 = vector.load %arg7[%c0, %c0_1] : memref<16x64xf32, #tpu.memory_space<vmem>>, vector<16x64xf32>
    %c0_2 = arith.constant 0 : index
    %c0_3 = arith.constant 0 : index
    %4 = vector.load %arg3[%c0_2, %c0_3] : memref<16x32xbf16, #tpu.memory_space<vmem>>, vector<16x32xbf16>
    %c0_4 = arith.constant 0 : index
    %c0_5 = arith.constant 0 : index
    %5 = vector.load %arg4[%c0_4, %c0_5] : memref<32x64xbf16, #tpu.memory_space<vmem>>, vector<32x64xbf16>
    %cst = arith.constant dense<0.000000e+00> : vector<16x64xf32>
    %6 = tpu.matmul %4, %5, %cst {dimension_numbers = #tpu.dot_dimension_numbers<[1], [0], [0], [1], [0, 0, 1, 1], [], []>} : vector<16x32xbf16>, vector<32x64xbf16>, vector<16x64xf32> -> vector<16x64xf32>
    %7 = arith.addf %3, %6 : vector<16x64xf32>
    %c0_6 = arith.constant 0 : index
    %c0_7 = arith.constant 0 : index
    %8 = vector.load %arg7[%c0_6, %c0_7] : memref<16x64xf32, #tpu.memory_space<vmem>>, vector<16x64xf32>
    tpu.vector_store %arg7[%c0_6, %c0_7], %7 {strides = array<i32>} : memref<16x64xf32, #tpu.memory_space<vmem>>, vector<16x64xf32>,
    %c0_i32_8 = arith.constant 0 : i32
    %9 = arith.cmpi eq, %arg2, %c0_i32_8 : i32
    %10 = arith.extui %9 : i1 to i32
    %c0_i32_9 = arith.constant 0 : i32
    %11 = arith.cmpi ne, %10, %c0_i32_9 : i32
    scf.if %11 {
      %c0_10 = arith.constant 0 : index
      %c0_11 = arith.constant 0 : index
      %12 = vector.load %arg7[%c0_10, %c0_11] : memref<16x64xf32, #tpu.memory_space<vmem>>, vector<16x64xf32>
      %c0_12 = arith.constant 0 : index
      %c0_13 = arith.constant 0 : index
      %13 = vector.load %arg5[%c0_12, %c0_13] : memref<1x64xf32, #tpu.memory_space<vmem>>, vector<1x64xf32>
      %14 = vector.broadcast %13 : vector<1x64xf32> to vector<16x64xf32>
      %15 = arith.addf %12, %14 : vector<16x64xf32>
      %cst_14 = arith.constant 0.707106769 : f32
      %16 = vector.broadcast %cst_14 : f32 to vector<16x64xf32>
      %17 = arith.mulf %15, %16 : vector<16x64xf32>
      %cst_15 = arith.constant 0.000000e+00 : f32
      %18 = vector.broadcast %cst_15 : f32 to vector<16x64xf32>
      %19 = arith.cmpf oge, %17, %18 : vector<16x64xf32>
      %cst_16 = arith.constant 1.000000e+00 : f32
      %cst_17 = arith.constant -1.000000e+00 : f32
      %20 = vector.broadcast %cst_16 : f32 to vector<16x64xf32>
      %21 = vector.broadcast %cst_17 : f32 to vector<16x64xf32>
      %22 = arith.select %19, %20, %21 : vector<16x64xi1>, vector<16x64xf32>
      %23 = arith.mulf %17, %22 : vector<16x64xf32>
      %cst_18 = arith.constant 0.327591091 : f32
      %24 = vector.broadcast %cst_18 : f32 to vector<16x64xf32>
      %25 = arith.mulf %24, %23 : vector<16x64xf32>
      %cst_19 = arith.constant 1.000000e+00 : f32
      %26 = vector.broadcast %cst_19 : f32 to vector<16x64xf32>
      %27 = arith.addf %26, %25 : vector<16x64xf32>
      %cst_20 = arith.constant 1.000000e+00 : f32
      %28 = vector.broadcast %cst_20 : f32 to vector<16x64xf32>
      %29 = arith.divf %28, %27 : vector<16x64xf32>
      %cst_21 = arith.constant 1.06140542 : f32
      %30 = vector.broadcast %cst_21 : f32 to vector<16x64xf32>
      %31 = arith.mulf %30, %29 : vector<16x64xf32>
      %cst_22 = arith.constant 1.45315206 : f32
      %32 = vector.broadcast %cst_22 : f32 to vector<16x64xf32>
      %33 = arith.subf %31, %32 : vector<16x64xf32>
      %34 = arith.mulf %33, %29 : vector<16x64xf32>
      %cst_23 = arith.constant 1.42141378 : f32
      %35 = vector.broadcast %cst_23 : f32 to vector<16x64xf32>
      %36 = arith.addf %34, %35 : vector<16x64xf32>
      %37 = arith.mulf %36, %29 : vector<16x64xf32>
      %cst_24 = arith.constant 0.284496725 : f32
      %38 = vector.broadcast %cst_24 : f32 to vector<16x64xf32>
      %39 = arith.subf %37, %38 : vector<16x64xf32>
      %40 = arith.mulf %39, %29 : vector<16x64xf32>
      %cst_25 = arith.constant 0.254829586 : f32
      %41 = vector.broadcast %cst_25 : f32 to vector<16x64xf32>
      %42 = arith.addf %40, %41 : vector<16x64xf32>
      %43 = arith.mulf %42, %29 : vector<16x64xf32>
      %cst_26 = arith.constant 0.000000e+00 : f32
      %44 = vector.broadcast %cst_26 : f32 to vector<16x64xf32>
      %45 = arith.subf %44, %23 : vector<16x64xf32>
      %46 = arith.mulf %45, %23 : vector<16x64xf32>
      %47 = math.exp %46 : vector<16x64xf32>
      %48 = arith.mulf %43, %47 : vector<16x64xf32>
      %cst_27 = arith.constant 1.000000e+00 : f32
      %49 = vector.broadcast %cst_27 : f32 to vector<16x64xf32>
      %50 = arith.subf %49, %48 : vector<16x64xf32>
      %51 = arith.mulf %22, %50 : vector<16x64xf32>
      %cst_28 = arith.constant 5.000000e-01 : f32
      %52 = vector.broadcast %cst_28 : f32 to vector<16x64xf32>
      %53 = arith.mulf %52, %15 : vector<16x64xf32>
      %cst_29 = arith.constant 1.000000e+00 : f32
      %54 = vector.broadcast %cst_29 : f32 to vector<16x64xf32>
      %55 = arith.addf %54, %51 : vector<16x64xf32>
      %56 = arith.mulf %53, %55 : vector<16x64xf32>
      %57 = arith.truncf %56 : vector<16x64xf32> to vector<16x64xbf16>
      %c0_30 = arith.constant 0 : index
      %c0_31 = arith.constant 0 : index
      %58 = vector.load %arg6[%c0_30, %c0_31] : memref<16x64xbf16, #tpu.memory_space<vmem>>, vector<16x64xbf16>
      tpu.vector_store %arg6[%c0_30, %c0_31], %57 {strides = array<i32>} : memref<16x64xbf16, #tpu.memory_space<vmem>>, vector<16x64xbf16>,
    } else {
    }
    return
  }
  func.func @transform_0(%arg0: i32, %arg1: i32, %arg2: i32) -> (i32, i32) {
    %c0_i32 = arith.constant 0 : i32
    return %arg0, %arg2 : i32, i32
  }
  func.func @transform_1(%arg0: i32, %arg1: i32, %arg2: i32) -> (i32, i32) {
    %c0_i32 = arith.constant 0 : i32
    return %arg2, %arg1 : i32, i32
  }
  func.func @transform_2(%arg0: i32, %arg1: i32, %arg2: i32) -> (i32, i32) {
    %c0_i32 = arith.constant 0 : i32
    %c0_i32_0 = arith.constant 0 : i32
    return %c0_i32, %arg1 : i32, i32
  }
  func.func @transform_3(%arg0: i32, %arg1: i32, %arg2: i32) -> (i32, i32) {
    %c0_i32 = arith.constant 0 : i32
    return %arg0, %arg1 : i32, i32
  }
}

module attributes {stable_mosaic.version = 11 : i64} {
  func.func @_matmul_res_ln_kernel(%arg0: i32, %arg1: i32, %arg2: memref<16x64xbf16, #tpu.memory_space<vmem>>, %arg3: memref<64x32xbf16, #tpu.memory_space<vmem>>, %arg4: memref<1x32xf32, #tpu.memory_space<vmem>>, %arg5: memref<16x32xf32, #tpu.memory_space<vmem>>, %arg6: memref<1x32xf32, #tpu.memory_space<vmem>>, %arg7: memref<1x32xf32, #tpu.memory_space<vmem>>, %arg8: memref<16x32xf32, #tpu.memory_space<vmem>>, %arg9: memref<16x32xbf16, #tpu.memory_space<vmem>>, %arg10: memref<16x32xf32, #tpu.memory_space<vmem>>) attributes {dimension_semantics = [#tpu.dimension_semantics<parallel>, #tpu.dimension_semantics<arbitrary>], iteration_bounds = array<i64: 1, 1>, scalar_prefetch = 0 : i64, scratch_operands = 1 : i64, tpu.core_type = #tpu.core_type<tc>, window_params = [{transform_indices = @transform_0, window_bounds = array<i64: 16, 64>}, {transform_indices = @transform_1, window_bounds = array<i64: 64, 32>}, {pipeline_mode = #tpu.pipeline_mode<synchronous>, transform_indices = @transform_2, window_bounds = array<i64: 1, 32>}, {transform_indices = @transform_3, window_bounds = array<i64: 16, 32>}, {pipeline_mode = #tpu.pipeline_mode<synchronous>, transform_indices = @transform_4, window_bounds = array<i64: 1, 32>}, {pipeline_mode = #tpu.pipeline_mode<synchronous>, transform_indices = @transform_5, window_bounds = array<i64: 1, 32>}, {transform_indices = @transform_6, window_bounds = array<i64: 16, 32>}, {transform_indices = @transform_7, window_bounds = array<i64: 16, 32>}]} {
    %c0_i32 = arith.constant 0 : i32
    %0 = arith.cmpi eq, %arg1, %c0_i32 : i32
    %1 = arith.extui %0 : i1 to i32
    %c0_i32_0 = arith.constant 0 : i32
    %2 = arith.cmpi ne, %1, %c0_i32_0 : i32
    scf.if %2 {
      %cst_10 = arith.constant 0.000000e+00 : f32
      %12 = vector.broadcast %cst_10 : f32 to vector<16x32xf32>
      %c0_11 = arith.constant 0 : index
      %c0_12 = arith.constant 0 : index
      %13 = vector.load %arg10[%c0_11, %c0_12] : memref<16x32xf32, #tpu.memory_space<vmem>>, vector<16x32xf32>
      tpu.vector_store %arg10[%c0_11, %c0_12], %12 {strides = array<i32>} : memref<16x32xf32, #tpu.memory_space<vmem>>, vector<16x32xf32>,
    } else {
    }
    %c0 = arith.constant 0 : index
    %c0_1 = arith.constant 0 : index
    %3 = vector.load %arg10[%c0, %c0_1] : memref<16x32xf32, #tpu.memory_space<vmem>>, vector<16x32xf32>
    %c0_2 = arith.constant 0 : index
    %c0_3 = arith.constant 0 : index
    %4 = vector.load %arg2[%c0_2, %c0_3] : memref<16x64xbf16, #tpu.memory_space<vmem>>, vector<16x64xbf16>
    %c0_4 = arith.constant 0 : index
    %c0_5 = arith.constant 0 : index
    %5 = vector.load %arg3[%c0_4, %c0_5] : memref<64x32xbf16, #tpu.memory_space<vmem>>, vector<64x32xbf16>
    %cst = arith.constant dense<0.000000e+00> : vector<16x32xf32>
    %6 = tpu.matmul %4, %5, %cst {dimension_numbers = #tpu.dot_dimension_numbers<[1], [0], [0], [1], [0, 0, 1, 1], [], []>} : vector<16x64xbf16>, vector<64x32xbf16>, vector<16x32xf32> -> vector<16x32xf32>
    %7 = arith.addf %3, %6 : vector<16x32xf32>
    %c0_6 = arith.constant 0 : index
    %c0_7 = arith.constant 0 : index
    %8 = vector.load %arg10[%c0_6, %c0_7] : memref<16x32xf32, #tpu.memory_space<vmem>>, vector<16x32xf32>
    tpu.vector_store %arg10[%c0_6, %c0_7], %7 {strides = array<i32>} : memref<16x32xf32, #tpu.memory_space<vmem>>, vector<16x32xf32>,
    %c0_i32_8 = arith.constant 0 : i32
    %9 = arith.cmpi eq, %arg1, %c0_i32_8 : i32
    %10 = arith.extui %9 : i1 to i32
    %c0_i32_9 = arith.constant 0 : i32
    %11 = arith.cmpi ne, %10, %c0_i32_9 : i32
    scf.if %11 {
      %c0_10 = arith.constant 0 : index
      %c0_11 = arith.constant 0 : index
      %12 = vector.load %arg10[%c0_10, %c0_11] : memref<16x32xf32, #tpu.memory_space<vmem>>, vector<16x32xf32>
      %c0_12 = arith.constant 0 : index
      %c0_13 = arith.constant 0 : index
      %13 = vector.load %arg4[%c0_12, %c0_13] : memref<1x32xf32, #tpu.memory_space<vmem>>, vector<1x32xf32>
      %14 = vector.broadcast %13 : vector<1x32xf32> to vector<16x32xf32>
      %15 = arith.addf %12, %14 : vector<16x32xf32>
      %c0_14 = arith.constant 0 : index
      %c0_15 = arith.constant 0 : index
      %16 = vector.load %arg5[%c0_14, %c0_15] : memref<16x32xf32, #tpu.memory_space<vmem>>, vector<16x32xf32>
      %17 = arith.addf %15, %16 : vector<16x32xf32>
      %cst_16 = arith.constant dense<0.000000e+00> : vector<16xf32>
      %18 = vector.multi_reduction <add>, %17, %cst_16 [1] : vector<16x32xf32> to vector<16xf32>
      %19 = vector.shape_cast %18 : vector<16xf32> to vector<16x1xf32>
      %cst_17 = arith.constant 3.200000e+01 : f32
      %20 = vector.broadcast %cst_17 : f32 to vector<16x1xf32>
      %21 = arith.divf %19, %20 : vector<16x1xf32>
      %22 = vector.broadcast %21 : vector<16x1xf32> to vector<16x32xf32>
      %23 = arith.subf %17, %22 : vector<16x32xf32>
      %24 = arith.mulf %23, %23 : vector<16x32xf32>
      %cst_18 = arith.constant dense<0.000000e+00> : vector<16xf32>
      %25 = vector.multi_reduction <add>, %24, %cst_18 [1] : vector<16x32xf32> to vector<16xf32>
      %26 = vector.shape_cast %25 : vector<16xf32> to vector<16x1xf32>
      %cst_19 = arith.constant 3.200000e+01 : f32
      %27 = vector.broadcast %cst_19 : f32 to vector<16x1xf32>
      %28 = arith.divf %26, %27 : vector<16x1xf32>
      %cst_20 = arith.constant 9.99999996E-13 : f32
      %29 = vector.broadcast %cst_20 : f32 to vector<16x1xf32>
      %30 = arith.addf %28, %29 : vector<16x1xf32>
      %31 = math.rsqrt %30 : vector<16x1xf32>
      %32 = vector.broadcast %21 : vector<16x1xf32> to vector<16x32xf32>
      %33 = arith.subf %17, %32 : vector<16x32xf32>
      %34 = vector.broadcast %31 : vector<16x1xf32> to vector<16x32xf32>
      %35 = arith.mulf %33, %34 : vector<16x32xf32>
      %c0_21 = arith.constant 0 : index
      %c0_22 = arith.constant 0 : index
      %36 = vector.load %arg6[%c0_21, %c0_22] : memref<1x32xf32, #tpu.memory_space<vmem>>, vector<1x32xf32>
      %37 = vector.broadcast %36 : vector<1x32xf32> to vector<16x32xf32>
      %38 = arith.mulf %35, %37 : vector<16x32xf32>
      %c0_23 = arith.constant 0 : index
      %c0_24 = arith.constant 0 : index
      %39 = vector.load %arg7[%c0_23, %c0_24] : memref<1x32xf32, #tpu.memory_space<vmem>>, vector<1x32xf32>
      %40 = vector.broadcast %39 : vector<1x32xf32> to vector<16x32xf32>
      %41 = arith.addf %38, %40 : vector<16x32xf32>
      %c0_25 = arith.constant 0 : index
      %c0_26 = arith.constant 0 : index
      %42 = vector.load %arg8[%c0_25, %c0_26] : memref<16x32xf32, #tpu.memory_space<vmem>>, vector<16x32xf32>
      tpu.vector_store %arg8[%c0_25, %c0_26], %41 {strides = array<i32>} : memref<16x32xf32, #tpu.memory_space<vmem>>, vector<16x32xf32>,
      %43 = arith.truncf %41 : vector<16x32xf32> to vector<16x32xbf16>
      %c0_27 = arith.constant 0 : index
      %c0_28 = arith.constant 0 : index
      %44 = vector.load %arg9[%c0_27, %c0_28] : memref<16x32xbf16, #tpu.memory_space<vmem>>, vector<16x32xbf16>
      tpu.vector_store %arg9[%c0_27, %c0_28], %43 {strides = array<i32>} : memref<16x32xbf16, #tpu.memory_space<vmem>>, vector<16x32xbf16>,
    } else {
    }
    return
  }
  func.func @transform_0(%arg0: i32, %arg1: i32) -> (i32, i32) {
    %c0_i32 = arith.constant 0 : i32
    return %arg0, %arg1 : i32, i32
  }
  func.func @transform_1(%arg0: i32, %arg1: i32) -> (i32, i32) {
    %c0_i32 = arith.constant 0 : i32
    %c0_i32_0 = arith.constant 0 : i32
    return %arg1, %c0_i32 : i32, i32
  }
  func.func @transform_2(%arg0: i32, %arg1: i32) -> (i32, i32) {
    %c0_i32 = arith.constant 0 : i32
    %c0_i32_0 = arith.constant 0 : i32
    %c0_i32_1 = arith.constant 0 : i32
    return %c0_i32, %c0_i32_0 : i32, i32
  }
  func.func @transform_3(%arg0: i32, %arg1: i32) -> (i32, i32) {
    %c0_i32 = arith.constant 0 : i32
    %c0_i32_0 = arith.constant 0 : i32
    return %arg0, %c0_i32 : i32, i32
  }
  func.func @transform_4(%arg0: i32, %arg1: i32) -> (i32, i32) {
    %c0_i32 = arith.constant 0 : i32
    %c0_i32_0 = arith.constant 0 : i32
    %c0_i32_1 = arith.constant 0 : i32
    return %c0_i32, %c0_i32_0 : i32, i32
  }
  func.func @transform_5(%arg0: i32, %arg1: i32) -> (i32, i32) {
    %c0_i32 = arith.constant 0 : i32
    %c0_i32_0 = arith.constant 0 : i32
    %c0_i32_1 = arith.constant 0 : i32
    return %c0_i32, %c0_i32_0 : i32, i32
  }
  func.func @transform_6(%arg0: i32, %arg1: i32) -> (i32, i32) {
    %c0_i32 = arith.constant 0 : i32
    %c0_i32_0 = arith.constant 0 : i32
    return %arg0, %c0_i32 : i32, i32
  }
  func.func @transform_7(%arg0: i32, %arg1: i32) -> (i32, i32) {
    %c0_i32 = arith.constant 0 : i32
    %c0_i32_0 = arith.constant 0 : i32
    return %arg0, %c0_i32 : i32, i32
  }
}

module attributes {stable_mosaic.version = 11 : i64} {
  func.func @_cross_attn_kernel(%arg0: i32, %arg1: i32, %arg2: i32, %arg3: memref<1x16x32xbf16, #tpu.memory_space<vmem>>, %arg4: memref<1x8x64xbf16, #tpu.memory_space<vmem>>, %arg5: memref<1x1x8xf32, #tpu.memory_space<vmem>>, %arg6: memref<1x16x32xbf16, #tpu.memory_space<vmem>>, %arg7: memref<1x4x16x8xf32, #tpu.memory_space<vmem>>) attributes {dimension_semantics = [#tpu.dimension_semantics<parallel>, #tpu.dimension_semantics<parallel>, #tpu.dimension_semantics<parallel>], iteration_bounds = array<i64: 2, 1, 1>, scalar_prefetch = 0 : i64, scratch_operands = 0 : i64, tpu.core_type = #tpu.core_type<tc>, window_params = [{transform_indices = @transform_0, window_bounds = array<i64: 1, 16, 32>}, {transform_indices = @transform_1, window_bounds = array<i64: 1, 8, 64>}, {transform_indices = @transform_2, window_bounds = array<i64: 1, 1, 8>}, {transform_indices = @transform_3, window_bounds = array<i64: 1, 16, 32>}, {transform_indices = @transform_4, window_bounds = array<i64: 1, 4, 16, 8>}]} {
    %c0 = arith.constant 0 : index
    %c0_0 = arith.constant 0 : index
    %c0_1 = arith.constant 0 : index
    %0 = vector.load %arg3[%c0, %c0_0, %c0_1] : memref<1x16x32xbf16, #tpu.memory_space<vmem>>, vector<1x16x32xbf16>
    %1 = vector.shape_cast %0 : vector<1x16x32xbf16> to vector<16x32xbf16>
    %c0_2 = arith.constant 0 : index
    %c0_3 = arith.constant 0 : index
    %c0_4 = arith.constant 0 : index
    %2 = vector.load %arg4[%c0_2, %c0_3, %c0_4] : memref<1x8x64xbf16, #tpu.memory_space<vmem>>, vector<1x8x64xbf16>
    %3 = vector.shape_cast %2 : vector<1x8x64xbf16> to vector<8x64xbf16>
    %c0_5 = arith.constant 0 : index
    %c0_6 = arith.constant 0 : index
    %c0_7 = arith.constant 0 : index
    %4 = vector.load %arg5[%c0_5, %c0_6, %c0_7] : memref<1x1x8xf32, #tpu.memory_space<vmem>>, vector<1x1x8xf32>
    %5 = vector.shape_cast %4 : vector<1x1x8xf32> to vector<1x8xf32>
    %6 = vector.extract_strided_slice %1 {offsets = [0, 0], sizes = [16, 8], strides = [1, 1]} : vector<16x32xbf16> to vector<16x8xbf16>
    %7 = vector.extract_strided_slice %3 {offsets = [0, 0], sizes = [8, 8], strides = [1, 1]} : vector<8x64xbf16> to vector<8x8xbf16>
    %8 = vector.extract_strided_slice %3 {offsets = [0, 8], sizes = [8, 8], strides = [1, 1]} : vector<8x64xbf16> to vector<8x8xbf16>
    %cst = arith.constant dense<0.000000e+00> : vector<16x8xf32>
    %9 = tpu.matmul %6, %7, %cst {dimension_numbers = #tpu.dot_dimension_numbers<[1], [1], [0], [0], [0, 0, 1, 0], [], []>} : vector<16x8xbf16>, vector<8x8xbf16>, vector<16x8xf32> -> vector<16x8xf32>
    %cst_8 = arith.constant 0.353553385 : f32
    %10 = vector.broadcast %cst_8 : f32 to vector<16x8xf32>
    %11 = arith.mulf %9, %10 : vector<16x8xf32>
    %c0_9 = arith.constant 0 : index
    %c0_10 = arith.constant 0 : index
    %c0_11 = arith.constant 0 : index
    %c0_12 = arith.constant 0 : index
    %12 = vector.load %arg7[%c0_9, %c0_10, %c0_11, %c0_12] : memref<1x4x16x8xf32, #tpu.memory_space<vmem>>, vector<1x1x16x8xf32>
    %13 = vector.shape_cast %12 : vector<1x1x16x8xf32> to vector<16x8xf32>
    %14 = vector.shape_cast %11 : vector<16x8xf32> to vector<1x1x16x8xf32>
    tpu.vector_store %arg7[%c0_9, %c0_10, %c0_11, %c0_12], %14 {strides = array<i32>} : memref<1x4x16x8xf32, #tpu.memory_space<vmem>>, vector<1x1x16x8xf32>,
    %15 = vector.broadcast %5 : vector<1x8xf32> to vector<16x8xf32>
    %16 = arith.addf %11, %15 : vector<16x8xf32>
    %cst_13 = arith.constant dense<0xFF800000> : vector<16xf32>
    %17 = vector.multi_reduction <maximumf>, %16, %cst_13 [1] : vector<16x8xf32> to vector<16xf32>
    %18 = vector.shape_cast %17 : vector<16xf32> to vector<16x1xf32>
    %19 = vector.broadcast %18 : vector<16x1xf32> to vector<16x8xf32>
    %20 = arith.subf %16, %19 : vector<16x8xf32>
    %21 = math.exp %20 : vector<16x8xf32>
    %cst_14 = arith.constant dense<0.000000e+00> : vector<16xf32>
    %22 = vector.multi_reduction <add>, %21, %cst_14 [1] : vector<16x8xf32> to vector<16xf32>
    %23 = vector.shape_cast %22 : vector<16xf32> to vector<16x1xf32>
    %24 = tpu.reciprocal %23 {approx = true} : vector<16x1xf32> -> vector<16x1xf32>
    %25 = vector.broadcast %24 : vector<16x1xf32> to vector<16x8xf32>
    %26 = arith.mulf %21, %25 : vector<16x8xf32>
    %27 = arith.truncf %26 : vector<16x8xf32> to vector<16x8xbf16>
    %cst_15 = arith.constant dense<0.000000e+00> : vector<16x8xf32>
    %28 = tpu.matmul %27, %8, %cst_15 {dimension_numbers = #tpu.dot_dimension_numbers<[1], [0], [0], [1], [0, 0, 1, 1], [], []>} : vector<16x8xbf16>, vector<8x8xbf16>, vector<16x8xf32> -> vector<16x8xf32>
    %29 = vector.extract_strided_slice %1 {offsets = [0, 8], sizes = [16, 8], strides = [1, 1]} : vector<16x32xbf16> to vector<16x8xbf16>
    %30 = vector.extract_strided_slice %3 {offsets = [0, 16], sizes = [8, 8], strides = [1, 1]} : vector<8x64xbf16> to vector<8x8xbf16>
    %31 = vector.extract_strided_slice %3 {offsets = [0, 24], sizes = [8, 8], strides = [1, 1]} : vector<8x64xbf16> to vector<8x8xbf16>
    %cst_16 = arith.constant dense<0.000000e+00> : vector<16x8xf32>
    %32 = tpu.matmul %29, %30, %cst_16 {dimension_numbers = #tpu.dot_dimension_numbers<[1], [1], [0], [0], [0, 0, 1, 0], [], []>} : vector<16x8xbf16>, vector<8x8xbf16>, vector<16x8xf32> -> vector<16x8xf32>
    %cst_17 = arith.constant 0.353553385 : f32
    %33 = vector.broadcast %cst_17 : f32 to vector<16x8xf32>
    %34 = arith.mulf %32, %33 : vector<16x8xf32>
    %c0_18 = arith.constant 0 : index
    %c1 = arith.constant 1 : index
    %c0_19 = arith.constant 0 : index
    %c0_20 = arith.constant 0 : index
    %35 = vector.load %arg7[%c0_18, %c1, %c0_19, %c0_20] : memref<1x4x16x8xf32, #tpu.memory_space<vmem>>, vector<1x1x16x8xf32>
    %36 = vector.shape_cast %35 : vector<1x1x16x8xf32> to vector<16x8xf32>
    %37 = vector.shape_cast %34 : vector<16x8xf32> to vector<1x1x16x8xf32>
    tpu.vector_store %arg7[%c0_18, %c1, %c0_19, %c0_20], %37 {strides = array<i32>} : memref<1x4x16x8xf32, #tpu.memory_space<vmem>>, vector<1x1x16x8xf32>,
    %38 = vector.broadcast %5 : vector<1x8xf32> to vector<16x8xf32>
    %39 = arith.addf %34, %38 : vector<16x8xf32>
    %cst_21 = arith.constant dense<0xFF800000> : vector<16xf32>
    %40 = vector.multi_reduction <maximumf>, %39, %cst_21 [1] : vector<16x8xf32> to vector<16xf32>
    %41 = vector.shape_cast %40 : vector<16xf32> to vector<16x1xf32>
    %42 = vector.broadcast %41 : vector<16x1xf32> to vector<16x8xf32>
    %43 = arith.subf %39, %42 : vector<16x8xf32>
    %44 = math.exp %43 : vector<16x8xf32>
    %cst_22 = arith.constant dense<0.000000e+00> : vector<16xf32>
    %45 = vector.multi_reduction <add>, %44, %cst_22 [1] : vector<16x8xf32> to vector<16xf32>
    %46 = vector.shape_cast %45 : vector<16xf32> to vector<16x1xf32>
    %47 = tpu.reciprocal %46 {approx = true} : vector<16x1xf32> -> vector<16x1xf32>
    %48 = vector.broadcast %47 : vector<16x1xf32> to vector<16x8xf32>
    %49 = arith.mulf %44, %48 : vector<16x8xf32>
    %50 = arith.truncf %49 : vector<16x8xf32> to vector<16x8xbf16>
    %cst_23 = arith.constant dense<0.000000e+00> : vector<16x8xf32>
    %51 = tpu.matmul %50, %31, %cst_23 {dimension_numbers = #tpu.dot_dimension_numbers<[1], [0], [0], [1], [0, 0, 1, 1], [], []>} : vector<16x8xbf16>, vector<8x8xbf16>, vector<16x8xf32> -> vector<16x8xf32>
    %52 = vector.extract_strided_slice %1 {offsets = [0, 16], sizes = [16, 8], strides = [1, 1]} : vector<16x32xbf16> to vector<16x8xbf16>
    %53 = vector.extract_strided_slice %3 {offsets = [0, 32], sizes = [8, 8], strides = [1, 1]} : vector<8x64xbf16> to vector<8x8xbf16>
    %54 = vector.extract_strided_slice %3 {offsets = [0, 40], sizes = [8, 8], strides = [1, 1]} : vector<8x64xbf16> to vector<8x8xbf16>
    %cst_24 = arith.constant dense<0.000000e+00> : vector<16x8xf32>
    %55 = tpu.matmul %52, %53, %cst_24 {dimension_numbers = #tpu.dot_dimension_numbers<[1], [1], [0], [0], [0, 0, 1, 0], [], []>} : vector<16x8xbf16>, vector<8x8xbf16>, vector<16x8xf32> -> vector<16x8xf32>
    %cst_25 = arith.constant 0.353553385 : f32
    %56 = vector.broadcast %cst_25 : f32 to vector<16x8xf32>
    %57 = arith.mulf %55, %56 : vector<16x8xf32>
    %c0_26 = arith.constant 0 : index
    %c2 = arith.constant 2 : index
    %c0_27 = arith.constant 0 : index
    %c0_28 = arith.constant 0 : index
    %58 = vector.load %arg7[%c0_26, %c2, %c0_27, %c0_28] : memref<1x4x16x8xf32, #tpu.memory_space<vmem>>, vector<1x1x16x8xf32>
    %59 = vector.shape_cast %58 : vector<1x1x16x8xf32> to vector<16x8xf32>
    %60 = vector.shape_cast %57 : vector<16x8xf32> to vector<1x1x16x8xf32>
    tpu.vector_store %arg7[%c0_26, %c2, %c0_27, %c0_28], %60 {strides = array<i32>} : memref<1x4x16x8xf32, #tpu.memory_space<vmem>>, vector<1x1x16x8xf32>,
    %61 = vector.broadcast %5 : vector<1x8xf32> to vector<16x8xf32>
    %62 = arith.addf %57, %61 : vector<16x8xf32>
    %cst_29 = arith.constant dense<0xFF800000> : vector<16xf32>
    %63 = vector.multi_reduction <maximumf>, %62, %cst_29 [1] : vector<16x8xf32> to vector<16xf32>
    %64 = vector.shape_cast %63 : vector<16xf32> to vector<16x1xf32>
    %65 = vector.broadcast %64 : vector<16x1xf32> to vector<16x8xf32>
    %66 = arith.subf %62, %65 : vector<16x8xf32>
    %67 = math.exp %66 : vector<16x8xf32>
    %cst_30 = arith.constant dense<0.000000e+00> : vector<16xf32>
    %68 = vector.multi_reduction <add>, %67, %cst_30 [1] : vector<16x8xf32> to vector<16xf32>
    %69 = vector.shape_cast %68 : vector<16xf32> to vector<16x1xf32>
    %70 = tpu.reciprocal %69 {approx = true} : vector<16x1xf32> -> vector<16x1xf32>
    %71 = vector.broadcast %70 : vector<16x1xf32> to vector<16x8xf32>
    %72 = arith.mulf %67, %71 : vector<16x8xf32>
    %73 = arith.truncf %72 : vector<16x8xf32> to vector<16x8xbf16>
    %cst_31 = arith.constant dense<0.000000e+00> : vector<16x8xf32>
    %74 = tpu.matmul %73, %54, %cst_31 {dimension_numbers = #tpu.dot_dimension_numbers<[1], [0], [0], [1], [0, 0, 1, 1], [], []>} : vector<16x8xbf16>, vector<8x8xbf16>, vector<16x8xf32> -> vector<16x8xf32>
    %75 = vector.extract_strided_slice %1 {offsets = [0, 24], sizes = [16, 8], strides = [1, 1]} : vector<16x32xbf16> to vector<16x8xbf16>
    %76 = vector.extract_strided_slice %3 {offsets = [0, 48], sizes = [8, 8], strides = [1, 1]} : vector<8x64xbf16> to vector<8x8xbf16>
    %77 = vector.extract_strided_slice %3 {offsets = [0, 56], sizes = [8, 8], strides = [1, 1]} : vector<8x64xbf16> to vector<8x8xbf16>
    %cst_32 = arith.constant dense<0.000000e+00> : vector<16x8xf32>
    %78 = tpu.matmul %75, %76, %cst_32 {dimension_numbers = #tpu.dot_dimension_numbers<[1], [1], [0], [0], [0, 0, 1, 0], [], []>} : vector<16x8xbf16>, vector<8x8xbf16>, vector<16x8xf32> -> vector<16x8xf32>
    %cst_33 = arith.constant 0.353553385 : f32
    %79 = vector.broadcast %cst_33 : f32 to vector<16x8xf32>
    %80 = arith.mulf %78, %79 : vector<16x8xf32>
    %c0_34 = arith.constant 0 : index
    %c3 = arith.constant 3 : index
    %c0_35 = arith.constant 0 : index
    %c0_36 = arith.constant 0 : index
    %81 = vector.load %arg7[%c0_34, %c3, %c0_35, %c0_36] : memref<1x4x16x8xf32, #tpu.memory_space<vmem>>, vector<1x1x16x8xf32>
    %82 = vector.shape_cast %81 : vector<1x1x16x8xf32> to vector<16x8xf32>
    %83 = vector.shape_cast %80 : vector<16x8xf32> to vector<1x1x16x8xf32>
    tpu.vector_store %arg7[%c0_34, %c3, %c0_35, %c0_36], %83 {strides = array<i32>} : memref<1x4x16x8xf32, #tpu.memory_space<vmem>>, vector<1x1x16x8xf32>,
    %84 = vector.broadcast %5 : vector<1x8xf32> to vector<16x8xf32>
    %85 = arith.addf %80, %84 : vector<16x8xf32>
    %cst_37 = arith.constant dense<0xFF800000> : vector<16xf32>
    %86 = vector.multi_reduction <maximumf>, %85, %cst_37 [1] : vector<16x8xf32> to vector<16xf32>
    %87 = vector.shape_cast %86 : vector<16xf32> to vector<16x1xf32>
    %88 = vector.broadcast %87 : vector<16x1xf32> to vector<16x8xf32>
    %89 = arith.subf %85, %88 : vector<16x8xf32>
    %90 = math.exp %89 : vector<16x8xf32>
    %cst_38 = arith.constant dense<0.000000e+00> : vector<16xf32>
    %91 = vector.multi_reduction <add>, %90, %cst_38 [1] : vector<16x8xf32> to vector<16xf32>
    %92 = vector.shape_cast %91 : vector<16xf32> to vector<16x1xf32>
    %93 = tpu.reciprocal %92 {approx = true} : vector<16x1xf32> -> vector<16x1xf32>
    %94 = vector.broadcast %93 : vector<16x1xf32> to vector<16x8xf32>
    %95 = arith.mulf %90, %94 : vector<16x8xf32>
    %96 = arith.truncf %95 : vector<16x8xf32> to vector<16x8xbf16>
    %cst_39 = arith.constant dense<0.000000e+00> : vector<16x8xf32>
    %97 = tpu.matmul %96, %77, %cst_39 {dimension_numbers = #tpu.dot_dimension_numbers<[1], [0], [0], [1], [0, 0, 1, 1], [], []>} : vector<16x8xbf16>, vector<8x8xbf16>, vector<16x8xf32> -> vector<16x8xf32>
    %98 = tpu.concatenate %28, %51, %74, %97 in 1 : vector<16x8xf32>, vector<16x8xf32>, vector<16x8xf32>, vector<16x8xf32> -> vector<16x32xf32>
    %99 = arith.truncf %98 : vector<16x32xf32> to vector<16x32xbf16>
    %c0_40 = arith.constant 0 : index
    %c0_41 = arith.constant 0 : index
    %c0_42 = arith.constant 0 : index
    %100 = vector.load %arg6[%c0_40, %c0_41, %c0_42] : memref<1x16x32xbf16, #tpu.memory_space<vmem>>, vector<1x16x32xbf16>
    %101 = vector.shape_cast %100 : vector<1x16x32xbf16> to vector<16x32xbf16>
    %102 = vector.shape_cast %99 : vector<16x32xbf16> to vector<1x16x32xbf16>
    tpu.vector_store %arg6[%c0_40, %c0_41, %c0_42], %102 {strides = array<i32>} : memref<1x16x32xbf16, #tpu.memory_space<vmem>>, vector<1x16x32xbf16>,
    return
  }
  func.func @transform_0(%arg0: i32, %arg1: i32, %arg2: i32) -> (i32, i32, i32) {
    %c0_i32 = arith.constant 0 : i32
    return %arg0, %arg2, %arg1 : i32, i32, i32
  }
  func.func @transform_1(%arg0: i32, %arg1: i32, %arg2: i32) -> (i32, i32, i32) {
    %c0_i32 = arith.constant 0 : i32
    %c0_i32_0 = arith.constant 0 : i32
    return %arg0, %c0_i32, %arg1 : i32, i32, i32
  }
  func.func @transform_2(%arg0: i32, %arg1: i32, %arg2: i32) -> (i32, i32, i32) {
    %c0_i32 = arith.constant 0 : i32
    %c0_i32_0 = arith.constant 0 : i32
    %c0_i32_1 = arith.constant 0 : i32
    return %arg0, %c0_i32, %c0_i32_0 : i32, i32, i32
  }
  func.func @transform_3(%arg0: i32, %arg1: i32, %arg2: i32) -> (i32, i32, i32) {
    %c0_i32 = arith.constant 0 : i32
    return %arg0, %arg2, %arg1 : i32, i32, i32
  }
  func.func @transform_4(%arg0: i32, %arg1: i32, %arg2: i32) -> (i32, i32, i32, i32) {
    %c0_i32 = arith.constant 0 : i32
    %c0_i32_0 = arith.constant 0 : i32
    return %arg0, %arg1, %arg2, %c0_i32 : i32, i32, i32, i32
  }
}

module attributes {stable_mosaic.version = 11 : i64} {
  func.func @_matmul_res_ln_kernel(%arg0: i32, %arg1: i32, %arg2: memref<32x32xbf16, #tpu.memory_space<vmem>>, %arg3: memref<32x32xbf16, #tpu.memory_space<vmem>>, %arg4: memref<1x32xf32, #tpu.memory_space<vmem>>, %arg5: memref<32x32xf32, #tpu.memory_space<vmem>>, %arg6: memref<1x32xf32, #tpu.memory_space<vmem>>, %arg7: memref<1x32xf32, #tpu.memory_space<vmem>>, %arg8: memref<32x32xf32, #tpu.memory_space<vmem>>, %arg9: memref<32x32xbf16, #tpu.memory_space<vmem>>, %arg10: memref<32x32xf32, #tpu.memory_space<vmem>>) attributes {dimension_semantics = [#tpu.dimension_semantics<parallel>, #tpu.dimension_semantics<arbitrary>], iteration_bounds = array<i64: 1, 1>, scalar_prefetch = 0 : i64, scratch_operands = 1 : i64, tpu.core_type = #tpu.core_type<tc>, window_params = [{transform_indices = @transform_0, window_bounds = array<i64: 32, 32>}, {transform_indices = @transform_1, window_bounds = array<i64: 32, 32>}, {pipeline_mode = #tpu.pipeline_mode<synchronous>, transform_indices = @transform_2, window_bounds = array<i64: 1, 32>}, {transform_indices = @transform_3, window_bounds = array<i64: 32, 32>}, {pipeline_mode = #tpu.pipeline_mode<synchronous>, transform_indices = @transform_4, window_bounds = array<i64: 1, 32>}, {pipeline_mode = #tpu.pipeline_mode<synchronous>, transform_indices = @transform_5, window_bounds = array<i64: 1, 32>}, {transform_indices = @transform_6, window_bounds = array<i64: 32, 32>}, {transform_indices = @transform_7, window_bounds = array<i64: 32, 32>}]} {
    %c0_i32 = arith.constant 0 : i32
    %0 = arith.cmpi eq, %arg1, %c0_i32 : i32
    %1 = arith.extui %0 : i1 to i32
    %c0_i32_0 = arith.constant 0 : i32
    %2 = arith.cmpi ne, %1, %c0_i32_0 : i32
    scf.if %2 {
      %cst_10 = arith.constant 0.000000e+00 : f32
      %12 = vector.broadcast %cst_10 : f32 to vector<32x32xf32>
      %c0_11 = arith.constant 0 : index
      %c0_12 = arith.constant 0 : index
      %13 = vector.load %arg10[%c0_11, %c0_12] : memref<32x32xf32, #tpu.memory_space<vmem>>, vector<32x32xf32>
      tpu.vector_store %arg10[%c0_11, %c0_12], %12 {strides = array<i32>} : memref<32x32xf32, #tpu.memory_space<vmem>>, vector<32x32xf32>,
    } else {
    }
    %c0 = arith.constant 0 : index
    %c0_1 = arith.constant 0 : index
    %3 = vector.load %arg10[%c0, %c0_1] : memref<32x32xf32, #tpu.memory_space<vmem>>, vector<32x32xf32>
    %c0_2 = arith.constant 0 : index
    %c0_3 = arith.constant 0 : index
    %4 = vector.load %arg2[%c0_2, %c0_3] : memref<32x32xbf16, #tpu.memory_space<vmem>>, vector<32x32xbf16>
    %c0_4 = arith.constant 0 : index
    %c0_5 = arith.constant 0 : index
    %5 = vector.load %arg3[%c0_4, %c0_5] : memref<32x32xbf16, #tpu.memory_space<vmem>>, vector<32x32xbf16>
    %cst = arith.constant dense<0.000000e+00> : vector<32x32xf32>
    %6 = tpu.matmul %4, %5, %cst {dimension_numbers = #tpu.dot_dimension_numbers<[1], [0], [0], [1], [0, 0, 1, 1], [], []>} : vector<32x32xbf16>, vector<32x32xbf16>, vector<32x32xf32> -> vector<32x32xf32>
    %7 = arith.addf %3, %6 : vector<32x32xf32>
    %c0_6 = arith.constant 0 : index
    %c0_7 = arith.constant 0 : index
    %8 = vector.load %arg10[%c0_6, %c0_7] : memref<32x32xf32, #tpu.memory_space<vmem>>, vector<32x32xf32>
    tpu.vector_store %arg10[%c0_6, %c0_7], %7 {strides = array<i32>} : memref<32x32xf32, #tpu.memory_space<vmem>>, vector<32x32xf32>,
    %c0_i32_8 = arith.constant 0 : i32
    %9 = arith.cmpi eq, %arg1, %c0_i32_8 : i32
    %10 = arith.extui %9 : i1 to i32
    %c0_i32_9 = arith.constant 0 : i32
    %11 = arith.cmpi ne, %10, %c0_i32_9 : i32
    scf.if %11 {
      %c0_10 = arith.constant 0 : index
      %c0_11 = arith.constant 0 : index
      %12 = vector.load %arg10[%c0_10, %c0_11] : memref<32x32xf32, #tpu.memory_space<vmem>>, vector<32x32xf32>
      %c0_12 = arith.constant 0 : index
      %c0_13 = arith.constant 0 : index
      %13 = vector.load %arg4[%c0_12, %c0_13] : memref<1x32xf32, #tpu.memory_space<vmem>>, vector<1x32xf32>
      %14 = vector.broadcast %13 : vector<1x32xf32> to vector<32x32xf32>
      %15 = arith.addf %12, %14 : vector<32x32xf32>
      %c0_14 = arith.constant 0 : index
      %c0_15 = arith.constant 0 : index
      %16 = vector.load %arg5[%c0_14, %c0_15] : memref<32x32xf32, #tpu.memory_space<vmem>>, vector<32x32xf32>
      %17 = arith.addf %15, %16 : vector<32x32xf32>
      %cst_16 = arith.constant dense<0.000000e+00> : vector<32xf32>
      %18 = vector.multi_reduction <add>, %17, %cst_16 [1] : vector<32x32xf32> to vector<32xf32>
      %19 = vector.shape_cast %18 : vector<32xf32> to vector<32x1xf32>
      %cst_17 = arith.constant 3.200000e+01 : f32
      %20 = vector.broadcast %cst_17 : f32 to vector<32x1xf32>
      %21 = arith.divf %19, %20 : vector<32x1xf32>
      %22 = vector.broadcast %21 : vector<32x1xf32> to vector<32x32xf32>
      %23 = arith.subf %17, %22 : vector<32x32xf32>
      %24 = arith.mulf %23, %23 : vector<32x32xf32>
      %cst_18 = arith.constant dense<0.000000e+00> : vector<32xf32>
      %25 = vector.multi_reduction <add>, %24, %cst_18 [1] : vector<32x32xf32> to vector<32xf32>
      %26 = vector.shape_cast %25 : vector<32xf32> to vector<32x1xf32>
      %cst_19 = arith.constant 3.200000e+01 : f32
      %27 = vector.broadcast %cst_19 : f32 to vector<32x1xf32>
      %28 = arith.divf %26, %27 : vector<32x1xf32>
      %cst_20 = arith.constant 9.99999996E-13 : f32
      %29 = vector.broadcast %cst_20 : f32 to vector<32x1xf32>
      %30 = arith.addf %28, %29 : vector<32x1xf32>
      %31 = math.rsqrt %30 : vector<32x1xf32>
      %32 = vector.broadcast %21 : vector<32x1xf32> to vector<32x32xf32>
      %33 = arith.subf %17, %32 : vector<32x32xf32>
      %34 = vector.broadcast %31 : vector<32x1xf32> to vector<32x32xf32>
      %35 = arith.mulf %33, %34 : vector<32x32xf32>
      %c0_21 = arith.constant 0 : index
      %c0_22 = arith.constant 0 : index
      %36 = vector.load %arg6[%c0_21, %c0_22] : memref<1x32xf32, #tpu.memory_space<vmem>>, vector<1x32xf32>
      %37 = vector.broadcast %36 : vector<1x32xf32> to vector<32x32xf32>
      %38 = arith.mulf %35, %37 : vector<32x32xf32>
      %c0_23 = arith.constant 0 : index
      %c0_24 = arith.constant 0 : index
      %39 = vector.load %arg7[%c0_23, %c0_24] : memref<1x32xf32, #tpu.memory_space<vmem>>, vector<1x32xf32>
      %40 = vector.broadcast %39 : vector<1x32xf32> to vector<32x32xf32>
      %41 = arith.addf %38, %40 : vector<32x32xf32>
      %c0_25 = arith.constant 0 : index
      %c0_26 = arith.constant 0 : index
      %42 = vector.load %arg8[%c0_25, %c0_26] : memref<32x32xf32, #tpu.memory_space<vmem>>, vector<32x32xf32>
      tpu.vector_store %arg8[%c0_25, %c0_26], %41 {strides = array<i32>} : memref<32x32xf32, #tpu.memory_space<vmem>>, vector<32x32xf32>,
      %43 = arith.truncf %41 : vector<32x32xf32> to vector<32x32xbf16>
      %c0_27 = arith.constant 0 : index
      %c0_28 = arith.constant 0 : index
      %44 = vector.load %arg9[%c0_27, %c0_28] : memref<32x32xbf16, #tpu.memory_space<vmem>>, vector<32x32xbf16>
      tpu.vector_store %arg9[%c0_27, %c0_28], %43 {strides = array<i32>} : memref<32x32xbf16, #tpu.memory_space<vmem>>, vector<32x32xbf16>,
    } else {
    }
    return
  }
  func.func @transform_0(%arg0: i32, %arg1: i32) -> (i32, i32) {
    %c0_i32 = arith.constant 0 : i32
    return %arg0, %arg1 : i32, i32
  }
  func.func @transform_1(%arg0: i32, %arg1: i32) -> (i32, i32) {
    %c0_i32 = arith.constant 0 : i32
    %c0_i32_0 = arith.constant 0 : i32
    return %arg1, %c0_i32 : i32, i32
  }
  func.func @transform_2(%arg0: i32, %arg1: i32) -> (i32, i32) {
    %c0_i32 = arith.constant 0 : i32
    %c0_i32_0 = arith.constant 0 : i32
    %c0_i32_1 = arith.constant 0 : i32
    return %c0_i32, %c0_i32_0 : i32, i32
  }
  func.func @transform_3(%arg0: i32, %arg1: i32) -> (i32, i32) {
    %c0_i32 = arith.constant 0 : i32
    %c0_i32_0 = arith.constant 0 : i32
    return %arg0, %c0_i32 : i32, i32
  }
  func.func @transform_4(%arg0: i32, %arg1: i32) -> (i32, i32) {
    %c0_i32 = arith.constant 0 : i32
    %c0_i32_0 = arith.constant 0 : i32
    %c0_i32_1 = arith.constant 0 : i32
    return %c0_i32, %c0_i32_0 : i32, i32
  }
  func.func @transform_5(%arg0: i32, %arg1: i32) -> (i32, i32) {
    %c0_i32 = arith.constant 0 : i32
    %c0_i32_0 = arith.constant 0 : i32
    %c0_i32_1 = arith.constant 0 : i32
    return %c0_i32, %c0_i32_0 : i32, i32
  }
  func.func @transform_6(%arg0: i32, %arg1: i32) -> (i32, i32) {
    %c0_i32 = arith.constant 0 : i32
    %c0_i32_0 = arith.constant 0 : i32
    return %arg0, %c0_i32 : i32, i32
  }
  func.func @transform_7(%arg0: i32, %arg1: i32) -> (i32, i32) {
    %c0_i32 = arith.constant 0 : i32
    %c0_i32_0 = arith.constant 0 : i32
    return %arg0, %c0_i32 : i32, i32
  }
}

module attributes {stable_mosaic.version = 11 : i64} {
  func.func @_matmul_bias_gelu_kernel(%arg0: i32, %arg1: i32, %arg2: i32, %arg3: memref<32x32xbf16, #tpu.memory_space<vmem>>, %arg4: memref<32x64xbf16, #tpu.memory_space<vmem>>, %arg5: memref<1x64xf32, #tpu.memory_space<vmem>>, %arg6: memref<32x64xbf16, #tpu.memory_space<vmem>>, %arg7: memref<32x64xf32, #tpu.memory_space<vmem>>) attributes {dimension_semantics = [#tpu.dimension_semantics<parallel>, #tpu.dimension_semantics<parallel>, #tpu.dimension_semantics<arbitrary>], iteration_bounds = array<i64: 1, 1, 1>, scalar_prefetch = 0 : i64, scratch_operands = 1 : i64, tpu.core_type = #tpu.core_type<tc>, window_params = [{transform_indices = @transform_0, window_bounds = array<i64: 32, 32>}, {transform_indices = @transform_1, window_bounds = array<i64: 32, 64>}, {transform_indices = @transform_2, window_bounds = array<i64: 1, 64>}, {transform_indices = @transform_3, window_bounds = array<i64: 32, 64>}]} {
    %c0_i32 = arith.constant 0 : i32
    %0 = arith.cmpi eq, %arg2, %c0_i32 : i32
    %1 = arith.extui %0 : i1 to i32
    %c0_i32_0 = arith.constant 0 : i32
    %2 = arith.cmpi ne, %1, %c0_i32_0 : i32
    scf.if %2 {
      %cst_10 = arith.constant 0.000000e+00 : f32
      %12 = vector.broadcast %cst_10 : f32 to vector<32x64xf32>
      %c0_11 = arith.constant 0 : index
      %c0_12 = arith.constant 0 : index
      %13 = vector.load %arg7[%c0_11, %c0_12] : memref<32x64xf32, #tpu.memory_space<vmem>>, vector<32x64xf32>
      tpu.vector_store %arg7[%c0_11, %c0_12], %12 {strides = array<i32>} : memref<32x64xf32, #tpu.memory_space<vmem>>, vector<32x64xf32>,
    } else {
    }
    %c0 = arith.constant 0 : index
    %c0_1 = arith.constant 0 : index
    %3 = vector.load %arg7[%c0, %c0_1] : memref<32x64xf32, #tpu.memory_space<vmem>>, vector<32x64xf32>
    %c0_2 = arith.constant 0 : index
    %c0_3 = arith.constant 0 : index
    %4 = vector.load %arg3[%c0_2, %c0_3] : memref<32x32xbf16, #tpu.memory_space<vmem>>, vector<32x32xbf16>
    %c0_4 = arith.constant 0 : index
    %c0_5 = arith.constant 0 : index
    %5 = vector.load %arg4[%c0_4, %c0_5] : memref<32x64xbf16, #tpu.memory_space<vmem>>, vector<32x64xbf16>
    %cst = arith.constant dense<0.000000e+00> : vector<32x64xf32>
    %6 = tpu.matmul %4, %5, %cst {dimension_numbers = #tpu.dot_dimension_numbers<[1], [0], [0], [1], [0, 0, 1, 1], [], []>} : vector<32x32xbf16>, vector<32x64xbf16>, vector<32x64xf32> -> vector<32x64xf32>
    %7 = arith.addf %3, %6 : vector<32x64xf32>
    %c0_6 = arith.constant 0 : index
    %c0_7 = arith.constant 0 : index
    %8 = vector.load %arg7[%c0_6, %c0_7] : memref<32x64xf32, #tpu.memory_space<vmem>>, vector<32x64xf32>
    tpu.vector_store %arg7[%c0_6, %c0_7], %7 {strides = array<i32>} : memref<32x64xf32, #tpu.memory_space<vmem>>, vector<32x64xf32>,
    %c0_i32_8 = arith.constant 0 : i32
    %9 = arith.cmpi eq, %arg2, %c0_i32_8 : i32
    %10 = arith.extui %9 : i1 to i32
    %c0_i32_9 = arith.constant 0 : i32
    %11 = arith.cmpi ne, %10, %c0_i32_9 : i32
    scf.if %11 {
      %c0_10 = arith.constant 0 : index
      %c0_11 = arith.constant 0 : index
      %12 = vector.load %arg7[%c0_10, %c0_11] : memref<32x64xf32, #tpu.memory_space<vmem>>, vector<32x64xf32>
      %c0_12 = arith.constant 0 : index
      %c0_13 = arith.constant 0 : index
      %13 = vector.load %arg5[%c0_12, %c0_13] : memref<1x64xf32, #tpu.memory_space<vmem>>, vector<1x64xf32>
      %14 = vector.broadcast %13 : vector<1x64xf32> to vector<32x64xf32>
      %15 = arith.addf %12, %14 : vector<32x64xf32>
      %cst_14 = arith.constant 0.707106769 : f32
      %16 = vector.broadcast %cst_14 : f32 to vector<32x64xf32>
      %17 = arith.mulf %15, %16 : vector<32x64xf32>
      %cst_15 = arith.constant 0.000000e+00 : f32
      %18 = vector.broadcast %cst_15 : f32 to vector<32x64xf32>
      %19 = arith.cmpf oge, %17, %18 : vector<32x64xf32>
      %cst_16 = arith.constant 1.000000e+00 : f32
      %cst_17 = arith.constant -1.000000e+00 : f32
      %20 = vector.broadcast %cst_16 : f32 to vector<32x64xf32>
      %21 = vector.broadcast %cst_17 : f32 to vector<32x64xf32>
      %22 = arith.select %19, %20, %21 : vector<32x64xi1>, vector<32x64xf32>
      %23 = arith.mulf %17, %22 : vector<32x64xf32>
      %cst_18 = arith.constant 0.327591091 : f32
      %24 = vector.broadcast %cst_18 : f32 to vector<32x64xf32>
      %25 = arith.mulf %24, %23 : vector<32x64xf32>
      %cst_19 = arith.constant 1.000000e+00 : f32
      %26 = vector.broadcast %cst_19 : f32 to vector<32x64xf32>
      %27 = arith.addf %26, %25 : vector<32x64xf32>
      %cst_20 = arith.constant 1.000000e+00 : f32
      %28 = vector.broadcast %cst_20 : f32 to vector<32x64xf32>
      %29 = arith.divf %28, %27 : vector<32x64xf32>
      %cst_21 = arith.constant 1.06140542 : f32
      %30 = vector.broadcast %cst_21 : f32 to vector<32x64xf32>
      %31 = arith.mulf %30, %29 : vector<32x64xf32>
      %cst_22 = arith.constant 1.45315206 : f32
      %32 = vector.broadcast %cst_22 : f32 to vector<32x64xf32>
      %33 = arith.subf %31, %32 : vector<32x64xf32>
      %34 = arith.mulf %33, %29 : vector<32x64xf32>
      %cst_23 = arith.constant 1.42141378 : f32
      %35 = vector.broadcast %cst_23 : f32 to vector<32x64xf32>
      %36 = arith.addf %34, %35 : vector<32x64xf32>
      %37 = arith.mulf %36, %29 : vector<32x64xf32>
      %cst_24 = arith.constant 0.284496725 : f32
      %38 = vector.broadcast %cst_24 : f32 to vector<32x64xf32>
      %39 = arith.subf %37, %38 : vector<32x64xf32>
      %40 = arith.mulf %39, %29 : vector<32x64xf32>
      %cst_25 = arith.constant 0.254829586 : f32
      %41 = vector.broadcast %cst_25 : f32 to vector<32x64xf32>
      %42 = arith.addf %40, %41 : vector<32x64xf32>
      %43 = arith.mulf %42, %29 : vector<32x64xf32>
      %cst_26 = arith.constant 0.000000e+00 : f32
      %44 = vector.broadcast %cst_26 : f32 to vector<32x64xf32>
      %45 = arith.subf %44, %23 : vector<32x64xf32>
      %46 = arith.mulf %45, %23 : vector<32x64xf32>
      %47 = math.exp %46 : vector<32x64xf32>
      %48 = arith.mulf %43, %47 : vector<32x64xf32>
      %cst_27 = arith.constant 1.000000e+00 : f32
      %49 = vector.broadcast %cst_27 : f32 to vector<32x64xf32>
      %50 = arith.subf %49, %48 : vector<32x64xf32>
      %51 = arith.mulf %22, %50 : vector<32x64xf32>
      %cst_28 = arith.constant 5.000000e-01 : f32
      %52 = vector.broadcast %cst_28 : f32 to vector<32x64xf32>
      %53 = arith.mulf %52, %15 : vector<32x64xf32>
      %cst_29 = arith.constant 1.000000e+00 : f32
      %54 = vector.broadcast %cst_29 : f32 to vector<32x64xf32>
      %55 = arith.addf %54, %51 : vector<32x64xf32>
      %56 = arith.mulf %53, %55 : vector<32x64xf32>
      %57 = arith.truncf %56 : vector<32x64xf32> to vector<32x64xbf16>
      %c0_30 = arith.constant 0 : index
      %c0_31 = arith.constant 0 : index
      %58 = vector.load %arg6[%c0_30, %c0_31] : memref<32x64xbf16, #tpu.memory_space<vmem>>, vector<32x64xbf16>
      tpu.vector_store %arg6[%c0_30, %c0_31], %57 {strides = array<i32>} : memref<32x64xbf16, #tpu.memory_space<vmem>>, vector<32x64xbf16>,
    } else {
    }
    return
  }
  func.func @transform_0(%arg0: i32, %arg1: i32, %arg2: i32) -> (i32, i32) {
    %c0_i32 = arith.constant 0 : i32
    return %arg0, %arg2 : i32, i32
  }
  func.func @transform_1(%arg0: i32, %arg1: i32, %arg2: i32) -> (i32, i32) {
    %c0_i32 = arith.constant 0 : i32
    return %arg2, %arg1 : i32, i32
  }
  func.func @transform_2(%arg0: i32, %arg1: i32, %arg2: i32) -> (i32, i32) {
    %c0_i32 = arith.constant 0 : i32
    %c0_i32_0 = arith.constant 0 : i32
    return %c0_i32, %arg1 : i32, i32
  }
  func.func @transform_3(%arg0: i32, %arg1: i32, %arg2: i32) -> (i32, i32) {
    %c0_i32 = arith.constant 0 : i32
    return %arg0, %arg1 : i32, i32
  }
}

module attributes {stable_mosaic.version = 11 : i64} {
  func.func @_matmul_res_ln_kernel(%arg0: i32, %arg1: i32, %arg2: memref<32x64xbf16, #tpu.memory_space<vmem>>, %arg3: memref<64x32xbf16, #tpu.memory_space<vmem>>, %arg4: memref<1x32xf32, #tpu.memory_space<vmem>>, %arg5: memref<32x32xf32, #tpu.memory_space<vmem>>, %arg6: memref<1x32xf32, #tpu.memory_space<vmem>>, %arg7: memref<1x32xf32, #tpu.memory_space<vmem>>, %arg8: memref<32x32xf32, #tpu.memory_space<vmem>>, %arg9: memref<32x32xbf16, #tpu.memory_space<vmem>>, %arg10: memref<32x32xf32, #tpu.memory_space<vmem>>) attributes {dimension_semantics = [#tpu.dimension_semantics<parallel>, #tpu.dimension_semantics<arbitrary>], iteration_bounds = array<i64: 1, 1>, scalar_prefetch = 0 : i64, scratch_operands = 1 : i64, tpu.core_type = #tpu.core_type<tc>, window_params = [{transform_indices = @transform_0, window_bounds = array<i64: 32, 64>}, {transform_indices = @transform_1, window_bounds = array<i64: 64, 32>}, {pipeline_mode = #tpu.pipeline_mode<synchronous>, transform_indices = @transform_2, window_bounds = array<i64: 1, 32>}, {transform_indices = @transform_3, window_bounds = array<i64: 32, 32>}, {pipeline_mode = #tpu.pipeline_mode<synchronous>, transform_indices = @transform_4, window_bounds = array<i64: 1, 32>}, {pipeline_mode = #tpu.pipeline_mode<synchronous>, transform_indices = @transform_5, window_bounds = array<i64: 1, 32>}, {transform_indices = @transform_6, window_bounds = array<i64: 32, 32>}, {transform_indices = @transform_7, window_bounds = array<i64: 32, 32>}]} {
    %c0_i32 = arith.constant 0 : i32
    %0 = arith.cmpi eq, %arg1, %c0_i32 : i32
    %1 = arith.extui %0 : i1 to i32
    %c0_i32_0 = arith.constant 0 : i32
    %2 = arith.cmpi ne, %1, %c0_i32_0 : i32
    scf.if %2 {
      %cst_10 = arith.constant 0.000000e+00 : f32
      %12 = vector.broadcast %cst_10 : f32 to vector<32x32xf32>
      %c0_11 = arith.constant 0 : index
      %c0_12 = arith.constant 0 : index
      %13 = vector.load %arg10[%c0_11, %c0_12] : memref<32x32xf32, #tpu.memory_space<vmem>>, vector<32x32xf32>
      tpu.vector_store %arg10[%c0_11, %c0_12], %12 {strides = array<i32>} : memref<32x32xf32, #tpu.memory_space<vmem>>, vector<32x32xf32>,
    } else {
    }
    %c0 = arith.constant 0 : index
    %c0_1 = arith.constant 0 : index
    %3 = vector.load %arg10[%c0, %c0_1] : memref<32x32xf32, #tpu.memory_space<vmem>>, vector<32x32xf32>
    %c0_2 = arith.constant 0 : index
    %c0_3 = arith.constant 0 : index
    %4 = vector.load %arg2[%c0_2, %c0_3] : memref<32x64xbf16, #tpu.memory_space<vmem>>, vector<32x64xbf16>
    %c0_4 = arith.constant 0 : index
    %c0_5 = arith.constant 0 : index
    %5 = vector.load %arg3[%c0_4, %c0_5] : memref<64x32xbf16, #tpu.memory_space<vmem>>, vector<64x32xbf16>
    %cst = arith.constant dense<0.000000e+00> : vector<32x32xf32>
    %6 = tpu.matmul %4, %5, %cst {dimension_numbers = #tpu.dot_dimension_numbers<[1], [0], [0], [1], [0, 0, 1, 1], [], []>} : vector<32x64xbf16>, vector<64x32xbf16>, vector<32x32xf32> -> vector<32x32xf32>
    %7 = arith.addf %3, %6 : vector<32x32xf32>
    %c0_6 = arith.constant 0 : index
    %c0_7 = arith.constant 0 : index
    %8 = vector.load %arg10[%c0_6, %c0_7] : memref<32x32xf32, #tpu.memory_space<vmem>>, vector<32x32xf32>
    tpu.vector_store %arg10[%c0_6, %c0_7], %7 {strides = array<i32>} : memref<32x32xf32, #tpu.memory_space<vmem>>, vector<32x32xf32>,
    %c0_i32_8 = arith.constant 0 : i32
    %9 = arith.cmpi eq, %arg1, %c0_i32_8 : i32
    %10 = arith.extui %9 : i1 to i32
    %c0_i32_9 = arith.constant 0 : i32
    %11 = arith.cmpi ne, %10, %c0_i32_9 : i32
    scf.if %11 {
      %c0_10 = arith.constant 0 : index
      %c0_11 = arith.constant 0 : index
      %12 = vector.load %arg10[%c0_10, %c0_11] : memref<32x32xf32, #tpu.memory_space<vmem>>, vector<32x32xf32>
      %c0_12 = arith.constant 0 : index
      %c0_13 = arith.constant 0 : index
      %13 = vector.load %arg4[%c0_12, %c0_13] : memref<1x32xf32, #tpu.memory_space<vmem>>, vector<1x32xf32>
      %14 = vector.broadcast %13 : vector<1x32xf32> to vector<32x32xf32>
      %15 = arith.addf %12, %14 : vector<32x32xf32>
      %c0_14 = arith.constant 0 : index
      %c0_15 = arith.constant 0 : index
      %16 = vector.load %arg5[%c0_14, %c0_15] : memref<32x32xf32, #tpu.memory_space<vmem>>, vector<32x32xf32>
      %17 = arith.addf %15, %16 : vector<32x32xf32>
      %cst_16 = arith.constant dense<0.000000e+00> : vector<32xf32>
      %18 = vector.multi_reduction <add>, %17, %cst_16 [1] : vector<32x32xf32> to vector<32xf32>
      %19 = vector.shape_cast %18 : vector<32xf32> to vector<32x1xf32>
      %cst_17 = arith.constant 3.200000e+01 : f32
      %20 = vector.broadcast %cst_17 : f32 to vector<32x1xf32>
      %21 = arith.divf %19, %20 : vector<32x1xf32>
      %22 = vector.broadcast %21 : vector<32x1xf32> to vector<32x32xf32>
      %23 = arith.subf %17, %22 : vector<32x32xf32>
      %24 = arith.mulf %23, %23 : vector<32x32xf32>
      %cst_18 = arith.constant dense<0.000000e+00> : vector<32xf32>
      %25 = vector.multi_reduction <add>, %24, %cst_18 [1] : vector<32x32xf32> to vector<32xf32>
      %26 = vector.shape_cast %25 : vector<32xf32> to vector<32x1xf32>
      %cst_19 = arith.constant 3.200000e+01 : f32
      %27 = vector.broadcast %cst_19 : f32 to vector<32x1xf32>
      %28 = arith.divf %26, %27 : vector<32x1xf32>
      %cst_20 = arith.constant 9.99999996E-13 : f32
      %29 = vector.broadcast %cst_20 : f32 to vector<32x1xf32>
      %30 = arith.addf %28, %29 : vector<32x1xf32>
      %31 = math.rsqrt %30 : vector<32x1xf32>
      %32 = vector.broadcast %21 : vector<32x1xf32> to vector<32x32xf32>
      %33 = arith.subf %17, %32 : vector<32x32xf32>
      %34 = vector.broadcast %31 : vector<32x1xf32> to vector<32x32xf32>
      %35 = arith.mulf %33, %34 : vector<32x32xf32>
      %c0_21 = arith.constant 0 : index
      %c0_22 = arith.constant 0 : index
      %36 = vector.load %arg6[%c0_21, %c0_22] : memref<1x32xf32, #tpu.memory_space<vmem>>, vector<1x32xf32>
      %37 = vector.broadcast %36 : vector<1x32xf32> to vector<32x32xf32>
      %38 = arith.mulf %35, %37 : vector<32x32xf32>
      %c0_23 = arith.constant 0 : index
      %c0_24 = arith.constant 0 : index
      %39 = vector.load %arg7[%c0_23, %c0_24] : memref<1x32xf32, #tpu.memory_space<vmem>>, vector<1x32xf32>
      %40 = vector.broadcast %39 : vector<1x32xf32> to vector<32x32xf32>
      %41 = arith.addf %38, %40 : vector<32x32xf32>
      %c0_25 = arith.constant 0 : index
      %c0_26 = arith.constant 0 : index
      %42 = vector.load %arg8[%c0_25, %c0_26] : memref<32x32xf32, #tpu.memory_space<vmem>>, vector<32x32xf32>
      tpu.vector_store %arg8[%c0_25, %c0_26], %41 {strides = array<i32>} : memref<32x32xf32, #tpu.memory_space<vmem>>, vector<32x32xf32>,
      %43 = arith.truncf %41 : vector<32x32xf32> to vector<32x32xbf16>
      %c0_27 = arith.constant 0 : index
      %c0_28 = arith.constant 0 : index
      %44 = vector.load %arg9[%c0_27, %c0_28] : memref<32x32xbf16, #tpu.memory_space<vmem>>, vector<32x32xbf16>
      tpu.vector_store %arg9[%c0_27, %c0_28], %43 {strides = array<i32>} : memref<32x32xbf16, #tpu.memory_space<vmem>>, vector<32x32xbf16>,
    } else {
    }
    return
  }
  func.func @transform_0(%arg0: i32, %arg1: i32) -> (i32, i32) {
    %c0_i32 = arith.constant 0 : i32
    return %arg0, %arg1 : i32, i32
  }
  func.func @transform_1(%arg0: i32, %arg1: i32) -> (i32, i32) {
    %c0_i32 = arith.constant 0 : i32
    %c0_i32_0 = arith.constant 0 : i32
    return %arg1, %c0_i32 : i32, i32
  }
  func.func @transform_2(%arg0: i32, %arg1: i32) -> (i32, i32) {
    %c0_i32 = arith.constant 0 : i32
    %c0_i32_0 = arith.constant 0 : i32
    %c0_i32_1 = arith.constant 0 : i32
    return %c0_i32, %c0_i32_0 : i32, i32
  }
  func.func @transform_3(%arg0: i32, %arg1: i32) -> (i32, i32) {
    %c0_i32 = arith.constant 0 : i32
    %c0_i32_0 = arith.constant 0 : i32
    return %arg0, %c0_i32 : i32, i32
  }
  func.func @transform_4(%arg0: i32, %arg1: i32) -> (i32, i32) {
    %c0_i32 = arith.constant 0 : i32
    %c0_i32_0 = arith.constant 0 : i32
    %c0_i32_1 = arith.constant 0 : i32
    return %c0_i32, %c0_i32_0 : i32, i32
  }
  func.func @transform_5(%arg0: i32, %arg1: i32) -> (i32, i32) {
    %c0_i32 = arith.constant 0 : i32
    %c0_i32_0 = arith.constant 0 : i32
    %c0_i32_1 = arith.constant 0 : i32
    return %c0_i32, %c0_i32_0 : i32, i32
  }
  func.func @transform_6(%arg0: i32, %arg1: i32) -> (i32, i32) {
    %c0_i32 = arith.constant 0 : i32
    %c0_i32_0 = arith.constant 0 : i32
    return %arg0, %c0_i32 : i32, i32
  }
  func.func @transform_7(%arg0: i32, %arg1: i32) -> (i32, i32) {
    %c0_i32 = arith.constant 0 : i32
    %c0_i32_0 = arith.constant 0 : i32
    return %arg0, %c0_i32 : i32, i32
  }
}

module attributes {stable_mosaic.version = 11 : i64} {
  func.func @_matmul_res_ln_kernel(%arg0: i32, %arg1: i32, %arg2: memref<32x64xbf16, #tpu.memory_space<vmem>>, %arg3: memref<64x32xbf16, #tpu.memory_space<vmem>>, %arg4: memref<1x32xf32, #tpu.memory_space<vmem>>, %arg5: memref<32x32xf32, #tpu.memory_space<vmem>>, %arg6: memref<1x32xf32, #tpu.memory_space<vmem>>, %arg7: memref<1x32xf32, #tpu.memory_space<vmem>>, %arg8: memref<32x32xf32, #tpu.memory_space<vmem>>, %arg9: memref<32x32xbf16, #tpu.memory_space<vmem>>, %arg10: memref<32x32xf32, #tpu.memory_space<vmem>>) attributes {dimension_semantics = [#tpu.dimension_semantics<parallel>, #tpu.dimension_semantics<arbitrary>], iteration_bounds = array<i64: 1, 1>, scalar_prefetch = 0 : i64, scratch_operands = 1 : i64, tpu.core_type = #tpu.core_type<tc>, window_params = [{transform_indices = @transform_0, window_bounds = array<i64: 32, 64>}, {transform_indices = @transform_1, window_bounds = array<i64: 64, 32>}, {pipeline_mode = #tpu.pipeline_mode<synchronous>, transform_indices = @transform_2, window_bounds = array<i64: 1, 32>}, {transform_indices = @transform_3, window_bounds = array<i64: 32, 32>}, {pipeline_mode = #tpu.pipeline_mode<synchronous>, transform_indices = @transform_4, window_bounds = array<i64: 1, 32>}, {pipeline_mode = #tpu.pipeline_mode<synchronous>, transform_indices = @transform_5, window_bounds = array<i64: 1, 32>}, {transform_indices = @transform_6, window_bounds = array<i64: 32, 32>}, {transform_indices = @transform_7, window_bounds = array<i64: 32, 32>}]} {
    %c0_i32 = arith.constant 0 : i32
    %0 = arith.cmpi eq, %arg1, %c0_i32 : i32
    %1 = arith.extui %0 : i1 to i32
    %c0_i32_0 = arith.constant 0 : i32
    %2 = arith.cmpi ne, %1, %c0_i32_0 : i32
    scf.if %2 {
      %cst_10 = arith.constant 0.000000e+00 : f32
      %12 = vector.broadcast %cst_10 : f32 to vector<32x32xf32>
      %c0_11 = arith.constant 0 : index
      %c0_12 = arith.constant 0 : index
      %13 = vector.load %arg10[%c0_11, %c0_12] : memref<32x32xf32, #tpu.memory_space<vmem>>, vector<32x32xf32>
      tpu.vector_store %arg10[%c0_11, %c0_12], %12 {strides = array<i32>} : memref<32x32xf32, #tpu.memory_space<vmem>>, vector<32x32xf32>,
    } else {
    }
    %c0 = arith.constant 0 : index
    %c0_1 = arith.constant 0 : index
    %3 = vector.load %arg10[%c0, %c0_1] : memref<32x32xf32, #tpu.memory_space<vmem>>, vector<32x32xf32>
    %c0_2 = arith.constant 0 : index
    %c0_3 = arith.constant 0 : index
    %4 = vector.load %arg2[%c0_2, %c0_3] : memref<32x64xbf16, #tpu.memory_space<vmem>>, vector<32x64xbf16>
    %c0_4 = arith.constant 0 : index
    %c0_5 = arith.constant 0 : index
    %5 = vector.load %arg3[%c0_4, %c0_5] : memref<64x32xbf16, #tpu.memory_space<vmem>>, vector<64x32xbf16>
    %cst = arith.constant dense<0.000000e+00> : vector<32x32xf32>
    %6 = tpu.matmul %4, %5, %cst {dimension_numbers = #tpu.dot_dimension_numbers<[1], [0], [0], [1], [0, 0, 1, 1], [], []>} : vector<32x64xbf16>, vector<64x32xbf16>, vector<32x32xf32> -> vector<32x32xf32>
    %7 = arith.addf %3, %6 : vector<32x32xf32>
    %c0_6 = arith.constant 0 : index
    %c0_7 = arith.constant 0 : index
    %8 = vector.load %arg10[%c0_6, %c0_7] : memref<32x32xf32, #tpu.memory_space<vmem>>, vector<32x32xf32>
    tpu.vector_store %arg10[%c0_6, %c0_7], %7 {strides = array<i32>} : memref<32x32xf32, #tpu.memory_space<vmem>>, vector<32x32xf32>,
    %c0_i32_8 = arith.constant 0 : i32
    %9 = arith.cmpi eq, %arg1, %c0_i32_8 : i32
    %10 = arith.extui %9 : i1 to i32
    %c0_i32_9 = arith.constant 0 : i32
    %11 = arith.cmpi ne, %10, %c0_i32_9 : i32
    scf.if %11 {
      %c0_10 = arith.constant 0 : index
      %c0_11 = arith.constant 0 : index
      %12 = vector.load %arg10[%c0_10, %c0_11] : memref<32x32xf32, #tpu.memory_space<vmem>>, vector<32x32xf32>
      %c0_12 = arith.constant 0 : index
      %c0_13 = arith.constant 0 : index
      %13 = vector.load %arg4[%c0_12, %c0_13] : memref<1x32xf32, #tpu.memory_space<vmem>>, vector<1x32xf32>
      %14 = vector.broadcast %13 : vector<1x32xf32> to vector<32x32xf32>
      %15 = arith.addf %12, %14 : vector<32x32xf32>
      %c0_14 = arith.constant 0 : index
      %c0_15 = arith.constant 0 : index
      %16 = vector.load %arg5[%c0_14, %c0_15] : memref<32x32xf32, #tpu.memory_space<vmem>>, vector<32x32xf32>
      %17 = arith.addf %15, %16 : vector<32x32xf32>
      %cst_16 = arith.constant dense<0.000000e+00> : vector<32xf32>
      %18 = vector.multi_reduction <add>, %17, %cst_16 [1] : vector<32x32xf32> to vector<32xf32>
      %19 = vector.shape_cast %18 : vector<32xf32> to vector<32x1xf32>
      %cst_17 = arith.constant 3.200000e+01 : f32
      %20 = vector.broadcast %cst_17 : f32 to vector<32x1xf32>
      %21 = arith.divf %19, %20 : vector<32x1xf32>
      %22 = vector.broadcast %21 : vector<32x1xf32> to vector<32x32xf32>
      %23 = arith.subf %17, %22 : vector<32x32xf32>
      %24 = arith.mulf %23, %23 : vector<32x32xf32>
      %cst_18 = arith.constant dense<0.000000e+00> : vector<32xf32>
      %25 = vector.multi_reduction <add>, %24, %cst_18 [1] : vector<32x32xf32> to vector<32xf32>
      %26 = vector.shape_cast %25 : vector<32xf32> to vector<32x1xf32>
      %cst_19 = arith.constant 3.200000e+01 : f32
      %27 = vector.broadcast %cst_19 : f32 to vector<32x1xf32>
      %28 = arith.divf %26, %27 : vector<32x1xf32>
      %cst_20 = arith.constant 9.99999996E-13 : f32
      %29 = vector.broadcast %cst_20 : f32 to vector<32x1xf32>
      %30 = arith.addf %28, %29 : vector<32x1xf32>
      %31 = math.rsqrt %30 : vector<32x1xf32>
      %32 = vector.broadcast %21 : vector<32x1xf32> to vector<32x32xf32>
      %33 = arith.subf %17, %32 : vector<32x32xf32>
      %34 = vector.broadcast %31 : vector<32x1xf32> to vector<32x32xf32>
      %35 = arith.mulf %33, %34 : vector<32x32xf32>
      %c0_21 = arith.constant 0 : index
      %c0_22 = arith.constant 0 : index
      %36 = vector.load %arg6[%c0_21, %c0_22] : memref<1x32xf32, #tpu.memory_space<vmem>>, vector<1x32xf32>
      %37 = vector.broadcast %36 : vector<1x32xf32> to vector<32x32xf32>
      %38 = arith.mulf %35, %37 : vector<32x32xf32>
      %c0_23 = arith.constant 0 : index
      %c0_24 = arith.constant 0 : index
      %39 = vector.load %arg7[%c0_23, %c0_24] : memref<1x32xf32, #tpu.memory_space<vmem>>, vector<1x32xf32>
      %40 = vector.broadcast %39 : vector<1x32xf32> to vector<32x32xf32>
      %41 = arith.addf %38, %40 : vector<32x32xf32>
      %c0_25 = arith.constant 0 : index
      %c0_26 = arith.constant 0 : index
      %42 = vector.load %arg8[%c0_25, %c0_26] : memref<32x32xf32, #tpu.memory_space<vmem>>, vector<32x32xf32>
      tpu.vector_store %arg8[%c0_25, %c0_26], %41 {strides = array<i32>} : memref<32x32xf32, #tpu.memory_space<vmem>>, vector<32x32xf32>,
      %43 = arith.truncf %41 : vector<32x32xf32> to vector<32x32xbf16>
      %c0_27 = arith.constant 0 : index
      %c0_28 = arith.constant 0 : index
      %44 = vector.load %arg9[%c0_27, %c0_28] : memref<32x32xbf16, #tpu.memory_space<vmem>>, vector<32x32xbf16>
      tpu.vector_store %arg9[%c0_27, %c0_28], %43 {strides = array<i32>} : memref<32x32xbf16, #tpu.memory_space<vmem>>, vector<32x32xbf16>,
    } else {
    }
    return
  }
  func.func @transform_0(%arg0: i32, %arg1: i32) -> (i32, i32) {
    %c0_i32 = arith.constant 0 : i32
    return %arg0, %arg1 : i32, i32
  }
  func.func @transform_1(%arg0: i32, %arg1: i32) -> (i32, i32) {
    %c0_i32 = arith.constant 0 : i32
    %c0_i32_0 = arith.constant 0 : i32
    return %arg1, %c0_i32 : i32, i32
  }
  func.func @transform_2(%arg0: i32, %arg1: i32) -> (i32, i32) {
    %c0_i32 = arith.constant 0 : i32
    %c0_i32_0 = arith.constant 0 : i32
    %c0_i32_1 = arith.constant 0 : i32
    return %c0_i32, %c0_i32_0 : i32, i32
  }
  func.func @transform_3(%arg0: i32, %arg1: i32) -> (i32, i32) {
    %c0_i32 = arith.constant 0 : i32
    %c0_i32_0 = arith.constant 0 : i32
    return %arg0, %c0_i32 : i32, i32
  }
  func.func @transform_4(%arg0: i32, %arg1: i32) -> (i32, i32) {
    %c0_i32 = arith.constant 0 : i32
    %c0_i32_0 = arith.constant 0 : i32
    %c0_i32_1 = arith.constant 0 : i32
    return %c0_i32, %c0_i32_0 : i32, i32
  }
  func.func @transform_5(%arg0: i32, %arg1: i32) -> (i32, i32) {
    %c0_i32 = arith.constant 0 : i32
    %c0_i32_0 = arith.constant 0 : i32
    %c0_i32_1 = arith.constant 0 : i32
    return %c0_i32, %c0_i32_0 : i32, i32
  }
  func.func @transform_6(%arg0: i32, %arg1: i32) -> (i32, i32) {
    %c0_i32 = arith.constant 0 : i32
    %c0_i32_0 = arith.constant 0 : i32
    return %arg0, %c0_i32 : i32, i32
  }
  func.func @transform_7(%arg0: i32, %arg1: i32) -> (i32, i32) {
    %c0_i32 = arith.constant 0 : i32
    %c0_i32_0 = arith.constant 0 : i32
    return %arg0, %c0_i32 : i32, i32
  }
}

module attributes {stable_mosaic.version = 11 : i64} {
  func.func @_cross_attn_kernel(%arg0: i32, %arg1: i32, %arg2: i32, %arg3: memref<1x8x32xbf16, #tpu.memory_space<vmem>>, %arg4: memref<1x16x64xbf16, #tpu.memory_space<vmem>>, %arg5: memref<1x1x16xf32, #tpu.memory_space<vmem>>, %arg6: memref<1x8x32xbf16, #tpu.memory_space<vmem>>, %arg7: memref<1x4x16x8xf32, #tpu.memory_space<vmem>>) attributes {dimension_semantics = [#tpu.dimension_semantics<parallel>, #tpu.dimension_semantics<parallel>, #tpu.dimension_semantics<parallel>], iteration_bounds = array<i64: 2, 1, 1>, scalar_prefetch = 0 : i64, scratch_operands = 0 : i64, tpu.core_type = #tpu.core_type<tc>, window_params = [{transform_indices = @transform_0, window_bounds = array<i64: 1, 8, 32>}, {transform_indices = @transform_1, window_bounds = array<i64: 1, 16, 64>}, {transform_indices = @transform_2, window_bounds = array<i64: 1, 1, 16>}, {transform_indices = @transform_3, window_bounds = array<i64: 1, 8, 32>}, {transform_indices = @transform_4, window_bounds = array<i64: 1, 4, 16, 8>}]} {
    %c0 = arith.constant 0 : index
    %c0_0 = arith.constant 0 : index
    %c0_1 = arith.constant 0 : index
    %0 = vector.load %arg3[%c0, %c0_0, %c0_1] : memref<1x8x32xbf16, #tpu.memory_space<vmem>>, vector<1x8x32xbf16>
    %1 = vector.shape_cast %0 : vector<1x8x32xbf16> to vector<8x32xbf16>
    %c0_2 = arith.constant 0 : index
    %c0_3 = arith.constant 0 : index
    %c0_4 = arith.constant 0 : index
    %2 = vector.load %arg4[%c0_2, %c0_3, %c0_4] : memref<1x16x64xbf16, #tpu.memory_space<vmem>>, vector<1x16x64xbf16>
    %3 = vector.shape_cast %2 : vector<1x16x64xbf16> to vector<16x64xbf16>
    %c0_5 = arith.constant 0 : index
    %c0_6 = arith.constant 0 : index
    %c0_7 = arith.constant 0 : index
    %4 = vector.load %arg5[%c0_5, %c0_6, %c0_7] : memref<1x1x16xf32, #tpu.memory_space<vmem>>, vector<1x1x16xf32>
    %5 = vector.shape_cast %4 : vector<1x1x16xf32> to vector<1x16xf32>
    %6 = vector.extract_strided_slice %1 {offsets = [0, 0], sizes = [8, 8], strides = [1, 1]} : vector<8x32xbf16> to vector<8x8xbf16>
    %7 = vector.extract_strided_slice %3 {offsets = [0, 0], sizes = [16, 8], strides = [1, 1]} : vector<16x64xbf16> to vector<16x8xbf16>
    %8 = vector.extract_strided_slice %3 {offsets = [0, 8], sizes = [16, 8], strides = [1, 1]} : vector<16x64xbf16> to vector<16x8xbf16>
    %cst = arith.constant dense<0.000000e+00> : vector<8x16xf32>
    %9 = tpu.matmul %6, %7, %cst {dimension_numbers = #tpu.dot_dimension_numbers<[1], [1], [0], [0], [0, 0, 1, 0], [], []>} : vector<8x8xbf16>, vector<16x8xbf16>, vector<8x16xf32> -> vector<8x16xf32>
    %cst_8 = arith.constant 0.353553385 : f32
    %10 = vector.broadcast %cst_8 : f32 to vector<8x16xf32>
    %11 = arith.mulf %9, %10 : vector<8x16xf32>
    %12 = tpu.transpose %11, [1, 0] : vector<8x16xf32> -> vector<16x8xf32>
    %c0_9 = arith.constant 0 : index
    %c0_10 = arith.constant 0 : index
    %c0_11 = arith.constant 0 : index
    %c0_12 = arith.constant 0 : index
    %13 = vector.load %arg7[%c0_9, %c0_10, %c0_11, %c0_12] : memref<1x4x16x8xf32, #tpu.memory_space<vmem>>, vector<1x1x16x8xf32>
    %14 = vector.shape_cast %13 : vector<1x1x16x8xf32> to vector<16x8xf32>
    %15 = vector.shape_cast %12 : vector<16x8xf32> to vector<1x1x16x8xf32>
    tpu.vector_store %arg7[%c0_9, %c0_10, %c0_11, %c0_12], %15 {strides = array<i32>} : memref<1x4x16x8xf32, #tpu.memory_space<vmem>>, vector<1x1x16x8xf32>,
    %16 = vector.broadcast %5 : vector<1x16xf32> to vector<8x16xf32>
    %17 = arith.addf %11, %16 : vector<8x16xf32>
    %cst_13 = arith.constant dense<0xFF800000> : vector<8xf32>
    %18 = vector.multi_reduction <maximumf>, %17, %cst_13 [1] : vector<8x16xf32> to vector<8xf32>
    %19 = vector.shape_cast %18 : vector<8xf32> to vector<8x1xf32>
    %20 = vector.broadcast %19 : vector<8x1xf32> to vector<8x16xf32>
    %21 = arith.subf %17, %20 : vector<8x16xf32>
    %22 = math.exp %21 : vector<8x16xf32>
    %cst_14 = arith.constant dense<0.000000e+00> : vector<8xf32>
    %23 = vector.multi_reduction <add>, %22, %cst_14 [1] : vector<8x16xf32> to vector<8xf32>
    %24 = vector.shape_cast %23 : vector<8xf32> to vector<8x1xf32>
    %25 = tpu.reciprocal %24 {approx = true} : vector<8x1xf32> -> vector<8x1xf32>
    %26 = vector.broadcast %25 : vector<8x1xf32> to vector<8x16xf32>
    %27 = arith.mulf %22, %26 : vector<8x16xf32>
    %28 = arith.truncf %27 : vector<8x16xf32> to vector<8x16xbf16>
    %cst_15 = arith.constant dense<0.000000e+00> : vector<8x8xf32>
    %29 = tpu.matmul %28, %8, %cst_15 {dimension_numbers = #tpu.dot_dimension_numbers<[1], [0], [0], [1], [0, 0, 1, 1], [], []>} : vector<8x16xbf16>, vector<16x8xbf16>, vector<8x8xf32> -> vector<8x8xf32>
    %30 = vector.extract_strided_slice %1 {offsets = [0, 8], sizes = [8, 8], strides = [1, 1]} : vector<8x32xbf16> to vector<8x8xbf16>
    %31 = vector.extract_strided_slice %3 {offsets = [0, 16], sizes = [16, 8], strides = [1, 1]} : vector<16x64xbf16> to vector<16x8xbf16>
    %32 = vector.extract_strided_slice %3 {offsets = [0, 24], sizes = [16, 8], strides = [1, 1]} : vector<16x64xbf16> to vector<16x8xbf16>
    %cst_16 = arith.constant dense<0.000000e+00> : vector<8x16xf32>
    %33 = tpu.matmul %30, %31, %cst_16 {dimension_numbers = #tpu.dot_dimension_numbers<[1], [1], [0], [0], [0, 0, 1, 0], [], []>} : vector<8x8xbf16>, vector<16x8xbf16>, vector<8x16xf32> -> vector<8x16xf32>
    %cst_17 = arith.constant 0.353553385 : f32
    %34 = vector.broadcast %cst_17 : f32 to vector<8x16xf32>
    %35 = arith.mulf %33, %34 : vector<8x16xf32>
    %36 = tpu.transpose %35, [1, 0] : vector<8x16xf32> -> vector<16x8xf32>
    %c0_18 = arith.constant 0 : index
    %c1 = arith.constant 1 : index
    %c0_19 = arith.constant 0 : index
    %c0_20 = arith.constant 0 : index
    %37 = vector.load %arg7[%c0_18, %c1, %c0_19, %c0_20] : memref<1x4x16x8xf32, #tpu.memory_space<vmem>>, vector<1x1x16x8xf32>
    %38 = vector.shape_cast %37 : vector<1x1x16x8xf32> to vector<16x8xf32>
    %39 = vector.shape_cast %36 : vector<16x8xf32> to vector<1x1x16x8xf32>
    tpu.vector_store %arg7[%c0_18, %c1, %c0_19, %c0_20], %39 {strides = array<i32>} : memref<1x4x16x8xf32, #tpu.memory_space<vmem>>, vector<1x1x16x8xf32>,
    %40 = vector.broadcast %5 : vector<1x16xf32> to vector<8x16xf32>
    %41 = arith.addf %35, %40 : vector<8x16xf32>
    %cst_21 = arith.constant dense<0xFF800000> : vector<8xf32>
    %42 = vector.multi_reduction <maximumf>, %41, %cst_21 [1] : vector<8x16xf32> to vector<8xf32>
    %43 = vector.shape_cast %42 : vector<8xf32> to vector<8x1xf32>
    %44 = vector.broadcast %43 : vector<8x1xf32> to vector<8x16xf32>
    %45 = arith.subf %41, %44 : vector<8x16xf32>
    %46 = math.exp %45 : vector<8x16xf32>
    %cst_22 = arith.constant dense<0.000000e+00> : vector<8xf32>
    %47 = vector.multi_reduction <add>, %46, %cst_22 [1] : vector<8x16xf32> to vector<8xf32>
    %48 = vector.shape_cast %47 : vector<8xf32> to vector<8x1xf32>
    %49 = tpu.reciprocal %48 {approx = true} : vector<8x1xf32> -> vector<8x1xf32>
    %50 = vector.broadcast %49 : vector<8x1xf32> to vector<8x16xf32>
    %51 = arith.mulf %46, %50 : vector<8x16xf32>
    %52 = arith.truncf %51 : vector<8x16xf32> to vector<8x16xbf16>
    %cst_23 = arith.constant dense<0.000000e+00> : vector<8x8xf32>
    %53 = tpu.matmul %52, %32, %cst_23 {dimension_numbers = #tpu.dot_dimension_numbers<[1], [0], [0], [1], [0, 0, 1, 1], [], []>} : vector<8x16xbf16>, vector<16x8xbf16>, vector<8x8xf32> -> vector<8x8xf32>
    %54 = vector.extract_strided_slice %1 {offsets = [0, 16], sizes = [8, 8], strides = [1, 1]} : vector<8x32xbf16> to vector<8x8xbf16>
    %55 = vector.extract_strided_slice %3 {offsets = [0, 32], sizes = [16, 8], strides = [1, 1]} : vector<16x64xbf16> to vector<16x8xbf16>
    %56 = vector.extract_strided_slice %3 {offsets = [0, 40], sizes = [16, 8], strides = [1, 1]} : vector<16x64xbf16> to vector<16x8xbf16>
    %cst_24 = arith.constant dense<0.000000e+00> : vector<8x16xf32>
    %57 = tpu.matmul %54, %55, %cst_24 {dimension_numbers = #tpu.dot_dimension_numbers<[1], [1], [0], [0], [0, 0, 1, 0], [], []>} : vector<8x8xbf16>, vector<16x8xbf16>, vector<8x16xf32> -> vector<8x16xf32>
    %cst_25 = arith.constant 0.353553385 : f32
    %58 = vector.broadcast %cst_25 : f32 to vector<8x16xf32>
    %59 = arith.mulf %57, %58 : vector<8x16xf32>
    %60 = tpu.transpose %59, [1, 0] : vector<8x16xf32> -> vector<16x8xf32>
    %c0_26 = arith.constant 0 : index
    %c2 = arith.constant 2 : index
    %c0_27 = arith.constant 0 : index
    %c0_28 = arith.constant 0 : index
    %61 = vector.load %arg7[%c0_26, %c2, %c0_27, %c0_28] : memref<1x4x16x8xf32, #tpu.memory_space<vmem>>, vector<1x1x16x8xf32>
    %62 = vector.shape_cast %61 : vector<1x1x16x8xf32> to vector<16x8xf32>
    %63 = vector.shape_cast %60 : vector<16x8xf32> to vector<1x1x16x8xf32>
    tpu.vector_store %arg7[%c0_26, %c2, %c0_27, %c0_28], %63 {strides = array<i32>} : memref<1x4x16x8xf32, #tpu.memory_space<vmem>>, vector<1x1x16x8xf32>,
    %64 = vector.broadcast %5 : vector<1x16xf32> to vector<8x16xf32>
    %65 = arith.addf %59, %64 : vector<8x16xf32>
    %cst_29 = arith.constant dense<0xFF800000> : vector<8xf32>
    %66 = vector.multi_reduction <maximumf>, %65, %cst_29 [1] : vector<8x16xf32> to vector<8xf32>
    %67 = vector.shape_cast %66 : vector<8xf32> to vector<8x1xf32>
    %68 = vector.broadcast %67 : vector<8x1xf32> to vector<8x16xf32>
    %69 = arith.subf %65, %68 : vector<8x16xf32>
    %70 = math.exp %69 : vector<8x16xf32>
    %cst_30 = arith.constant dense<0.000000e+00> : vector<8xf32>
    %71 = vector.multi_reduction <add>, %70, %cst_30 [1] : vector<8x16xf32> to vector<8xf32>
    %72 = vector.shape_cast %71 : vector<8xf32> to vector<8x1xf32>
    %73 = tpu.reciprocal %72 {approx = true} : vector<8x1xf32> -> vector<8x1xf32>
    %74 = vector.broadcast %73 : vector<8x1xf32> to vector<8x16xf32>
    %75 = arith.mulf %70, %74 : vector<8x16xf32>
    %76 = arith.truncf %75 : vector<8x16xf32> to vector<8x16xbf16>
    %cst_31 = arith.constant dense<0.000000e+00> : vector<8x8xf32>
    %77 = tpu.matmul %76, %56, %cst_31 {dimension_numbers = #tpu.dot_dimension_numbers<[1], [0], [0], [1], [0, 0, 1, 1], [], []>} : vector<8x16xbf16>, vector<16x8xbf16>, vector<8x8xf32> -> vector<8x8xf32>
    %78 = vector.extract_strided_slice %1 {offsets = [0, 24], sizes = [8, 8], strides = [1, 1]} : vector<8x32xbf16> to vector<8x8xbf16>
    %79 = vector.extract_strided_slice %3 {offsets = [0, 48], sizes = [16, 8], strides = [1, 1]} : vector<16x64xbf16> to vector<16x8xbf16>
    %80 = vector.extract_strided_slice %3 {offsets = [0, 56], sizes = [16, 8], strides = [1, 1]} : vector<16x64xbf16> to vector<16x8xbf16>
    %cst_32 = arith.constant dense<0.000000e+00> : vector<8x16xf32>
    %81 = tpu.matmul %78, %79, %cst_32 {dimension_numbers = #tpu.dot_dimension_numbers<[1], [1], [0], [0], [0, 0, 1, 0], [], []>} : vector<8x8xbf16>, vector<16x8xbf16>, vector<8x16xf32> -> vector<8x16xf32>
    %cst_33 = arith.constant 0.353553385 : f32
    %82 = vector.broadcast %cst_33 : f32 to vector<8x16xf32>
    %83 = arith.mulf %81, %82 : vector<8x16xf32>
    %84 = tpu.transpose %83, [1, 0] : vector<8x16xf32> -> vector<16x8xf32>
    %c0_34 = arith.constant 0 : index
    %c3 = arith.constant 3 : index
    %c0_35 = arith.constant 0 : index
    %c0_36 = arith.constant 0 : index
    %85 = vector.load %arg7[%c0_34, %c3, %c0_35, %c0_36] : memref<1x4x16x8xf32, #tpu.memory_space<vmem>>, vector<1x1x16x8xf32>
    %86 = vector.shape_cast %85 : vector<1x1x16x8xf32> to vector<16x8xf32>
    %87 = vector.shape_cast %84 : vector<16x8xf32> to vector<1x1x16x8xf32>
    tpu.vector_store %arg7[%c0_34, %c3, %c0_35, %c0_36], %87 {strides = array<i32>} : memref<1x4x16x8xf32, #tpu.memory_space<vmem>>, vector<1x1x16x8xf32>,
    %88 = vector.broadcast %5 : vector<1x16xf32> to vector<8x16xf32>
    %89 = arith.addf %83, %88 : vector<8x16xf32>
    %cst_37 = arith.constant dense<0xFF800000> : vector<8xf32>
    %90 = vector.multi_reduction <maximumf>, %89, %cst_37 [1] : vector<8x16xf32> to vector<8xf32>
    %91 = vector.shape_cast %90 : vector<8xf32> to vector<8x1xf32>
    %92 = vector.broadcast %91 : vector<8x1xf32> to vector<8x16xf32>
    %93 = arith.subf %89, %92 : vector<8x16xf32>
    %94 = math.exp %93 : vector<8x16xf32>
    %cst_38 = arith.constant dense<0.000000e+00> : vector<8xf32>
    %95 = vector.multi_reduction <add>, %94, %cst_38 [1] : vector<8x16xf32> to vector<8xf32>
    %96 = vector.shape_cast %95 : vector<8xf32> to vector<8x1xf32>
    %97 = tpu.reciprocal %96 {approx = true} : vector<8x1xf32> -> vector<8x1xf32>
    %98 = vector.broadcast %97 : vector<8x1xf32> to vector<8x16xf32>
    %99 = arith.mulf %94, %98 : vector<8x16xf32>
    %100 = arith.truncf %99 : vector<8x16xf32> to vector<8x16xbf16>
    %cst_39 = arith.constant dense<0.000000e+00> : vector<8x8xf32>
    %101 = tpu.matmul %100, %80, %cst_39 {dimension_numbers = #tpu.dot_dimension_numbers<[1], [0], [0], [1], [0, 0, 1, 1], [], []>} : vector<8x16xbf16>, vector<16x8xbf16>, vector<8x8xf32> -> vector<8x8xf32>
    %102 = tpu.concatenate %29, %53, %77, %101 in 1 : vector<8x8xf32>, vector<8x8xf32>, vector<8x8xf32>, vector<8x8xf32> -> vector<8x32xf32>
    %103 = arith.truncf %102 : vector<8x32xf32> to vector<8x32xbf16>
    %c0_40 = arith.constant 0 : index
    %c0_41 = arith.constant 0 : index
    %c0_42 = arith.constant 0 : index
    %104 = vector.load %arg6[%c0_40, %c0_41, %c0_42] : memref<1x8x32xbf16, #tpu.memory_space<vmem>>, vector<1x8x32xbf16>
    %105 = vector.shape_cast %104 : vector<1x8x32xbf16> to vector<8x32xbf16>
    %106 = vector.shape_cast %103 : vector<8x32xbf16> to vector<1x8x32xbf16>
    tpu.vector_store %arg6[%c0_40, %c0_41, %c0_42], %106 {strides = array<i32>} : memref<1x8x32xbf16, #tpu.memory_space<vmem>>, vector<1x8x32xbf16>,
    return
  }
  func.func @transform_0(%arg0: i32, %arg1: i32, %arg2: i32) -> (i32, i32, i32) {
    %c0_i32 = arith.constant 0 : i32
    return %arg0, %arg2, %arg1 : i32, i32, i32
  }
  func.func @transform_1(%arg0: i32, %arg1: i32, %arg2: i32) -> (i32, i32, i32) {
    %c0_i32 = arith.constant 0 : i32
    %c0_i32_0 = arith.constant 0 : i32
    return %arg0, %c0_i32, %arg1 : i32, i32, i32
  }
  func.func @transform_2(%arg0: i32, %arg1: i32, %arg2: i32) -> (i32, i32, i32) {
    %c0_i32 = arith.constant 0 : i32
    %c0_i32_0 = arith.constant 0 : i32
    %c0_i32_1 = arith.constant 0 : i32
    return %arg0, %c0_i32, %c0_i32_0 : i32, i32, i32
  }
  func.func @transform_3(%arg0: i32, %arg1: i32, %arg2: i32) -> (i32, i32, i32) {
    %c0_i32 = arith.constant 0 : i32
    return %arg0, %arg2, %arg1 : i32, i32, i32
  }
  func.func @transform_4(%arg0: i32, %arg1: i32, %arg2: i32) -> (i32, i32, i32, i32) {
    %c0_i32 = arith.constant 0 : i32
    %c0_i32_0 = arith.constant 0 : i32
    return %arg0, %arg1, %c0_i32, %arg2 : i32, i32, i32, i32
  }
}

module attributes {stable_mosaic.version = 11 : i64} {
  func.func @_cross_attn_kernel(%arg0: i32, %arg1: i32, %arg2: i32, %arg3: memref<1x16x32xbf16, #tpu.memory_space<vmem>>, %arg4: memref<1x8x64xbf16, #tpu.memory_space<vmem>>, %arg5: memref<1x1x8xf32, #tpu.memory_space<vmem>>, %arg6: memref<1x16x32xbf16, #tpu.memory_space<vmem>>, %arg7: memref<1x4x16x8xf32, #tpu.memory_space<vmem>>) attributes {dimension_semantics = [#tpu.dimension_semantics<parallel>, #tpu.dimension_semantics<parallel>, #tpu.dimension_semantics<parallel>], iteration_bounds = array<i64: 2, 1, 1>, scalar_prefetch = 0 : i64, scratch_operands = 0 : i64, tpu.core_type = #tpu.core_type<tc>, window_params = [{transform_indices = @transform_0, window_bounds = array<i64: 1, 16, 32>}, {transform_indices = @transform_1, window_bounds = array<i64: 1, 8, 64>}, {transform_indices = @transform_2, window_bounds = array<i64: 1, 1, 8>}, {transform_indices = @transform_3, window_bounds = array<i64: 1, 16, 32>}, {transform_indices = @transform_4, window_bounds = array<i64: 1, 4, 16, 8>}]} {
    %c0 = arith.constant 0 : index
    %c0_0 = arith.constant 0 : index
    %c0_1 = arith.constant 0 : index
    %0 = vector.load %arg3[%c0, %c0_0, %c0_1] : memref<1x16x32xbf16, #tpu.memory_space<vmem>>, vector<1x16x32xbf16>
    %1 = vector.shape_cast %0 : vector<1x16x32xbf16> to vector<16x32xbf16>
    %c0_2 = arith.constant 0 : index
    %c0_3 = arith.constant 0 : index
    %c0_4 = arith.constant 0 : index
    %2 = vector.load %arg4[%c0_2, %c0_3, %c0_4] : memref<1x8x64xbf16, #tpu.memory_space<vmem>>, vector<1x8x64xbf16>
    %3 = vector.shape_cast %2 : vector<1x8x64xbf16> to vector<8x64xbf16>
    %c0_5 = arith.constant 0 : index
    %c0_6 = arith.constant 0 : index
    %c0_7 = arith.constant 0 : index
    %4 = vector.load %arg5[%c0_5, %c0_6, %c0_7] : memref<1x1x8xf32, #tpu.memory_space<vmem>>, vector<1x1x8xf32>
    %5 = vector.shape_cast %4 : vector<1x1x8xf32> to vector<1x8xf32>
    %6 = vector.extract_strided_slice %1 {offsets = [0, 0], sizes = [16, 8], strides = [1, 1]} : vector<16x32xbf16> to vector<16x8xbf16>
    %7 = vector.extract_strided_slice %3 {offsets = [0, 0], sizes = [8, 8], strides = [1, 1]} : vector<8x64xbf16> to vector<8x8xbf16>
    %8 = vector.extract_strided_slice %3 {offsets = [0, 8], sizes = [8, 8], strides = [1, 1]} : vector<8x64xbf16> to vector<8x8xbf16>
    %cst = arith.constant dense<0.000000e+00> : vector<16x8xf32>
    %9 = tpu.matmul %6, %7, %cst {dimension_numbers = #tpu.dot_dimension_numbers<[1], [1], [0], [0], [0, 0, 1, 0], [], []>} : vector<16x8xbf16>, vector<8x8xbf16>, vector<16x8xf32> -> vector<16x8xf32>
    %cst_8 = arith.constant 0.353553385 : f32
    %10 = vector.broadcast %cst_8 : f32 to vector<16x8xf32>
    %11 = arith.mulf %9, %10 : vector<16x8xf32>
    %c0_9 = arith.constant 0 : index
    %c0_10 = arith.constant 0 : index
    %c0_11 = arith.constant 0 : index
    %c0_12 = arith.constant 0 : index
    %12 = vector.load %arg7[%c0_9, %c0_10, %c0_11, %c0_12] : memref<1x4x16x8xf32, #tpu.memory_space<vmem>>, vector<1x1x16x8xf32>
    %13 = vector.shape_cast %12 : vector<1x1x16x8xf32> to vector<16x8xf32>
    %14 = vector.shape_cast %11 : vector<16x8xf32> to vector<1x1x16x8xf32>
    tpu.vector_store %arg7[%c0_9, %c0_10, %c0_11, %c0_12], %14 {strides = array<i32>} : memref<1x4x16x8xf32, #tpu.memory_space<vmem>>, vector<1x1x16x8xf32>,
    %15 = vector.broadcast %5 : vector<1x8xf32> to vector<16x8xf32>
    %16 = arith.addf %11, %15 : vector<16x8xf32>
    %cst_13 = arith.constant dense<0xFF800000> : vector<16xf32>
    %17 = vector.multi_reduction <maximumf>, %16, %cst_13 [1] : vector<16x8xf32> to vector<16xf32>
    %18 = vector.shape_cast %17 : vector<16xf32> to vector<16x1xf32>
    %19 = vector.broadcast %18 : vector<16x1xf32> to vector<16x8xf32>
    %20 = arith.subf %16, %19 : vector<16x8xf32>
    %21 = math.exp %20 : vector<16x8xf32>
    %cst_14 = arith.constant dense<0.000000e+00> : vector<16xf32>
    %22 = vector.multi_reduction <add>, %21, %cst_14 [1] : vector<16x8xf32> to vector<16xf32>
    %23 = vector.shape_cast %22 : vector<16xf32> to vector<16x1xf32>
    %24 = tpu.reciprocal %23 {approx = true} : vector<16x1xf32> -> vector<16x1xf32>
    %25 = vector.broadcast %24 : vector<16x1xf32> to vector<16x8xf32>
    %26 = arith.mulf %21, %25 : vector<16x8xf32>
    %27 = arith.truncf %26 : vector<16x8xf32> to vector<16x8xbf16>
    %cst_15 = arith.constant dense<0.000000e+00> : vector<16x8xf32>
    %28 = tpu.matmul %27, %8, %cst_15 {dimension_numbers = #tpu.dot_dimension_numbers<[1], [0], [0], [1], [0, 0, 1, 1], [], []>} : vector<16x8xbf16>, vector<8x8xbf16>, vector<16x8xf32> -> vector<16x8xf32>
    %29 = vector.extract_strided_slice %1 {offsets = [0, 8], sizes = [16, 8], strides = [1, 1]} : vector<16x32xbf16> to vector<16x8xbf16>
    %30 = vector.extract_strided_slice %3 {offsets = [0, 16], sizes = [8, 8], strides = [1, 1]} : vector<8x64xbf16> to vector<8x8xbf16>
    %31 = vector.extract_strided_slice %3 {offsets = [0, 24], sizes = [8, 8], strides = [1, 1]} : vector<8x64xbf16> to vector<8x8xbf16>
    %cst_16 = arith.constant dense<0.000000e+00> : vector<16x8xf32>
    %32 = tpu.matmul %29, %30, %cst_16 {dimension_numbers = #tpu.dot_dimension_numbers<[1], [1], [0], [0], [0, 0, 1, 0], [], []>} : vector<16x8xbf16>, vector<8x8xbf16>, vector<16x8xf32> -> vector<16x8xf32>
    %cst_17 = arith.constant 0.353553385 : f32
    %33 = vector.broadcast %cst_17 : f32 to vector<16x8xf32>
    %34 = arith.mulf %32, %33 : vector<16x8xf32>
    %c0_18 = arith.constant 0 : index
    %c1 = arith.constant 1 : index
    %c0_19 = arith.constant 0 : index
    %c0_20 = arith.constant 0 : index
    %35 = vector.load %arg7[%c0_18, %c1, %c0_19, %c0_20] : memref<1x4x16x8xf32, #tpu.memory_space<vmem>>, vector<1x1x16x8xf32>
    %36 = vector.shape_cast %35 : vector<1x1x16x8xf32> to vector<16x8xf32>
    %37 = vector.shape_cast %34 : vector<16x8xf32> to vector<1x1x16x8xf32>
    tpu.vector_store %arg7[%c0_18, %c1, %c0_19, %c0_20], %37 {strides = array<i32>} : memref<1x4x16x8xf32, #tpu.memory_space<vmem>>, vector<1x1x16x8xf32>,
    %38 = vector.broadcast %5 : vector<1x8xf32> to vector<16x8xf32>
    %39 = arith.addf %34, %38 : vector<16x8xf32>
    %cst_21 = arith.constant dense<0xFF800000> : vector<16xf32>
    %40 = vector.multi_reduction <maximumf>, %39, %cst_21 [1] : vector<16x8xf32> to vector<16xf32>
    %41 = vector.shape_cast %40 : vector<16xf32> to vector<16x1xf32>
    %42 = vector.broadcast %41 : vector<16x1xf32> to vector<16x8xf32>
    %43 = arith.subf %39, %42 : vector<16x8xf32>
    %44 = math.exp %43 : vector<16x8xf32>
    %cst_22 = arith.constant dense<0.000000e+00> : vector<16xf32>
    %45 = vector.multi_reduction <add>, %44, %cst_22 [1] : vector<16x8xf32> to vector<16xf32>
    %46 = vector.shape_cast %45 : vector<16xf32> to vector<16x1xf32>
    %47 = tpu.reciprocal %46 {approx = true} : vector<16x1xf32> -> vector<16x1xf32>
    %48 = vector.broadcast %47 : vector<16x1xf32> to vector<16x8xf32>
    %49 = arith.mulf %44, %48 : vector<16x8xf32>
    %50 = arith.truncf %49 : vector<16x8xf32> to vector<16x8xbf16>
    %cst_23 = arith.constant dense<0.000000e+00> : vector<16x8xf32>
    %51 = tpu.matmul %50, %31, %cst_23 {dimension_numbers = #tpu.dot_dimension_numbers<[1], [0], [0], [1], [0, 0, 1, 1], [], []>} : vector<16x8xbf16>, vector<8x8xbf16>, vector<16x8xf32> -> vector<16x8xf32>
    %52 = vector.extract_strided_slice %1 {offsets = [0, 16], sizes = [16, 8], strides = [1, 1]} : vector<16x32xbf16> to vector<16x8xbf16>
    %53 = vector.extract_strided_slice %3 {offsets = [0, 32], sizes = [8, 8], strides = [1, 1]} : vector<8x64xbf16> to vector<8x8xbf16>
    %54 = vector.extract_strided_slice %3 {offsets = [0, 40], sizes = [8, 8], strides = [1, 1]} : vector<8x64xbf16> to vector<8x8xbf16>
    %cst_24 = arith.constant dense<0.000000e+00> : vector<16x8xf32>
    %55 = tpu.matmul %52, %53, %cst_24 {dimension_numbers = #tpu.dot_dimension_numbers<[1], [1], [0], [0], [0, 0, 1, 0], [], []>} : vector<16x8xbf16>, vector<8x8xbf16>, vector<16x8xf32> -> vector<16x8xf32>
    %cst_25 = arith.constant 0.353553385 : f32
    %56 = vector.broadcast %cst_25 : f32 to vector<16x8xf32>
    %57 = arith.mulf %55, %56 : vector<16x8xf32>
    %c0_26 = arith.constant 0 : index
    %c2 = arith.constant 2 : index
    %c0_27 = arith.constant 0 : index
    %c0_28 = arith.constant 0 : index
    %58 = vector.load %arg7[%c0_26, %c2, %c0_27, %c0_28] : memref<1x4x16x8xf32, #tpu.memory_space<vmem>>, vector<1x1x16x8xf32>
    %59 = vector.shape_cast %58 : vector<1x1x16x8xf32> to vector<16x8xf32>
    %60 = vector.shape_cast %57 : vector<16x8xf32> to vector<1x1x16x8xf32>
    tpu.vector_store %arg7[%c0_26, %c2, %c0_27, %c0_28], %60 {strides = array<i32>} : memref<1x4x16x8xf32, #tpu.memory_space<vmem>>, vector<1x1x16x8xf32>,
    %61 = vector.broadcast %5 : vector<1x8xf32> to vector<16x8xf32>
    %62 = arith.addf %57, %61 : vector<16x8xf32>
    %cst_29 = arith.constant dense<0xFF800000> : vector<16xf32>
    %63 = vector.multi_reduction <maximumf>, %62, %cst_29 [1] : vector<16x8xf32> to vector<16xf32>
    %64 = vector.shape_cast %63 : vector<16xf32> to vector<16x1xf32>
    %65 = vector.broadcast %64 : vector<16x1xf32> to vector<16x8xf32>
    %66 = arith.subf %62, %65 : vector<16x8xf32>
    %67 = math.exp %66 : vector<16x8xf32>
    %cst_30 = arith.constant dense<0.000000e+00> : vector<16xf32>
    %68 = vector.multi_reduction <add>, %67, %cst_30 [1] : vector<16x8xf32> to vector<16xf32>
    %69 = vector.shape_cast %68 : vector<16xf32> to vector<16x1xf32>
    %70 = tpu.reciprocal %69 {approx = true} : vector<16x1xf32> -> vector<16x1xf32>
    %71 = vector.broadcast %70 : vector<16x1xf32> to vector<16x8xf32>
    %72 = arith.mulf %67, %71 : vector<16x8xf32>
    %73 = arith.truncf %72 : vector<16x8xf32> to vector<16x8xbf16>
    %cst_31 = arith.constant dense<0.000000e+00> : vector<16x8xf32>
    %74 = tpu.matmul %73, %54, %cst_31 {dimension_numbers = #tpu.dot_dimension_numbers<[1], [0], [0], [1], [0, 0, 1, 1], [], []>} : vector<16x8xbf16>, vector<8x8xbf16>, vector<16x8xf32> -> vector<16x8xf32>
    %75 = vector.extract_strided_slice %1 {offsets = [0, 24], sizes = [16, 8], strides = [1, 1]} : vector<16x32xbf16> to vector<16x8xbf16>
    %76 = vector.extract_strided_slice %3 {offsets = [0, 48], sizes = [8, 8], strides = [1, 1]} : vector<8x64xbf16> to vector<8x8xbf16>
    %77 = vector.extract_strided_slice %3 {offsets = [0, 56], sizes = [8, 8], strides = [1, 1]} : vector<8x64xbf16> to vector<8x8xbf16>
    %cst_32 = arith.constant dense<0.000000e+00> : vector<16x8xf32>
    %78 = tpu.matmul %75, %76, %cst_32 {dimension_numbers = #tpu.dot_dimension_numbers<[1], [1], [0], [0], [0, 0, 1, 0], [], []>} : vector<16x8xbf16>, vector<8x8xbf16>, vector<16x8xf32> -> vector<16x8xf32>
    %cst_33 = arith.constant 0.353553385 : f32
    %79 = vector.broadcast %cst_33 : f32 to vector<16x8xf32>
    %80 = arith.mulf %78, %79 : vector<16x8xf32>
    %c0_34 = arith.constant 0 : index
    %c3 = arith.constant 3 : index
    %c0_35 = arith.constant 0 : index
    %c0_36 = arith.constant 0 : index
    %81 = vector.load %arg7[%c0_34, %c3, %c0_35, %c0_36] : memref<1x4x16x8xf32, #tpu.memory_space<vmem>>, vector<1x1x16x8xf32>
    %82 = vector.shape_cast %81 : vector<1x1x16x8xf32> to vector<16x8xf32>
    %83 = vector.shape_cast %80 : vector<16x8xf32> to vector<1x1x16x8xf32>
    tpu.vector_store %arg7[%c0_34, %c3, %c0_35, %c0_36], %83 {strides = array<i32>} : memref<1x4x16x8xf32, #tpu.memory_space<vmem>>, vector<1x1x16x8xf32>,
    %84 = vector.broadcast %5 : vector<1x8xf32> to vector<16x8xf32>
    %85 = arith.addf %80, %84 : vector<16x8xf32>
    %cst_37 = arith.constant dense<0xFF800000> : vector<16xf32>
    %86 = vector.multi_reduction <maximumf>, %85, %cst_37 [1] : vector<16x8xf32> to vector<16xf32>
    %87 = vector.shape_cast %86 : vector<16xf32> to vector<16x1xf32>
    %88 = vector.broadcast %87 : vector<16x1xf32> to vector<16x8xf32>
    %89 = arith.subf %85, %88 : vector<16x8xf32>
    %90 = math.exp %89 : vector<16x8xf32>
    %cst_38 = arith.constant dense<0.000000e+00> : vector<16xf32>
    %91 = vector.multi_reduction <add>, %90, %cst_38 [1] : vector<16x8xf32> to vector<16xf32>
    %92 = vector.shape_cast %91 : vector<16xf32> to vector<16x1xf32>
    %93 = tpu.reciprocal %92 {approx = true} : vector<16x1xf32> -> vector<16x1xf32>
    %94 = vector.broadcast %93 : vector<16x1xf32> to vector<16x8xf32>
    %95 = arith.mulf %90, %94 : vector<16x8xf32>
    %96 = arith.truncf %95 : vector<16x8xf32> to vector<16x8xbf16>
    %cst_39 = arith.constant dense<0.000000e+00> : vector<16x8xf32>
    %97 = tpu.matmul %96, %77, %cst_39 {dimension_numbers = #tpu.dot_dimension_numbers<[1], [0], [0], [1], [0, 0, 1, 1], [], []>} : vector<16x8xbf16>, vector<8x8xbf16>, vector<16x8xf32> -> vector<16x8xf32>
    %98 = tpu.concatenate %28, %51, %74, %97 in 1 : vector<16x8xf32>, vector<16x8xf32>, vector<16x8xf32>, vector<16x8xf32> -> vector<16x32xf32>
    %99 = arith.truncf %98 : vector<16x32xf32> to vector<16x32xbf16>
    %c0_40 = arith.constant 0 : index
    %c0_41 = arith.constant 0 : index
    %c0_42 = arith.constant 0 : index
    %100 = vector.load %arg6[%c0_40, %c0_41, %c0_42] : memref<1x16x32xbf16, #tpu.memory_space<vmem>>, vector<1x16x32xbf16>
    %101 = vector.shape_cast %100 : vector<1x16x32xbf16> to vector<16x32xbf16>
    %102 = vector.shape_cast %99 : vector<16x32xbf16> to vector<1x16x32xbf16>
    tpu.vector_store %arg6[%c0_40, %c0_41, %c0_42], %102 {strides = array<i32>} : memref<1x16x32xbf16, #tpu.memory_space<vmem>>, vector<1x16x32xbf16>,
    return
  }
  func.func @transform_0(%arg0: i32, %arg1: i32, %arg2: i32) -> (i32, i32, i32) {
    %c0_i32 = arith.constant 0 : i32
    return %arg0, %arg2, %arg1 : i32, i32, i32
  }
  func.func @transform_1(%arg0: i32, %arg1: i32, %arg2: i32) -> (i32, i32, i32) {
    %c0_i32 = arith.constant 0 : i32
    %c0_i32_0 = arith.constant 0 : i32
    return %arg0, %c0_i32, %arg1 : i32, i32, i32
  }
  func.func @transform_2(%arg0: i32, %arg1: i32, %arg2: i32) -> (i32, i32, i32) {
    %c0_i32 = arith.constant 0 : i32
    %c0_i32_0 = arith.constant 0 : i32
    %c0_i32_1 = arith.constant 0 : i32
    return %arg0, %c0_i32, %c0_i32_0 : i32, i32, i32
  }
  func.func @transform_3(%arg0: i32, %arg1: i32, %arg2: i32) -> (i32, i32, i32) {
    %c0_i32 = arith.constant 0 : i32
    return %arg0, %arg2, %arg1 : i32, i32, i32
  }
  func.func @transform_4(%arg0: i32, %arg1: i32, %arg2: i32) -> (i32, i32, i32, i32) {
    %c0_i32 = arith.constant 0 : i32
    %c0_i32_0 = arith.constant 0 : i32
    return %arg0, %arg1, %arg2, %c0_i32 : i32, i32, i32, i32
  }
}

module attributes {stable_mosaic.version = 11 : i64} {
  func.func @_matmul_res_ln_kernel(%arg0: i32, %arg1: i32, %arg2: memref<16x64xbf16, #tpu.memory_space<vmem>>, %arg3: memref<64x32xbf16, #tpu.memory_space<vmem>>, %arg4: memref<1x32xf32, #tpu.memory_space<vmem>>, %arg5: memref<16x32xf32, #tpu.memory_space<vmem>>, %arg6: memref<1x32xf32, #tpu.memory_space<vmem>>, %arg7: memref<1x32xf32, #tpu.memory_space<vmem>>, %arg8: memref<16x32xf32, #tpu.memory_space<vmem>>, %arg9: memref<16x32xbf16, #tpu.memory_space<vmem>>, %arg10: memref<16x32xf32, #tpu.memory_space<vmem>>) attributes {dimension_semantics = [#tpu.dimension_semantics<parallel>, #tpu.dimension_semantics<arbitrary>], iteration_bounds = array<i64: 1, 1>, scalar_prefetch = 0 : i64, scratch_operands = 1 : i64, tpu.core_type = #tpu.core_type<tc>, window_params = [{transform_indices = @transform_0, window_bounds = array<i64: 16, 64>}, {transform_indices = @transform_1, window_bounds = array<i64: 64, 32>}, {pipeline_mode = #tpu.pipeline_mode<synchronous>, transform_indices = @transform_2, window_bounds = array<i64: 1, 32>}, {transform_indices = @transform_3, window_bounds = array<i64: 16, 32>}, {pipeline_mode = #tpu.pipeline_mode<synchronous>, transform_indices = @transform_4, window_bounds = array<i64: 1, 32>}, {pipeline_mode = #tpu.pipeline_mode<synchronous>, transform_indices = @transform_5, window_bounds = array<i64: 1, 32>}, {transform_indices = @transform_6, window_bounds = array<i64: 16, 32>}, {transform_indices = @transform_7, window_bounds = array<i64: 16, 32>}]} {
    %c0_i32 = arith.constant 0 : i32
    %0 = arith.cmpi eq, %arg1, %c0_i32 : i32
    %1 = arith.extui %0 : i1 to i32
    %c0_i32_0 = arith.constant 0 : i32
    %2 = arith.cmpi ne, %1, %c0_i32_0 : i32
    scf.if %2 {
      %cst_10 = arith.constant 0.000000e+00 : f32
      %12 = vector.broadcast %cst_10 : f32 to vector<16x32xf32>
      %c0_11 = arith.constant 0 : index
      %c0_12 = arith.constant 0 : index
      %13 = vector.load %arg10[%c0_11, %c0_12] : memref<16x32xf32, #tpu.memory_space<vmem>>, vector<16x32xf32>
      tpu.vector_store %arg10[%c0_11, %c0_12], %12 {strides = array<i32>} : memref<16x32xf32, #tpu.memory_space<vmem>>, vector<16x32xf32>,
    } else {
    }
    %c0 = arith.constant 0 : index
    %c0_1 = arith.constant 0 : index
    %3 = vector.load %arg10[%c0, %c0_1] : memref<16x32xf32, #tpu.memory_space<vmem>>, vector<16x32xf32>
    %c0_2 = arith.constant 0 : index
    %c0_3 = arith.constant 0 : index
    %4 = vector.load %arg2[%c0_2, %c0_3] : memref<16x64xbf16, #tpu.memory_space<vmem>>, vector<16x64xbf16>
    %c0_4 = arith.constant 0 : index
    %c0_5 = arith.constant 0 : index
    %5 = vector.load %arg3[%c0_4, %c0_5] : memref<64x32xbf16, #tpu.memory_space<vmem>>, vector<64x32xbf16>
    %cst = arith.constant dense<0.000000e+00> : vector<16x32xf32>
    %6 = tpu.matmul %4, %5, %cst {dimension_numbers = #tpu.dot_dimension_numbers<[1], [0], [0], [1], [0, 0, 1, 1], [], []>} : vector<16x64xbf16>, vector<64x32xbf16>, vector<16x32xf32> -> vector<16x32xf32>
    %7 = arith.addf %3, %6 : vector<16x32xf32>
    %c0_6 = arith.constant 0 : index
    %c0_7 = arith.constant 0 : index
    %8 = vector.load %arg10[%c0_6, %c0_7] : memref<16x32xf32, #tpu.memory_space<vmem>>, vector<16x32xf32>
    tpu.vector_store %arg10[%c0_6, %c0_7], %7 {strides = array<i32>} : memref<16x32xf32, #tpu.memory_space<vmem>>, vector<16x32xf32>,
    %c0_i32_8 = arith.constant 0 : i32
    %9 = arith.cmpi eq, %arg1, %c0_i32_8 : i32
    %10 = arith.extui %9 : i1 to i32
    %c0_i32_9 = arith.constant 0 : i32
    %11 = arith.cmpi ne, %10, %c0_i32_9 : i32
    scf.if %11 {
      %c0_10 = arith.constant 0 : index
      %c0_11 = arith.constant 0 : index
      %12 = vector.load %arg10[%c0_10, %c0_11] : memref<16x32xf32, #tpu.memory_space<vmem>>, vector<16x32xf32>
      %c0_12 = arith.constant 0 : index
      %c0_13 = arith.constant 0 : index
      %13 = vector.load %arg4[%c0_12, %c0_13] : memref<1x32xf32, #tpu.memory_space<vmem>>, vector<1x32xf32>
      %14 = vector.broadcast %13 : vector<1x32xf32> to vector<16x32xf32>
      %15 = arith.addf %12, %14 : vector<16x32xf32>
      %c0_14 = arith.constant 0 : index
      %c0_15 = arith.constant 0 : index
      %16 = vector.load %arg5[%c0_14, %c0_15] : memref<16x32xf32, #tpu.memory_space<vmem>>, vector<16x32xf32>
      %17 = arith.addf %15, %16 : vector<16x32xf32>
      %cst_16 = arith.constant dense<0.000000e+00> : vector<16xf32>
      %18 = vector.multi_reduction <add>, %17, %cst_16 [1] : vector<16x32xf32> to vector<16xf32>
      %19 = vector.shape_cast %18 : vector<16xf32> to vector<16x1xf32>
      %cst_17 = arith.constant 3.200000e+01 : f32
      %20 = vector.broadcast %cst_17 : f32 to vector<16x1xf32>
      %21 = arith.divf %19, %20 : vector<16x1xf32>
      %22 = vector.broadcast %21 : vector<16x1xf32> to vector<16x32xf32>
      %23 = arith.subf %17, %22 : vector<16x32xf32>
      %24 = arith.mulf %23, %23 : vector<16x32xf32>
      %cst_18 = arith.constant dense<0.000000e+00> : vector<16xf32>
      %25 = vector.multi_reduction <add>, %24, %cst_18 [1] : vector<16x32xf32> to vector<16xf32>
      %26 = vector.shape_cast %25 : vector<16xf32> to vector<16x1xf32>
      %cst_19 = arith.constant 3.200000e+01 : f32
      %27 = vector.broadcast %cst_19 : f32 to vector<16x1xf32>
      %28 = arith.divf %26, %27 : vector<16x1xf32>
      %cst_20 = arith.constant 9.99999996E-13 : f32
      %29 = vector.broadcast %cst_20 : f32 to vector<16x1xf32>
      %30 = arith.addf %28, %29 : vector<16x1xf32>
      %31 = math.rsqrt %30 : vector<16x1xf32>
      %32 = vector.broadcast %21 : vector<16x1xf32> to vector<16x32xf32>
      %33 = arith.subf %17, %32 : vector<16x32xf32>
      %34 = vector.broadcast %31 : vector<16x1xf32> to vector<16x32xf32>
      %35 = arith.mulf %33, %34 : vector<16x32xf32>
      %c0_21 = arith.constant 0 : index
      %c0_22 = arith.constant 0 : index
      %36 = vector.load %arg6[%c0_21, %c0_22] : memref<1x32xf32, #tpu.memory_space<vmem>>, vector<1x32xf32>
      %37 = vector.broadcast %36 : vector<1x32xf32> to vector<16x32xf32>
      %38 = arith.mulf %35, %37 : vector<16x32xf32>
      %c0_23 = arith.constant 0 : index
      %c0_24 = arith.constant 0 : index
      %39 = vector.load %arg7[%c0_23, %c0_24] : memref<1x32xf32, #tpu.memory_space<vmem>>, vector<1x32xf32>
      %40 = vector.broadcast %39 : vector<1x32xf32> to vector<16x32xf32>
      %41 = arith.addf %38, %40 : vector<16x32xf32>
      %c0_25 = arith.constant 0 : index
      %c0_26 = arith.constant 0 : index
      %42 = vector.load %arg8[%c0_25, %c0_26] : memref<16x32xf32, #tpu.memory_space<vmem>>, vector<16x32xf32>
      tpu.vector_store %arg8[%c0_25, %c0_26], %41 {strides = array<i32>} : memref<16x32xf32, #tpu.memory_space<vmem>>, vector<16x32xf32>,
      %43 = arith.truncf %41 : vector<16x32xf32> to vector<16x32xbf16>
      %c0_27 = arith.constant 0 : index
      %c0_28 = arith.constant 0 : index
      %44 = vector.load %arg9[%c0_27, %c0_28] : memref<16x32xbf16, #tpu.memory_space<vmem>>, vector<16x32xbf16>
      tpu.vector_store %arg9[%c0_27, %c0_28], %43 {strides = array<i32>} : memref<16x32xbf16, #tpu.memory_space<vmem>>, vector<16x32xbf16>,
    } else {
    }
    return
  }
  func.func @transform_0(%arg0: i32, %arg1: i32) -> (i32, i32) {
    %c0_i32 = arith.constant 0 : i32
    return %arg0, %arg1 : i32, i32
  }
  func.func @transform_1(%arg0: i32, %arg1: i32) -> (i32, i32) {
    %c0_i32 = arith.constant 0 : i32
    %c0_i32_0 = arith.constant 0 : i32
    return %arg1, %c0_i32 : i32, i32
  }
  func.func @transform_2(%arg0: i32, %arg1: i32) -> (i32, i32) {
    %c0_i32 = arith.constant 0 : i32
    %c0_i32_0 = arith.constant 0 : i32
    %c0_i32_1 = arith.constant 0 : i32
    return %c0_i32, %c0_i32_0 : i32, i32
  }
  func.func @transform_3(%arg0: i32, %arg1: i32) -> (i32, i32) {
    %c0_i32 = arith.constant 0 : i32
    %c0_i32_0 = arith.constant 0 : i32
    return %arg0, %c0_i32 : i32, i32
  }
  func.func @transform_4(%arg0: i32, %arg1: i32) -> (i32, i32) {
    %c0_i32 = arith.constant 0 : i32
    %c0_i32_0 = arith.constant 0 : i32
    %c0_i32_1 = arith.constant 0 : i32
    return %c0_i32, %c0_i32_0 : i32, i32
  }
  func.func @transform_5(%arg0: i32, %arg1: i32) -> (i32, i32) {
    %c0_i32 = arith.constant 0 : i32
    %c0_i32_0 = arith.constant 0 : i32
    %c0_i32_1 = arith.constant 0 : i32
    return %c0_i32, %c0_i32_0 : i32, i32
  }
  func.func @transform_6(%arg0: i32, %arg1: i32) -> (i32, i32) {
    %c0_i32 = arith.constant 0 : i32
    %c0_i32_0 = arith.constant 0 : i32
    return %arg0, %c0_i32 : i32, i32
  }
  func.func @transform_7(%arg0: i32, %arg1: i32) -> (i32, i32) {
    %c0_i32 = arith.constant 0 : i32
    %c0_i32_0 = arith.constant 0 : i32
    return %arg0, %c0_i32 : i32, i32
  }
}

</mosaic_0001>

<llo_original>
// kernel: cross_pair_forward.34
$region0: #{cross_pair_forward.34}
  #allocation0 [shape = 'u32[]', space=smem, size = 0x4, offset = 0x4, fixed_abs, tag = 'smem constant byte address 0x4 - core index']
  #allocation1 [shape = 'u32[144,128]{1,0:T(1,128)}', space=vmem, size = 0x12000, scoped, tag = 'internal scratch']
  #allocation2 [shape = 'f32[16,32]{1,0:T(8,128)}', space=vmem, size = 0x2000, scoped, tag = 'scratch operand']
  %s0 = inlined_call_operand.vmem [shape: bf16[16,32], index: 0, kind: input, shape index: {}]
  %s1 = inlined_call_operand.vmem [shape: bf16[32,32], index: 1, kind: input, shape index: {}]
  %s2 = inlined_call_operand.vmem [shape: bf16[16,32], index: 2, kind: output, shape index: {}]
  %s3 = sld [smem:[#allocation0]]
  $region26: #{cross_pair_forward.34} parent=0
    _
  %s5 = ssub.s32 1, %s3
  %s6 = scalar_select 0, %s5, %s3
  // Predicated region
  $region2: #{cross_pair_forward.34} parent=0 // pred_check
    _
  $region3: #{cross_pair_forward.34} parent=0 // pred_check_branch
    %8 = sbr.rel (0) target = $region5
  $region4: #{cross_pair_forward.34} parent=0 // pred_region
    _
  $region5: #{cross_pair_forward.34} parent=0 // pred_fallthru
    _
  // Predicated region
  $region6: #{cross_pair_forward.34} parent=0 // pred_check
    _
  $region7: #{cross_pair_forward.34} parent=0 // pred_check_branch
    %10 = sbr.rel (0) target = $region9
  $region8: #{cross_pair_forward.34} parent=0 // pred_region
    _
  $region9: #{cross_pair_forward.34} parent=0 // pred_fallthru
    _
  %p12 = scmp.eq.s32.totalorder 0, 0
  // Predicated region
  $region10: #{cross_pair_forward.34} parent=0 // pred_check
    %p13 = pneg %p12
  $region11: #{cross_pair_forward.34} parent=0 // pred_check_branch
    %15 = sbr.rel (%p13) target = $region13
  $region12: #{cross_pair_forward.34} parent=0 // pred_region
    %vm16 = vcmask 261120
    %17 = vst.msk [vmem:[#allocation2] sm:$0xff] %vm16, 0.0
    %18 = vst.msk [vmem:[#allocation2 + $0x8] sm:$0xff] %vm16, 0.0
  $region13: #{cross_pair_forward.34} parent=0 // pred_fallthru
    _
  %v19 = vld [vmem:[#allocation2] sm:$0xff]
  %v20 = vld [vmem:[#allocation2 + $0x8] sm:$0xff]
  %v21 = vld [vmem:[%s0] sm:$0xf]
  %v22 = vld [vmem:[%s0 + $0x4] sm:$0xf]
  %v23 = vld [vmem:[%s1] sm:$0xf]
  %v24 = vld [vmem:[%s1 + $0x4] sm:$0xf]
  %v25 = vld [vmem:[%s1 + $0x8] sm:$0xf]
  %v26 = vld [vmem:[%s1 + $0xc] sm:$0xf]
  %v29 = vunpack.c.l.b16 %v21
  %v30 = vunpack.c.l.b16 %v22
  %v31 = vpack.c.b16 %v30, %v29
  %v36 = vunpack.c.l.b16 %v23
  %v37 = vunpack.c.l.b16 %v24
  %v38 = vunpack.c.l.b16 %v25
  %v39 = vunpack.c.l.b16 %v26
  %v40 = vpack.c.b16 %v37, %v36
  %v41 = vpack.c.b16 %v39, %v38
  %vm44 = vcmask 261120
  %v46 = vsel %vm44, %v31, 0
  %48 = vmatprep.subr.bf16.mxu0 0
  %49 = vmatpush1.bf16.msra.mxu0 %v40
  %50 = vmatprep.subr.bf16.mxu0 0
  %51 = vmatpush1.bf16.msra.mxu0 %v41
  %52 = vmatprep.subr.bf16.mxu0 0
  %53 = vmatpush1.bf16.msra.mxu0 0
  %54 = vmatprep.subr.bf16.mxu0 0
  %55 = vmatpush1.bf16.msra.mxu0 0
  %56 = vmatprep.subr.bf16.mxu0 0
  %57 = vmatpush1.bf16.msra.mxu0 0
  %58 = vmatprep.subr.bf16.mxu0 0
  %59 = vmatpush1.bf16.msra.mxu0 0
  %60 = vmatprep.subr.bf16.mxu0 0
  %61 = vmatpush1.bf16.msra.mxu0 0
  %62 = vmatprep.subr.bf16.mxu0 0
  %63 = vmatpush1.bf16.msra.mxu0 0
  %64 = vmatprep.subr.bf16.mxu0 0
  %65 = vmatpush1.bf16.msra.mxu0 0
  %66 = vmatprep.subr.bf16.mxu0 0
  %67 = vmatpush1.bf16.msra.mxu0 0
  %68 = vmatprep.subr.bf16.mxu0 0
  %69 = vmatpush1.bf16.msra.mxu0 0
  %70 = vmatprep.subr.bf16.mxu0 0
  %71 = vmatpush1.bf16.msra.mxu0 0
  %72 = vmatprep.subr.bf16.mxu0 0
  %73 = vmatpush1.bf16.msra.mxu0 0
  %74 = vmatprep.subr.bf16.mxu0 0
  %75 = vmatpush1.bf16.msra.mxu0 0
  %76 = vmatprep.subr.bf16.mxu0 0
  %77 = vmatpush1.bf16.msra.mxu0 0
  %78 = vmatprep.subr.bf16.mxu0 0
  %79 = vmatpush1.bf16.msra.mxu0 0
  %80 = vmatprep.mubr.bf16.mxu0 0
  %81 = vmatmul.mubr.bf16.gmra.mrb[0].mxu0 %v46
  %v82 = vpop.f32.mrb[0].mxu0
  %v83 = vadd.f32 0.0, %v82
  %v84 = vpop.f32.mrb[0].mxu0
  %v85 = vpop.f32.mrb[0].mxu0
  %v86 = vadd.f32 0.0, %v85
  %v87 = vpop.f32.mrb[0].mxu0
  %88 = vdwg.mxu0
  %v89 = vadd.f32 %v19, %v83
  %v90 = vadd.f32 %v20, %v86
  %91 = vst.msk [vmem:[#allocation2] sm:$0xff] %vm44, %v89
  %92 = vst.msk [vmem:[#allocation2 + $0x8] sm:$0xff] %vm44, %v90
  // Predicated region
  $region14: #{cross_pair_forward.34} parent=0 // pred_check
    %p93 = pneg %p12
  $region15: #{cross_pair_forward.34} parent=0 // pred_check_branch
    %95 = sbr.rel (%p93) target = $region17
  $region16: #{cross_pair_forward.34} parent=0 // pred_region
    %v96 = vld [vmem:[#allocation2] sm:$0xff]
    %v97 = vld [vmem:[#allocation2 + $0x8] sm:$0xff]
    %v98 = vpack.c.bf16 %v97, %v96
    %v100 = vunpack.c.l.b16 %v98
    %v101 = vunpack.c.h.b16 %v98
    %v102 = vpack.c.b16 %v100, %v100
    %v103 = vpack.c.b16 %v101, %v101
    %vm106 = vcmask 257024
    %107 = vst.msk [vmem:[%s2] sm:$0xf] %vm106, %v102
    %108 = vst.msk [vmem:[%s2 + $0x4] sm:$0xf] %vm106, %v103
  $region17: #{cross_pair_forward.34} parent=0 // pred_fallthru
    _
  // Predicated region
  $region18: #{cross_pair_forward.34} parent=0 // pred_check
    _
  $region19: #{cross_pair_forward.34} parent=0 // pred_check_branch
    %110 = sbr.rel (0) target = $region21
  $region20: #{cross_pair_forward.34} parent=0 // pred_region
    _
  $region21: #{cross_pair_forward.34} parent=0 // pred_fallthru
    _
  // Predicated region
  $region22: #{cross_pair_forward.34} parent=0 // pred_check
    _
  $region23: #{cross_pair_forward.34} parent=0 // pred_check_branch
    %112 = sbr.rel (0) target = $region25
  $region24: #{cross_pair_forward.34} parent=0 // pred_region
    _
  $region25: #{cross_pair_forward.34} parent=0 // pred_fallthru
    _

// kernel: cross_pair_forward.27
$region0: #{cross_pair_forward.27}
  #allocation0 [shape = 'u32[]', space=smem, size = 0x4, offset = 0x4, fixed_abs, tag = 'smem constant byte address 0x4 - core index']
  #allocation1 [shape = 'u32[144,128]{1,0:T(1,128)}', space=vmem, size = 0x12000, scoped, tag = 'internal scratch']
  %s0 = inlined_call_operand.vmem [shape: f32[16,32], index: 0, kind: input, shape index: {}]
  %s1 = inlined_call_operand.vmem [shape: f32[1,32], index: 1, kind: input, shape index: {}]
  %s2 = inlined_call_operand.vmem [shape: f32[1,32], index: 2, kind: input, shape index: {}]
  %s3 = inlined_call_operand.vmem [shape: f32[16,32], index: 3, kind: output, shape index: {0}]
  %s4 = inlined_call_operand.vmem [shape: bf16[16,32], index: 4, kind: output, shape index: {1}]
  %5 = xla_tuple %s3, %s4
  %s6 = sld [smem:[#allocation0]]
  $region30: #{cross_pair_forward.27} parent=0
    _
  %s8 = ssub.s32 1, %s6
  %s9 = scalar_select 0, %s8, %s6
  // Predicated region
  $region2: #{cross_pair_forward.27} parent=0 // pred_check
    _
  $region3: #{cross_pair_forward.27} parent=0 // pred_check_branch
    %11 = sbr.rel (0) target = $region5
  $region4: #{cross_pair_forward.27} parent=0 // pred_region
    _
  $region5: #{cross_pair_forward.27} parent=0 // pred_fallthru
    _
  // Predicated region
  $region6: #{cross_pair_forward.27} parent=0 // pred_check
    _
  $region7: #{cross_pair_forward.27} parent=0 // pred_check_branch
    %13 = sbr.rel (0) target = $region9
  $region8: #{cross_pair_forward.27} parent=0 // pred_region
    _
  $region9: #{cross_pair_forward.27} parent=0 // pred_fallthru
    _
  // Predicated region
  $region10: #{cross_pair_forward.27} parent=0 // pred_check
    _
  $region11: #{cross_pair_forward.27} parent=0 // pred_check_branch
    %15 = sbr.rel (0) target = $region13
  $region12: #{cross_pair_forward.27} parent=0 // pred_region
    _
  $region13: #{cross_pair_forward.27} parent=0 // pred_fallthru
    _
  %v16 = vld [vmem:[%s0] sm:$0xff]
  %v17 = vld [vmem:[%s0 + $0x8] sm:$0xff]
  %vm18 = vcmask 261120
  %v19 = vsel %vm18, %v16, 0.0
  %20 = vadd.xlane.f32.xlu0 %v19
  %v21 = vpop.xlane.xlu0 %20
  %v22 = vsel %vm18, %v17, 0.0
  %23 = vadd.xlane.f32.xlu0 %v22
  %v24 = vpop.xlane.xlu0 %23
  %v25 = vrcp.pop 32.0
  %v26 = vmul.f32 %v21, %v25
  %v27 = vmul.f32 %v24, %v25
  %v28 = vsub.f32 %v16, %v26
  %v29 = vsub.f32 %v17, %v27
  %v30 = vmul.f32 %v28, %v28
  %v31 = vmul.f32 %v29, %v29
  %v32 = vsel %vm18, %v30, 0.0
  %33 = vadd.xlane.f32.xlu0 %v32
  %v34 = vpop.xlane.xlu0 %33
  %v35 = vsel %vm18, %v31, 0.0
  %36 = vadd.xlane.f32.xlu0 %v35
  %v37 = vpop.xlane.xlu0 %36
  %v38 = vmul.f32 %v34, %v25
  %v39 = vmul.f32 %v37, %v25
  %v40 = vadd.f32 %v38, 1e-05
  %v41 = vadd.f32 %v39, 1e-05
  %v42 = vrsqrt.pop %v40
  %v43 = vrsqrt.pop %v41
  %v44 = vmul.f32 %v28, %v42
  %v45 = vmul.f32 %v29, %v43
  %v46 = vld [vmem:[%s1] sm:$0x1]
  %v48 = vlaneseq
  %v49 = vshrl.u32 %v48, 7
  %v50 = vsub.s32 0, %v49
  %v51 = vrot.slane %v46, %v50
  %v53 = vmul.f32 %v44, %v51
  %v54 = vmul.f32 %v45, %v51
  %v55 = vld [vmem:[%s2] sm:$0x1]
  %v57 = vlaneseq
  %v58 = vshrl.u32 %v57, 7
  %v59 = vsub.s32 0, %v58
  %v60 = vrot.slane %v55, %v59
  %v62 = vadd.f32 %v53, %v60
  %v63 = vadd.f32 %v54, %v60
  %64 = vst.msk [vmem:[%s3] sm:$0xff] %vm18, %v62
  %65 = vst.msk [vmem:[%s3 + $0x8] sm:$0xff] %vm18, %v63
  %v66 = vpack.c.bf16 %v63, %v62
  %v68 = vunpack.c.l.b16 %v66
  %v69 = vunpack.c.h.b16 %v66
  %v70 = vpack.c.b16 %v68, %v68
  %v71 = vpack.c.b16 %v69, %v69
  %vm74 = vcmask 257024
  %75 = vst.msk [vmem:[%s4] sm:$0xf] %vm74, %v70
  %76 = vst.msk [vmem:[%s4 + $0x4] sm:$0xf] %vm74, %v71
  // Predicated region
  $region14: #{cross_pair_forward.27} parent=0 // pred_check
    _
  $region15: #{cross_pair_forward.27} parent=0 // pred_check_branch
    %78 = sbr.rel (0) target = $region17
  $region16: #{cross_pair_forward.27} parent=0 // pred_region
    _
  $region17: #{cross_pair_forward.27} parent=0 // pred_fallthru
    _
  // Predicated region
  $region18: #{cross_pair_forward.27} parent=0 // pred_check
    _
  $region19: #{cross_pair_forward.27} parent=0 // pred_check_branch
    %80 = sbr.rel (0) target = $region21
  $region20: #{cross_pair_forward.27} parent=0 // pred_region
    _
  $region21: #{cross_pair_forward.27} parent=0 // pred_fallthru
    _
  // Predicated region
  $region22: #{cross_pair_forward.27} parent=0 // pred_check
    _
  $region23: #{cross_pair_forward.27} parent=0 // pred_check_branch
    %82 = sbr.rel (0) target = $region25
  $region24: #{cross_pair_forward.27} parent=0 // pred_region
    _
  $region25: #{cross_pair_forward.27} parent=0 // pred_fallthru
    _
  // Predicated region
  $region26: #{cross_pair_forward.27} parent=0 // pred_check
    _
  $region27: #{cross_pair_forward.27} parent=0 // pred_check_branch
    %84 = sbr.rel (0) target = $region29
  $region28: #{cross_pair_forward.27} parent=0 // pred_region
    _
  $region29: #{cross_pair_forward.27} parent=0 // pred_fallthru
    _

// kernel: cross_pair_forward.29
$region0: #{cross_pair_forward.29}
  #allocation0 [shape = 'u32[]', space=smem, size = 0x4, offset = 0x4, fixed_abs, tag = 'smem constant byte address 0x4 - core index']
  #allocation1 [shape = 'u32[144,128]{1,0:T(1,128)}', space=vmem, size = 0x12000, scoped, tag = 'internal scratch']
  #allocation2 [shape = 'f32[16,64]{1,0:T(8,128)}', space=vmem, size = 0x2000, scoped, tag = 'scratch operand']
  %s0 = inlined_call_operand.vmem [shape: bf16[16,32], index: 0, kind: input, shape index: {}]
  %s1 = inlined_call_operand.vmem [shape: bf16[32,64], index: 1, kind: input, shape index: {}]
  %s2 = inlined_call_operand.vmem [shape: bf16[16,64], index: 2, kind: output, shape index: {}]
  %s3 = sld [smem:[#allocation0]]
  $region26: #{cross_pair_forward.29} parent=0
    _
  %s5 = ssub.s32 1, %s3
  %s6 = scalar_select 0, %s5, %s3
  // Predicated region
  $region2: #{cross_pair_forward.29} parent=0 // pred_check
    _
  $region3: #{cross_pair_forward.29} parent=0 // pred_check_branch
    %8 = sbr.rel (0) target = $region5
  $region4: #{cross_pair_forward.29} parent=0 // pred_region
    _
  $region5: #{cross_pair_forward.29} parent=0 // pred_fallthru
    _
  // Predicated region
  $region6: #{cross_pair_forward.29} parent=0 // pred_check
    _
  $region7: #{cross_pair_forward.29} parent=0 // pred_check_branch
    %10 = sbr.rel (0) target = $region9
  $region8: #{cross_pair_forward.29} parent=0 // pred_region
    _
  $region9: #{cross_pair_forward.29} parent=0 // pred_fallthru
    _
  %p12 = scmp.eq.s32.totalorder 0, 0
  // Predicated region
  $region10: #{cross_pair_forward.29} parent=0 // pred_check
    %p13 = pneg %p12
  $region11: #{cross_pair_forward.29} parent=0 // pred_check_branch
    %15 = sbr.rel (%p13) target = $region13
  $region12: #{cross_pair_forward.29} parent=0 // pred_region
    %vm16 = vcmask 523264
    %17 = vst.msk [vmem:[#allocation2] sm:$0xff] %vm16, 0.0
    %18 = vst.msk [vmem:[#allocation2 + $0x8] sm:$0xff] %vm16, 0.0
  $region13: #{cross_pair_forward.29} parent=0 // pred_fallthru
    _
  %v19 = vld [vmem:[#allocation2] sm:$0xff]
  %v20 = vld [vmem:[#allocation2 + $0x8] sm:$0xff]
  %v21 = vld [vmem:[%s0] sm:$0xf]
  %v22 = vld [vmem:[%s0 + $0x4] sm:$0xf]
  %v23 = vld [vmem:[%s1] sm:$0xf]
  %v24 = vld [vmem:[%s1 + $0x4] sm:$0xf]
  %v25 = vld [vmem:[%s1 + $0x8] sm:$0xf]
  %v26 = vld [vmem:[%s1 + $0xc] sm:$0xf]
  %v29 = vunpack.c.l.b16 %v21
  %v30 = vunpack.c.l.b16 %v22
  %v31 = vpack.c.b16 %v30, %v29
  %v36 = vunpack.c.l.b16 %v23
  %v37 = vunpack.c.l.b16 %v24
  %v38 = vunpack.c.l.b16 %v25
  %v39 = vunpack.c.l.b16 %v26
  %v40 = vpack.c.b16 %v37, %v36
  %v41 = vpack.c.b16 %v39, %v38
  %vm44 = vcmask 261120
  %v46 = vsel %vm44, %v31, 0
  %48 = vmatprep.subr.bf16.mxu0 0
  %49 = vmatpush1.bf16.msra.mxu0 %v40
  %50 = vmatprep.subr.bf16.mxu0 0
  %51 = vmatpush1.bf16.msra.mxu0 %v41
  %52 = vmatprep.subr.bf16.mxu0 0
  %53 = vmatpush1.bf16.msra.mxu0 0
  %54 = vmatprep.subr.bf16.mxu0 0
  %55 = vmatpush1.bf16.msra.mxu0 0
  %56 = vmatprep.subr.bf16.mxu0 0
  %57 = vmatpush1.bf16.msra.mxu0 0
  %58 = vmatprep.subr.bf16.mxu0 0
  %59 = vmatpush1.bf16.msra.mxu0 0
  %60 = vmatprep.subr.bf16.mxu0 0
  %61 = vmatpush1.bf16.msra.mxu0 0
  %62 = vmatprep.subr.bf16.mxu0 0
  %63 = vmatpush1.bf16.msra.mxu0 0
  %64 = vmatprep.subr.bf16.mxu0 0
  %65 = vmatpush1.bf16.msra.mxu0 0
  %66 = vmatprep.subr.bf16.mxu0 0
  %67 = vmatpush1.bf16.msra.mxu0 0
  %68 = vmatprep.subr.bf16.mxu0 0
  %69 = vmatpush1.bf16.msra.mxu0 0
  %70 = vmatprep.subr.bf16.mxu0 0
  %71 = vmatpush1.bf16.msra.mxu0 0
  %72 = vmatprep.subr.bf16.mxu0 0
  %73 = vmatpush1.bf16.msra.mxu0 0
  %74 = vmatprep.subr.bf16.mxu0 0
  %75 = vmatpush1.bf16.msra.mxu0 0
  %76 = vmatprep.subr.bf16.mxu0 0
  %77 = vmatpush1.bf16.msra.mxu0 0
  %78 = vmatprep.subr.bf16.mxu0 0
  %79 = vmatpush1.bf16.msra.mxu0 0
  %80 = vmatprep.mubr.bf16.mxu0 0
  %81 = vmatmul.mubr.bf16.gmra.mrb[0].mxu0 %v46
  %v82 = vpop.f32.mrb[0].mxu0
  %v83 = vadd.f32 0.0, %v82
  %v84 = vpop.f32.mrb[0].mxu0
  %v85 = vpop.f32.mrb[0].mxu0
  %v86 = vadd.f32 0.0, %v85
  %v87 = vpop.f32.mrb[0].mxu0
  %88 = vdwg.mxu0
  %v89 = vadd.f32 %v19, %v83
  %v90 = vadd.f32 %v20, %v86
  %vm91 = vcmask 523264
  %92 = vst.msk [vmem:[#allocation2] sm:$0xff] %vm91, %v89
  %93 = vst.msk [vmem:[#allocation2 + $0x8] sm:$0xff] %vm91, %v90
  // Predicated region
  $region14: #{cross_pair_forward.29} parent=0 // pred_check
    %p94 = pneg %p12
  $region15: #{cross_pair_forward.29} parent=0 // pred_check_branch
    %96 = sbr.rel (%p94) target = $region17
  $region16: #{cross_pair_forward.29} parent=0 // pred_region
    %v97 = vld [vmem:[#allocation2] sm:$0xff]
    %v98 = vld [vmem:[#allocation2 + $0x8] sm:$0xff]
    %v99 = vpack.c.bf16 %v98, %v97
    %v101 = vunpack.c.l.b16 %v99
    %v102 = vunpack.c.h.b16 %v99
    %v103 = vpack.c.b16 %v101, %v101
    %v104 = vpack.c.b16 %v102, %v102
    %vm107 = vcmask 519168
    %108 = vst.msk [vmem:[%s2] sm:$0xf] %vm107, %v103
    %109 = vst.msk [vmem:[%s2 + $0x4] sm:$0xf] %vm107, %v104
  $region17: #{cross_pair_forward.29} parent=0 // pred_fallthru
    _
  // Predicated region
  $region18: #{cross_pair_forward.29} parent=0 // pred_check
    _
  $region19: #{cross_pair_forward.29} parent=0 // pred_check_branch
    %111 = sbr.rel (0) target = $region21
  $region20: #{cross_pair_forward.29} parent=0 // pred_region
    _
  $region21: #{cross_pair_forward.29} parent=0 // pred_fallthru
    _
  // Predicated region
  $region22: #{cross_pair_forward.29} parent=0 // pred_check
    _
  $region23: #{cross_pair_forward.29} parent=0 // pred_check_branch
    %113 = sbr.rel (0) target = $region25
  $region24: #{cross_pair_forward.29} parent=0 // pred_region
    _
  $region25: #{cross_pair_forward.29} parent=0 // pred_fallthru
    _

// kernel: cross_pair_forward.26
$region0: #{cross_pair_forward.26}
  #allocation0 [shape = 'u32[]', space=smem, size = 0x4, offset = 0x4, fixed_abs, tag = 'smem constant byte address 0x4 - core index']
  #allocation1 [shape = 'u32[144,128]{1,0:T(1,128)}', space=vmem, size = 0x12000, scoped, tag = 'internal scratch']
  %s0 = inlined_call_operand.vmem [shape: f32[32,32], index: 0, kind: input, shape index: {}]
  %s1 = inlined_call_operand.vmem [shape: f32[1,32], index: 1, kind: input, shape index: {}]
  %s2 = inlined_call_operand.vmem [shape: f32[1,32], index: 2, kind: input, shape index: {}]
  %s3 = inlined_call_operand.vmem [shape: f32[32,32], index: 3, kind: output, shape index: {0}]
  %s4 = inlined_call_operand.vmem [shape: bf16[32,32], index: 4, kind: output, shape index: {1}]
  %5 = xla_tuple %s3, %s4
  %s6 = sld [smem:[#allocation0]]
  $region30: #{cross_pair_forward.26} parent=0
    _
  %s8 = ssub.s32 1, %s6
  %s9 = scalar_select 0, %s8, %s6
  // Predicated region
  $region2: #{cross_pair_forward.26} parent=0 // pred_check
    _
  $region3: #{cross_pair_forward.26} parent=0 // pred_check_branch
    %11 = sbr.rel (0) target = $region5
  $region4: #{cross_pair_forward.26} parent=0 // pred_region
    _
  $region5: #{cross_pair_forward.26} parent=0 // pred_fallthru
    _
  // Predicated region
  $region6: #{cross_pair_forward.26} parent=0 // pred_check
    _
  $region7: #{cross_pair_forward.26} parent=0 // pred_check_branch
    %13 = sbr.rel (0) target = $region9
  $region8: #{cross_pair_forward.26} parent=0 // pred_region
    _
  $region9: #{cross_pair_forward.26} parent=0 // pred_fallthru
    _
  // Predicated region
  $region10: #{cross_pair_forward.26} parent=0 // pred_check
    _
  $region11: #{cross_pair_forward.26} parent=0 // pred_check_branch
    %15 = sbr.rel (0) target = $region13
  $region12: #{cross_pair_forward.26} parent=0 // pred_region
    _
  $region13: #{cross_pair_forward.26} parent=0 // pred_fallthru
    _
  %v16 = vld [vmem:[%s0] sm:$0xff]
  %v17 = vld [vmem:[%s0 + $0x8] sm:$0xff]
  %v18 = vld [vmem:[%s0 + $0x10] sm:$0xff]
  %v19 = vld [vmem:[%s0 + $0x18] sm:$0xff]
  %vm20 = vcmask 261120
  %v21 = vsel %vm20, %v16, 0.0
  %22 = vadd.xlane.f32.xlu0 %v21
  %v23 = vpop.xlane.xlu0 %22
  %v24 = vsel %vm20, %v17, 0.0
  %25 = vadd.xlane.f32.xlu0 %v24
  %v26 = vpop.xlane.xlu0 %25
  %v27 = vsel %vm20, %v18, 0.0
  %28 = vadd.xlane.f32.xlu0 %v27
  %v29 = vpop.xlane.xlu0 %28
  %v30 = vsel %vm20, %v19, 0.0
  %31 = vadd.xlane.f32.xlu0 %v30
  %v32 = vpop.xlane.xlu0 %31
  %v33 = vrcp.pop 32.0
  %v34 = vmul.f32 %v23, %v33
  %v35 = vmul.f32 %v26, %v33
  %v36 = vmul.f32 %v29, %v33
  %v37 = vmul.f32 %v32, %v33
  %v38 = vsub.f32 %v16, %v34
  %v39 = vsub.f32 %v17, %v35
  %v40 = vsub.f32 %v18, %v36
  %v41 = vsub.f32 %v19, %v37
  %v42 = vmul.f32 %v38, %v38
  %v43 = vmul.f32 %v39, %v39
  %v44 = vmul.f32 %v40, %v40
  %v45 = vmul.f32 %v41, %v41
  %v46 = vsel %vm20, %v42, 0.0
  %47 = vadd.xlane.f32.xlu0 %v46
  %v48 = vpop.xlane.xlu0 %47
  %v49 = vsel %vm20, %v43, 0.0
  %50 = vadd.xlane.f32.xlu0 %v49
  %v51 = vpop.xlane.xlu0 %50
  %v52 = vsel %vm20, %v44, 0.0
  %53 = vadd.xlane.f32.xlu0 %v52
  %v54 = vpop.xlane.xlu0 %53
  %v55 = vsel %vm20, %v45, 0.0
  %56 = vadd.xlane.f32.xlu0 %v55
  %v57 = vpop.xlane.xlu0 %56
  %v58 = vmul.f32 %v48, %v33
  %v59 = vmul.f32 %v51, %v33
  %v60 = vmul.f32 %v54, %v33
  %v61 = vmul.f32 %v57, %v33
  %v62 = vadd.f32 %v58, 1e-05
  %v63 = vadd.f32 %v59, 1e-05
  %v64 = vadd.f32 %v60, 1e-05
  %v65 = vadd.f32 %v61, 1e-05
  %v66 = vrsqrt.pop %v62
  %v67 = vrsqrt.pop %v63
  %v68 = vrsqrt.pop %v64
  %v69 = vrsqrt.pop %v65
  %v70 = vmul.f32 %v38, %v66
  %v71 = vmul.f32 %v39, %v67
  %v72 = vmul.f32 %v40, %v68
  %v73 = vmul.f32 %v41, %v69
  %v74 = vld [vmem:[%s1] sm:$0x1]
  %v76 = vlaneseq
  %v77 = vshrl.u32 %v76, 7
  %v78 = vsub.s32 0, %v77
  %v79 = vrot.slane %v74, %v78
  %v81 = vmul.f32 %v70, %v79
  %v82 = vmul.f32 %v71, %v79
  %v83 = vmul.f32 %v72, %v79
  %v84 = vmul.f32 %v73, %v79
  %v85 = vld [vmem:[%s2] sm:$0x1]
  %v87 = vlaneseq
  %v88 = vshrl.u32 %v87, 7
  %v89 = vsub.s32 0, %v88
  %v90 = vrot.slane %v85, %v89
  %v92 = vadd.f32 %v81, %v90
  %v93 = vadd.f32 %v82, %v90
  %v94 = vadd.f32 %v83, %v90
  %v95 = vadd.f32 %v84, %v90
  %96 = vst.msk [vmem:[%s3] sm:$0xff] %vm20, %v92
  %97 = vst.msk [vmem:[%s3 + $0x8] sm:$0xff] %vm20, %v93
  %98 = vst.msk [vmem:[%s3 + $0x10] sm:$0xff] %vm20, %v94
  %99 = vst.msk [vmem:[%s3 + $0x18] sm:$0xff] %vm20, %v95
  %v100 = vpack.c.bf16 %v93, %v92
  %v101 = vpack.c.bf16 %v95, %v94
  %v104 = vunpack.c.l.b16 %v100
  %v105 = vunpack.c.h.b16 %v100
  %v106 = vunpack.c.l.b16 %v101
  %v107 = vunpack.c.h.b16 %v101
  %v108 = vpack.c.b16 %v104, %v104
  %v109 = vpack.c.b16 %v105, %v105
  %v110 = vpack.c.b16 %v106, %v106
  %v111 = vpack.c.b16 %v107, %v107
  %vm116 = vcmask 257024
  %117 = vst.msk [vmem:[%s4] sm:$0xf] %vm116, %v108
  %118 = vst.msk [vmem:[%s4 + $0x4] sm:$0xf] %vm116, %v109
  %119 = vst.msk [vmem:[%s4 + $0x8] sm:$0xf] %vm116, %v110
  %120 = vst.msk [vmem:[%s4 + $0xc] sm:$0xf] %vm116, %v111
  // Predicated region
  $region14: #{cross_pair_forward.26} parent=0 // pred_check
    _
  $region15: #{cross_pair_forward.26} parent=0 // pred_check_branch
    %122 = sbr.rel (0) target = $region17
  $region16: #{cross_pair_forward.26} parent=0 // pred_region
    _
  $region17: #{cross_pair_forward.26} parent=0 // pred_fallthru
    _
  // Predicated region
  $region18: #{cross_pair_forward.26} parent=0 // pred_check
    _
  $region19: #{cross_pair_forward.26} parent=0 // pred_check_branch
    %124 = sbr.rel (0) target = $region21
  $region20: #{cross_pair_forward.26} parent=0 // pred_region
    _
  $region21: #{cross_pair_forward.26} parent=0 // pred_fallthru
    _
  // Predicated region
  $region22: #{cross_pair_forward.26} parent=0 // pred_check
    _
  $region23: #{cross_pair_forward.26} parent=0 // pred_check_branch
    %126 = sbr.rel (0) target = $region25
  $region24: #{cross_pair_forward.26} parent=0 // pred_region
    _
  $region25: #{cross_pair_forward.26} parent=0 // pred_fallthru
    _
  // Predicated region
  $region26: #{cross_pair_forward.26} parent=0 // pred_check
    _
  $region27: #{cross_pair_forward.26} parent=0 // pred_check_branch
    %128 = sbr.rel (0) target = $region29
  $region28: #{cross_pair_forward.26} parent=0 // pred_region
    _
  $region29: #{cross_pair_forward.26} parent=0 // pred_fallthru
    _

// kernel: cross_pair_forward.28
$region0: #{cross_pair_forward.28}
  #allocation0 [shape = 'u32[]', space=smem, size = 0x4, offset = 0x4, fixed_abs, tag = 'smem constant byte address 0x4 - core index']
  #allocation1 [shape = 'u32[144,128]{1,0:T(1,128)}', space=vmem, size = 0x12000, scoped, tag = 'internal scratch']
  #allocation2 [shape = 'f32[32,32]{1,0:T(8,128)}', space=vmem, size = 0x4000, scoped, tag = 'scratch operand']
  %s0 = inlined_call_operand.vmem [shape: bf16[32,32], index: 0, kind: input, shape index: {}]
  %s1 = inlined_call_operand.vmem [shape: bf16[32,32], index: 1, kind: input, shape index: {}]
  %s2 = inlined_call_operand.vmem [shape: bf16[32,32], index: 2, kind: output, shape index: {}]
  %s3 = sld [smem:[#allocation0]]
  $region26: #{cross_pair_forward.28} parent=0
    _
  %s5 = ssub.s32 1, %s3
  %s6 = scalar_select 0, %s5, %s3
  // Predicated region
  $region2: #{cross_pair_forward.28} parent=0 // pred_check
    _
  $region3: #{cross_pair_forward.28} parent=0 // pred_check_branch
    %8 = sbr.rel (0) target = $region5
  $region4: #{cross_pair_forward.28} parent=0 // pred_region
    _
  $region5: #{cross_pair_forward.28} parent=0 // pred_fallthru
    _
  // Predicated region
  $region6: #{cross_pair_forward.28} parent=0 // pred_check
    _
  $region7: #{cross_pair_forward.28} parent=0 // pred_check_branch
    %10 = sbr.rel (0) target = $region9
  $region8: #{cross_pair_forward.28} parent=0 // pred_region
    _
  $region9: #{cross_pair_forward.28} parent=0 // pred_fallthru
    _
  %p12 = scmp.eq.s32.totalorder 0, 0
  // Predicated region
  $region10: #{cross_pair_forward.28} parent=0 // pred_check
    %p13 = pneg %p12
  $region11: #{cross_pair_forward.28} parent=0 // pred_check_branch
    %15 = sbr.rel (%p13) target = $region13
  $region12: #{cross_pair_forward.28} parent=0 // pred_region
    %vm16 = vcmask 261120
    %17 = vst.msk [vmem:[#allocation2] sm:$0xff] %vm16, 0.0
    %18 = vst.msk [vmem:[#allocation2 + $0x8] sm:$0xff] %vm16, 0.0
    %19 = vst.msk [vmem:[#allocation2 + $0x10] sm:$0xff] %vm16, 0.0
    %20 = vst.msk [vmem:[#allocation2 + $0x18] sm:$0xff] %vm16, 0.0
  $region13: #{cross_pair_forward.28} parent=0 // pred_fallthru
    _
  %v21 = vld [vmem:[#allocation2] sm:$0xff]
  %v22 = vld [vmem:[#allocation2 + $0x8] sm:$0xff]
  %v23 = vld [vmem:[#allocation2 + $0x10] sm:$0xff]
  %v24 = vld [vmem:[#allocation2 + $0x18] sm:$0xff]
  %v25 = vld [vmem:[%s0] sm:$0xf]
  %v26 = vld [vmem:[%s0 + $0x4] sm:$0xf]
  %v27 = vld [vmem:[%s0 + $0x8] sm:$0xf]
  %v28 = vld [vmem:[%s0 + $0xc] sm:$0xf]
  %v29 = vld [vmem:[%s1] sm:$0xf]
  %v30 = vld [vmem:[%s1 + $0x4] sm:$0xf]
  %v31 = vld [vmem:[%s1 + $0x8] sm:$0xf]
  %v32 = vld [vmem:[%s1 + $0xc] sm:$0xf]
  %v37 = vunpack.c.l.b16 %v25
  %v38 = vunpack.c.l.b16 %v26
  %v39 = vunpack.c.l.b16 %v27
  %v40 = vunpack.c.l.b16 %v28
  %v41 = vpack.c.b16 %v38, %v37
  %v42 = vpack.c.b16 %v40, %v39
  %v47 = vunpack.c.l.b16 %v29
  %v48 = vunpack.c.l.b16 %v30
  %v49 = vunpack.c.l.b16 %v31
  %v50 = vunpack.c.l.b16 %v32
  %v51 = vpack.c.b16 %v48, %v47
  %v52 = vpack.c.b16 %v50, %v49
  %vm55 = vcmask 261120
  %v57 = vsel %vm55, %v41, 0
  %v60 = vsel %vm55, %v42, 0
  %62 = vmatprep.subr.bf16.mxu0 0
  %63 = vmatpush1.bf16.msra.mxu0 %v51
  %64 = vmatprep.subr.bf16.mxu0 0
  %65 = vmatpush1.bf16.msra.mxu0 %v52
  %66 = vmatprep.subr.bf16.mxu0 0
  %67 = vmatpush1.bf16.msra.mxu0 0
  %68 = vmatprep.subr.bf16.mxu0 0
  %69 = vmatpush1.bf16.msra.mxu0 0
  %70 = vmatprep.subr.bf16.mxu0 0
  %71 = vmatpush1.bf16.msra.mxu0 0
  %72 = vmatprep.subr.bf16.mxu0 0
  %73 = vmatpush1.bf16.msra.mxu0 0
  %74 = vmatprep.subr.bf16.mxu0 0
  %75 = vmatpush1.bf16.msra.mxu0 0
  %76 = vmatprep.subr.bf16.mxu0 0
  %77 = vmatpush1.bf16.msra.mxu0 0
  %78 = vmatprep.subr.bf16.mxu0 0
  %79 = vmatpush1.bf16.msra.mxu0 0
  %80 = vmatprep.subr.bf16.mxu0 0
  %81 = vmatpush1.bf16.msra.mxu0 0
  %82 = vmatprep.subr.bf16.mxu0 0
  %83 = vmatpush1.bf16.msra.mxu0 0
  %84 = vmatprep.subr.bf16.mxu0 0
  %85 = vmatpush1.bf16.msra.mxu0 0
  %86 = vmatprep.subr.bf16.mxu0 0
  %87 = vmatpush1.bf16.msra.mxu0 0
  %88 = vmatprep.subr.bf16.mxu0 0
  %89 = vmatpush1.bf16.msra.mxu0 0
  %90 = vmatprep.subr.bf16.mxu0 0
  %91 = vmatpush1.bf16.msra.mxu0 0
  %92 = vmatprep.subr.bf16.mxu0 0
  %93 = vmatpush1.bf16.msra.mxu0 0
  %94 = vmatprep.mubr.bf16.mxu0 0
  %95 = vmatmul.mubr.bf16.gmra.mrb[0].mxu0 %v57
  %v96 = vpop.f32.mrb[0].mxu0
  %v97 = vadd.f32 0.0, %v96
  %v98 = vpop.f32.mrb[0].mxu0
  %v99 = vpop.f32.mrb[0].mxu0
  %v100 = vadd.f32 0.0, %v99
  %v101 = vpop.f32.mrb[0].mxu0
  %102 = vmatprep.mubr.bf16.mxu0 0
  %103 = vmatmul.mubr.bf16.gmra.mrb[0].mxu0 %v60
  %v104 = vpop.f32.mrb[0].mxu0
  %v105 = vadd.f32 0.0, %v104
  %v106 = vpop.f32.mrb[0].mxu0
  %v107 = vpop.f32.mrb[0].mxu0
  %v108 = vadd.f32 0.0, %v107
  %v109 = vpop.f32.mrb[0].mxu0
  %110 = vdwg.mxu0
  %v111 = vadd.f32 %v21, %v97
  %v112 = vadd.f32 %v22, %v100
  %v113 = vadd.f32 %v23, %v105
  %v114 = vadd.f32 %v24, %v108
  %115 = vst.msk [vmem:[#allocation2] sm:$0xff] %vm55, %v111
  %116 = vst.msk [vmem:[#allocation2 + $0x8] sm:$0xff] %vm55, %v112
  %117 = vst.msk [vmem:[#allocation2 + $0x10] sm:$0xff] %vm55, %v113
  %118 = vst.msk [vmem:[#allocation2 + $0x18] sm:$0xff] %vm55, %v114
  // Predicated region
  $region14: #{cross_pair_forward.28} parent=0 // pred_check
    %p119 = pneg %p12
  $region15: #{cross_pair_forward.28} parent=0 // pred_check_branch
    %121 = sbr.rel (%p119) target = $region17
  $region16: #{cross_pair_forward.28} parent=0 // pred_region
    %v122 = vld [vmem:[#allocation2] sm:$0xff]
    %v123 = vld [vmem:[#allocation2 + $0x8] sm:$0xff]
    %v124 = vld [vmem:[#allocation2 + $0x10] sm:$0xff]
    %v125 = vld [vmem:[#allocation2 + $0x18] sm:$0xff]
    %v126 = vpack.c.bf16 %v123, %v122
    %v127 = vpack.c.bf16 %v125, %v124
    %v130 = vunpack.c.l.b16 %v126
    %v131 = vunpack.c.h.b16 %v126
    %v132 = vunpack.c.l.b16 %v127
    %v133 = vunpack.c.h.b16 %v127
    %v134 = vpack.c.b16 %v130, %v130
    %v135 = vpack.c.b16 %v131, %v131
    %v136 = vpack.c.b16 %v132, %v132
    %v137 = vpack.c.b16 %v133, %v133
    %vm142 = vcmask 257024
    %143 = vst.msk [vmem:[%s2] sm:$0xf] %vm142, %v134
    %144 = vst.msk [vmem:[%s2 + $0x4] sm:$0xf] %vm142, %v135
    %145 = vst.msk [vmem:[%s2 + $0x8] sm:$0xf] %vm142, %v136
    %146 = vst.msk [vmem:[%s2 + $0xc] sm:$0xf] %vm142, %v137
  $region17: #{cross_pair_forward.28} parent=0 // pred_fallthru
    _
  // Predicated region
  $region18: #{cross_pair_forward.28} parent=0 // pred_check
    _
  $region19: #{cross_pair_forward.28} parent=0 // pred_check_branch
    %148 = sbr.rel (0) target = $region21
  $region20: #{cross_pair_forward.28} parent=0 // pred_region
    _
  $region21: #{cross_pair_forward.28} parent=0 // pred_fallthru
    _
  // Predicated region
  $region22: #{cross_pair_forward.28} parent=0 // pred_check
    _
  $region23: #{cross_pair_forward.28} parent=0 // pred_check_branch
    %150 = sbr.rel (0) target = $region25
  $region24: #{cross_pair_forward.28} parent=0 // pred_region
    _
  $region25: #{cross_pair_forward.28} parent=0 // pred_fallthru
    _

// kernel: cross_pair_forward.35
$region0: #{cross_pair_forward.35}
  #allocation0 [shape = 'u32[]', space=smem, size = 0x4, offset = 0x4, fixed_abs, tag = 'smem constant byte address 0x4 - core index']
  #allocation1 [shape = 'u32[144,128]{1,0:T(1,128)}', space=vmem, size = 0x12000, scoped, tag = 'internal scratch']
  #allocation2 [shape = 'f32[32,64]{1,0:T(8,128)}', space=vmem, size = 0x4000, scoped, tag = 'scratch operand']
  %s0 = inlined_call_operand.vmem [shape: bf16[32,32], index: 0, kind: input, shape index: {}]
  %s1 = inlined_call_operand.vmem [shape: bf16[32,64], index: 1, kind: input, shape index: {}]
  %s2 = inlined_call_operand.vmem [shape: bf16[32,64], index: 2, kind: output, shape index: {}]
  %s3 = sld [smem:[#allocation0]]
  $region26: #{cross_pair_forward.35} parent=0
    _
  %s5 = ssub.s32 1, %s3
  %s6 = scalar_select 0, %s5, %s3
  // Predicated region
  $region2: #{cross_pair_forward.35} parent=0 // pred_check
    _
  $region3: #{cross_pair_forward.35} parent=0 // pred_check_branch
    %8 = sbr.rel (0) target = $region5
  $region4: #{cross_pair_forward.35} parent=0 // pred_region
    _
  $region5: #{cross_pair_forward.35} parent=0 // pred_fallthru
    _
  // Predicated region
  $region6: #{cross_pair_forward.35} parent=0 // pred_check
    _
  $region7: #{cross_pair_forward.35} parent=0 // pred_check_branch
    %10 = sbr.rel (0) target = $region9
  $region8: #{cross_pair_forward.35} parent=0 // pred_region
    _
  $region9: #{cross_pair_forward.35} parent=0 // pred_fallthru
    _
  %p12 = scmp.eq.s32.totalorder 0, 0
  // Predicated region
  $region10: #{cross_pair_forward.35} parent=0 // pred_check
    %p13 = pneg %p12
  $region11: #{cross_pair_forward.35} parent=0 // pred_check_branch
    %15 = sbr.rel (%p13) target = $region13
  $region12: #{cross_pair_forward.35} parent=0 // pred_region
    %vm16 = vcmask 523264
    %17 = vst.msk [vmem:[#allocation2] sm:$0xff] %vm16, 0.0
    %18 = vst.msk [vmem:[#allocation2 + $0x8] sm:$0xff] %vm16, 0.0
    %19 = vst.msk [vmem:[#allocation2 + $0x10] sm:$0xff] %vm16, 0.0
    %20 = vst.msk [vmem:[#allocation2 + $0x18] sm:$0xff] %vm16, 0.0
  $region13: #{cross_pair_forward.35} parent=0 // pred_fallthru
    _
  %v21 = vld [vmem:[#allocation2] sm:$0xff]
  %v22 = vld [vmem:[#allocation2 + $0x8] sm:$0xff]
  %v23 = vld [vmem:[#allocation2 + $0x10] sm:$0xff]
  %v24 = vld [vmem:[#allocation2 + $0x18] sm:$0xff]
  %v25 = vld [vmem:[%s0] sm:$0xf]
  %v26 = vld [vmem:[%s0 + $0x4] sm:$0xf]
  %v27 = vld [vmem:[%s0 + $0x8] sm:$0xf]
  %v28 = vld [vmem:[%s0 + $0xc] sm:$0xf]
  %v29 = vld [vmem:[%s1] sm:$0xf]
  %v30 = vld [vmem:[%s1 + $0x4] sm:$0xf]
  %v31 = vld [vmem:[%s1 + $0x8] sm:$0xf]
  %v32 = vld [vmem:[%s1 + $0xc] sm:$0xf]
  %v37 = vunpack.c.l.b16 %v25
  %v38 = vunpack.c.l.b16 %v26
  %v39 = vunpack.c.l.b16 %v27
  %v40 = vunpack.c.l.b16 %v28
  %v41 = vpack.c.b16 %v38, %v37
  %v42 = vpack.c.b16 %v40, %v39
  %v47 = vunpack.c.l.b16 %v29
  %v48 = vunpack.c.l.b16 %v30
  %v49 = vunpack.c.l.b16 %v31
  %v50 = vunpack.c.l.b16 %v32
  %v51 = vpack.c.b16 %v48, %v47
  %v52 = vpack.c.b16 %v50, %v49
  %vm55 = vcmask 261120
  %v57 = vsel %vm55, %v41, 0
  %v60 = vsel %vm55, %v42, 0
  %62 = vmatprep.subr.bf16.mxu0 0
  %63 = vmatpush1.bf16.msra.mxu0 %v51
  %64 = vmatprep.subr.bf16.mxu0 0
  %65 = vmatpush1.bf16.msra.mxu0 %v52
  %66 = vmatprep.subr.bf16.mxu0 0
  %67 = vmatpush1.bf16.msra.mxu0 0
  %68 = vmatprep.subr.bf16.mxu0 0
  %69 = vmatpush1.bf16.msra.mxu0 0
  %70 = vmatprep.subr.bf16.mxu0 0
  %71 = vmatpush1.bf16.msra.mxu0 0
  %72 = vmatprep.subr.bf16.mxu0 0
  %73 = vmatpush1.bf16.msra.mxu0 0
  %74 = vmatprep.subr.bf16.mxu0 0
  %75 = vmatpush1.bf16.msra.mxu0 0
  %76 = vmatprep.subr.bf16.mxu0 0
  %77 = vmatpush1.bf16.msra.mxu0 0
  %78 = vmatprep.subr.bf16.mxu0 0
  %79 = vmatpush1.bf16.msra.mxu0 0
  %80 = vmatprep.subr.bf16.mxu0 0
  %81 = vmatpush1.bf16.msra.mxu0 0
  %82 = vmatprep.subr.bf16.mxu0 0
  %83 = vmatpush1.bf16.msra.mxu0 0
  %84 = vmatprep.subr.bf16.mxu0 0
  %85 = vmatpush1.bf16.msra.mxu0 0
  %86 = vmatprep.subr.bf16.mxu0 0
  %87 = vmatpush1.bf16.msra.mxu0 0
  %88 = vmatprep.subr.bf16.mxu0 0
  %89 = vmatpush1.bf16.msra.mxu0 0
  %90 = vmatprep.subr.bf16.mxu0 0
  %91 = vmatpush1.bf16.msra.mxu0 0
  %92 = vmatprep.subr.bf16.mxu0 0
  %93 = vmatpush1.bf16.msra.mxu0 0
  %94 = vmatprep.mubr.bf16.mxu0 0
  %95 = vmatmul.mubr.bf16.gmra.mrb[0].mxu0 %v57
  %v96 = vpop.f32.mrb[0].mxu0
  %v97 = vadd.f32 0.0, %v96
  %v98 = vpop.f32.mrb[0].mxu0
  %v99 = vpop.f32.mrb[0].mxu0
  %v100 = vadd.f32 0.0, %v99
  %v101 = vpop.f32.mrb[0].mxu0
  %102 = vmatprep.mubr.bf16.mxu0 0
  %103 = vmatmul.mubr.bf16.gmra.mrb[0].mxu0 %v60
  %v104 = vpop.f32.mrb[0].mxu0
  %v105 = vadd.f32 0.0, %v104
  %v106 = vpop.f32.mrb[0].mxu0
  %v107 = vpop.f32.mrb[0].mxu0
  %v108 = vadd.f32 0.0, %v107
  %v109 = vpop.f32.mrb[0].mxu0
  %110 = vdwg.mxu0
  %v111 = vadd.f32 %v21, %v97
  %v112 = vadd.f32 %v22, %v100
  %v113 = vadd.f32 %v23, %v105
  %v114 = vadd.f32 %v24, %v108
  %vm115 = vcmask 523264
  %116 = vst.msk [vmem:[#allocation2] sm:$0xff] %vm115, %v111
  %117 = vst.msk [vmem:[#allocation2 + $0x8] sm:$0xff] %vm115, %v112
  %118 = vst.msk [vmem:[#allocation2 + $0x10] sm:$0xff] %vm115, %v113
  %119 = vst.msk [vmem:[#allocation2 + $0x18] sm:$0xff] %vm115, %v114
  // Predicated region
  $region14: #{cross_pair_forward.35} parent=0 // pred_check
    %p120 = pneg %p12
  $region15: #{cross_pair_forward.35} parent=0 // pred_check_branch
    %122 = sbr.rel (%p120) target = $region17
  $region16: #{cross_pair_forward.35} parent=0 // pred_region
    %v123 = vld [vmem:[#allocation2] sm:$0xff]
    %v124 = vld [vmem:[#allocation2 + $0x8] sm:$0xff]
    %v125 = vld [vmem:[#allocation2 + $0x10] sm:$0xff]
    %v126 = vld [vmem:[#allocation2 + $0x18] sm:$0xff]
    %v127 = vpack.c.bf16 %v124, %v123
    %v128 = vpack.c.bf16 %v126, %v125
    %v131 = vunpack.c.l.b16 %v127
    %v132 = vunpack.c.h.b16 %v127
    %v133 = vunpack.c.l.b16 %v128
    %v134 = vunpack.c.h.b16 %v128
    %v135 = vpack.c.b16 %v131, %v131
    %v136 = vpack.c.b16 %v132, %v132
    %v137 = vpack.c.b16 %v133, %v133
    %v138 = vpack.c.b16 %v134, %v134
    %vm143 = vcmask 519168
    %144 = vst.msk [vmem:[%s2] sm:$0xf] %vm143, %v135
    %145 = vst.msk [vmem:[%s2 + $0x4] sm:$0xf] %vm143, %v136
    %146 = vst.msk [vmem:[%s2 + $0x8] sm:$0xf] %vm143, %v137
    %147 = vst.msk [vmem:[%s2 + $0xc] sm:$0xf] %vm143, %v138
  $region17: #{cross_pair_forward.35} parent=0 // pred_fallthru
    _
  // Predicated region
  $region18: #{cross_pair_forward.35} parent=0 // pred_check
    _
  $region19: #{cross_pair_forward.35} parent=0 // pred_check_branch
    %149 = sbr.rel (0) target = $region21
  $region20: #{cross_pair_forward.35} parent=0 // pred_region
    _
  $region21: #{cross_pair_forward.35} parent=0 // pred_fallthru
    _
  // Predicated region
  $region22: #{cross_pair_forward.35} parent=0 // pred_check
    _
  $region23: #{cross_pair_forward.35} parent=0 // pred_check_branch
    %151 = sbr.rel (0) target = $region25
  $region24: #{cross_pair_forward.35} parent=0 // pred_region
    _
  $region25: #{cross_pair_forward.35} parent=0 // pred_fallthru
    _

// kernel: cross_pair_forward.37
$region0: #{cross_pair_forward.37}
  #allocation0 [shape = 'u32[]', space=smem, size = 0x4, offset = 0x4, fixed_abs, tag = 'smem constant byte address 0x4 - core index']
  #allocation1 [shape = 'u32[144,128]{1,0:T(1,128)}', space=vmem, size = 0x12000, scoped, tag = 'internal scratch']
  #allocation2 [shape = 'f32[16,32]{1,0:T(8,128)}', space=vmem, size = 0x2000, scoped, tag = 'scratch operand']
  %s0 = inlined_call_operand.vmem [shape: bf16[16,32], index: 0, kind: input, shape index: {}]
  %s1 = inlined_call_operand.vmem [shape: bf16[32,32], index: 1, kind: input, shape index: {}]
  %s2 = inlined_call_operand.vmem [shape: f32[1,32], index: 2, kind: input, shape index: {}]
  %s3 = inlined_call_operand.vmem [shape: f32[16,32], index: 3, kind: input, shape index: {}]
  %s4 = inlined_call_operand.vmem [shape: f32[1,32], index: 4, kind: input, shape index: {}]
  %s5 = inlined_call_operand.vmem [shape: f32[1,32], index: 5, kind: input, shape index: {}]
  %s6 = inlined_call_operand.vmem [shape: f32[16,32], index: 6, kind: output, shape index: {0}]
  %s7 = inlined_call_operand.vmem [shape: bf16[16,32], index: 7, kind: output, shape index: {1}]
  %8 = xla_tuple %s6, %s7
  %s9 = sld [smem:[#allocation0]]
  $region50: #{cross_pair_forward.37} parent=0
    _
  %s11 = ssub.s32 1, %s9
  %s12 = scalar_select 0, %s11, %s9
  // Predicated region
  $region2: #{cross_pair_forward.37} parent=0 // pred_check
    _
  $region3: #{cross_pair_forward.37} parent=0 // pred_check_branch
    %14 = sbr.rel (0) target = $region5
  $region4: #{cross_pair_forward.37} parent=0 // pred_region
    _
  $region5: #{cross_pair_forward.37} parent=0 // pred_fallthru
    _
  // Predicated region
  $region6: #{cross_pair_forward.37} parent=0 // pred_check
    _
  $region7: #{cross_pair_forward.37} parent=0 // pred_check_branch
    %16 = sbr.rel (0) target = $region9
  $region8: #{cross_pair_forward.37} parent=0 // pred_region
    _
  $region9: #{cross_pair_forward.37} parent=0 // pred_fallthru
    _
  // Predicated region
  $region10: #{cross_pair_forward.37} parent=0 // pred_check
    _
  $region11: #{cross_pair_forward.37} parent=0 // pred_check_branch
    %18 = sbr.rel (0) target = $region13
  $region12: #{cross_pair_forward.37} parent=0 // pred_region
    _
  $region13: #{cross_pair_forward.37} parent=0 // pred_fallthru
    _
  // Predicated region
  $region14: #{cross_pair_forward.37} parent=0 // pred_check
    _
  $region15: #{cross_pair_forward.37} parent=0 // pred_check_branch
    %20 = sbr.rel (0) target = $region17
  $region16: #{cross_pair_forward.37} parent=0 // pred_region
    _
  $region17: #{cross_pair_forward.37} parent=0 // pred_fallthru
    _
  // Predicated region
  $region18: #{cross_pair_forward.37} parent=0 // pred_check
    _
  $region19: #{cross_pair_forward.37} parent=0 // pred_check_branch
    %22 = sbr.rel (0) target = $region21
  $region20: #{cross_pair_forward.37} parent=0 // pred_region
    _
  $region21: #{cross_pair_forward.37} parent=0 // pred_fallthru
    _
  // Predicated region
  $region22: #{cross_pair_forward.37} parent=0 // pred_check
    _
  $region23: #{cross_pair_forward.37} parent=0 // pred_check_branch
    %24 = sbr.rel (0) target = $region25
  $region24: #{cross_pair_forward.37} parent=0 // pred_region
    _
  $region25: #{cross_pair_forward.37} parent=0 // pred_fallthru
    _
  %p26 = scmp.eq.s32.totalorder 0, 0
  // Predicated region
  $region26: #{cross_pair_forward.37} parent=0 // pred_check
    %p27 = pneg %p26
  $region27: #{cross_pair_forward.37} parent=0 // pred_check_branch
    %29 = sbr.rel (%p27) target = $region29
  $region28: #{cross_pair_forward.37} parent=0 // pred_region
    %vm30 = vcmask 261120
    %31 = vst.msk [vmem:[#allocation2] sm:$0xff] %vm30, 0.0
    %32 = vst.msk [vmem:[#allocation2 + $0x8] sm:$0xff] %vm30, 0.0
  $region29: #{cross_pair_forward.37} parent=0 // pred_fallthru
    _
  %v33 = vld [vmem:[#allocation2] sm:$0xff]
  %v34 = vld [vmem:[#allocation2 + $0x8] sm:$0xff]
  %v35 = vld [vmem:[%s0] sm:$0xf]
  %v36 = vld [vmem:[%s0 + $0x4] sm:$0xf]
  %v37 = vld [vmem:[%s1] sm:$0xf]
  %v38 = vld [vmem:[%s1 + $0x4] sm:$0xf]
  %v39 = vld [vmem:[%s1 + $0x8] sm:$0xf]
  %v40 = vld [vmem:[%s1 + $0xc] sm:$0xf]
  %v43 = vunpack.c.l.b16 %v35
  %v44 = vunpack.c.l.b16 %v36
  %v45 = vpack.c.b16 %v44, %v43
  %v50 = vunpack.c.l.b16 %v37
  %v51 = vunpack.c.l.b16 %v38
  %v52 = vunpack.c.l.b16 %v39
  %v53 = vunpack.c.l.b16 %v40
  %v54 = vpack.c.b16 %v51, %v50
  %v55 = vpack.c.b16 %v53, %v52
  %vm58 = vcmask 261120
  %v60 = vsel %vm58, %v45, 0
  %62 = vmatprep.subr.bf16.mxu0 0
  %63 = vmatpush1.bf16.msra.mxu0 %v54
  %64 = vmatprep.subr.bf16.mxu0 0
  %65 = vmatpush1.bf16.msra.mxu0 %v55
  %66 = vmatprep.subr.bf16.mxu0 0
  %67 = vmatpush1.bf16.msra.mxu0 0
  %68 = vmatprep.subr.bf16.mxu0 0
  %69 = vmatpush1.bf16.msra.mxu0 0
  %70 = vmatprep.subr.bf16.mxu0 0
  %71 = vmatpush1.bf16.msra.mxu0 0
  %72 = vmatprep.subr.bf16.mxu0 0
  %73 = vmatpush1.bf16.msra.mxu0 0
  %74 = vmatprep.subr.bf16.mxu0 0
  %75 = vmatpush1.bf16.msra.mxu0 0
  %76 = vmatprep.subr.bf16.mxu0 0
  %77 = vmatpush1.bf16.msra.mxu0 0
  %78 = vmatprep.subr.bf16.mxu0 0
  %79 = vmatpush1.bf16.msra.mxu0 0
  %80 = vmatprep.subr.bf16.mxu0 0
  %81 = vmatpush1.bf16.msra.mxu0 0
  %82 = vmatprep.subr.bf16.mxu0 0
  %83 = vmatpush1.bf16.msra.mxu0 0
  %84 = vmatprep.subr.bf16.mxu0 0
  %85 = vmatpush1.bf16.msra.mxu0 0
  %86 = vmatprep.subr.bf16.mxu0 0
  %87 = vmatpush1.bf16.msra.mxu0 0
  %88 = vmatprep.subr.bf16.mxu0 0
  %89 = vmatpush1.bf16.msra.mxu0 0
  %90 = vmatprep.subr.bf16.mxu0 0
  %91 = vmatpush1.bf16.msra.mxu0 0
  %92 = vmatprep.subr.bf16.mxu0 0
  %93 = vmatpush1.bf16.msra.mxu0 0
  %94 = vmatprep.mubr.bf16.mxu0 0
  %95 = vmatmul.mubr.bf16.gmra.mrb[0].mxu0 %v60
  %v96 = vpop.f32.mrb[0].mxu0
  %v97 = vadd.f32 0.0, %v96
  %v98 = vpop.f32.mrb[0].mxu0
  %v99 = vpop.f32.mrb[0].mxu0
  %v100 = vadd.f32 0.0, %v99
  %v101 = vpop.f32.mrb[0].mxu0
  %102 = vdwg.mxu0
  %v103 = vadd.f32 %v33, %v97
  %v104 = vadd.f32 %v34, %v100
  %105 = vst.msk [vmem:[#allocation2] sm:$0xff] %vm58, %v103
  %106 = vst.msk [vmem:[#allocation2 + $0x8] sm:$0xff] %vm58, %v104
  // Predicated region
  $region30: #{cross_pair_forward.37} parent=0 // pred_check
    %p107 = pneg %p26
  $region31: #{cross_pair_forward.37} parent=0 // pred_check_branch
    %109 = sbr.rel (%p107) target = $region33
  $region32: #{cross_pair_forward.37} parent=0 // pred_region
    %v110 = vld [vmem:[#allocation2] sm:$0xff]
    %v111 = vld [vmem:[#allocation2 + $0x8] sm:$0xff]
    %v112 = vld [vmem:[%s2] sm:$0x1]
    %v114 = vlaneseq
    %v115 = vshrl.u32 %v114, 7
    %v116 = vsub.s32 0, %v115
    %v117 = vrot.slane %v112, %v116
    %v119 = vadd.f32 %v110, %v117
    %v120 = vadd.f32 %v111, %v117
    %v121 = vld [vmem:[%s3] sm:$0xff]
    %v122 = vld [vmem:[%s3 + $0x8] sm:$0xff]
    %v123 = vadd.f32 %v119, %v121
    %v124 = vadd.f32 %v120, %v122
    %v125 = vsel %vm58, %v123, 0.0
    %126 = vadd.xlane.f32.xlu0 %v125
    %v127 = vpop.xlane.xlu0 %126
    %v128 = vsel %vm58, %v124, 0.0
    %129 = vadd.xlane.f32.xlu0 %v128
    %v130 = vpop.xlane.xlu0 %129
    %v131 = vrcp.pop 32.0
    %v132 = vmul.f32 %v127, %v131
    %v133 = vmul.f32 %v130, %v131
    %v134 = vsub.f32 %v123, %v132
    %v135 = vsub.f32 %v124, %v133
    %v136 = vmul.f32 %v134, %v134
    %v137 = vmul.f32 %v135, %v135
    %v138 = vsel %vm58, %v136, 0.0
    %139 = vadd.xlane.f32.xlu0 %v138
    %v140 = vpop.xlane.xlu0 %139
    %v141 = vsel %vm58, %v137, 0.0
    %142 = vadd.xlane.f32.xlu0 %v141
    %v143 = vpop.xlane.xlu0 %142
    %v144 = vmul.f32 %v140, %v131
    %v145 = vmul.f32 %v143, %v131
    %v146 = vadd.f32 %v144, 1e-12
    %v147 = vadd.f32 %v145, 1e-12
    %v148 = vrsqrt.pop %v146
    %v149 = vrsqrt.pop %v147
    %v150 = vmul.f32 %v134, %v148
    %v151 = vmul.f32 %v135, %v149
    %v152 = vld [vmem:[%s4] sm:$0x1]
    %v154 = vlaneseq
    %v155 = vshrl.u32 %v154, 7
    %v156 = vsub.s32 0, %v155
    %v157 = vrot.slane %v152, %v156
    %v159 = vmul.f32 %v150, %v157
    %v160 = vmul.f32 %v151, %v157
    %v161 = vld [vmem:[%s5] sm:$0x1]
    %v163 = vlaneseq
    %v164 = vshrl.u32 %v163, 7
    %v165 = vsub.s32 0, %v164
    %v166 = vrot.slane %v161, %v165
    %v168 = vadd.f32 %v159, %v166
    %v169 = vadd.f32 %v160, %v166
    %170 = vst.msk [vmem:[%s6] sm:$0xff] %vm58, %v168
    %171 = vst.msk [vmem:[%s6 + $0x8] sm:$0xff] %vm58, %v169
    %v172 = vpack.c.bf16 %v169, %v168
    %v174 = vunpack.c.l.b16 %v172
    %v175 = vunpack.c.h.b16 %v172
    %v176 = vpack.c.b16 %v174, %v174
    %v177 = vpack.c.b16 %v175, %v175
    %vm180 = vcmask 257024
    %181 = vst.msk [vmem:[%s7] sm:$0xf] %vm180, %v176
    %182 = vst.msk [vmem:[%s7 + $0x4] sm:$0xf] %vm180, %v177
  $region33: #{cross_pair_forward.37} parent=0 // pred_fallthru
    _
  // Predicated region
  $region34: #{cross_pair_forward.37} parent=0 // pred_check
    _
  $region35: #{cross_pair_forward.37} parent=0 // pred_check_branch
    %184 = sbr.rel (0) target = $region37
  $region36: #{cross_pair_forward.37} parent=0 // pred_region
    _
  $region37: #{cross_pair_forward.37} parent=0 // pred_fallthru
    _
  // Predicated region
  $region38: #{cross_pair_forward.37} parent=0 // pred_check
    _
  $region39: #{cross_pair_forward.37} parent=0 // pred_check_branch
    %186 = sbr.rel (0) target = $region41
  $region40: #{cross_pair_forward.37} parent=0 // pred_region
    _
  $region41: #{cross_pair_forward.37} parent=0 // pred_fallthru
    _
  // Predicated region
  $region42: #{cross_pair_forward.37} parent=0 // pred_check
    _
  $region43: #{cross_pair_forward.37} parent=0 // pred_check_branch
    %188 = sbr.rel (0) target = $region45
  $region44: #{cross_pair_forward.37} parent=0 // pred_region
    _
  $region45: #{cross_pair_forward.37} parent=0 // pred_fallthru
    _
  // Predicated region
  $region46: #{cross_pair_forward.37} parent=0 // pred_check
    _
  $region47: #{cross_pair_forward.37} parent=0 // pred_check_branch
    %190 = sbr.rel (0) target = $region49
  $region48: #{cross_pair_forward.37} parent=0 // pred_region
    _
  $region49: #{cross_pair_forward.37} parent=0 // pred_fallthru
    _

// kernel: cross_pair_forward.36
$region0: #{cross_pair_forward.36}
  #allocation0 [shape = 'u32[]', space=smem, size = 0x4, offset = 0x4, fixed_abs, tag = 'smem constant byte address 0x4 - core index']
  #allocation1 [shape = 'u32[144,128]{1,0:T(1,128)}', space=vmem, size = 0x12000, scoped, tag = 'internal scratch']
  %s0 = inlined_call_operand.vmem [shape: bf16[2,8,32], index: 0, kind: input, shape index: {}]
  %s1 = inlined_call_operand.vmem [shape: bf16[2,16,64], index: 1, kind: input, shape index: {}]
  %s2 = inlined_call_operand.vmem [shape: f32[2,1,16], index: 2, kind: input, shape index: {}]
  %s3 = inlined_call_operand.vmem [shape: bf16[2,8,32], index: 3, kind: output, shape index: {0}]
  %s4 = inlined_call_operand.hbm [shape: f32[2,4,16,8], index: 4, kind: output, shape index: {1}]
  %5 = xla_tuple %s3, %s4
  %s6 = sld [smem:[#allocation0]]
  $region53: #{cross_pair_forward.36} parent=0
    _
  %s8 = ssub.s32 1, %s6
  %s9 = scalar_select 0, %s8, %s6
  $region1: #{cross_pair_forward.36} parent=0
    #allocation2 [shape = 'u8[65536]{0}', space=vmem, size = 0x10000, scoped, tag = 'output window, operand 1']
    #allocation3 [shape = 's32[2]{0}', space=sflag, size = 0x8, scoped, tag = 'scoped memory for cross_pair_forward.36']
    %10 = vsyncpa [#allocation3], 0
    %s11 = scalar_lea.sflag [#allocation3], 1
    %12 = vsyncpa %s11, 0
    loop: start=0, step=1, limit=4
    $region2: #{cross_pair_forward.36} parent=1 // loop_pre_header
      _
    $region3: #{cross_pair_forward.36} parent=1 // loop_header
      %s14 = sphi 0, %s18
      %p15 = scmp.ge.s32.totalorder %s14, 4
      %s21 = sphi 0, %s40
      %s22 = sphi 0, %s36
      %s23 = sphi 0, %s32
      %s24 = sphi 0, %s21
      %s25 = sphi 0, %s22
      %s26 = sphi 0, %s23
      %s27 = sphi 0, %s24
      %s28 = sphi 0, %s25
      %s29 = sphi 0, %s26
      %s47 = sphi 0, %s49
      %s50 = sphi 0, %s47
      %s51 = sphi 0, %s50
      %s67 = sphi 0, %s51
      %s75 = sphi 0, %s77
      %s78 = sphi 0, %s75
      %s79 = sphi 0, %s78
      %s95 = sphi 0, %s79
      %s101 = sphi 0, %s103
      %s104 = sphi 0, %s101
      %s105 = sphi 0, %s104
      %s121 = sphi 0, %s105
      %s131 = sphi 0, %s133
      %s134 = sphi 0, %s131
      %s135 = sphi 0, %s134
      %s151 = sphi 0, %s135
      %s161 = sphi 0, %s163
      %s164 = sphi 0, %s161
      %s165 = sphi 0, %s164
      %s181 = sphi 0, %s165
    $region4: #{cross_pair_forward.36} parent=1 // loop_header_branch
      %17 = sbr.rel (%p15) target = $region8
    $region5: #{cross_pair_forward.36} parent=1 // loop_body
      %s19 = ssub.s32 %s14, 1
      %s20 = ssub.s32 %s14, 2
      %s30 = sadd.s32 1, %s23
      %p31 = scmp.ge.s32.totalorder %s30, 1
      %s32 = scalar_select %p31, 0, %s30
      %s33 = sadd.s32 1, %s22
      %s34 = scalar_select %p31, %s33, %s22
      %p35 = scmp.ge.s32.totalorder %s34, 1
      %s36 = scalar_select %p35, 0, %s34
      %s37 = sadd.s32 1, %s21
      %s38 = scalar_select %p35, %s37, %s21
      %p39 = scmp.ge.s32.totalorder %s38, 2
      %s40 = scalar_select %p39, 0, %s38
      %s41 = ssub.s32 %s21, %s40
      %s42 = ssub.s32 %s23, %s32
      %s43 = sor.u32 %s41, %s42
      %s44 = ssub.s32 %s22, %s36
      %s45 = sor.u32 %s43, %s44
      %p46 = scmp.eq.s32.totalorder %s45, 0
      %s48 = sadd.s32 %s47, 1
      %s49 = scalar_select %p46, %s47, %s48
      %p52 = pneg %p46
      %p53 = scmp.eq.s32.totalorder %s14, 1
      %p54 = por %p52, %p53
      %p55 = scmp.ne.s32.totalorder %s47, %s50
      %p56 = scmp.eq.s32.totalorder %s14, 0
      %p57 = por %p55, %p56
      %p58 = scmp.ne.s32.totalorder %s47, %s50
      %p59 = scmp.eq.s32.totalorder %s19, 1
      %p60 = por %p58, %p59
      %p61 = scmp.ne.s32.totalorder %s50, %s51
      %p62 = scmp.eq.s32.totalorder %s19, 0
      %p63 = por %p61, %p62
      %p64 = scmp.ne.s32.totalorder %s50, %s51
      %p65 = scmp.eq.s32.totalorder %s20, 1
      %p66 = por %p64, %p65
      %p68 = scmp.ne.s32.totalorder %s51, %s67
      %p69 = scmp.eq.s32.totalorder %s20, 0
      %p70 = por %p68, %p69
      %s71 = ssub.s32 %s21, %s40
      %s72 = ssub.s32 %s22, %s36
      %s73 = sor.u32 %s71, %s72
      %p74 = scmp.eq.s32.totalorder %s73, 0
      %s76 = sadd.s32 %s75, 1
      %s77 = scalar_select %p74, %s75, %s76
      %p80 = pneg %p74
      %p81 = scmp.eq.s32.totalorder %s14, 1
      %p82 = por %p80, %p81
      %p83 = scmp.ne.s32.totalorder %s75, %s78
      %p84 = scmp.eq.s32.totalorder %s14, 0
      %p85 = por %p83, %p84
      %p86 = scmp.ne.s32.totalorder %s75, %s78
      %p87 = scmp.eq.s32.totalorder %s19, 1
      %p88 = por %p86, %p87
      %p89 = scmp.ne.s32.totalorder %s78, %s79
      %p90 = scmp.eq.s32.totalorder %s19, 0
      %p91 = por %p89, %p90
      %p92 = scmp.ne.s32.totalorder %s78, %s79
      %p93 = scmp.eq.s32.totalorder %s20, 1
      %p94 = por %p92, %p93
      %p96 = scmp.ne.s32.totalorder %s79, %s95
      %p97 = scmp.eq.s32.totalorder %s20, 0
      %p98 = por %p96, %p97
      %s99 = ssub.s32 %s21, %s40
      %p100 = scmp.eq.s32.totalorder %s99, 0
      %s102 = sadd.s32 %s101, 1
      %s103 = scalar_select %p100, %s101, %s102
      %p106 = pneg %p100
      %p107 = scmp.eq.s32.totalorder %s14, 1
      %p108 = por %p106, %p107
      %p109 = scmp.ne.s32.totalorder %s101, %s104
      %p110 = scmp.eq.s32.totalorder %s14, 0
      %p111 = por %p109, %p110
      %p112 = scmp.ne.s32.totalorder %s101, %s104
      %p113 = scmp.eq.s32.totalorder %s19, 1
      %p114 = por %p112, %p113
      %p115 = scmp.ne.s32.totalorder %s104, %s105
      %p116 = scmp.eq.s32.totalorder %s19, 0
      %p117 = por %p115, %p116
      %p118 = scmp.ne.s32.totalorder %s104, %s105
      %p119 = scmp.eq.s32.totalorder %s20, 1
      %p120 = por %p118, %p119
      %p122 = scmp.ne.s32.totalorder %s105, %s121
      %p123 = scmp.eq.s32.totalorder %s20, 0
      %p124 = por %p122, %p123
      %s125 = ssub.s32 %s21, %s40
      %s126 = ssub.s32 %s23, %s32
      %s127 = sor.u32 %s125, %s126
      %s128 = ssub.s32 %s22, %s36
      %s129 = sor.u32 %s127, %s128
      %p130 = scmp.eq.s32.totalorder %s129, 0
      %s132 = sadd.s32 %s131, 1
      %s133 = scalar_select %p130, %s131, %s132
      %p136 = pneg %p130
      %p137 = scmp.eq.s32.totalorder %s14, 1
      %p138 = por %p136, %p137
      %p139 = scmp.ne.s32.totalorder %s131, %s134
      %p140 = scmp.eq.s32.totalorder %s14, 0
      %p141 = por %p139, %p140
      %p142 = scmp.ne.s32.totalorder %s131, %s134
      %p143 = scmp.eq.s32.totalorder %s19, 1
      %p144 = por %p142, %p143
      %p145 = scmp.ne.s32.totalorder %s134, %s135
      %p146 = scmp.eq.s32.totalorder %s19, 0
      %p147 = por %p145, %p146
      %p148 = scmp.ne.s32.totalorder %s134, %s135
      %p149 = scmp.eq.s32.totalorder %s20, 1
      %p150 = por %p148, %p149
      %p152 = scmp.ne.s32.totalorder %s135, %s151
      %p153 = scmp.eq.s32.totalorder %s20, 0
      %p154 = por %p152, %p153
      %s155 = ssub.s32 %s21, %s40
      %s156 = ssub.s32 %s22, %s36
      %s157 = sor.u32 %s155, %s156
      %s158 = ssub.s32 %s23, %s32
      %s159 = sor.u32 %s157, %s158
      %p160 = scmp.eq.s32.totalorder %s159, 0
      %s162 = sadd.s32 %s161, 1
      %s163 = scalar_select %p160, %s161, %s162
      %p166 = pneg %p160
      %p167 = scmp.eq.s32.totalorder %s14, 1
      %p168 = por %p166, %p167
      %p169 = scmp.ne.s32.totalorder %s161, %s164
      %p170 = scmp.eq.s32.totalorder %s14, 0
      %p171 = por %p169, %p170
      %p172 = scmp.ne.s32.totalorder %s161, %s164
      %p173 = scmp.eq.s32.totalorder %s19, 1
      %p174 = por %p172, %p173
      %p175 = scmp.ne.s32.totalorder %s164, %s165
      %p176 = scmp.eq.s32.totalorder %s19, 0
      %p177 = por %p175, %p176
      %p178 = scmp.ne.s32.totalorder %s164, %s165
      %p179 = scmp.eq.s32.totalorder %s20, 1
      %p180 = por %p178, %p179
      %p182 = scmp.ne.s32.totalorder %s165, %s181
      %p183 = scmp.eq.s32.totalorder %s20, 0
      %p184 = por %p182, %p183
      %p185 = scmp.le.s32.totalorder 1, %s14
      %p186 = scmp.lt.s32.totalorder %s14, 3
      %p187 = pnand %p185, %p186
      %p188 = pneg %p187
      // Predicated region
      $region9: #{cross_pair_forward.36} parent=5 // pred_check
        _
      $region10: #{cross_pair_forward.36} parent=5 // pred_check_branch
        %190 = sbr.rel (%p187) target = $region12
      $region11: #{cross_pair_forward.36} parent=5 // pred_region
        %s191 = ssub.s32 %s14, 1
      $region12: #{cross_pair_forward.36} parent=5 // pred_fallthru
        _
      %p192 = scmp.lt.s32.totalorder %s14, 2
      // Predicated region
      $region13: #{cross_pair_forward.36} parent=5 // pred_check
        %p193 = pneg %p192
      $region14: #{cross_pair_forward.36} parent=5 // pred_check_branch
        %195 = sbr.rel (%p193) target = $region16
      $region15: #{cross_pair_forward.36} parent=5 // pred_region
        // Predicated region
        $region17: #{cross_pair_forward.36} parent=15 // pred_check
          %p196 = pneg %p57
        $region18: #{cross_pair_forward.36} parent=15 // pred_check_branch
          %198 = sbr.rel (%p196) target = $region20
        $region19: #{cross_pair_forward.36} parent=15 // pred_region
          %p199 = scmp.lt.s32.totalorder %s21, 1
          %s200 = scalar_select %p199, %s21, 1
          %p201 = scmp.lt.s32.totalorder %s23, 0
          %s202 = scalar_select %p201, %s23, 0
          %p203 = scmp.lt.s32.totalorder %s22, 0
          %s204 = scalar_select %p203, %s22, 0
          %s205 = sadd.s32 %s204, %s202
          %s206 = sadd.s32 %s205, %s200
          %s207 = smul.addr %s206, 4
          %s208 = scalar_lea.vmem %s0, %s207
        $region20: #{cross_pair_forward.36} parent=15 // pred_fallthru
          _
        // Predicated region
        $region21: #{cross_pair_forward.36} parent=15 // pred_check
          %p209 = pneg %p85
        $region22: #{cross_pair_forward.36} parent=15 // pred_check_branch
          %211 = sbr.rel (%p209) target = $region24
        $region23: #{cross_pair_forward.36} parent=15 // pred_region
          %p212 = scmp.lt.s32.totalorder %s21, 1
          %s213 = scalar_select %p212, %s21, 1
          %p214 = scmp.lt.s32.totalorder %s22, 0
          %s215 = scalar_select %p214, %s22, 0
          %s216 = smul.addr %s213, 2
          %s217 = sadd.s32 %s215, %s216
          %s218 = smul.addr %s217, 4
          %s219 = scalar_lea.vmem %s1, %s218
        $region24: #{cross_pair_forward.36} parent=15 // pred_fallthru
          _
        // Predicated region
        $region25: #{cross_pair_forward.36} parent=15 // pred_check
          %p220 = pneg %p111
        $region26: #{cross_pair_forward.36} parent=15 // pred_check_branch
          %222 = sbr.rel (%p220) target = $region28
        $region27: #{cross_pair_forward.36} parent=15 // pred_region
          %p223 = scmp.lt.s32.totalorder %s21, 1
          %s224 = scalar_select %p223, %s21, 1
          %s225 = scalar_lea.vmem %s2, %s224
        $region28: #{cross_pair_forward.36} parent=15 // pred_fallthru
          _
      $region16: #{cross_pair_forward.36} parent=5 // pred_fallthru
        _
      %p226 = scmp.le.s32.totalorder 1, %s14
      %p227 = scmp.lt.s32.totalorder %s14, 3
      %p228 = pnand %p226, %p227
      %p229 = pneg %p228
      // Predicated region
      $region29: #{cross_pair_forward.36} parent=5 // pred_check
        _
      $region30: #{cross_pair_forward.36} parent=5 // pred_check_branch
        %231 = sbr.rel (%p228) target = $region32
      $region31: #{cross_pair_forward.36} parent=5 // pred_region
        %s232 = ssub.s32 %s14, 1
        %p233 = scmp.lt.s32.totalorder %s24, 1
        %s234 = scalar_select %p233, %s24, 1
        %p235 = scmp.lt.s32.totalorder %s26, 0
        %s236 = scalar_select %p235, %s26, 0
        %p237 = scmp.lt.s32.totalorder %s25, 0
        %s238 = scalar_select %p237, %s25, 0
        %s239 = sadd.s32 %s238, %s236
        %s240 = sadd.s32 %s239, %s234
        %s241 = smul.addr %s240, 4
        %s242 = scalar_lea.vmem %s0, %s241
        %p243 = pneg %p63
        %p244 = pneg %p60
        %p245 = scmp.lt.s32.totalorder %s24, 1
        %s246 = scalar_select %p245, %s24, 1
        %p247 = scmp.lt.s32.totalorder %s25, 0
        %s248 = scalar_select %p247, %s25, 0
        %s249 = smul.addr %s246, 2
        %s250 = sadd.s32 %s248, %s249
        %s251 = smul.addr %s250, 4
        %s252 = scalar_lea.vmem %s1, %s251
        %p253 = pneg %p91
        %p254 = pneg %p88
        %p255 = scmp.lt.s32.totalorder %s24, 1
        %s256 = scalar_select %p255, %s24, 1
        %s257 = scalar_lea.vmem %s2, %s256
        %p258 = pneg %p117
        %p259 = pneg %p114
        %p260 = pneg %p147
        %p261 = pneg %p144
        %p262 = scmp.lt.s32.totalorder %s24, 1
        %s263 = scalar_select %p262, %s24, 1
        %p264 = scmp.lt.s32.totalorder %s26, 0
        %s265 = scalar_select %p264, %s26, 0
        %p266 = scmp.lt.s32.totalorder %s25, 0
        %s267 = scalar_select %p266, %s25, 0
        %s268 = sadd.s32 %s267, %s265
        %s269 = sadd.s32 %s268, %s263
        %s270 = smul.addr %s269, 4
        %s271 = scalar_lea.vmem %s3, %s270
        %p272 = pneg %p177
        %p273 = pneg %p174
        %s274 = sand.u32 %s164, 1
        %s275 = scalar_lea.sflag [#allocation3], %s274
        %s276 = sand.u32 %s164, 1
        %s277 = smul.addr %s276, 64
        %s278 = scalar_lea.vmem [#allocation2], %s277
        %p279 = scmp.lt.s32.totalorder %s24, 1
        %s280 = scalar_select %p279, %s24, 1
        %p281 = scmp.lt.s32.totalorder %s26, 0
        %s282 = scalar_select %p281, %s26, 0
        %p283 = scmp.lt.s32.totalorder %s25, 0
        %s284 = scalar_select %p283, %s25, 0
        %s285 = sadd.s32 %s284, %s282
        %s286 = sadd.s32 %s285, %s280
        %s287 = smul.addr %s286, 4
        %s288 = scalar_lea.vmem %s0, %s287
        %p289 = scmp.lt.s32.totalorder %s24, 1
        %s290 = scalar_select %p289, %s24, 1
        %p291 = scmp.lt.s32.totalorder %s25, 0
        %s292 = scalar_select %p291, %s25, 0
        %s293 = smul.addr %s290, 2
        %s294 = sadd.s32 %s292, %s293
        %s295 = smul.addr %s294, 4
        %s296 = scalar_lea.vmem %s1, %s295
        %p297 = scmp.lt.s32.totalorder %s24, 1
        %s298 = scalar_select %p297, %s24, 1
        %s299 = scalar_lea.vmem %s2, %s298
        %p300 = scmp.lt.s32.totalorder %s24, 1
        %s301 = scalar_select %p300, %s24, 1
        %p302 = scmp.lt.s32.totalorder %s26, 0
        %s303 = scalar_select %p302, %s26, 0
        %p304 = scmp.lt.s32.totalorder %s25, 0
        %s305 = scalar_select %p304, %s25, 0
        %s306 = sadd.s32 %s305, %s303
        %s307 = sadd.s32 %s306, %s301
        %s308 = smul.addr %s307, 4
        %s309 = scalar_lea.vmem %s3, %s308
        %s310 = smul.u32 4, %s25
        %v312 = vld [vmem:[%s288] sm:$0xf]
        %v313 = vld [vmem:[%s296] sm:$0xf]
        %v314 = vld [vmem:[%s296 + $0x4] sm:$0xf]
        %v315 = vld [vmem:[%s299] sm:$0x1]
        %v318 = vunpack.c.l.b16 %v313
        %v319 = vunpack.c.l.b16 %v314
        %v320 = vpack.c.b16 %v319, %v318
        %vm321 = vcmask 64512
        %v323 = vsel %vm321, %v312, 0
        %v326 = vsel %vm321, %v320, 0
        %328 = vmatprep.subr.bf16.mxu0 0
        %329 = vmatpush1.bf16.xpose.msra.mxu0 %v326
        %330 = vmatprep.subr.bf16.mxu0 0
        %331 = vmatpush1.bf16.xpose.msra.mxu0 0
        %332 = vmatprep.subr.bf16.mxu0 0
        %333 = vmatpush1.bf16.xpose.msra.mxu0 0
        %334 = vmatprep.subr.bf16.mxu0 0
        %335 = vmatpush1.bf16.xpose.msra.mxu0 0
        %336 = vmatprep.subr.bf16.mxu0 0
        %337 = vmatpush1.bf16.xpose.msra.mxu0 0
        %338 = vmatprep.subr.bf16.mxu0 0
        %339 = vmatpush1.bf16.xpose.msra.mxu0 0
        %340 = vmatprep.subr.bf16.mxu0 0
        %341 = vmatpush1.bf16.xpose.msra.mxu0 0
        %342 = vmatprep.subr.bf16.mxu0 0
        %343 = vmatpush1.bf16.xpose.msra.mxu0 0
        %344 = vmatprep.subr.bf16.mxu0 0
        %345 = vmatpush1.bf16.xpose.msra.mxu0 0
        %346 = vmatprep.subr.bf16.mxu0 0
        %347 = vmatpush1.bf16.xpose.msra.mxu0 0
        %348 = vmatprep.subr.bf16.mxu0 0
        %349 = vmatpush1.bf16.xpose.msra.mxu0 0
        %350 = vmatprep.subr.bf16.mxu0 0
        %351 = vmatpush1.bf16.xpose.msra.mxu0 0
        %352 = vmatprep.subr.bf16.mxu0 0
        %353 = vmatpush1.bf16.xpose.msra.mxu0 0
        %354 = vmatprep.subr.bf16.mxu0 0
        %355 = vmatpush1.bf16.xpose.msra.mxu0 0
        %356 = vmatprep.subr.bf16.mxu0 0
        %357 = vmatpush1.bf16.xpose.msra.mxu0 0
        %358 = vmatprep.subr.bf16.mxu0 0
        %359 = vmatpush1.bf16.xpose.msra.mxu0 0
        %360 = vmatprep.mubr.bf16.mxu0 0
        %361 = vmatmul.mubr.bf16.gmra.mrb[0].mxu0 %v323
        %v362 = vpop.f32.mrb[0].mxu0
        %v363 = vadd.f32 0.0, %v362
        %v364 = vpop.f32.mrb[0].mxu0
        %v365 = vpop.f32.mrb[0].mxu0
        %v366 = vpop.f32.mrb[0].mxu0
        %367 = vdwg.mxu0
        %v368 = vmul.f32 %v363, 0.35355338
        %369 = vxpose.xlu0.b32.start [1/16] %v368, 128
        %370 = vxpose.xlu0.b32.cont [2/16] 0.0, 128
        %371 = vxpose.xlu0.b32.cont [3/16] 0.0, 128
        %372 = vxpose.xlu0.b32.cont [4/16] 0.0, 128
        %373 = vxpose.xlu0.b32.cont [5/16] 0.0, 128
        %374 = vxpose.xlu0.b32.cont [6/16] 0.0, 128
        %375 = vxpose.xlu0.b32.cont [7/16] 0.0, 128
        %376 = vxpose.xlu0.b32.cont [8/16] 0.0, 128
        %377 = vxpose.xlu0.b32.cont [9/16] 0.0, 128
        %378 = vxpose.xlu0.b32.cont [10/16] 0.0, 128
        %379 = vxpose.xlu0.b32.cont [11/16] 0.0, 128
        %380 = vxpose.xlu0.b32.cont [12/16] 0.0, 128
        %381 = vxpose.xlu0.b32.cont [13/16] 0.0, 128
        %382 = vxpose.xlu0.b32.cont [14/16] 0.0, 128
        %383 = vxpose.xlu0.b32.cont [15/16] 0.0, 128
        %384 = vxpose.xlu0.b32.end [16/16] 0.0, 128
        %v385 = vpop.trf.xlu0
        %v386 = vpop.trf.xlu0
        %v387 = vpop.trf.xlu0
        %v388 = vpop.trf.xlu0
        %v389 = vpop.trf.xlu0
        %v390 = vpop.trf.xlu0
        %v391 = vpop.trf.xlu0
        %v392 = vpop.trf.xlu0
        %v393 = vpop.trf.xlu0
        %v394 = vpop.trf.xlu0
        %v395 = vpop.trf.xlu0
        %v396 = vpop.trf.xlu0
        %v397 = vpop.trf.xlu0
        %v398 = vpop.trf.xlu0
        %v399 = vpop.trf.xlu0
        %v400 = vpop.trf.xlu0
        %401 = vst.msk [vmem:[%s278] sm:$0xff] %vm321, %v385
        %402 = vst.msk [vmem:[%s278 + $0x8] sm:$0xff] %vm321, %v386
        %v404 = vlaneseq
        %v405 = vshrl.u32 %v404, 7
        %v406 = vsub.s32 0, %v405
        %v407 = vrot.slane %v315, %v406
        %v409 = vadd.f32 %v368, %v407
        %vm410 = vcmask 130048
        %v411 = vsel %vm410, %v409, -inf
        %412 = vmax.xlane.f32.xlu0 %v411
        %v413 = vpop.xlane.xlu0 %412
        %v414 = vsub.f32 %v409, %v413
        %v415 = vmul.f32 %v414, 1.442695
        %v416 = vpow.pop %v415
        %v417 = vsel %vm410, %v416, 0.0
        %418 = vadd.xlane.f32.xlu0 %v417
        %v419 = vpop.xlane.xlu0 %418
        %v420 = vrcp.pop %v419
        %v421 = vmul.f32 %v416, %v420
        %v422 = vpack.c.bf16 %v421, %v421
        %423 = vrot.lane.b32.xlu0 %v320, 120
        %v424 = vpop.permute.xlu0 %423
        %v427 = vsel %vm410, %v422, 0
        %429 = vmatprep.subr.bf16.mxu0 0
        %430 = vmatpush1.bf16.msra.mxu0 %v424
        %431 = vmatprep.subr.bf16.mxu0 0
        %432 = vmatpush1.bf16.msra.mxu0 0
        %433 = vmatprep.subr.bf16.mxu0 0
        %434 = vmatpush1.bf16.msra.mxu0 0
        %435 = vmatprep.subr.bf16.mxu0 0
        %436 = vmatpush1.bf16.msra.mxu0 0
        %437 = vmatprep.subr.bf16.mxu0 0
        %438 = vmatpush1.bf16.msra.mxu0 0
        %439 = vmatprep.subr.bf16.mxu0 0
        %440 = vmatpush1.bf16.msra.mxu0 0
        %441 = vmatprep.subr.bf16.mxu0 0
        %442 = vmatpush1.bf16.msra.mxu0 0
        %443 = vmatprep.subr.bf16.mxu0 0
        %444 = vmatpush1.bf16.msra.mxu0 0
        %445 = vmatprep.subr.bf16.mxu0 0
        %446 = vmatpush1.bf16.msra.mxu0 0
        %447 = vmatprep.subr.bf16.mxu0 0
        %448 = vmatpush1.bf16.msra.mxu0 0
        %449 = vmatprep.subr.bf16.mxu0 0
        %450 = vmatpush1.bf16.msra.mxu0 0
        %451 = vmatprep.subr.bf16.mxu0 0
        %452 = vmatpush1.bf16.msra.mxu0 0
        %453 = vmatprep.subr.bf16.mxu0 0
        %454 = vmatpush1.bf16.msra.mxu0 0
        %455 = vmatprep.subr.bf16.mxu0 0
        %456 = vmatpush1.bf16.msra.mxu0 0
        %457 = vmatprep.subr.bf16.mxu0 0
        %458 = vmatpush1.bf16.msra.mxu0 0
        %459 = vmatprep.subr.bf16.mxu0 0
        %460 = vmatpush1.bf16.msra.mxu0 0
        %461 = vmatprep.mubr.bf16.mxu0 0
        %462 = vmatmul.mubr.bf16.gmra.mrb[0].mxu0 %v427
        %v463 = vpop.f32.mrb[0].mxu0
        %v464 = vadd.f32 0.0, %v463
        %v465 = vpop.f32.mrb[0].mxu0
        %v466 = vpop.f32.mrb[0].mxu0
        %v467 = vpop.f32.mrb[0].mxu0
        %468 = vdwg.mxu0
        %v470 = vunpack.c.l.b16 %v312
        %v471 = vpack.c.b16 %v470, %v470
        %472 = vrot.lane.b32.xlu0 %v471, 120
        %v473 = vpop.permute.xlu0 %472
        %474 = vrot.lane.b32.xlu0 %v320, 112
        %v475 = vpop.permute.xlu0 %474
        %v477 = vsel %vm321, %v473, 0
        %v480 = vsel %vm321, %v475, 0
        %482 = vmatprep.subr.bf16.mxu0 0
        %483 = vmatpush1.bf16.xpose.msra.mxu0 %v480
        %484 = vmatprep.subr.bf16.mxu0 0
        %485 = vmatpush1.bf16.xpose.msra.mxu0 0
        %486 = vmatprep.subr.bf16.mxu0 0
        %487 = vmatpush1.bf16.xpose.msra.mxu0 0
        %488 = vmatprep.subr.bf16.mxu0 0
        %489 = vmatpush1.bf16.xpose.msra.mxu0 0
        %490 = vmatprep.subr.bf16.mxu0 0
        %491 = vmatpush1.bf16.xpose.msra.mxu0 0
        %492 = vmatprep.subr.bf16.mxu0 0
        %493 = vmatpush1.bf16.xpose.msra.mxu0 0
        %494 = vmatprep.subr.bf16.mxu0 0
        %495 = vmatpush1.bf16.xpose.msra.mxu0 0
        %496 = vmatprep.subr.bf16.mxu0 0
        %497 = vmatpush1.bf16.xpose.msra.mxu0 0
        %498 = vmatprep.subr.bf16.mxu0 0
        %499 = vmatpush1.bf16.xpose.msra.mxu0 0
        %500 = vmatprep.subr.bf16.mxu0 0
        %501 = vmatpush1.bf16.xpose.msra.mxu0 0
        %502 = vmatprep.subr.bf16.mxu0 0
        %503 = vmatpush1.bf16.xpose.msra.mxu0 0
        %504 = vmatprep.subr.bf16.mxu0 0
        %505 = vmatpush1.bf16.xpose.msra.mxu0 0
        %506 = vmatprep.subr.bf16.mxu0 0
        %507 = vmatpush1.bf16.xpose.msra.mxu0 0
        %508 = vmatprep.subr.bf16.mxu0 0
        %509 = vmatpush1.bf16.xpose.msra.mxu0 0
        %510 = vmatprep.subr.bf16.mxu0 0
        %511 = vmatpush1.bf16.xpose.msra.mxu0 0
        %512 = vmatprep.subr.bf16.mxu0 0
        %513 = vmatpush1.bf16.xpose.msra.mxu0 0
        %514 = vmatprep.mubr.bf16.mxu0 0
        %515 = vmatmul.mubr.bf16.gmra.mrb[0].mxu0 %v477
        %v516 = vpop.f32.mrb[0].mxu0
        %v517 = vadd.f32 0.0, %v516
        %v518 = vpop.f32.mrb[0].mxu0
        %v519 = vpop.f32.mrb[0].mxu0
        %v520 = vpop.f32.mrb[0].mxu0
        %521 = vdwg.mxu0
        %v522 = vmul.f32 %v517, 0.35355338
        %523 = vxpose.xlu0.b32.start [1/16] %v522, 128
        %524 = vxpose.xlu0.b32.cont [2/16] 0.0, 128
        %525 = vxpose.xlu0.b32.cont [3/16] 0.0, 128
        %526 = vxpose.xlu0.b32.cont [4/16] 0.0, 128
        %527 = vxpose.xlu0.b32.cont [5/16] 0.0, 128
        %528 = vxpose.xlu0.b32.cont [6/16] 0.0, 128
        %529 = vxpose.xlu0.b32.cont [7/16] 0.0, 128
        %530 = vxpose.xlu0.b32.cont [8/16] 0.0, 128
        %531 = vxpose.xlu0.b32.cont [9/16] 0.0, 128
        %532 = vxpose.xlu0.b32.cont [10/16] 0.0, 128
        %533 = vxpose.xlu0.b32.cont [11/16] 0.0, 128
        %534 = vxpose.xlu0.b32.cont [12/16] 0.0, 128
        %535 = vxpose.xlu0.b32.cont [13/16] 0.0, 128
        %536 = vxpose.xlu0.b32.cont [14/16] 0.0, 128
        %537 = vxpose.xlu0.b32.cont [15/16] 0.0, 128
        %538 = vxpose.xlu0.b32.end [16/16] 0.0, 128
        %v539 = vpop.trf.xlu0
        %v540 = vpop.trf.xlu0
        %v541 = vpop.trf.xlu0
        %v542 = vpop.trf.xlu0
        %v543 = vpop.trf.xlu0
        %v544 = vpop.trf.xlu0
        %v545 = vpop.trf.xlu0
        %v546 = vpop.trf.xlu0
        %v547 = vpop.trf.xlu0
        %v548 = vpop.trf.xlu0
        %v549 = vpop.trf.xlu0
        %v550 = vpop.trf.xlu0
        %v551 = vpop.trf.xlu0
        %v552 = vpop.trf.xlu0
        %v553 = vpop.trf.xlu0
        %v554 = vpop.trf.xlu0
        %s555 = scalar_lea.vmem %s278, 16 [#allocation2]
        %556 = vst.msk [vmem:[%s555] sm:$0xff] %vm321, %v539
        %557 = vst.msk [vmem:[%s555 + $0x8] sm:$0xff] %vm321, %v540
        %v558 = vadd.f32 %v522, %v407
        %v559 = vsel %vm410, %v558, -inf
        %560 = vmax.xlane.f32.xlu0 %v559
        %v561 = vpop.xlane.xlu0 %560
        %v562 = vsub.f32 %v558, %v561
        %v563 = vmul.f32 %v562, 1.442695
        %v564 = vpow.pop %v563
        %v565 = vsel %vm410, %v564, 0.0
        %566 = vadd.xlane.f32.xlu0 %v565
        %v567 = vpop.xlane.xlu0 %566
        %v568 = vrcp.pop %v567
        %v569 = vmul.f32 %v564, %v568
        %v570 = vpack.c.bf16 %v569, %v569
        %571 = vrot.lane.b32.xlu0 %v320, 104
        %v572 = vpop.permute.xlu0 %571
        %v575 = vsel %vm410, %v570, 0
        %577 = vmatprep.subr.bf16.mxu0 0
        %578 = vmatpush1.bf16.msra.mxu0 %v572
        %579 = vmatprep.subr.bf16.mxu0 0
        %580 = vmatpush1.bf16.msra.mxu0 0
        %581 = vmatprep.subr.bf16.mxu0 0
        %582 = vmatpush1.bf16.msra.mxu0 0
        %583 = vmatprep.subr.bf16.mxu0 0
        %584 = vmatpush1.bf16.msra.mxu0 0
        %585 = vmatprep.subr.bf16.mxu0 0
        %586 = vmatpush1.bf16.msra.mxu0 0
        %587 = vmatprep.subr.bf16.mxu0 0
        %588 = vmatpush1.bf16.msra.mxu0 0
        %589 = vmatprep.subr.bf16.mxu0 0
        %590 = vmatpush1.bf16.msra.mxu0 0
        %591 = vmatprep.subr.bf16.mxu0 0
        %592 = vmatpush1.bf16.msra.mxu0 0
        %593 = vmatprep.subr.bf16.mxu0 0
        %594 = vmatpush1.bf16.msra.mxu0 0
        %595 = vmatprep.subr.bf16.mxu0 0
        %596 = vmatpush1.bf16.msra.mxu0 0
        %597 = vmatprep.subr.bf16.mxu0 0
        %598 = vmatpush1.bf16.msra.mxu0 0
        %599 = vmatprep.subr.bf16.mxu0 0
        %600 = vmatpush1.bf16.msra.mxu0 0
        %601 = vmatprep.subr.bf16.mxu0 0
        %602 = vmatpush1.bf16.msra.mxu0 0
        %603 = vmatprep.subr.bf16.mxu0 0
        %604 = vmatpush1.bf16.msra.mxu0 0
        %605 = vmatprep.subr.bf16.mxu0 0
        %606 = vmatpush1.bf16.msra.mxu0 0
        %607 = vmatprep.subr.bf16.mxu0 0
        %608 = vmatpush1.bf16.msra.mxu0 0
        %609 = vmatprep.mubr.bf16.mxu0 0
        %610 = vmatmul.mubr.bf16.gmra.mrb[0].mxu0 %v575
        %v611 = vpop.f32.mrb[0].mxu0
        %v612 = vadd.f32 0.0, %v611
        %v613 = vpop.f32.mrb[0].mxu0
        %v614 = vpop.f32.mrb[0].mxu0
        %v615 = vpop.f32.mrb[0].mxu0
        %616 = vdwg.mxu0
        %617 = vrot.lane.b32.xlu0 %v471, 112
        %v618 = vpop.permute.xlu0 %617
        %619 = vrot.lane.b32.xlu0 %v320, 96
        %v620 = vpop.permute.xlu0 %619
        %v622 = vsel %vm321, %v618, 0
        %v625 = vsel %vm321, %v620, 0
        %627 = vmatprep.subr.bf16.mxu0 0
        %628 = vmatpush1.bf16.xpose.msra.mxu0 %v625
        %629 = vmatprep.subr.bf16.mxu0 0
        %630 = vmatpush1.bf16.xpose.msra.mxu0 0
        %631 = vmatprep.subr.bf16.mxu0 0
        %632 = vmatpush1.bf16.xpose.msra.mxu0 0
        %633 = vmatprep.subr.bf16.mxu0 0
        %634 = vmatpush1.bf16.xpose.msra.mxu0 0
        %635 = vmatprep.subr.bf16.mxu0 0
        %636 = vmatpush1.bf16.xpose.msra.mxu0 0
        %637 = vmatprep.subr.bf16.mxu0 0
        %638 = vmatpush1.bf16.xpose.msra.mxu0 0
        %639 = vmatprep.subr.bf16.mxu0 0
        %640 = vmatpush1.bf16.xpose.msra.mxu0 0
        %641 = vmatprep.subr.bf16.mxu0 0
        %642 = vmatpush1.bf16.xpose.msra.mxu0 0
        %643 = vmatprep.subr.bf16.mxu0 0
        %644 = vmatpush1.bf16.xpose.msra.mxu0 0
        %645 = vmatprep.subr.bf16.mxu0 0
        %646 = vmatpush1.bf16.xpose.msra.mxu0 0
        %647 = vmatprep.subr.bf16.mxu0 0
        %648 = vmatpush1.bf16.xpose.msra.mxu0 0
        %649 = vmatprep.subr.bf16.mxu0 0
        %650 = vmatpush1.bf16.xpose.msra.mxu0 0
        %651 = vmatprep.subr.bf16.mxu0 0
        %652 = vmatpush1.bf16.xpose.msra.mxu0 0
        %653 = vmatprep.subr.bf16.mxu0 0
        %654 = vmatpush1.bf16.xpose.msra.mxu0 0
        %655 = vmatprep.subr.bf16.mxu0 0
        %656 = vmatpush1.bf16.xpose.msra.mxu0 0
        %657 = vmatprep.subr.bf16.mxu0 0
        %658 = vmatpush1.bf16.xpose.msra.mxu0 0
        %659 = vmatprep.mubr.bf16.mxu0 0
        %660 = vmatmul.mubr.bf16.gmra.mrb[0].mxu0 %v622
        %v661 = vpop.f32.mrb[0].mxu0
        %v662 = vadd.f32 0.0, %v661
        %v663 = vpop.f32.mrb[0].mxu0
        %v664 = vpop.f32.mrb[0].mxu0
        %v665 = vpop.f32.mrb[0].mxu0
        %666 = vdwg.mxu0
        %v667 = vmul.f32 %v662, 0.35355338
        %668 = vxpose.xlu0.b32.start [1/16] %v667, 128
        %669 = vxpose.xlu0.b32.cont [2/16] 0.0, 128
        %670 = vxpose.xlu0.b32.cont [3/16] 0.0, 128
        %671 = vxpose.xlu0.b32.cont [4/16] 0.0, 128
        %672 = vxpose.xlu0.b32.cont [5/16] 0.0, 128
        %673 = vxpose.xlu0.b32.cont [6/16] 0.0, 128
        %674 = vxpose.xlu0.b32.cont [7/16] 0.0, 128
        %675 = vxpose.xlu0.b32.cont [8/16] 0.0, 128
        %676 = vxpose.xlu0.b32.cont [9/16] 0.0, 128
        %677 = vxpose.xlu0.b32.cont [10/16] 0.0, 128
        %678 = vxpose.xlu0.b32.cont [11/16] 0.0, 128
        %679 = vxpose.xlu0.b32.cont [12/16] 0.0, 128
        %680 = vxpose.xlu0.b32.cont [13/16] 0.0, 128
        %681 = vxpose.xlu0.b32.cont [14/16] 0.0, 128
        %682 = vxpose.xlu0.b32.cont [15/16] 0.0, 128
        %683 = vxpose.xlu0.b32.end [16/16] 0.0, 128
        %v684 = vpop.trf.xlu0
        %v685 = vpop.trf.xlu0
        %v686 = vpop.trf.xlu0
        %v687 = vpop.trf.xlu0
        %v688 = vpop.trf.xlu0
        %v689 = vpop.trf.xlu0
        %v690 = vpop.trf.xlu0
        %v691 = vpop.trf.xlu0
        %v692 = vpop.trf.xlu0
        %v693 = vpop.trf.xlu0
        %v694 = vpop.trf.xlu0
        %v695 = vpop.trf.xlu0
        %v696 = vpop.trf.xlu0
        %v697 = vpop.trf.xlu0
        %v698 = vpop.trf.xlu0
        %v699 = vpop.trf.xlu0
        %s700 = scalar_lea.vmem %s278, 32 [#allocation2]
        %701 = vst.msk [vmem:[%s700] sm:$0xff] %vm321, %v684
        %702 = vst.msk [vmem:[%s700 + $0x8] sm:$0xff] %vm321, %v685
        %v703 = vadd.f32 %v667, %v407
        %v704 = vsel %vm410, %v703, -inf
        %705 = vmax.xlane.f32.xlu0 %v704
        %v706 = vpop.xlane.xlu0 %705
        %v707 = vsub.f32 %v703, %v706
        %v708 = vmul.f32 %v707, 1.442695
        %v709 = vpow.pop %v708
        %v710 = vsel %vm410, %v709, 0.0
        %711 = vadd.xlane.f32.xlu0 %v710
        %v712 = vpop.xlane.xlu0 %711
        %v713 = vrcp.pop %v712
        %v714 = vmul.f32 %v709, %v713
        %v715 = vpack.c.bf16 %v714, %v714
        %716 = vrot.lane.b32.xlu0 %v320, 88
        %v717 = vpop.permute.xlu0 %716
        %v720 = vsel %vm410, %v715, 0
        %722 = vmatprep.subr.bf16.mxu0 0
        %723 = vmatpush1.bf16.msra.mxu0 %v717
        %724 = vmatprep.subr.bf16.mxu0 0
        %725 = vmatpush1.bf16.msra.mxu0 0
        %726 = vmatprep.subr.bf16.mxu0 0
        %727 = vmatpush1.bf16.msra.mxu0 0
        %728 = vmatprep.subr.bf16.mxu0 0
        %729 = vmatpush1.bf16.msra.mxu0 0
        %730 = vmatprep.subr.bf16.mxu0 0
        %731 = vmatpush1.bf16.msra.mxu0 0
        %732 = vmatprep.subr.bf16.mxu0 0
        %733 = vmatpush1.bf16.msra.mxu0 0
        %734 = vmatprep.subr.bf16.mxu0 0
        %735 = vmatpush1.bf16.msra.mxu0 0
        %736 = vmatprep.subr.bf16.mxu0 0
        %737 = vmatpush1.bf16.msra.mxu0 0
        %738 = vmatprep.subr.bf16.mxu0 0
        %739 = vmatpush1.bf16.msra.mxu0 0
        %740 = vmatprep.subr.bf16.mxu0 0
        %741 = vmatpush1.bf16.msra.mxu0 0
        %742 = vmatprep.subr.bf16.mxu0 0
        %743 = vmatpush1.bf16.msra.mxu0 0
        %744 = vmatprep.subr.bf16.mxu0 0
        %745 = vmatpush1.bf16.msra.mxu0 0
        %746 = vmatprep.subr.bf16.mxu0 0
        %747 = vmatpush1.bf16.msra.mxu0 0
        %748 = vmatprep.subr.bf16.mxu0 0
        %749 = vmatpush1.bf16.msra.mxu0 0
        %750 = vmatprep.subr.bf16.mxu0 0
        %751 = vmatpush1.bf16.msra.mxu0 0
        %752 = vmatprep.subr.bf16.mxu0 0
        %753 = vmatpush1.bf16.msra.mxu0 0
        %754 = vmatprep.mubr.bf16.mxu0 0
        %755 = vmatmul.mubr.bf16.gmra.mrb[0].mxu0 %v720
        %v756 = vpop.f32.mrb[0].mxu0
        %v757 = vadd.f32 0.0, %v756
        %v758 = vpop.f32.mrb[0].mxu0
        %v759 = vpop.f32.mrb[0].mxu0
        %v760 = vpop.f32.mrb[0].mxu0
        %761 = vdwg.mxu0
        %762 = vrot.lane.b32.xlu0 %v471, 104
        %v763 = vpop.permute.xlu0 %762
        %764 = vrot.lane.b32.xlu0 %v320, 80
        %v765 = vpop.permute.xlu0 %764
        %v767 = vsel %vm321, %v763, 0
        %v770 = vsel %vm321, %v765, 0
        %772 = vmatprep.subr.bf16.mxu0 0
        %773 = vmatpush1.bf16.xpose.msra.mxu0 %v770
        %774 = vmatprep.subr.bf16.mxu0 0
        %775 = vmatpush1.bf16.xpose.msra.mxu0 0
        %776 = vmatprep.subr.bf16.mxu0 0
        %777 = vmatpush1.bf16.xpose.msra.mxu0 0
        %778 = vmatprep.subr.bf16.mxu0 0
        %779 = vmatpush1.bf16.xpose.msra.mxu0 0
        %780 = vmatprep.subr.bf16.mxu0 0
        %781 = vmatpush1.bf16.xpose.msra.mxu0 0
        %782 = vmatprep.subr.bf16.mxu0 0
        %783 = vmatpush1.bf16.xpose.msra.mxu0 0
        %784 = vmatprep.subr.bf16.mxu0 0
        %785 = vmatpush1.bf16.xpose.msra.mxu0 0
        %786 = vmatprep.subr.bf16.mxu0 0
        %787 = vmatpush1.bf16.xpose.msra.mxu0 0
        %788 = vmatprep.subr.bf16.mxu0 0
        %789 = vmatpush1.bf16.xpose.msra.mxu0 0
        %790 = vmatprep.subr.bf16.mxu0 0
        %791 = vmatpush1.bf16.xpose.msra.mxu0 0
        %792 = vmatprep.subr.bf16.mxu0 0
        %793 = vmatpush1.bf16.xpose.msra.mxu0 0
        %794 = vmatprep.subr.bf16.mxu0 0
        %795 = vmatpush1.bf16.xpose.msra.mxu0 0
        %796 = vmatprep.subr.bf16.mxu0 0
        %797 = vmatpush1.bf16.xpose.msra.mxu0 0
        %798 = vmatprep.subr.bf16.mxu0 0
        %799 = vmatpush1.bf16.xpose.msra.mxu0 0
        %800 = vmatprep.subr.bf16.mxu0 0
        %801 = vmatpush1.bf16.xpose.msra.mxu0 0
        %802 = vmatprep.subr.bf16.mxu0 0
        %803 = vmatpush1.bf16.xpose.msra.mxu0 0
        %804 = vmatprep.mubr.bf16.mxu0 0
        %805 = vmatmul.mubr.bf16.gmra.mrb[0].mxu0 %v767
        %v806 = vpop.f32.mrb[0].mxu0
        %v807 = vadd.f32 0.0, %v806
        %v808 = vpop.f32.mrb[0].mxu0
        %v809 = vpop.f32.mrb[0].mxu0
        %v810 = vpop.f32.mrb[0].mxu0
        %811 = vdwg.mxu0
        %v812 = vmul.f32 %v807, 0.35355338
        %813 = vxpose.xlu0.b32.start [1/16] %v812, 128
        %814 = vxpose.xlu0.b32.cont [2/16] 0.0, 128
        %815 = vxpose.xlu0.b32.cont [3/16] 0.0, 128
        %816 = vxpose.xlu0.b32.cont [4/16] 0.0, 128
        %817 = vxpose.xlu0.b32.cont [5/16] 0.0, 128
        %818 = vxpose.xlu0.b32.cont [6/16] 0.0, 128
        %819 = vxpose.xlu0.b32.cont [7/16] 0.0, 128
        %820 = vxpose.xlu0.b32.cont [8/16] 0.0, 128
        %821 = vxpose.xlu0.b32.cont [9/16] 0.0, 128
        %822 = vxpose.xlu0.b32.cont [10/16] 0.0, 128
        %823 = vxpose.xlu0.b32.cont [11/16] 0.0, 128
        %824 = vxpose.xlu0.b32.cont [12/16] 0.0, 128
        %825 = vxpose.xlu0.b32.cont [13/16] 0.0, 128
        %826 = vxpose.xlu0.b32.cont [14/16] 0.0, 128
        %827 = vxpose.xlu0.b32.cont [15/16] 0.0, 128
        %828 = vxpose.xlu0.b32.end [16/16] 0.0, 128
        %v829 = vpop.trf.xlu0
        %v830 = vpop.trf.xlu0
        %v831 = vpop.trf.xlu0
        %v832 = vpop.trf.xlu0
        %v833 = vpop.trf.xlu0
        %v834 = vpop.trf.xlu0
        %v835 = vpop.trf.xlu0
        %v836 = vpop.trf.xlu0
        %v837 = vpop.trf.xlu0
        %v838 = vpop.trf.xlu0
        %v839 = vpop.trf.xlu0
        %v840 = vpop.trf.xlu0
        %v841 = vpop.trf.xlu0
        %v842 = vpop.trf.xlu0
        %v843 = vpop.trf.xlu0
        %v844 = vpop.trf.xlu0
        %s845 = scalar_lea.vmem %s278, 48 [#allocation2]
        %846 = vst.msk [vmem:[%s845] sm:$0xff] %vm321, %v829
        %847 = vst.msk [vmem:[%s845 + $0x8] sm:$0xff] %vm321, %v830
        %v848 = vadd.f32 %v812, %v407
        %v849 = vsel %vm410, %v848, -inf
        %850 = vmax.xlane.f32.xlu0 %v849
        %v851 = vpop.xlane.xlu0 %850
        %v852 = vsub.f32 %v848, %v851
        %v853 = vmul.f32 %v852, 1.442695
        %v854 = vpow.pop %v853
        %v855 = vsel %vm410, %v854, 0.0
        %856 = vadd.xlane.f32.xlu0 %v855
        %v857 = vpop.xlane.xlu0 %856
        %v858 = vrcp.pop %v857
        %v859 = vmul.f32 %v854, %v858
        %v860 = vpack.c.bf16 %v859, %v859
        %861 = vrot.lane.b32.xlu0 %v320, 72
        %v862 = vpop.permute.xlu0 %861
        %v865 = vsel %vm410, %v860, 0
        %867 = vmatprep.subr.bf16.mxu0 0
        %868 = vmatpush1.bf16.msra.mxu0 %v862
        %869 = vmatprep.subr.bf16.mxu0 0
        %870 = vmatpush1.bf16.msra.mxu0 0
        %871 = vmatprep.subr.bf16.mxu0 0
        %872 = vmatpush1.bf16.msra.mxu0 0
        %873 = vmatprep.subr.bf16.mxu0 0
        %874 = vmatpush1.bf16.msra.mxu0 0
        %875 = vmatprep.subr.bf16.mxu0 0
        %876 = vmatpush1.bf16.msra.mxu0 0
        %877 = vmatprep.subr.bf16.mxu0 0
        %878 = vmatpush1.bf16.msra.mxu0 0
        %879 = vmatprep.subr.bf16.mxu0 0
        %880 = vmatpush1.bf16.msra.mxu0 0
        %881 = vmatprep.subr.bf16.mxu0 0
        %882 = vmatpush1.bf16.msra.mxu0 0
        %883 = vmatprep.subr.bf16.mxu0 0
        %884 = vmatpush1.bf16.msra.mxu0 0
        %885 = vmatprep.subr.bf16.mxu0 0
        %886 = vmatpush1.bf16.msra.mxu0 0
        %887 = vmatprep.subr.bf16.mxu0 0
        %888 = vmatpush1.bf16.msra.mxu0 0
        %889 = vmatprep.subr.bf16.mxu0 0
        %890 = vmatpush1.bf16.msra.mxu0 0
        %891 = vmatprep.subr.bf16.mxu0 0
        %892 = vmatpush1.bf16.msra.mxu0 0
        %893 = vmatprep.subr.bf16.mxu0 0
        %894 = vmatpush1.bf16.msra.mxu0 0
        %895 = vmatprep.subr.bf16.mxu0 0
        %896 = vmatpush1.bf16.msra.mxu0 0
        %897 = vmatprep.subr.bf16.mxu0 0
        %898 = vmatpush1.bf16.msra.mxu0 0
        %899 = vmatprep.mubr.bf16.mxu0 0
        %900 = vmatmul.mubr.bf16.gmra.mrb[0].mxu0 %v865
        %v901 = vpop.f32.mrb[0].mxu0
        %v902 = vadd.f32 0.0, %v901
        %v903 = vpop.f32.mrb[0].mxu0
        %v904 = vpop.f32.mrb[0].mxu0
        %v905 = vpop.f32.mrb[0].mxu0
        %906 = vdwg.mxu0
        %908 = vrot.lane.b32.xlu0 %v612, 8
        %v909 = vpop.permute.xlu0 %908
        %912 = vrot.lane.b32.xlu0 %v757, 16
        %v913 = vpop.permute.xlu0 %912
        %916 = vrot.lane.b32.xlu0 %v902, 24
        %v917 = vpop.permute.xlu0 %916
        %v919 = vsel %vm321, %v464, %v909
        %v920 = vsel %vm410, %v919, %v913
        %vm921 = vcmask 195584
        %v922 = vsel %vm921, %v920, %v917
        %v923 = vpack.c.bf16 %v922, %v922
        %vm924 = vcmask 257024
        %925 = vst.msk [vmem:[%s309] sm:$0xf] %vm924, %v923
        %p926 = scmp.lt.s32.totalorder %s24, 1
        %s927 = scalar_select %p926, %s24, 1
        %p928 = scmp.lt.s32.totalorder %s26, 0
        %s929 = scalar_select %p928, %s26, 0
        %p930 = scmp.lt.s32.totalorder %s25, 0
        %s931 = scalar_select %p930, %s25, 0
        %s932 = sadd.s32 %s931, %s929
        %s933 = sadd.s32 %s932, %s927
        %s934 = smul.addr %s933, 4
        %s935 = scalar_lea.vmem %s3, %s934
        %s936 = sand.u32 %s164, 1
        %s937 = scalar_lea.sflag [#allocation3], %s936
        %s938 = sand.u32 %s164, 1
        %s939 = smul.addr %s938, 64
        %s940 = scalar_lea.vmem [#allocation2], %s939
        // Predicated region
        $region33: #{cross_pair_forward.36} parent=31 // pred_check
          %p941 = pneg %p144
        $region34: #{cross_pair_forward.36} parent=31 // pred_check_branch
          %943 = sbr.rel (%p941) target = $region36
        $region35: #{cross_pair_forward.36} parent=31 // pred_region
          _
        $region36: #{cross_pair_forward.36} parent=31 // pred_fallthru
          _
        // Predicated region
        $region37: #{cross_pair_forward.36} parent=31 // pred_check
          %p944 = pneg %p174
        $region38: #{cross_pair_forward.36} parent=31 // pred_check_branch
          %946 = sbr.rel (%p944) target = $region40
        $region39: #{cross_pair_forward.36} parent=31 // pred_region
          %s947 = smul.u32 4, %s25
          %s949 = ssub.s32 1024, 1024
          %950 = vsyncadd %s937, %s949
          %s951 = smul.addr %s947, 2
          %s952 = sadd.s32 %s26, %s951
          %s953 = smul.addr %s24, 8
          %s954 = sadd.s32 %s952, %s953
          %s955 = smul.addr %s954, 128
          %s956 = scalar_lea.hbm %s4, %s955
          %s957 = sshll.u32 %s940, 4
          %s958 = int_to_ptr.vmem [resolvable:$true] %s957
          %963 = dma.vmem_to_hbm [thread:$0]  %s958, 1024, %s956, %s937, 128, 128, 8
        $region40: #{cross_pair_forward.36} parent=31 // pred_fallthru
          _
      $region32: #{cross_pair_forward.36} parent=5 // pred_fallthru
        _
      %p964 = scmp.le.s32.totalorder 2, %s14
      // Predicated region
      $region41: #{cross_pair_forward.36} parent=5 // pred_check
        %p965 = pneg %p964
      $region42: #{cross_pair_forward.36} parent=5 // pred_check_branch
        %967 = sbr.rel (%p965) target = $region44
      $region43: #{cross_pair_forward.36} parent=5 // pred_region
        %s968 = ssub.s32 %s14, 2
        // Predicated region
        $region45: #{cross_pair_forward.36} parent=43 // pred_check
          %p969 = pneg %p150
        $region46: #{cross_pair_forward.36} parent=43 // pred_check_branch
          %971 = sbr.rel (%p969) target = $region48
        $region47: #{cross_pair_forward.36} parent=43 // pred_region
          %p972 = scmp.lt.s32.totalorder %s27, 1
          %s973 = scalar_select %p972, %s27, 1
          %p974 = scmp.lt.s32.totalorder %s29, 0
          %s975 = scalar_select %p974, %s29, 0
          %p976 = scmp.lt.s32.totalorder %s28, 0
          %s977 = scalar_select %p976, %s28, 0
          %s978 = sadd.s32 %s977, %s975
          %s979 = sadd.s32 %s978, %s973
          %s980 = smul.addr %s979, 4
          %s981 = scalar_lea.vmem %s3, %s980
        $region48: #{cross_pair_forward.36} parent=43 // pred_fallthru
          _
        // Predicated region
        $region49: #{cross_pair_forward.36} parent=43 // pred_check
          %p982 = pneg %p180
        $region50: #{cross_pair_forward.36} parent=43 // pred_check_branch
          %984 = sbr.rel (%p982) target = $region52
        $region51: #{cross_pair_forward.36} parent=43 // pred_region
          %s985 = sand.u32 %s165, 1
          %s986 = scalar_lea.sflag [#allocation3], %s985
          %s987 = sand.u32 %s165, 1
          %s988 = smul.addr %s987, 64
          %s989 = scalar_lea.vmem [#allocation2], %s988
          %990 = dma.done %s986, 1024
        $region52: #{cross_pair_forward.36} parent=43 // pred_fallthru
          _
      $region44: #{cross_pair_forward.36} parent=5 // pred_fallthru
        _
    $region6: #{cross_pair_forward.36} parent=1 // loop_footer
      %s18 = sadd.s32 1, %s14
    $region7: #{cross_pair_forward.36} parent=1 // loop_footer_branch
      %13 = sbr.rel target = $region3
    $region8: #{cross_pair_forward.36} parent=1 // loop_exit
      _
    %991 = vsyncpa [#allocation3], 1
    %s992 = scalar_lea.sflag [#allocation3], 1
    %993 = vsyncpa %s992, 1

// kernel: cross_pair_forward.38
$region0: #{cross_pair_forward.38}
  #allocation0 [shape = 'u32[]', space=smem, size = 0x4, offset = 0x4, fixed_abs, tag = 'smem constant byte address 0x4 - core index']
  #allocation1 [shape = 'u32[144,128]{1,0:T(1,128)}', space=vmem, size = 0x12000, scoped, tag = 'internal scratch']
  #allocation2 [shape = 'f32[16,64]{1,0:T(8,128)}', space=vmem, size = 0x2000, scoped, tag = 'scratch operand']
  %s0 = inlined_call_operand.vmem [shape: bf16[16,32], index: 0, kind: input, shape index: {}]
  %s1 = inlined_call_operand.vmem [shape: bf16[32,64], index: 1, kind: input, shape index: {}]
  %s2 = inlined_call_operand.vmem [shape: f32[1,64], index: 2, kind: input, shape index: {}]
  %s3 = inlined_call_operand.vmem [shape: bf16[16,64], index: 3, kind: output, shape index: {}]
  %s4 = sld [smem:[#allocation0]]
  $region30: #{cross_pair_forward.38} parent=0
    _
  %s6 = ssub.s32 1, %s4
  %s7 = scalar_select 0, %s6, %s4
  // Predicated region
  $region2: #{cross_pair_forward.38} parent=0 // pred_check
    _
  $region3: #{cross_pair_forward.38} parent=0 // pred_check_branch
    %9 = sbr.rel (0) target = $region5
  $region4: #{cross_pair_forward.38} parent=0 // pred_region
    _
  $region5: #{cross_pair_forward.38} parent=0 // pred_fallthru
    _
  // Predicated region
  $region6: #{cross_pair_forward.38} parent=0 // pred_check
    _
  $region7: #{cross_pair_forward.38} parent=0 // pred_check_branch
    %11 = sbr.rel (0) target = $region9
  $region8: #{cross_pair_forward.38} parent=0 // pred_region
    _
  $region9: #{cross_pair_forward.38} parent=0 // pred_fallthru
    _
  // Predicated region
  $region10: #{cross_pair_forward.38} parent=0 // pred_check
    _
  $region11: #{cross_pair_forward.38} parent=0 // pred_check_branch
    %13 = sbr.rel (0) target = $region13
  $region12: #{cross_pair_forward.38} parent=0 // pred_region
    _
  $region13: #{cross_pair_forward.38} parent=0 // pred_fallthru
    _
  %p15 = scmp.eq.s32.totalorder 0, 0
  // Predicated region
  $region14: #{cross_pair_forward.38} parent=0 // pred_check
    %p16 = pneg %p15
  $region15: #{cross_pair_forward.38} parent=0 // pred_check_branch
    %18 = sbr.rel (%p16) target = $region17
  $region16: #{cross_pair_forward.38} parent=0 // pred_region
    %vm19 = vcmask 523264
    %20 = vst.msk [vmem:[#allocation2] sm:$0xff] %vm19, 0.0
    %21 = vst.msk [vmem:[#allocation2 + $0x8] sm:$0xff] %vm19, 0.0
  $region17: #{cross_pair_forward.38} parent=0 // pred_fallthru
    _
  %v22 = vld [vmem:[#allocation2] sm:$0xff]
  %v23 = vld [vmem:[#allocation2 + $0x8] sm:$0xff]
  %v24 = vld [vmem:[%s0] sm:$0xf]
  %v25 = vld [vmem:[%s0 + $0x4] sm:$0xf]
  %v26 = vld [vmem:[%s1] sm:$0xf]
  %v27 = vld [vmem:[%s1 + $0x4] sm:$0xf]
  %v28 = vld [vmem:[%s1 + $0x8] sm:$0xf]
  %v29 = vld [vmem:[%s1 + $0xc] sm:$0xf]
  %v32 = vunpack.c.l.b16 %v24
  %v33 = vunpack.c.l.b16 %v25
  %v34 = vpack.c.b16 %v33, %v32
  %v39 = vunpack.c.l.b16 %v26
  %v40 = vunpack.c.l.b16 %v27
  %v41 = vunpack.c.l.b16 %v28
  %v42 = vunpack.c.l.b16 %v29
  %v43 = vpack.c.b16 %v40, %v39
  %v44 = vpack.c.b16 %v42, %v41
  %vm47 = vcmask 261120
  %v49 = vsel %vm47, %v34, 0
  %51 = vmatprep.subr.bf16.mxu0 0
  %52 = vmatpush1.bf16.msra.mxu0 %v43
  %53 = vmatprep.subr.bf16.mxu0 0
  %54 = vmatpush1.bf16.msra.mxu0 %v44
  %55 = vmatprep.subr.bf16.mxu0 0
  %56 = vmatpush1.bf16.msra.mxu0 0
  %57 = vmatprep.subr.bf16.mxu0 0
  %58 = vmatpush1.bf16.msra.mxu0 0
  %59 = vmatprep.subr.bf16.mxu0 0
  %60 = vmatpush1.bf16.msra.mxu0 0
  %61 = vmatprep.subr.bf16.mxu0 0
  %62 = vmatpush1.bf16.msra.mxu0 0
  %63 = vmatprep.subr.bf16.mxu0 0
  %64 = vmatpush1.bf16.msra.mxu0 0
  %65 = vmatprep.subr.bf16.mxu0 0
  %66 = vmatpush1.bf16.msra.mxu0 0
  %67 = vmatprep.subr.bf16.mxu0 0
  %68 = vmatpush1.bf16.msra.mxu0 0
  %69 = vmatprep.subr.bf16.mxu0 0
  %70 = vmatpush1.bf16.msra.mxu0 0
  %71 = vmatprep.subr.bf16.mxu0 0
  %72 = vmatpush1.bf16.msra.mxu0 0
  %73 = vmatprep.subr.bf16.mxu0 0
  %74 = vmatpush1.bf16.msra.mxu0 0
  %75 = vmatprep.subr.bf16.mxu0 0
  %76 = vmatpush1.bf16.msra.mxu0 0
  %77 = vmatprep.subr.bf16.mxu0 0
  %78 = vmatpush1.bf16.msra.mxu0 0
  %79 = vmatprep.subr.bf16.mxu0 0
  %80 = vmatpush1.bf16.msra.mxu0 0
  %81 = vmatprep.subr.bf16.mxu0 0
  %82 = vmatpush1.bf16.msra.mxu0 0
  %83 = vmatprep.mubr.bf16.mxu0 0
  %84 = vmatmul.mubr.bf16.gmra.mrb[0].mxu0 %v49
  %v85 = vpop.f32.mrb[0].mxu0
  %v86 = vadd.f32 0.0, %v85
  %v87 = vpop.f32.mrb[0].mxu0
  %v88 = vpop.f32.mrb[0].mxu0
  %v89 = vadd.f32 0.0, %v88
  %v90 = vpop.f32.mrb[0].mxu0
  %91 = vdwg.mxu0
  %v92 = vadd.f32 %v22, %v86
  %v93 = vadd.f32 %v23, %v89
  %vm94 = vcmask 523264
  %95 = vst.msk [vmem:[#allocation2] sm:$0xff] %vm94, %v92
  %96 = vst.msk [vmem:[#allocation2 + $0x8] sm:$0xff] %vm94, %v93
  // Predicated region
  $region18: #{cross_pair_forward.38} parent=0 // pred_check
    %p97 = pneg %p15
  $region19: #{cross_pair_forward.38} parent=0 // pred_check_branch
    %99 = sbr.rel (%p97) target = $region21
  $region20: #{cross_pair_forward.38} parent=0 // pred_region
    %v100 = vld [vmem:[#allocation2] sm:$0xff]
    %v101 = vld [vmem:[#allocation2 + $0x8] sm:$0xff]
    %v102 = vld [vmem:[%s2] sm:$0x1]
    %v104 = vlaneseq
    %v105 = vshrl.u32 %v104, 7
    %v106 = vsub.s32 0, %v105
    %v107 = vrot.slane %v102, %v106
    %v109 = vadd.f32 %v100, %v107
    %v110 = vadd.f32 %v101, %v107
    %v111 = vmul.f32 %v109, 0.70710677
    %v112 = vmul.f32 %v110, 0.70710677
    %vm113 = vcmp.ge.f32.partialorder %v111, 0.0
    %vm114 = vcmp.ge.f32.partialorder %v112, 0.0
    %v115 = vsel %vm113, 1.0, -1.0
    %v116 = vsel %vm114, 1.0, -1.0
    %v117 = vmul.f32 %v111, %v115
    %v118 = vmul.f32 %v112, %v116
    %v119 = vmul.f32 %v117, 0.3275911
    %v120 = vmul.f32 %v118, 0.3275911
    %v121 = vadd.f32 %v119, 1.0
    %v122 = vadd.f32 %v120, 1.0
    %v123 = vrcp.pop %v121
    %v124 = vmul.f32 1.0, %v123
    %v125 = vrcp.pop %v122
    %v126 = vmul.f32 1.0, %v125
    %v127 = vmul.f32 %v124, 1.0614054
    %v128 = vmul.f32 %v126, 1.0614054
    %v129 = vsub.f32 %v127, 1.4531521
    %v130 = vsub.f32 %v128, 1.4531521
    %v131 = vmul.f32 %v129, %v124
    %v132 = vmul.f32 %v130, %v126
    %v133 = vadd.f32 %v131, 1.4214138
    %v134 = vadd.f32 %v132, 1.4214138
    %v135 = vmul.f32 %v133, %v124
    %v136 = vmul.f32 %v134, %v126
    %v137 = vsub.f32 %v135, 0.28449672
    %v138 = vsub.f32 %v136, 0.28449672
    %v139 = vmul.f32 %v137, %v124
    %v140 = vmul.f32 %v138, %v126
    %v141 = vadd.f32 %v139, 0.2548296
    %v142 = vadd.f32 %v140, 0.2548296
    %v143 = vmul.f32 %v141, %v124
    %v144 = vmul.f32 %v142, %v126
    %v145 = vsub.f32 0.0, %v117
    %v146 = vsub.f32 0.0, %v118
    %v147 = vmul.f32 %v145, %v117
    %v148 = vmul.f32 %v146, %v118
    %v149 = vmul.f32 %v147, 1.442695
    %v150 = vpow.pop %v149
    %v151 = vmul.f32 %v148, 1.442695
    %v152 = vpow.pop %v151
    %v153 = vmul.f32 %v143, %v150
    %v154 = vmul.f32 %v144, %v152
    %v155 = vsub.f32 1.0, %v153
    %v156 = vsub.f32 1.0, %v154
    %v157 = vmul.f32 %v115, %v155
    %v158 = vmul.f32 %v116, %v156
    %v159 = vmul.f32 %v109, 0.5
    %v160 = vmul.f32 %v110, 0.5
    %v161 = vadd.f32 %v157, 1.0
    %v162 = vadd.f32 %v158, 1.0
    %v163 = vmul.f32 %v159, %v161
    %v164 = vmul.f32 %v160, %v162
    %v165 = vpack.c.bf16 %v164, %v163
    %v167 = vunpack.c.l.b16 %v165
    %v168 = vunpack.c.h.b16 %v165
    %v169 = vpack.c.b16 %v167, %v167
    %v170 = vpack.c.b16 %v168, %v168
    %vm173 = vcmask 519168
    %174 = vst.msk [vmem:[%s3] sm:$0xf] %vm173, %v169
    %175 = vst.msk [vmem:[%s3 + $0x4] sm:$0xf] %vm173, %v170
  $region21: #{cross_pair_forward.38} parent=0 // pred_fallthru
    _
  // Predicated region
  $region22: #{cross_pair_forward.38} parent=0 // pred_check
    _
  $region23: #{cross_pair_forward.38} parent=0 // pred_check_branch
    %177 = sbr.rel (0) target = $region25
  $region24: #{cross_pair_forward.38} parent=0 // pred_region
    _
  $region25: #{cross_pair_forward.38} parent=0 // pred_fallthru
    _
  // Predicated region
  $region26: #{cross_pair_forward.38} parent=0 // pred_check
    _
  $region27: #{cross_pair_forward.38} parent=0 // pred_check_branch
    %179 = sbr.rel (0) target = $region29
  $region28: #{cross_pair_forward.38} parent=0 // pred_region
    _
  $region29: #{cross_pair_forward.38} parent=0 // pred_fallthru
    _

// kernel: cross_pair_forward.39
$region0: #{cross_pair_forward.39}
  #allocation0 [shape = 'u32[]', space=smem, size = 0x4, offset = 0x4, fixed_abs, tag = 'smem constant byte address 0x4 - core index']
  #allocation1 [shape = 'u32[144,128]{1,0:T(1,128)}', space=vmem, size = 0x12000, scoped, tag = 'internal scratch']
  #allocation2 [shape = 'f32[16,32]{1,0:T(8,128)}', space=vmem, size = 0x2000, scoped, tag = 'scratch operand']
  %s0 = inlined_call_operand.vmem [shape: bf16[16,64], index: 0, kind: input, shape index: {}]
  %s1 = inlined_call_operand.vmem [shape: bf16[64,32], index: 1, kind: input, shape index: {}]
  %s2 = inlined_call_operand.vmem [shape: f32[1,32], index: 2, kind: input, shape index: {}]
  %s3 = inlined_call_operand.vmem [shape: f32[16,32], index: 3, kind: input, shape index: {}]
  %s4 = inlined_call_operand.vmem [shape: f32[1,32], index: 4, kind: input, shape index: {}]
  %s5 = inlined_call_operand.vmem [shape: f32[1,32], index: 5, kind: input, shape index: {}]
  %s6 = inlined_call_operand.vmem [shape: f32[16,32], index: 6, kind: output, shape index: {0}]
  %s7 = inlined_call_operand.vmem [shape: bf16[16,32], index: 7, kind: output, shape index: {1}]
  %8 = xla_tuple %s6, %s7
  %s9 = sld [smem:[#allocation0]]
  $region50: #{cross_pair_forward.39} parent=0
    _
  %s11 = ssub.s32 1, %s9
  %s12 = scalar_select 0, %s11, %s9
  // Predicated region
  $region2: #{cross_pair_forward.39} parent=0 // pred_check
    _
  $region3: #{cross_pair_forward.39} parent=0 // pred_check_branch
    %14 = sbr.rel (0) target = $region5
  $region4: #{cross_pair_forward.39} parent=0 // pred_region
    _
  $region5: #{cross_pair_forward.39} parent=0 // pred_fallthru
    _
  // Predicated region
  $region6: #{cross_pair_forward.39} parent=0 // pred_check
    _
  $region7: #{cross_pair_forward.39} parent=0 // pred_check_branch
    %16 = sbr.rel (0) target = $region9
  $region8: #{cross_pair_forward.39} parent=0 // pred_region
    _
  $region9: #{cross_pair_forward.39} parent=0 // pred_fallthru
    _
  // Predicated region
  $region10: #{cross_pair_forward.39} parent=0 // pred_check
    _
  $region11: #{cross_pair_forward.39} parent=0 // pred_check_branch
    %18 = sbr.rel (0) target = $region13
  $region12: #{cross_pair_forward.39} parent=0 // pred_region
    _
  $region13: #{cross_pair_forward.39} parent=0 // pred_fallthru
    _
  // Predicated region
  $region14: #{cross_pair_forward.39} parent=0 // pred_check
    _
  $region15: #{cross_pair_forward.39} parent=0 // pred_check_branch
    %20 = sbr.rel (0) target = $region17
  $region16: #{cross_pair_forward.39} parent=0 // pred_region
    _
  $region17: #{cross_pair_forward.39} parent=0 // pred_fallthru
    _
  // Predicated region
  $region18: #{cross_pair_forward.39} parent=0 // pred_check
    _
  $region19: #{cross_pair_forward.39} parent=0 // pred_check_branch
    %22 = sbr.rel (0) target = $region21
  $region20: #{cross_pair_forward.39} parent=0 // pred_region
    _
  $region21: #{cross_pair_forward.39} parent=0 // pred_fallthru
    _
  // Predicated region
  $region22: #{cross_pair_forward.39} parent=0 // pred_check
    _
  $region23: #{cross_pair_forward.39} parent=0 // pred_check_branch
    %24 = sbr.rel (0) target = $region25
  $region24: #{cross_pair_forward.39} parent=0 // pred_region
    _
  $region25: #{cross_pair_forward.39} parent=0 // pred_fallthru
    _
  %p26 = scmp.eq.s32.totalorder 0, 0
  // Predicated region
  $region26: #{cross_pair_forward.39} parent=0 // pred_check
    %p27 = pneg %p26
  $region27: #{cross_pair_forward.39} parent=0 // pred_check_branch
    %29 = sbr.rel (%p27) target = $region29
  $region28: #{cross_pair_forward.39} parent=0 // pred_region
    %vm30 = vcmask 261120
    %31 = vst.msk [vmem:[#allocation2] sm:$0xff] %vm30, 0.0
    %32 = vst.msk [vmem:[#allocation2 + $0x8] sm:$0xff] %vm30, 0.0
  $region29: #{cross_pair_forward.39} parent=0 // pred_fallthru
    _
  %v33 = vld [vmem:[#allocation2] sm:$0xff]
  %v34 = vld [vmem:[#allocation2 + $0x8] sm:$0xff]
  %v35 = vld [vmem:[%s0] sm:$0xf]
  %v36 = vld [vmem:[%s0 + $0x4] sm:$0xf]
  %v37 = vld [vmem:[%s1] sm:$0xf]
  %v38 = vld [vmem:[%s1 + $0x4] sm:$0xf]
  %v39 = vld [vmem:[%s1 + $0x8] sm:$0xf]
  %v40 = vld [vmem:[%s1 + $0xc] sm:$0xf]
  %v41 = vld [vmem:[%s1 + $0x10] sm:$0xf]
  %v42 = vld [vmem:[%s1 + $0x14] sm:$0xf]
  %v43 = vld [vmem:[%s1 + $0x18] sm:$0xf]
  %v44 = vld [vmem:[%s1 + $0x1c] sm:$0xf]
  %v47 = vunpack.c.l.b16 %v35
  %v48 = vunpack.c.l.b16 %v36
  %v49 = vpack.c.b16 %v48, %v47
  %v58 = vunpack.c.l.b16 %v37
  %v59 = vunpack.c.l.b16 %v38
  %v60 = vunpack.c.l.b16 %v39
  %v61 = vunpack.c.l.b16 %v40
  %v62 = vunpack.c.l.b16 %v41
  %v63 = vunpack.c.l.b16 %v42
  %v64 = vunpack.c.l.b16 %v43
  %v65 = vunpack.c.l.b16 %v44
  %v66 = vpack.c.b16 %v59, %v58
  %v67 = vpack.c.b16 %v61, %v60
  %v68 = vpack.c.b16 %v63, %v62
  %v69 = vpack.c.b16 %v65, %v64
  %vm74 = vcmask 523264
  %v76 = vsel %vm74, %v49, 0
  %78 = vmatprep.subr.bf16.mxu0 0
  %79 = vmatpush1.bf16.msra.mxu0 %v66
  %80 = vmatprep.subr.bf16.mxu0 0
  %81 = vmatpush1.bf16.msra.mxu0 %v67
  %82 = vmatprep.subr.bf16.mxu0 0
  %83 = vmatpush1.bf16.msra.mxu0 %v68
  %84 = vmatprep.subr.bf16.mxu0 0
  %85 = vmatpush1.bf16.msra.mxu0 %v69
  %86 = vmatprep.subr.bf16.mxu0 0
  %87 = vmatpush1.bf16.msra.mxu0 0
  %88 = vmatprep.subr.bf16.mxu0 0
  %89 = vmatpush1.bf16.msra.mxu0 0
  %90 = vmatprep.subr.bf16.mxu0 0
  %91 = vmatpush1.bf16.msra.mxu0 0
  %92 = vmatprep.subr.bf16.mxu0 0
  %93 = vmatpush1.bf16.msra.mxu0 0
  %94 = vmatprep.subr.bf16.mxu0 0
  %95 = vmatpush1.bf16.msra.mxu0 0
  %96 = vmatprep.subr.bf16.mxu0 0
  %97 = vmatpush1.bf16.msra.mxu0 0
  %98 = vmatprep.subr.bf16.mxu0 0
  %99 = vmatpush1.bf16.msra.mxu0 0
  %100 = vmatprep.subr.bf16.mxu0 0
  %101 = vmatpush1.bf16.msra.mxu0 0
  %102 = vmatprep.subr.bf16.mxu0 0
  %103 = vmatpush1.bf16.msra.mxu0 0
  %104 = vmatprep.subr.bf16.mxu0 0
  %105 = vmatpush1.bf16.msra.mxu0 0
  %106 = vmatprep.subr.bf16.mxu0 0
  %107 = vmatpush1.bf16.msra.mxu0 0
  %108 = vmatprep.subr.bf16.mxu0 0
  %109 = vmatpush1.bf16.msra.mxu0 0
  %110 = vmatprep.mubr.bf16.mxu0 0
  %111 = vmatmul.mubr.bf16.gmra.mrb[0].mxu0 %v76
  %v112 = vpop.f32.mrb[0].mxu0
  %v113 = vadd.f32 0.0, %v112
  %v114 = vpop.f32.mrb[0].mxu0
  %v115 = vpop.f32.mrb[0].mxu0
  %v116 = vadd.f32 0.0, %v115
  %v117 = vpop.f32.mrb[0].mxu0
  %118 = vdwg.mxu0
  %v119 = vadd.f32 %v33, %v113
  %v120 = vadd.f32 %v34, %v116
  %vm121 = vcmask 261120
  %122 = vst.msk [vmem:[#allocation2] sm:$0xff] %vm121, %v119
  %123 = vst.msk [vmem:[#allocation2 + $0x8] sm:$0xff] %vm121, %v120
  // Predicated region
  $region30: #{cross_pair_forward.39} parent=0 // pred_check
    %p124 = pneg %p26
  $region31: #{cross_pair_forward.39} parent=0 // pred_check_branch
    %126 = sbr.rel (%p124) target = $region33
  $region32: #{cross_pair_forward.39} parent=0 // pred_region
    %v127 = vld [vmem:[#allocation2] sm:$0xff]
    %v128 = vld [vmem:[#allocation2 + $0x8] sm:$0xff]
    %v129 = vld [vmem:[%s2] sm:$0x1]
    %v131 = vlaneseq
    %v132 = vshrl.u32 %v131, 7
    %v133 = vsub.s32 0, %v132
    %v134 = vrot.slane %v129, %v133
    %v136 = vadd.f32 %v127, %v134
    %v137 = vadd.f32 %v128, %v134
    %v138 = vld [vmem:[%s3] sm:$0xff]
    %v139 = vld [vmem:[%s3 + $0x8] sm:$0xff]
    %v140 = vadd.f32 %v136, %v138
    %v141 = vadd.f32 %v137, %v139
    %v142 = vsel %vm121, %v140, 0.0
    %143 = vadd.xlane.f32.xlu0 %v142
    %v144 = vpop.xlane.xlu0 %143
    %v145 = vsel %vm121, %v141, 0.0
    %146 = vadd.xlane.f32.xlu0 %v145
    %v147 = vpop.xlane.xlu0 %146
    %v148 = vrcp.pop 32.0
    %v149 = vmul.f32 %v144, %v148
    %v150 = vmul.f32 %v147, %v148
    %v151 = vsub.f32 %v140, %v149
    %v152 = vsub.f32 %v141, %v150
    %v153 = vmul.f32 %v151, %v151
    %v154 = vmul.f32 %v152, %v152
    %v155 = vsel %vm121, %v153, 0.0
    %156 = vadd.xlane.f32.xlu0 %v155
    %v157 = vpop.xlane.xlu0 %156
    %v158 = vsel %vm121, %v154, 0.0
    %159 = vadd.xlane.f32.xlu0 %v158
    %v160 = vpop.xlane.xlu0 %159
    %v161 = vmul.f32 %v157, %v148
    %v162 = vmul.f32 %v160, %v148
    %v163 = vadd.f32 %v161, 1e-12
    %v164 = vadd.f32 %v162, 1e-12
    %v165 = vrsqrt.pop %v163
    %v166 = vrsqrt.pop %v164
    %v167 = vmul.f32 %v151, %v165
    %v168 = vmul.f32 %v152, %v166
    %v169 = vld [vmem:[%s4] sm:$0x1]
    %v171 = vlaneseq
    %v172 = vshrl.u32 %v171, 7
    %v173 = vsub.s32 0, %v172
    %v174 = vrot.slane %v169, %v173
    %v176 = vmul.f32 %v167, %v174
    %v177 = vmul.f32 %v168, %v174
    %v178 = vld [vmem:[%s5] sm:$0x1]
    %v180 = vlaneseq
    %v181 = vshrl.u32 %v180, 7
    %v182 = vsub.s32 0, %v181
    %v183 = vrot.slane %v178, %v182
    %v185 = vadd.f32 %v176, %v183
    %v186 = vadd.f32 %v177, %v183
    %187 = vst.msk [vmem:[%s6] sm:$0xff] %vm121, %v185
    %188 = vst.msk [vmem:[%s6 + $0x8] sm:$0xff] %vm121, %v186
    %v189 = vpack.c.bf16 %v186, %v185
    %v191 = vunpack.c.l.b16 %v189
    %v192 = vunpack.c.h.b16 %v189
    %v193 = vpack.c.b16 %v191, %v191
    %v194 = vpack.c.b16 %v192, %v192
    %vm197 = vcmask 257024
    %198 = vst.msk [vmem:[%s7] sm:$0xf] %vm197, %v193
    %199 = vst.msk [vmem:[%s7 + $0x4] sm:$0xf] %vm197, %v194
  $region33: #{cross_pair_forward.39} parent=0 // pred_fallthru
    _
  // Predicated region
  $region34: #{cross_pair_forward.39} parent=0 // pred_check
    _
  $region35: #{cross_pair_forward.39} parent=0 // pred_check_branch
    %201 = sbr.rel (0) target = $region37
  $region36: #{cross_pair_forward.39} parent=0 // pred_region
    _
  $region37: #{cross_pair_forward.39} parent=0 // pred_fallthru
    _
  // Predicated region
  $region38: #{cross_pair_forward.39} parent=0 // pred_check
    _
  $region39: #{cross_pair_forward.39} parent=0 // pred_check_branch
    %203 = sbr.rel (0) target = $region41
  $region40: #{cross_pair_forward.39} parent=0 // pred_region
    _
  $region41: #{cross_pair_forward.39} parent=0 // pred_fallthru
    _
  // Predicated region
  $region42: #{cross_pair_forward.39} parent=0 // pred_check
    _
  $region43: #{cross_pair_forward.39} parent=0 // pred_check_branch
    %205 = sbr.rel (0) target = $region45
  $region44: #{cross_pair_forward.39} parent=0 // pred_region
    _
  $region45: #{cross_pair_forward.39} parent=0 // pred_fallthru
    _
  // Predicated region
  $region46: #{cross_pair_forward.39} parent=0 // pred_check
    _
  $region47: #{cross_pair_forward.39} parent=0 // pred_check_branch
    %207 = sbr.rel (0) target = $region49
  $region48: #{cross_pair_forward.39} parent=0 // pred_region
    _
  $region49: #{cross_pair_forward.39} parent=0 // pred_fallthru
    _

// kernel: cross_pair_forward.30
$region0: #{cross_pair_forward.30}
  #allocation0 [shape = 'u32[]', space=smem, size = 0x4, offset = 0x4, fixed_abs, tag = 'smem constant byte address 0x4 - core index']
  #allocation1 [shape = 'u32[144,128]{1,0:T(1,128)}', space=vmem, size = 0x12000, scoped, tag = 'internal scratch']
  %s0 = inlined_call_operand.vmem [shape: bf16[2,16,32], index: 0, kind: input, shape index: {}]
  %s1 = inlined_call_operand.vmem [shape: bf16[2,8,64], index: 1, kind: input, shape index: {}]
  %s2 = inlined_call_operand.vmem [shape: f32[2,1,8], index: 2, kind: input, shape index: {}]
  %s3 = inlined_call_operand.vmem [shape: bf16[2,16,32], index: 3, kind: output, shape index: {0}]
  %s4 = inlined_call_operand.hbm [shape: f32[2,4,16,8], index: 4, kind: output, shape index: {1}]
  %5 = xla_tuple %s3, %s4
  %s6 = sld [smem:[#allocation0]]
  $region53: #{cross_pair_forward.30} parent=0
    _
  %s8 = ssub.s32 1, %s6
  %s9 = scalar_select 0, %s8, %s6
  $region1: #{cross_pair_forward.30} parent=0
    #allocation2 [shape = 'u8[65536]{0}', space=vmem, size = 0x10000, scoped, tag = 'output window, operand 1']
    #allocation3 [shape = 's32[2]{0}', space=sflag, size = 0x8, scoped, tag = 'scoped memory for cross_pair_forward.30']
    %10 = vsyncpa [#allocation3], 0
    %s11 = scalar_lea.sflag [#allocation3], 1
    %12 = vsyncpa %s11, 0
    loop: start=0, step=1, limit=4
    $region2: #{cross_pair_forward.30} parent=1 // loop_pre_header
      _
    $region3: #{cross_pair_forward.30} parent=1 // loop_header
      %s14 = sphi 0, %s18
      %p15 = scmp.ge.s32.totalorder %s14, 4
      %s21 = sphi 0, %s40
      %s22 = sphi 0, %s36
      %s23 = sphi 0, %s32
      %s24 = sphi 0, %s21
      %s25 = sphi 0, %s22
      %s26 = sphi 0, %s23
      %s27 = sphi 0, %s24
      %s28 = sphi 0, %s25
      %s29 = sphi 0, %s26
      %s47 = sphi 0, %s49
      %s50 = sphi 0, %s47
      %s51 = sphi 0, %s50
      %s67 = sphi 0, %s51
      %s75 = sphi 0, %s77
      %s78 = sphi 0, %s75
      %s79 = sphi 0, %s78
      %s95 = sphi 0, %s79
      %s101 = sphi 0, %s103
      %s104 = sphi 0, %s101
      %s105 = sphi 0, %s104
      %s121 = sphi 0, %s105
      %s131 = sphi 0, %s133
      %s134 = sphi 0, %s131
      %s135 = sphi 0, %s134
      %s151 = sphi 0, %s135
      %s161 = sphi 0, %s163
      %s164 = sphi 0, %s161
      %s165 = sphi 0, %s164
      %s181 = sphi 0, %s165
    $region4: #{cross_pair_forward.30} parent=1 // loop_header_branch
      %17 = sbr.rel (%p15) target = $region8
    $region5: #{cross_pair_forward.30} parent=1 // loop_body
      %s19 = ssub.s32 %s14, 1
      %s20 = ssub.s32 %s14, 2
      %s30 = sadd.s32 1, %s23
      %p31 = scmp.ge.s32.totalorder %s30, 1
      %s32 = scalar_select %p31, 0, %s30
      %s33 = sadd.s32 1, %s22
      %s34 = scalar_select %p31, %s33, %s22
      %p35 = scmp.ge.s32.totalorder %s34, 1
      %s36 = scalar_select %p35, 0, %s34
      %s37 = sadd.s32 1, %s21
      %s38 = scalar_select %p35, %s37, %s21
      %p39 = scmp.ge.s32.totalorder %s38, 2
      %s40 = scalar_select %p39, 0, %s38
      %s41 = ssub.s32 %s21, %s40
      %s42 = ssub.s32 %s23, %s32
      %s43 = sor.u32 %s41, %s42
      %s44 = ssub.s32 %s22, %s36
      %s45 = sor.u32 %s43, %s44
      %p46 = scmp.eq.s32.totalorder %s45, 0
      %s48 = sadd.s32 %s47, 1
      %s49 = scalar_select %p46, %s47, %s48
      %p52 = pneg %p46
      %p53 = scmp.eq.s32.totalorder %s14, 1
      %p54 = por %p52, %p53
      %p55 = scmp.ne.s32.totalorder %s47, %s50
      %p56 = scmp.eq.s32.totalorder %s14, 0
      %p57 = por %p55, %p56
      %p58 = scmp.ne.s32.totalorder %s47, %s50
      %p59 = scmp.eq.s32.totalorder %s19, 1
      %p60 = por %p58, %p59
      %p61 = scmp.ne.s32.totalorder %s50, %s51
      %p62 = scmp.eq.s32.totalorder %s19, 0
      %p63 = por %p61, %p62
      %p64 = scmp.ne.s32.totalorder %s50, %s51
      %p65 = scmp.eq.s32.totalorder %s20, 1
      %p66 = por %p64, %p65
      %p68 = scmp.ne.s32.totalorder %s51, %s67
      %p69 = scmp.eq.s32.totalorder %s20, 0
      %p70 = por %p68, %p69
      %s71 = ssub.s32 %s21, %s40
      %s72 = ssub.s32 %s22, %s36
      %s73 = sor.u32 %s71, %s72
      %p74 = scmp.eq.s32.totalorder %s73, 0
      %s76 = sadd.s32 %s75, 1
      %s77 = scalar_select %p74, %s75, %s76
      %p80 = pneg %p74
      %p81 = scmp.eq.s32.totalorder %s14, 1
      %p82 = por %p80, %p81
      %p83 = scmp.ne.s32.totalorder %s75, %s78
      %p84 = scmp.eq.s32.totalorder %s14, 0
      %p85 = por %p83, %p84
      %p86 = scmp.ne.s32.totalorder %s75, %s78
      %p87 = scmp.eq.s32.totalorder %s19, 1
      %p88 = por %p86, %p87
      %p89 = scmp.ne.s32.totalorder %s78, %s79
      %p90 = scmp.eq.s32.totalorder %s19, 0
      %p91 = por %p89, %p90
      %p92 = scmp.ne.s32.totalorder %s78, %s79
      %p93 = scmp.eq.s32.totalorder %s20, 1
      %p94 = por %p92, %p93
      %p96 = scmp.ne.s32.totalorder %s79, %s95
      %p97 = scmp.eq.s32.totalorder %s20, 0
      %p98 = por %p96, %p97
      %s99 = ssub.s32 %s21, %s40
      %p100 = scmp.eq.s32.totalorder %s99, 0
      %s102 = sadd.s32 %s101, 1
      %s103 = scalar_select %p100, %s101, %s102
      %p106 = pneg %p100
      %p107 = scmp.eq.s32.totalorder %s14, 1
      %p108 = por %p106, %p107
      %p109 = scmp.ne.s32.totalorder %s101, %s104
      %p110 = scmp.eq.s32.totalorder %s14, 0
      %p111 = por %p109, %p110
      %p112 = scmp.ne.s32.totalorder %s101, %s104
      %p113 = scmp.eq.s32.totalorder %s19, 1
      %p114 = por %p112, %p113
      %p115 = scmp.ne.s32.totalorder %s104, %s105
      %p116 = scmp.eq.s32.totalorder %s19, 0
      %p117 = por %p115, %p116
      %p118 = scmp.ne.s32.totalorder %s104, %s105
      %p119 = scmp.eq.s32.totalorder %s20, 1
      %p120 = por %p118, %p119
      %p122 = scmp.ne.s32.totalorder %s105, %s121
      %p123 = scmp.eq.s32.totalorder %s20, 0
      %p124 = por %p122, %p123
      %s125 = ssub.s32 %s21, %s40
      %s126 = ssub.s32 %s23, %s32
      %s127 = sor.u32 %s125, %s126
      %s128 = ssub.s32 %s22, %s36
      %s129 = sor.u32 %s127, %s128
      %p130 = scmp.eq.s32.totalorder %s129, 0
      %s132 = sadd.s32 %s131, 1
      %s133 = scalar_select %p130, %s131, %s132
      %p136 = pneg %p130
      %p137 = scmp.eq.s32.totalorder %s14, 1
      %p138 = por %p136, %p137
      %p139 = scmp.ne.s32.totalorder %s131, %s134
      %p140 = scmp.eq.s32.totalorder %s14, 0
      %p141 = por %p139, %p140
      %p142 = scmp.ne.s32.totalorder %s131, %s134
      %p143 = scmp.eq.s32.totalorder %s19, 1
      %p144 = por %p142, %p143
      %p145 = scmp.ne.s32.totalorder %s134, %s135
      %p146 = scmp.eq.s32.totalorder %s19, 0
      %p147 = por %p145, %p146
      %p148 = scmp.ne.s32.totalorder %s134, %s135
      %p149 = scmp.eq.s32.totalorder %s20, 1
      %p150 = por %p148, %p149
      %p152 = scmp.ne.s32.totalorder %s135, %s151
      %p153 = scmp.eq.s32.totalorder %s20, 0
      %p154 = por %p152, %p153
      %s155 = ssub.s32 %s21, %s40
      %s156 = ssub.s32 %s22, %s36
      %s157 = sor.u32 %s155, %s156
      %s158 = ssub.s32 %s23, %s32
      %s159 = sor.u32 %s157, %s158
      %p160 = scmp.eq.s32.totalorder %s159, 0
      %s162 = sadd.s32 %s161, 1
      %s163 = scalar_select %p160, %s161, %s162
      %p166 = pneg %p160
      %p167 = scmp.eq.s32.totalorder %s14, 1
      %p168 = por %p166, %p167
      %p169 = scmp.ne.s32.totalorder %s161, %s164
      %p170 = scmp.eq.s32.totalorder %s14, 0
      %p171 = por %p169, %p170
      %p172 = scmp.ne.s32.totalorder %s161, %s164
      %p173 = scmp.eq.s32.totalorder %s19, 1
      %p174 = por %p172, %p173
      %p175 = scmp.ne.s32.totalorder %s164, %s165
      %p176 = scmp.eq.s32.totalorder %s19, 0
      %p177 = por %p175, %p176
      %p178 = scmp.ne.s32.totalorder %s164, %s165
      %p179 = scmp.eq.s32.totalorder %s20, 1
      %p180 = por %p178, %p179
      %p182 = scmp.ne.s32.totalorder %s165, %s181
      %p183 = scmp.eq.s32.totalorder %s20, 0
      %p184 = por %p182, %p183
      %p185 = scmp.le.s32.totalorder 1, %s14
      %p186 = scmp.lt.s32.totalorder %s14, 3
      %p187 = pnand %p185, %p186
      %p188 = pneg %p187
      // Predicated region
      $region9: #{cross_pair_forward.30} parent=5 // pred_check
        _
      $region10: #{cross_pair_forward.30} parent=5 // pred_check_branch
        %190 = sbr.rel (%p187) target = $region12
      $region11: #{cross_pair_forward.30} parent=5 // pred_region
        %s191 = ssub.s32 %s14, 1
      $region12: #{cross_pair_forward.30} parent=5 // pred_fallthru
        _
      %p192 = scmp.lt.s32.totalorder %s14, 2
      // Predicated region
      $region13: #{cross_pair_forward.30} parent=5 // pred_check
        %p193 = pneg %p192
      $region14: #{cross_pair_forward.30} parent=5 // pred_check_branch
        %195 = sbr.rel (%p193) target = $region16
      $region15: #{cross_pair_forward.30} parent=5 // pred_region
        // Predicated region
        $region17: #{cross_pair_forward.30} parent=15 // pred_check
          %p196 = pneg %p57
        $region18: #{cross_pair_forward.30} parent=15 // pred_check_branch
          %198 = sbr.rel (%p196) target = $region20
        $region19: #{cross_pair_forward.30} parent=15 // pred_region
          %s199 = smul.u32 2, %s23
          %p200 = scmp.lt.s32.totalorder %s21, 1
          %s201 = scalar_select %p200, %s21, 1
          %p202 = scmp.lt.s32.totalorder %s199, 1
          %s203 = scalar_select %p202, %s199, 1
          %p204 = scmp.lt.s32.totalorder %s22, 0
          %s205 = scalar_select %p204, %s22, 0
          %s206 = sadd.s32 %s205, %s203
          %s207 = smul.addr %s201, 2
          %s208 = sadd.s32 %s206, %s207
          %s209 = smul.addr %s208, 4
          %s210 = scalar_lea.vmem %s0, %s209
          %s211 = smul.u32 2, %s23
        $region20: #{cross_pair_forward.30} parent=15 // pred_fallthru
          _
        // Predicated region
        $region21: #{cross_pair_forward.30} parent=15 // pred_check
          %p212 = pneg %p85
        $region22: #{cross_pair_forward.30} parent=15 // pred_check_branch
          %214 = sbr.rel (%p212) target = $region24
        $region23: #{cross_pair_forward.30} parent=15 // pred_region
          %p215 = scmp.lt.s32.totalorder %s21, 1
          %s216 = scalar_select %p215, %s21, 1
          %p217 = scmp.lt.s32.totalorder %s22, 0
          %s218 = scalar_select %p217, %s22, 0
          %s219 = sadd.s32 %s218, %s216
          %s220 = smul.addr %s219, 4
          %s221 = scalar_lea.vmem %s1, %s220
        $region24: #{cross_pair_forward.30} parent=15 // pred_fallthru
          _
        // Predicated region
        $region25: #{cross_pair_forward.30} parent=15 // pred_check
          %p222 = pneg %p111
        $region26: #{cross_pair_forward.30} parent=15 // pred_check_branch
          %224 = sbr.rel (%p222) target = $region28
        $region27: #{cross_pair_forward.30} parent=15 // pred_region
          %p225 = scmp.lt.s32.totalorder %s21, 1
          %s226 = scalar_select %p225, %s21, 1
          %s227 = scalar_lea.vmem %s2, %s226
        $region28: #{cross_pair_forward.30} parent=15 // pred_fallthru
          _
      $region16: #{cross_pair_forward.30} parent=5 // pred_fallthru
        _
      %p228 = scmp.le.s32.totalorder 1, %s14
      %p229 = scmp.lt.s32.totalorder %s14, 3
      %p230 = pnand %p228, %p229
      %p231 = pneg %p230
      // Predicated region
      $region29: #{cross_pair_forward.30} parent=5 // pred_check
        _
      $region30: #{cross_pair_forward.30} parent=5 // pred_check_branch
        %233 = sbr.rel (%p230) target = $region32
      $region31: #{cross_pair_forward.30} parent=5 // pred_region
        %s234 = ssub.s32 %s14, 1
        %s235 = smul.u32 2, %s26
        %p236 = scmp.lt.s32.totalorder %s24, 1
        %s237 = scalar_select %p236, %s24, 1
        %p238 = scmp.lt.s32.totalorder %s235, 1
        %s239 = scalar_select %p238, %s235, 1
        %p240 = scmp.lt.s32.totalorder %s25, 0
        %s241 = scalar_select %p240, %s25, 0
        %s242 = sadd.s32 %s241, %s239
        %s243 = smul.addr %s237, 2
        %s244 = sadd.s32 %s242, %s243
        %s245 = smul.addr %s244, 4
        %s246 = scalar_lea.vmem %s0, %s245
        %p247 = pneg %p63
        %p248 = pneg %p60
        %p249 = scmp.lt.s32.totalorder %s24, 1
        %s250 = scalar_select %p249, %s24, 1
        %p251 = scmp.lt.s32.totalorder %s25, 0
        %s252 = scalar_select %p251, %s25, 0
        %s253 = sadd.s32 %s252, %s250
        %s254 = smul.addr %s253, 4
        %s255 = scalar_lea.vmem %s1, %s254
        %p256 = pneg %p91
        %p257 = pneg %p88
        %p258 = scmp.lt.s32.totalorder %s24, 1
        %s259 = scalar_select %p258, %s24, 1
        %s260 = scalar_lea.vmem %s2, %s259
        %p261 = pneg %p117
        %p262 = pneg %p114
        %p263 = pneg %p147
        %p264 = pneg %p144
        %s265 = smul.u32 2, %s26
        %p266 = scmp.lt.s32.totalorder %s24, 1
        %s267 = scalar_select %p266, %s24, 1
        %p268 = scmp.lt.s32.totalorder %s265, 1
        %s269 = scalar_select %p268, %s265, 1
        %p270 = scmp.lt.s32.totalorder %s25, 0
        %s271 = scalar_select %p270, %s25, 0
        %s272 = sadd.s32 %s271, %s269
        %s273 = smul.addr %s267, 2
        %s274 = sadd.s32 %s272, %s273
        %s275 = smul.addr %s274, 4
        %s276 = scalar_lea.vmem %s3, %s275
        %p277 = pneg %p177
        %p278 = pneg %p174
        %s279 = sand.u32 %s164, 1
        %s280 = scalar_lea.sflag [#allocation3], %s279
        %s281 = sand.u32 %s164, 1
        %s282 = smul.addr %s281, 64
        %s283 = scalar_lea.vmem [#allocation2], %s282
        %s284 = smul.u32 2, %s26
        %p285 = scmp.lt.s32.totalorder %s24, 1
        %s286 = scalar_select %p285, %s24, 1
        %p287 = scmp.lt.s32.totalorder %s284, 1
        %s288 = scalar_select %p287, %s284, 1
        %p289 = scmp.lt.s32.totalorder %s25, 0
        %s290 = scalar_select %p289, %s25, 0
        %s291 = sadd.s32 %s290, %s288
        %s292 = smul.addr %s286, 2
        %s293 = sadd.s32 %s291, %s292
        %s294 = smul.addr %s293, 4
        %s295 = scalar_lea.vmem %s0, %s294
        %s296 = smul.u32 2, %s26
        %p297 = scmp.lt.s32.totalorder %s24, 1
        %s298 = scalar_select %p297, %s24, 1
        %p299 = scmp.lt.s32.totalorder %s25, 0
        %s300 = scalar_select %p299, %s25, 0
        %s301 = sadd.s32 %s300, %s298
        %s302 = smul.addr %s301, 4
        %s303 = scalar_lea.vmem %s1, %s302
        %p304 = scmp.lt.s32.totalorder %s24, 1
        %s305 = scalar_select %p304, %s24, 1
        %s306 = scalar_lea.vmem %s2, %s305
        %s307 = smul.u32 2, %s26
        %p308 = scmp.lt.s32.totalorder %s24, 1
        %s309 = scalar_select %p308, %s24, 1
        %p310 = scmp.lt.s32.totalorder %s307, 1
        %s311 = scalar_select %p310, %s307, 1
        %p312 = scmp.lt.s32.totalorder %s25, 0
        %s313 = scalar_select %p312, %s25, 0
        %s314 = sadd.s32 %s313, %s311
        %s315 = smul.addr %s309, 2
        %s316 = sadd.s32 %s314, %s315
        %s317 = smul.addr %s316, 4
        %s318 = scalar_lea.vmem %s3, %s317
        %s319 = smul.u32 2, %s26
        %s320 = smul.u32 4, %s25
        %s321 = smul.u32 2, %s26
        %v323 = vld [vmem:[%s295] sm:$0xf]
        %v324 = vld [vmem:[%s295 + $0x4] sm:$0xf]
        %v325 = vld [vmem:[%s303] sm:$0xf]
        %v326 = vld [vmem:[%s306] sm:$0x1]
        %v329 = vunpack.c.l.b16 %v323
        %v330 = vunpack.c.l.b16 %v324
        %v331 = vpack.c.b16 %v330, %v329
        %vm332 = vcmask 64512
        %v334 = vsel %vm332, %v331, 0
        %v337 = vsel %vm332, %v325, 0
        %339 = vmatprep.subr.bf16.mxu0 0
        %340 = vmatpush1.bf16.xpose.msra.mxu0 %v337
        %341 = vmatprep.subr.bf16.mxu0 0
        %342 = vmatpush1.bf16.xpose.msra.mxu0 0
        %343 = vmatprep.subr.bf16.mxu0 0
        %344 = vmatpush1.bf16.xpose.msra.mxu0 0
        %345 = vmatprep.subr.bf16.mxu0 0
        %346 = vmatpush1.bf16.xpose.msra.mxu0 0
        %347 = vmatprep.subr.bf16.mxu0 0
        %348 = vmatpush1.bf16.xpose.msra.mxu0 0
        %349 = vmatprep.subr.bf16.mxu0 0
        %350 = vmatpush1.bf16.xpose.msra.mxu0 0
        %351 = vmatprep.subr.bf16.mxu0 0
        %352 = vmatpush1.bf16.xpose.msra.mxu0 0
        %353 = vmatprep.subr.bf16.mxu0 0
        %354 = vmatpush1.bf16.xpose.msra.mxu0 0
        %355 = vmatprep.subr.bf16.mxu0 0
        %356 = vmatpush1.bf16.xpose.msra.mxu0 0
        %357 = vmatprep.subr.bf16.mxu0 0
        %358 = vmatpush1.bf16.xpose.msra.mxu0 0
        %359 = vmatprep.subr.bf16.mxu0 0
        %360 = vmatpush1.bf16.xpose.msra.mxu0 0
        %361 = vmatprep.subr.bf16.mxu0 0
        %362 = vmatpush1.bf16.xpose.msra.mxu0 0
        %363 = vmatprep.subr.bf16.mxu0 0
        %364 = vmatpush1.bf16.xpose.msra.mxu0 0
        %365 = vmatprep.subr.bf16.mxu0 0
        %366 = vmatpush1.bf16.xpose.msra.mxu0 0
        %367 = vmatprep.subr.bf16.mxu0 0
        %368 = vmatpush1.bf16.xpose.msra.mxu0 0
        %369 = vmatprep.subr.bf16.mxu0 0
        %370 = vmatpush1.bf16.xpose.msra.mxu0 0
        %371 = vmatprep.mubr.bf16.mxu0 0
        %372 = vmatmul.mubr.bf16.gmra.mrb[0].mxu0 %v334
        %v373 = vpop.f32.mrb[0].mxu0
        %v374 = vadd.f32 0.0, %v373
        %v375 = vpop.f32.mrb[0].mxu0
        %v376 = vpop.f32.mrb[0].mxu0
        %v377 = vadd.f32 0.0, %v376
        %v378 = vpop.f32.mrb[0].mxu0
        %379 = vdwg.mxu0
        %v380 = vmul.f32 %v374, 0.35355338
        %v381 = vmul.f32 %v377, 0.35355338
        %382 = vst.msk [vmem:[%s283] sm:$0xff] %vm332, %v380
        %383 = vst.msk [vmem:[%s283 + $0x8] sm:$0xff] %vm332, %v381
        %v385 = vlaneseq
        %v386 = vshrl.u32 %v385, 7
        %v387 = vsub.s32 0, %v386
        %v388 = vrot.slane %v326, %v387
        %v390 = vadd.f32 %v380, %v388
        %v391 = vadd.f32 %v381, %v388
        %v392 = vsel %vm332, %v390, -inf
        %393 = vmax.xlane.f32.xlu0 %v392
        %v394 = vpop.xlane.xlu0 %393
        %v395 = vsel %vm332, %v391, -inf
        %396 = vmax.xlane.f32.xlu0 %v395
        %v397 = vpop.xlane.xlu0 %396
        %v398 = vsub.f32 %v390, %v394
        %v399 = vsub.f32 %v391, %v397
        %v400 = vmul.f32 %v398, 1.442695
        %v401 = vpow.pop %v400
        %v402 = vmul.f32 %v399, 1.442695
        %v403 = vpow.pop %v402
        %v404 = vsel %vm332, %v401, 0.0
        %405 = vadd.xlane.f32.xlu0 %v404
        %v406 = vpop.xlane.xlu0 %405
        %v407 = vsel %vm332, %v403, 0.0
        %408 = vadd.xlane.f32.xlu0 %v407
        %v409 = vpop.xlane.xlu0 %408
        %v410 = vrcp.pop %v406
        %v411 = vrcp.pop %v409
        %v412 = vmul.f32 %v401, %v410
        %v413 = vmul.f32 %v403, %v411
        %v414 = vpack.c.bf16 %v413, %v412
        %v416 = vunpack.c.l.b16 %v325
        %v417 = vpack.c.b16 %v416, %v416
        %418 = vrot.lane.b32.xlu0 %v417, 120
        %v419 = vpop.permute.xlu0 %418
        %v421 = vsel %vm332, %v414, 0
        %vm423 = vcmask 1043456
        %v425 = vsel %vm423, %v419, 0
        %427 = vmatprep.subr.bf16.mxu0 0
        %428 = vmatpush1.bf16.msra.mxu0 %v425
        %429 = vmatprep.subr.bf16.mxu0 0
        %430 = vmatpush1.bf16.msra.mxu0 0
        %431 = vmatprep.subr.bf16.mxu0 0
        %432 = vmatpush1.bf16.msra.mxu0 0
        %433 = vmatprep.subr.bf16.mxu0 0
        %434 = vmatpush1.bf16.msra.mxu0 0
        %435 = vmatprep.subr.bf16.mxu0 0
        %436 = vmatpush1.bf16.msra.mxu0 0
        %437 = vmatprep.subr.bf16.mxu0 0
        %438 = vmatpush1.bf16.msra.mxu0 0
        %439 = vmatprep.subr.bf16.mxu0 0
        %440 = vmatpush1.bf16.msra.mxu0 0
        %441 = vmatprep.subr.bf16.mxu0 0
        %442 = vmatpush1.bf16.msra.mxu0 0
        %443 = vmatprep.subr.bf16.mxu0 0
        %444 = vmatpush1.bf16.msra.mxu0 0
        %445 = vmatprep.subr.bf16.mxu0 0
        %446 = vmatpush1.bf16.msra.mxu0 0
        %447 = vmatprep.subr.bf16.mxu0 0
        %448 = vmatpush1.bf16.msra.mxu0 0
        %449 = vmatprep.subr.bf16.mxu0 0
        %450 = vmatpush1.bf16.msra.mxu0 0
        %451 = vmatprep.subr.bf16.mxu0 0
        %452 = vmatpush1.bf16.msra.mxu0 0
        %453 = vmatprep.subr.bf16.mxu0 0
        %454 = vmatpush1.bf16.msra.mxu0 0
        %455 = vmatprep.subr.bf16.mxu0 0
        %456 = vmatpush1.bf16.msra.mxu0 0
        %457 = vmatprep.subr.bf16.mxu0 0
        %458 = vmatpush1.bf16.msra.mxu0 0
        %459 = vmatprep.mubr.bf16.mxu0 0
        %460 = vmatmul.mubr.bf16.gmra.mrb[0].mxu0 %v421
        %v461 = vpop.f32.mrb[0].mxu0
        %v462 = vadd.f32 0.0, %v461
        %v463 = vpop.f32.mrb[0].mxu0
        %v464 = vpop.f32.mrb[0].mxu0
        %v465 = vadd.f32 0.0, %v464
        %v466 = vpop.f32.mrb[0].mxu0
        %467 = vdwg.mxu0
        %468 = vrot.lane.b32.xlu0 %v331, 120
        %v469 = vpop.permute.xlu0 %468
        %470 = vrot.lane.b32.xlu0 %v417, 112
        %v471 = vpop.permute.xlu0 %470
        %v473 = vsel %vm332, %v469, 0
        %v476 = vsel %vm332, %v471, 0
        %478 = vmatprep.subr.bf16.mxu0 0
        %479 = vmatpush1.bf16.xpose.msra.mxu0 %v476
        %480 = vmatprep.subr.bf16.mxu0 0
        %481 = vmatpush1.bf16.xpose.msra.mxu0 0
        %482 = vmatprep.subr.bf16.mxu0 0
        %483 = vmatpush1.bf16.xpose.msra.mxu0 0
        %484 = vmatprep.subr.bf16.mxu0 0
        %485 = vmatpush1.bf16.xpose.msra.mxu0 0
        %486 = vmatprep.subr.bf16.mxu0 0
        %487 = vmatpush1.bf16.xpose.msra.mxu0 0
        %488 = vmatprep.subr.bf16.mxu0 0
        %489 = vmatpush1.bf16.xpose.msra.mxu0 0
        %490 = vmatprep.subr.bf16.mxu0 0
        %491 = vmatpush1.bf16.xpose.msra.mxu0 0
        %492 = vmatprep.subr.bf16.mxu0 0
        %493 = vmatpush1.bf16.xpose.msra.mxu0 0
        %494 = vmatprep.subr.bf16.mxu0 0
        %495 = vmatpush1.bf16.xpose.msra.mxu0 0
        %496 = vmatprep.subr.bf16.mxu0 0
        %497 = vmatpush1.bf16.xpose.msra.mxu0 0
        %498 = vmatprep.subr.bf16.mxu0 0
        %499 = vmatpush1.bf16.xpose.msra.mxu0 0
        %500 = vmatprep.subr.bf16.mxu0 0
        %501 = vmatpush1.bf16.xpose.msra.mxu0 0
        %502 = vmatprep.subr.bf16.mxu0 0
        %503 = vmatpush1.bf16.xpose.msra.mxu0 0
        %504 = vmatprep.subr.bf16.mxu0 0
        %505 = vmatpush1.bf16.xpose.msra.mxu0 0
        %506 = vmatprep.subr.bf16.mxu0 0
        %507 = vmatpush1.bf16.xpose.msra.mxu0 0
        %508 = vmatprep.subr.bf16.mxu0 0
        %509 = vmatpush1.bf16.xpose.msra.mxu0 0
        %510 = vmatprep.mubr.bf16.mxu0 0
        %511 = vmatmul.mubr.bf16.gmra.mrb[0].mxu0 %v473
        %v512 = vpop.f32.mrb[0].mxu0
        %v513 = vadd.f32 0.0, %v512
        %v514 = vpop.f32.mrb[0].mxu0
        %v515 = vpop.f32.mrb[0].mxu0
        %v516 = vadd.f32 0.0, %v515
        %v517 = vpop.f32.mrb[0].mxu0
        %518 = vdwg.mxu0
        %v519 = vmul.f32 %v513, 0.35355338
        %v520 = vmul.f32 %v516, 0.35355338
        %s521 = scalar_lea.vmem %s283, 16 [#allocation2]
        %522 = vst.msk [vmem:[%s521] sm:$0xff] %vm332, %v519
        %523 = vst.msk [vmem:[%s521 + $0x8] sm:$0xff] %vm332, %v520
        %v524 = vadd.f32 %v519, %v388
        %v525 = vadd.f32 %v520, %v388
        %v526 = vsel %vm332, %v524, -inf
        %527 = vmax.xlane.f32.xlu0 %v526
        %v528 = vpop.xlane.xlu0 %527
        %v529 = vsel %vm332, %v525, -inf
        %530 = vmax.xlane.f32.xlu0 %v529
        %v531 = vpop.xlane.xlu0 %530
        %v532 = vsub.f32 %v524, %v528
        %v533 = vsub.f32 %v525, %v531
        %v534 = vmul.f32 %v532, 1.442695
        %v535 = vpow.pop %v534
        %v536 = vmul.f32 %v533, 1.442695
        %v537 = vpow.pop %v536
        %v538 = vsel %vm332, %v535, 0.0
        %539 = vadd.xlane.f32.xlu0 %v538
        %v540 = vpop.xlane.xlu0 %539
        %v541 = vsel %vm332, %v537, 0.0
        %542 = vadd.xlane.f32.xlu0 %v541
        %v543 = vpop.xlane.xlu0 %542
        %v544 = vrcp.pop %v540
        %v545 = vrcp.pop %v543
        %v546 = vmul.f32 %v535, %v544
        %v547 = vmul.f32 %v537, %v545
        %v548 = vpack.c.bf16 %v547, %v546
        %549 = vrot.lane.b32.xlu0 %v417, 104
        %v550 = vpop.permute.xlu0 %549
        %v552 = vsel %vm332, %v548, 0
        %v555 = vsel %vm423, %v550, 0
        %557 = vmatprep.subr.bf16.mxu0 0
        %558 = vmatpush1.bf16.msra.mxu0 %v555
        %559 = vmatprep.subr.bf16.mxu0 0
        %560 = vmatpush1.bf16.msra.mxu0 0
        %561 = vmatprep.subr.bf16.mxu0 0
        %562 = vmatpush1.bf16.msra.mxu0 0
        %563 = vmatprep.subr.bf16.mxu0 0
        %564 = vmatpush1.bf16.msra.mxu0 0
        %565 = vmatprep.subr.bf16.mxu0 0
        %566 = vmatpush1.bf16.msra.mxu0 0
        %567 = vmatprep.subr.bf16.mxu0 0
        %568 = vmatpush1.bf16.msra.mxu0 0
        %569 = vmatprep.subr.bf16.mxu0 0
        %570 = vmatpush1.bf16.msra.mxu0 0
        %571 = vmatprep.subr.bf16.mxu0 0
        %572 = vmatpush1.bf16.msra.mxu0 0
        %573 = vmatprep.subr.bf16.mxu0 0
        %574 = vmatpush1.bf16.msra.mxu0 0
        %575 = vmatprep.subr.bf16.mxu0 0
        %576 = vmatpush1.bf16.msra.mxu0 0
        %577 = vmatprep.subr.bf16.mxu0 0
        %578 = vmatpush1.bf16.msra.mxu0 0
        %579 = vmatprep.subr.bf16.mxu0 0
        %580 = vmatpush1.bf16.msra.mxu0 0
        %581 = vmatprep.subr.bf16.mxu0 0
        %582 = vmatpush1.bf16.msra.mxu0 0
        %583 = vmatprep.subr.bf16.mxu0 0
        %584 = vmatpush1.bf16.msra.mxu0 0
        %585 = vmatprep.subr.bf16.mxu0 0
        %586 = vmatpush1.bf16.msra.mxu0 0
        %587 = vmatprep.subr.bf16.mxu0 0
        %588 = vmatpush1.bf16.msra.mxu0 0
        %589 = vmatprep.mubr.bf16.mxu0 0
        %590 = vmatmul.mubr.bf16.gmra.mrb[0].mxu0 %v552
        %v591 = vpop.f32.mrb[0].mxu0
        %v592 = vadd.f32 0.0, %v591
        %v593 = vpop.f32.mrb[0].mxu0
        %v594 = vpop.f32.mrb[0].mxu0
        %v595 = vadd.f32 0.0, %v594
        %v596 = vpop.f32.mrb[0].mxu0
        %597 = vdwg.mxu0
        %598 = vrot.lane.b32.xlu0 %v331, 112
        %v599 = vpop.permute.xlu0 %598
        %600 = vrot.lane.b32.xlu0 %v417, 96
        %v601 = vpop.permute.xlu0 %600
        %v603 = vsel %vm332, %v599, 0
        %v606 = vsel %vm332, %v601, 0
        %608 = vmatprep.subr.bf16.mxu0 0
        %609 = vmatpush1.bf16.xpose.msra.mxu0 %v606
        %610 = vmatprep.subr.bf16.mxu0 0
        %611 = vmatpush1.bf16.xpose.msra.mxu0 0
        %612 = vmatprep.subr.bf16.mxu0 0
        %613 = vmatpush1.bf16.xpose.msra.mxu0 0
        %614 = vmatprep.subr.bf16.mxu0 0
        %615 = vmatpush1.bf16.xpose.msra.mxu0 0
        %616 = vmatprep.subr.bf16.mxu0 0
        %617 = vmatpush1.bf16.xpose.msra.mxu0 0
        %618 = vmatprep.subr.bf16.mxu0 0
        %619 = vmatpush1.bf16.xpose.msra.mxu0 0
        %620 = vmatprep.subr.bf16.mxu0 0
        %621 = vmatpush1.bf16.xpose.msra.mxu0 0
        %622 = vmatprep.subr.bf16.mxu0 0
        %623 = vmatpush1.bf16.xpose.msra.mxu0 0
        %624 = vmatprep.subr.bf16.mxu0 0
        %625 = vmatpush1.bf16.xpose.msra.mxu0 0
        %626 = vmatprep.subr.bf16.mxu0 0
        %627 = vmatpush1.bf16.xpose.msra.mxu0 0
        %628 = vmatprep.subr.bf16.mxu0 0
        %629 = vmatpush1.bf16.xpose.msra.mxu0 0
        %630 = vmatprep.subr.bf16.mxu0 0
        %631 = vmatpush1.bf16.xpose.msra.mxu0 0
        %632 = vmatprep.subr.bf16.mxu0 0
        %633 = vmatpush1.bf16.xpose.msra.mxu0 0
        %634 = vmatprep.subr.bf16.mxu0 0
        %635 = vmatpush1.bf16.xpose.msra.mxu0 0
        %636 = vmatprep.subr.bf16.mxu0 0
        %637 = vmatpush1.bf16.xpose.msra.mxu0 0
        %638 = vmatprep.subr.bf16.mxu0 0
        %639 = vmatpush1.bf16.xpose.msra.mxu0 0
        %640 = vmatprep.mubr.bf16.mxu0 0
        %641 = vmatmul.mubr.bf16.gmra.mrb[0].mxu0 %v603
        %v642 = vpop.f32.mrb[0].mxu0
        %v643 = vadd.f32 0.0, %v642
        %v644 = vpop.f32.mrb[0].mxu0
        %v645 = vpop.f32.mrb[0].mxu0
        %v646 = vadd.f32 0.0, %v645
        %v647 = vpop.f32.mrb[0].mxu0
        %648 = vdwg.mxu0
        %v649 = vmul.f32 %v643, 0.35355338
        %v650 = vmul.f32 %v646, 0.35355338
        %s651 = scalar_lea.vmem %s283, 32 [#allocation2]
        %652 = vst.msk [vmem:[%s651] sm:$0xff] %vm332, %v649
        %653 = vst.msk [vmem:[%s651 + $0x8] sm:$0xff] %vm332, %v650
        %v654 = vadd.f32 %v649, %v388
        %v655 = vadd.f32 %v650, %v388
        %v656 = vsel %vm332, %v654, -inf
        %657 = vmax.xlane.f32.xlu0 %v656
        %v658 = vpop.xlane.xlu0 %657
        %v659 = vsel %vm332, %v655, -inf
        %660 = vmax.xlane.f32.xlu0 %v659
        %v661 = vpop.xlane.xlu0 %660
        %v662 = vsub.f32 %v654, %v658
        %v663 = vsub.f32 %v655, %v661
        %v664 = vmul.f32 %v662, 1.442695
        %v665 = vpow.pop %v664
        %v666 = vmul.f32 %v663, 1.442695
        %v667 = vpow.pop %v666
        %v668 = vsel %vm332, %v665, 0.0
        %669 = vadd.xlane.f32.xlu0 %v668
        %v670 = vpop.xlane.xlu0 %669
        %v671 = vsel %vm332, %v667, 0.0
        %672 = vadd.xlane.f32.xlu0 %v671
        %v673 = vpop.xlane.xlu0 %672
        %v674 = vrcp.pop %v670
        %v675 = vrcp.pop %v673
        %v676 = vmul.f32 %v665, %v674
        %v677 = vmul.f32 %v667, %v675
        %v678 = vpack.c.bf16 %v677, %v676
        %679 = vrot.lane.b32.xlu0 %v417, 88
        %v680 = vpop.permute.xlu0 %679
        %v682 = vsel %vm332, %v678, 0
        %v685 = vsel %vm423, %v680, 0
        %687 = vmatprep.subr.bf16.mxu0 0
        %688 = vmatpush1.bf16.msra.mxu0 %v685
        %689 = vmatprep.subr.bf16.mxu0 0
        %690 = vmatpush1.bf16.msra.mxu0 0
        %691 = vmatprep.subr.bf16.mxu0 0
        %692 = vmatpush1.bf16.msra.mxu0 0
        %693 = vmatprep.subr.bf16.mxu0 0
        %694 = vmatpush1.bf16.msra.mxu0 0
        %695 = vmatprep.subr.bf16.mxu0 0
        %696 = vmatpush1.bf16.msra.mxu0 0
        %697 = vmatprep.subr.bf16.mxu0 0
        %698 = vmatpush1.bf16.msra.mxu0 0
        %699 = vmatprep.subr.bf16.mxu0 0
        %700 = vmatpush1.bf16.msra.mxu0 0
        %701 = vmatprep.subr.bf16.mxu0 0
        %702 = vmatpush1.bf16.msra.mxu0 0
        %703 = vmatprep.subr.bf16.mxu0 0
        %704 = vmatpush1.bf16.msra.mxu0 0
        %705 = vmatprep.subr.bf16.mxu0 0
        %706 = vmatpush1.bf16.msra.mxu0 0
        %707 = vmatprep.subr.bf16.mxu0 0
        %708 = vmatpush1.bf16.msra.mxu0 0
        %709 = vmatprep.subr.bf16.mxu0 0
        %710 = vmatpush1.bf16.msra.mxu0 0
        %711 = vmatprep.subr.bf16.mxu0 0
        %712 = vmatpush1.bf16.msra.mxu0 0
        %713 = vmatprep.subr.bf16.mxu0 0
        %714 = vmatpush1.bf16.msra.mxu0 0
        %715 = vmatprep.subr.bf16.mxu0 0
        %716 = vmatpush1.bf16.msra.mxu0 0
        %717 = vmatprep.subr.bf16.mxu0 0
        %718 = vmatpush1.bf16.msra.mxu0 0
        %719 = vmatprep.mubr.bf16.mxu0 0
        %720 = vmatmul.mubr.bf16.gmra.mrb[0].mxu0 %v682
        %v721 = vpop.f32.mrb[0].mxu0
        %v722 = vadd.f32 0.0, %v721
        %v723 = vpop.f32.mrb[0].mxu0
        %v724 = vpop.f32.mrb[0].mxu0
        %v725 = vadd.f32 0.0, %v724
        %v726 = vpop.f32.mrb[0].mxu0
        %727 = vdwg.mxu0
        %728 = vrot.lane.b32.xlu0 %v331, 104
        %v729 = vpop.permute.xlu0 %728
        %730 = vrot.lane.b32.xlu0 %v417, 80
        %v731 = vpop.permute.xlu0 %730
        %v733 = vsel %vm332, %v729, 0
        %v736 = vsel %vm332, %v731, 0
        %738 = vmatprep.subr.bf16.mxu0 0
        %739 = vmatpush1.bf16.xpose.msra.mxu0 %v736
        %740 = vmatprep.subr.bf16.mxu0 0
        %741 = vmatpush1.bf16.xpose.msra.mxu0 0
        %742 = vmatprep.subr.bf16.mxu0 0
        %743 = vmatpush1.bf16.xpose.msra.mxu0 0
        %744 = vmatprep.subr.bf16.mxu0 0
        %745 = vmatpush1.bf16.xpose.msra.mxu0 0
        %746 = vmatprep.subr.bf16.mxu0 0
        %747 = vmatpush1.bf16.xpose.msra.mxu0 0
        %748 = vmatprep.subr.bf16.mxu0 0
        %749 = vmatpush1.bf16.xpose.msra.mxu0 0
        %750 = vmatprep.subr.bf16.mxu0 0
        %751 = vmatpush1.bf16.xpose.msra.mxu0 0
        %752 = vmatprep.subr.bf16.mxu0 0
        %753 = vmatpush1.bf16.xpose.msra.mxu0 0
        %754 = vmatprep.subr.bf16.mxu0 0
        %755 = vmatpush1.bf16.xpose.msra.mxu0 0
        %756 = vmatprep.subr.bf16.mxu0 0
        %757 = vmatpush1.bf16.xpose.msra.mxu0 0
        %758 = vmatprep.subr.bf16.mxu0 0
        %759 = vmatpush1.bf16.xpose.msra.mxu0 0
        %760 = vmatprep.subr.bf16.mxu0 0
        %761 = vmatpush1.bf16.xpose.msra.mxu0 0
        %762 = vmatprep.subr.bf16.mxu0 0
        %763 = vmatpush1.bf16.xpose.msra.mxu0 0
        %764 = vmatprep.subr.bf16.mxu0 0
        %765 = vmatpush1.bf16.xpose.msra.mxu0 0
        %766 = vmatprep.subr.bf16.mxu0 0
        %767 = vmatpush1.bf16.xpose.msra.mxu0 0
        %768 = vmatprep.subr.bf16.mxu0 0
        %769 = vmatpush1.bf16.xpose.msra.mxu0 0
        %770 = vmatprep.mubr.bf16.mxu0 0
        %771 = vmatmul.mubr.bf16.gmra.mrb[0].mxu0 %v733
        %v772 = vpop.f32.mrb[0].mxu0
        %v773 = vadd.f32 0.0, %v772
        %v774 = vpop.f32.mrb[0].mxu0
        %v775 = vpop.f32.mrb[0].mxu0
        %v776 = vadd.f32 0.0, %v775
        %v777 = vpop.f32.mrb[0].mxu0
        %778 = vdwg.mxu0
        %v779 = vmul.f32 %v773, 0.35355338
        %v780 = vmul.f32 %v776, 0.35355338
        %s781 = scalar_lea.vmem %s283, 48 [#allocation2]
        %782 = vst.msk [vmem:[%s781] sm:$0xff] %vm332, %v779
        %783 = vst.msk [vmem:[%s781 + $0x8] sm:$0xff] %vm332, %v780
        %v784 = vadd.f32 %v779, %v388
        %v785 = vadd.f32 %v780, %v388
        %v786 = vsel %vm332, %v784, -inf
        %787 = vmax.xlane.f32.xlu0 %v786
        %v788 = vpop.xlane.xlu0 %787
        %v789 = vsel %vm332, %v785, -inf
        %790 = vmax.xlane.f32.xlu0 %v789
        %v791 = vpop.xlane.xlu0 %790
        %v792 = vsub.f32 %v784, %v788
        %v793 = vsub.f32 %v785, %v791
        %v794 = vmul.f32 %v792, 1.442695
        %v795 = vpow.pop %v794
        %v796 = vmul.f32 %v793, 1.442695
        %v797 = vpow.pop %v796
        %v798 = vsel %vm332, %v795, 0.0
        %799 = vadd.xlane.f32.xlu0 %v798
        %v800 = vpop.xlane.xlu0 %799
        %v801 = vsel %vm332, %v797, 0.0
        %802 = vadd.xlane.f32.xlu0 %v801
        %v803 = vpop.xlane.xlu0 %802
        %v804 = vrcp.pop %v800
        %v805 = vrcp.pop %v803
        %v806 = vmul.f32 %v795, %v804
        %v807 = vmul.f32 %v797, %v805
        %v808 = vpack.c.bf16 %v807, %v806
        %809 = vrot.lane.b32.xlu0 %v417, 72
        %v810 = vpop.permute.xlu0 %809
        %v812 = vsel %vm332, %v808, 0
        %v815 = vsel %vm423, %v810, 0
        %817 = vmatprep.subr.bf16.mxu0 0
        %818 = vmatpush1.bf16.msra.mxu0 %v815
        %819 = vmatprep.subr.bf16.mxu0 0
        %820 = vmatpush1.bf16.msra.mxu0 0
        %821 = vmatprep.subr.bf16.mxu0 0
        %822 = vmatpush1.bf16.msra.mxu0 0
        %823 = vmatprep.subr.bf16.mxu0 0
        %824 = vmatpush1.bf16.msra.mxu0 0
        %825 = vmatprep.subr.bf16.mxu0 0
        %826 = vmatpush1.bf16.msra.mxu0 0
        %827 = vmatprep.subr.bf16.mxu0 0
        %828 = vmatpush1.bf16.msra.mxu0 0
        %829 = vmatprep.subr.bf16.mxu0 0
        %830 = vmatpush1.bf16.msra.mxu0 0
        %831 = vmatprep.subr.bf16.mxu0 0
        %832 = vmatpush1.bf16.msra.mxu0 0
        %833 = vmatprep.subr.bf16.mxu0 0
        %834 = vmatpush1.bf16.msra.mxu0 0
        %835 = vmatprep.subr.bf16.mxu0 0
        %836 = vmatpush1.bf16.msra.mxu0 0
        %837 = vmatprep.subr.bf16.mxu0 0
        %838 = vmatpush1.bf16.msra.mxu0 0
        %839 = vmatprep.subr.bf16.mxu0 0
        %840 = vmatpush1.bf16.msra.mxu0 0
        %841 = vmatprep.subr.bf16.mxu0 0
        %842 = vmatpush1.bf16.msra.mxu0 0
        %843 = vmatprep.subr.bf16.mxu0 0
        %844 = vmatpush1.bf16.msra.mxu0 0
        %845 = vmatprep.subr.bf16.mxu0 0
        %846 = vmatpush1.bf16.msra.mxu0 0
        %847 = vmatprep.subr.bf16.mxu0 0
        %848 = vmatpush1.bf16.msra.mxu0 0
        %849 = vmatprep.mubr.bf16.mxu0 0
        %850 = vmatmul.mubr.bf16.gmra.mrb[0].mxu0 %v812
        %v851 = vpop.f32.mrb[0].mxu0
        %v852 = vadd.f32 0.0, %v851
        %v853 = vpop.f32.mrb[0].mxu0
        %v854 = vpop.f32.mrb[0].mxu0
        %v855 = vadd.f32 0.0, %v854
        %v856 = vpop.f32.mrb[0].mxu0
        %857 = vdwg.mxu0
        %860 = vrot.lane.b32.xlu0 %v592, 8
        %v861 = vpop.permute.xlu0 %860
        %862 = vrot.lane.b32.xlu0 %v595, 8
        %v863 = vpop.permute.xlu0 %862
        %868 = vrot.lane.b32.xlu0 %v722, 16
        %v869 = vpop.permute.xlu0 %868
        %870 = vrot.lane.b32.xlu0 %v725, 16
        %v871 = vpop.permute.xlu0 %870
        %876 = vrot.lane.b32.xlu0 %v852, 24
        %v877 = vpop.permute.xlu0 %876
        %878 = vrot.lane.b32.xlu0 %v855, 24
        %v879 = vpop.permute.xlu0 %878
        %v882 = vsel %vm332, %v462, %v861
        %v883 = vsel %vm332, %v465, %v863
        %vm884 = vcmask 130048
        %v885 = vsel %vm884, %v882, %v869
        %v886 = vsel %vm884, %v883, %v871
        %vm887 = vcmask 195584
        %v888 = vsel %vm887, %v885, %v877
        %v889 = vsel %vm887, %v886, %v879
        %v890 = vpack.c.bf16 %v889, %v888
        %v892 = vunpack.c.l.b16 %v890
        %v893 = vunpack.c.h.b16 %v890
        %v894 = vpack.c.b16 %v892, %v892
        %v895 = vpack.c.b16 %v893, %v893
        %vm898 = vcmask 257024
        %899 = vst.msk [vmem:[%s318] sm:$0xf] %vm898, %v894
        %900 = vst.msk [vmem:[%s318 + $0x4] sm:$0xf] %vm898, %v895
        %s901 = smul.u32 2, %s26
        %p902 = scmp.lt.s32.totalorder %s24, 1
        %s903 = scalar_select %p902, %s24, 1
        %p904 = scmp.lt.s32.totalorder %s901, 1
        %s905 = scalar_select %p904, %s901, 1
        %p906 = scmp.lt.s32.totalorder %s25, 0
        %s907 = scalar_select %p906, %s25, 0
        %s908 = sadd.s32 %s907, %s905
        %s909 = smul.addr %s903, 2
        %s910 = sadd.s32 %s908, %s909
        %s911 = smul.addr %s910, 4
        %s912 = scalar_lea.vmem %s3, %s911
        %s913 = sand.u32 %s164, 1
        %s914 = scalar_lea.sflag [#allocation3], %s913
        %s915 = sand.u32 %s164, 1
        %s916 = smul.addr %s915, 64
        %s917 = scalar_lea.vmem [#allocation2], %s916
        // Predicated region
        $region33: #{cross_pair_forward.30} parent=31 // pred_check
          %p918 = pneg %p144
        $region34: #{cross_pair_forward.30} parent=31 // pred_check_branch
          %920 = sbr.rel (%p918) target = $region36
        $region35: #{cross_pair_forward.30} parent=31 // pred_region
          %s921 = smul.u32 2, %s26
        $region36: #{cross_pair_forward.30} parent=31 // pred_fallthru
          _
        // Predicated region
        $region37: #{cross_pair_forward.30} parent=31 // pred_check
          %p922 = pneg %p174
        $region38: #{cross_pair_forward.30} parent=31 // pred_check_branch
          %924 = sbr.rel (%p922) target = $region40
        $region39: #{cross_pair_forward.30} parent=31 // pred_region
          %s925 = smul.u32 4, %s25
          %s926 = smul.u32 2, %s26
          %s928 = ssub.s32 1024, 1024
          %929 = vsyncadd %s914, %s928
          %s930 = smul.addr %s925, 2
          %s931 = sadd.s32 %s926, %s930
          %s932 = smul.addr %s24, 8
          %s933 = sadd.s32 %s931, %s932
          %s934 = smul.addr %s933, 128
          %s935 = scalar_lea.hbm %s4, %s934
          %s936 = sshll.u32 %s917, 4
          %s937 = int_to_ptr.vmem [resolvable:$true] %s936
          %942 = dma.vmem_to_hbm [thread:$0]  %s937, 1024, %s935, %s914, 128, 128, 8
        $region40: #{cross_pair_forward.30} parent=31 // pred_fallthru
          _
      $region32: #{cross_pair_forward.30} parent=5 // pred_fallthru
        _
      %p943 = scmp.le.s32.totalorder 2, %s14
      // Predicated region
      $region41: #{cross_pair_forward.30} parent=5 // pred_check
        %p944 = pneg %p943
      $region42: #{cross_pair_forward.30} parent=5 // pred_check_branch
        %946 = sbr.rel (%p944) target = $region44
      $region43: #{cross_pair_forward.30} parent=5 // pred_region
        %s947 = ssub.s32 %s14, 2
        // Predicated region
        $region45: #{cross_pair_forward.30} parent=43 // pred_check
          %p948 = pneg %p150
        $region46: #{cross_pair_forward.30} parent=43 // pred_check_branch
          %950 = sbr.rel (%p948) target = $region48
        $region47: #{cross_pair_forward.30} parent=43 // pred_region
          %s951 = smul.u32 2, %s29
          %p952 = scmp.lt.s32.totalorder %s27, 1
          %s953 = scalar_select %p952, %s27, 1
          %p954 = scmp.lt.s32.totalorder %s951, 1
          %s955 = scalar_select %p954, %s951, 1
          %p956 = scmp.lt.s32.totalorder %s28, 0
          %s957 = scalar_select %p956, %s28, 0
          %s958 = sadd.s32 %s957, %s955
          %s959 = smul.addr %s953, 2
          %s960 = sadd.s32 %s958, %s959
          %s961 = smul.addr %s960, 4
          %s962 = scalar_lea.vmem %s3, %s961
        $region48: #{cross_pair_forward.30} parent=43 // pred_fallthru
          _
        // Predicated region
        $region49: #{cross_pair_forward.30} parent=43 // pred_check
          %p963 = pneg %p180
        $region50: #{cross_pair_forward.30} parent=43 // pred_check_branch
          %965 = sbr.rel (%p963) target = $region52
        $region51: #{cross_pair_forward.30} parent=43 // pred_region
          %s966 = sand.u32 %s165, 1
          %s967 = scalar_lea.sflag [#allocation3], %s966
          %s968 = sand.u32 %s165, 1
          %s969 = smul.addr %s968, 64
          %s970 = scalar_lea.vmem [#allocation2], %s969
          %971 = dma.done %s967, 1024
        $region52: #{cross_pair_forward.30} parent=43 // pred_fallthru
          _
      $region44: #{cross_pair_forward.30} parent=5 // pred_fallthru
        _
    $region6: #{cross_pair_forward.30} parent=1 // loop_footer
      %s18 = sadd.s32 1, %s14
    $region7: #{cross_pair_forward.30} parent=1 // loop_footer_branch
      %13 = sbr.rel target = $region3
    $region8: #{cross_pair_forward.30} parent=1 // loop_exit
      _
    %972 = vsyncpa [#allocation3], 1
    %s973 = scalar_lea.sflag [#allocation3], 1
    %974 = vsyncpa %s973, 1

// kernel: cross_pair_forward.31
$region0: #{cross_pair_forward.31}
  #allocation0 [shape = 'u32[]', space=smem, size = 0x4, offset = 0x4, fixed_abs, tag = 'smem constant byte address 0x4 - core index']
  #allocation1 [shape = 'u32[144,128]{1,0:T(1,128)}', space=vmem, size = 0x12000, scoped, tag = 'internal scratch']
  #allocation2 [shape = 'f32[32,32]{1,0:T(8,128)}', space=vmem, size = 0x4000, scoped, tag = 'scratch operand']
  %s0 = inlined_call_operand.vmem [shape: bf16[32,32], index: 0, kind: input, shape index: {}]
  %s1 = inlined_call_operand.vmem [shape: bf16[32,32], index: 1, kind: input, shape index: {}]
  %s2 = inlined_call_operand.vmem [shape: f32[1,32], index: 2, kind: input, shape index: {}]
  %s3 = inlined_call_operand.vmem [shape: f32[32,32], index: 3, kind: input, shape index: {}]
  %s4 = inlined_call_operand.vmem [shape: f32[1,32], index: 4, kind: input, shape index: {}]
  %s5 = inlined_call_operand.vmem [shape: f32[1,32], index: 5, kind: input, shape index: {}]
  %s6 = inlined_call_operand.vmem [shape: f32[32,32], index: 6, kind: output, shape index: {0}]
  %s7 = inlined_call_operand.vmem [shape: bf16[32,32], index: 7, kind: output, shape index: {1}]
  %8 = xla_tuple %s6, %s7
  %s9 = sld [smem:[#allocation0]]
  $region50: #{cross_pair_forward.31} parent=0
    _
  %s11 = ssub.s32 1, %s9
  %s12 = scalar_select 0, %s11, %s9
  // Predicated region
  $region2: #{cross_pair_forward.31} parent=0 // pred_check
    _
  $region3: #{cross_pair_forward.31} parent=0 // pred_check_branch
    %14 = sbr.rel (0) target = $region5
  $region4: #{cross_pair_forward.31} parent=0 // pred_region
    _
  $region5: #{cross_pair_forward.31} parent=0 // pred_fallthru
    _
  // Predicated region
  $region6: #{cross_pair_forward.31} parent=0 // pred_check
    _
  $region7: #{cross_pair_forward.31} parent=0 // pred_check_branch
    %16 = sbr.rel (0) target = $region9
  $region8: #{cross_pair_forward.31} parent=0 // pred_region
    _
  $region9: #{cross_pair_forward.31} parent=0 // pred_fallthru
    _
  // Predicated region
  $region10: #{cross_pair_forward.31} parent=0 // pred_check
    _
  $region11: #{cross_pair_forward.31} parent=0 // pred_check_branch
    %18 = sbr.rel (0) target = $region13
  $region12: #{cross_pair_forward.31} parent=0 // pred_region
    _
  $region13: #{cross_pair_forward.31} parent=0 // pred_fallthru
    _
  // Predicated region
  $region14: #{cross_pair_forward.31} parent=0 // pred_check
    _
  $region15: #{cross_pair_forward.31} parent=0 // pred_check_branch
    %20 = sbr.rel (0) target = $region17
  $region16: #{cross_pair_forward.31} parent=0 // pred_region
    _
  $region17: #{cross_pair_forward.31} parent=0 // pred_fallthru
    _
  // Predicated region
  $region18: #{cross_pair_forward.31} parent=0 // pred_check
    _
  $region19: #{cross_pair_forward.31} parent=0 // pred_check_branch
    %22 = sbr.rel (0) target = $region21
  $region20: #{cross_pair_forward.31} parent=0 // pred_region
    _
  $region21: #{cross_pair_forward.31} parent=0 // pred_fallthru
    _
  // Predicated region
  $region22: #{cross_pair_forward.31} parent=0 // pred_check
    _
  $region23: #{cross_pair_forward.31} parent=0 // pred_check_branch
    %24 = sbr.rel (0) target = $region25
  $region24: #{cross_pair_forward.31} parent=0 // pred_region
    _
  $region25: #{cross_pair_forward.31} parent=0 // pred_fallthru
    _
  %p26 = scmp.eq.s32.totalorder 0, 0
  // Predicated region
  $region26: #{cross_pair_forward.31} parent=0 // pred_check
    %p27 = pneg %p26
  $region27: #{cross_pair_forward.31} parent=0 // pred_check_branch
    %29 = sbr.rel (%p27) target = $region29
  $region28: #{cross_pair_forward.31} parent=0 // pred_region
    %vm30 = vcmask 261120
    %31 = vst.msk [vmem:[#allocation2] sm:$0xff] %vm30, 0.0
    %32 = vst.msk [vmem:[#allocation2 + $0x8] sm:$0xff] %vm30, 0.0
    %33 = vst.msk [vmem:[#allocation2 + $0x10] sm:$0xff] %vm30, 0.0
    %34 = vst.msk [vmem:[#allocation2 + $0x18] sm:$0xff] %vm30, 0.0
  $region29: #{cross_pair_forward.31} parent=0 // pred_fallthru
    _
  %v35 = vld [vmem:[#allocation2] sm:$0xff]
  %v36 = vld [vmem:[#allocation2 + $0x8] sm:$0xff]
  %v37 = vld [vmem:[#allocation2 + $0x10] sm:$0xff]
  %v38 = vld [vmem:[#allocation2 + $0x18] sm:$0xff]
  %v39 = vld [vmem:[%s0] sm:$0xf]
  %v40 = vld [vmem:[%s0 + $0x4] sm:$0xf]
  %v41 = vld [vmem:[%s0 + $0x8] sm:$0xf]
  %v42 = vld [vmem:[%s0 + $0xc] sm:$0xf]
  %v43 = vld [vmem:[%s1] sm:$0xf]
  %v44 = vld [vmem:[%s1 + $0x4] sm:$0xf]
  %v45 = vld [vmem:[%s1 + $0x8] sm:$0xf]
  %v46 = vld [vmem:[%s1 + $0xc] sm:$0xf]
  %v51 = vunpack.c.l.b16 %v39
  %v52 = vunpack.c.l.b16 %v40
  %v53 = vunpack.c.l.b16 %v41
  %v54 = vunpack.c.l.b16 %v42
  %v55 = vpack.c.b16 %v52, %v51
  %v56 = vpack.c.b16 %v54, %v53
  %v61 = vunpack.c.l.b16 %v43
  %v62 = vunpack.c.l.b16 %v44
  %v63 = vunpack.c.l.b16 %v45
  %v64 = vunpack.c.l.b16 %v46
  %v65 = vpack.c.b16 %v62, %v61
  %v66 = vpack.c.b16 %v64, %v63
  %vm69 = vcmask 261120
  %v71 = vsel %vm69, %v55, 0
  %v74 = vsel %vm69, %v56, 0
  %76 = vmatprep.subr.bf16.mxu0 0
  %77 = vmatpush1.bf16.msra.mxu0 %v65
  %78 = vmatprep.subr.bf16.mxu0 0
  %79 = vmatpush1.bf16.msra.mxu0 %v66
  %80 = vmatprep.subr.bf16.mxu0 0
  %81 = vmatpush1.bf16.msra.mxu0 0
  %82 = vmatprep.subr.bf16.mxu0 0
  %83 = vmatpush1.bf16.msra.mxu0 0
  %84 = vmatprep.subr.bf16.mxu0 0
  %85 = vmatpush1.bf16.msra.mxu0 0
  %86 = vmatprep.subr.bf16.mxu0 0
  %87 = vmatpush1.bf16.msra.mxu0 0
  %88 = vmatprep.subr.bf16.mxu0 0
  %89 = vmatpush1.bf16.msra.mxu0 0
  %90 = vmatprep.subr.bf16.mxu0 0
  %91 = vmatpush1.bf16.msra.mxu0 0
  %92 = vmatprep.subr.bf16.mxu0 0
  %93 = vmatpush1.bf16.msra.mxu0 0
  %94 = vmatprep.subr.bf16.mxu0 0
  %95 = vmatpush1.bf16.msra.mxu0 0
  %96 = vmatprep.subr.bf16.mxu0 0
  %97 = vmatpush1.bf16.msra.mxu0 0
  %98 = vmatprep.subr.bf16.mxu0 0
  %99 = vmatpush1.bf16.msra.mxu0 0
  %100 = vmatprep.subr.bf16.mxu0 0
  %101 = vmatpush1.bf16.msra.mxu0 0
  %102 = vmatprep.subr.bf16.mxu0 0
  %103 = vmatpush1.bf16.msra.mxu0 0
  %104 = vmatprep.subr.bf16.mxu0 0
  %105 = vmatpush1.bf16.msra.mxu0 0
  %106 = vmatprep.subr.bf16.mxu0 0
  %107 = vmatpush1.bf16.msra.mxu0 0
  %108 = vmatprep.mubr.bf16.mxu0 0
  %109 = vmatmul.mubr.bf16.gmra.mrb[0].mxu0 %v71
  %v110 = vpop.f32.mrb[0].mxu0
  %v111 = vadd.f32 0.0, %v110
  %v112 = vpop.f32.mrb[0].mxu0
  %v113 = vpop.f32.mrb[0].mxu0
  %v114 = vadd.f32 0.0, %v113
  %v115 = vpop.f32.mrb[0].mxu0
  %116 = vmatprep.mubr.bf16.mxu0 0
  %117 = vmatmul.mubr.bf16.gmra.mrb[0].mxu0 %v74
  %v118 = vpop.f32.mrb[0].mxu0
  %v119 = vadd.f32 0.0, %v118
  %v120 = vpop.f32.mrb[0].mxu0
  %v121 = vpop.f32.mrb[0].mxu0
  %v122 = vadd.f32 0.0, %v121
  %v123 = vpop.f32.mrb[0].mxu0
  %124 = vdwg.mxu0
  %v125 = vadd.f32 %v35, %v111
  %v126 = vadd.f32 %v36, %v114
  %v127 = vadd.f32 %v37, %v119
  %v128 = vadd.f32 %v38, %v122
  %129 = vst.msk [vmem:[#allocation2] sm:$0xff] %vm69, %v125
  %130 = vst.msk [vmem:[#allocation2 + $0x8] sm:$0xff] %vm69, %v126
  %131 = vst.msk [vmem:[#allocation2 + $0x10] sm:$0xff] %vm69, %v127
  %132 = vst.msk [vmem:[#allocation2 + $0x18] sm:$0xff] %vm69, %v128
  // Predicated region
  $region30: #{cross_pair_forward.31} parent=0 // pred_check
    %p133 = pneg %p26
  $region31: #{cross_pair_forward.31} parent=0 // pred_check_branch
    %135 = sbr.rel (%p133) target = $region33
  $region32: #{cross_pair_forward.31} parent=0 // pred_region
    %v136 = vld [vmem:[#allocation2] sm:$0xff]
    %v137 = vld [vmem:[#allocation2 + $0x8] sm:$0xff]
    %v138 = vld [vmem:[#allocation2 + $0x10] sm:$0xff]
    %v139 = vld [vmem:[#allocation2 + $0x18] sm:$0xff]
    %v140 = vld [vmem:[%s2] sm:$0x1]
    %v142 = vlaneseq
    %v143 = vshrl.u32 %v142, 7
    %v144 = vsub.s32 0, %v143
    %v145 = vrot.slane %v140, %v144
    %v147 = vadd.f32 %v136, %v145
    %v148 = vadd.f32 %v137, %v145
    %v149 = vadd.f32 %v138, %v145
    %v150 = vadd.f32 %v139, %v145
    %v151 = vld [vmem:[%s3] sm:$0xff]
    %v152 = vld [vmem:[%s3 + $0x8] sm:$0xff]
    %v153 = vld [vmem:[%s3 + $0x10] sm:$0xff]
    %v154 = vld [vmem:[%s3 + $0x18] sm:$0xff]
    %v155 = vadd.f32 %v147, %v151
    %v156 = vadd.f32 %v148, %v152
    %v157 = vadd.f32 %v149, %v153
    %v158 = vadd.f32 %v150, %v154
    %v159 = vsel %vm69, %v155, 0.0
    %160 = vadd.xlane.f32.xlu0 %v159
    %v161 = vpop.xlane.xlu0 %160
    %v162 = vsel %vm69, %v156, 0.0
    %163 = vadd.xlane.f32.xlu0 %v162
    %v164 = vpop.xlane.xlu0 %163
    %v165 = vsel %vm69, %v157, 0.0
    %166 = vadd.xlane.f32.xlu0 %v165
    %v167 = vpop.xlane.xlu0 %166
    %v168 = vsel %vm69, %v158, 0.0
    %169 = vadd.xlane.f32.xlu0 %v168
    %v170 = vpop.xlane.xlu0 %169
    %v171 = vrcp.pop 32.0
    %v172 = vmul.f32 %v161, %v171
    %v173 = vmul.f32 %v164, %v171
    %v174 = vmul.f32 %v167, %v171
    %v175 = vmul.f32 %v170, %v171
    %v176 = vsub.f32 %v155, %v172
    %v177 = vsub.f32 %v156, %v173
    %v178 = vsub.f32 %v157, %v174
    %v179 = vsub.f32 %v158, %v175
    %v180 = vmul.f32 %v176, %v176
    %v181 = vmul.f32 %v177, %v177
    %v182 = vmul.f32 %v178, %v178
    %v183 = vmul.f32 %v179, %v179
    %v184 = vsel %vm69, %v180, 0.0
    %185 = vadd.xlane.f32.xlu0 %v184
    %v186 = vpop.xlane.xlu0 %185
    %v187 = vsel %vm69, %v181, 0.0
    %188 = vadd.xlane.f32.xlu0 %v187
    %v189 = vpop.xlane.xlu0 %188
    %v190 = vsel %vm69, %v182, 0.0
    %191 = vadd.xlane.f32.xlu0 %v190
    %v192 = vpop.xlane.xlu0 %191
    %v193 = vsel %vm69, %v183, 0.0
    %194 = vadd.xlane.f32.xlu0 %v193
    %v195 = vpop.xlane.xlu0 %194
    %v196 = vmul.f32 %v186, %v171
    %v197 = vmul.f32 %v189, %v171
    %v198 = vmul.f32 %v192, %v171
    %v199 = vmul.f32 %v195, %v171
    %v200 = vadd.f32 %v196, 1e-12
    %v201 = vadd.f32 %v197, 1e-12
    %v202 = vadd.f32 %v198, 1e-12
    %v203 = vadd.f32 %v199, 1e-12
    %v204 = vrsqrt.pop %v200
    %v205 = vrsqrt.pop %v201
    %v206 = vrsqrt.pop %v202
    %v207 = vrsqrt.pop %v203
    %v208 = vmul.f32 %v176, %v204
    %v209 = vmul.f32 %v177, %v205
    %v210 = vmul.f32 %v178, %v206
    %v211 = vmul.f32 %v179, %v207
    %v212 = vld [vmem:[%s4] sm:$0x1]
    %v214 = vlaneseq
    %v215 = vshrl.u32 %v214, 7
    %v216 = vsub.s32 0, %v215
    %v217 = vrot.slane %v212, %v216
    %v219 = vmul.f32 %v208, %v217
    %v220 = vmul.f32 %v209, %v217
    %v221 = vmul.f32 %v210, %v217
    %v222 = vmul.f32 %v211, %v217
    %v223 = vld [vmem:[%s5] sm:$0x1]
    %v225 = vlaneseq
    %v226 = vshrl.u32 %v225, 7
    %v227 = vsub.s32 0, %v226
    %v228 = vrot.slane %v223, %v227
    %v230 = vadd.f32 %v219, %v228
    %v231 = vadd.f32 %v220, %v228
    %v232 = vadd.f32 %v221, %v228
    %v233 = vadd.f32 %v222, %v228
    %234 = vst.msk [vmem:[%s6] sm:$0xff] %vm69, %v230
    %235 = vst.msk [vmem:[%s6 + $0x8] sm:$0xff] %vm69, %v231
    %236 = vst.msk [vmem:[%s6 + $0x10] sm:$0xff] %vm69, %v232
    %237 = vst.msk [vmem:[%s6 + $0x18] sm:$0xff] %vm69, %v233
    %v238 = vpack.c.bf16 %v231, %v230
    %v239 = vpack.c.bf16 %v233, %v232
    %v242 = vunpack.c.l.b16 %v238
    %v243 = vunpack.c.h.b16 %v238
    %v244 = vunpack.c.l.b16 %v239
    %v245 = vunpack.c.h.b16 %v239
    %v246 = vpack.c.b16 %v242, %v242
    %v247 = vpack.c.b16 %v243, %v243
    %v248 = vpack.c.b16 %v244, %v244
    %v249 = vpack.c.b16 %v245, %v245
    %vm254 = vcmask 257024
    %255 = vst.msk [vmem:[%s7] sm:$0xf] %vm254, %v246
    %256 = vst.msk [vmem:[%s7 + $0x4] sm:$0xf] %vm254, %v247
    %257 = vst.msk [vmem:[%s7 + $0x8] sm:$0xf] %vm254, %v248
    %258 = vst.msk [vmem:[%s7 + $0xc] sm:$0xf] %vm254, %v249
  $region33: #{cross_pair_forward.31} parent=0 // pred_fallthru
    _
  // Predicated region
  $region34: #{cross_pair_forward.31} parent=0 // pred_check
    _
  $region35: #{cross_pair_forward.31} parent=0 // pred_check_branch
    %260 = sbr.rel (0) target = $region37
  $region36: #{cross_pair_forward.31} parent=0 // pred_region
    _
  $region37: #{cross_pair_forward.31} parent=0 // pred_fallthru
    _
  // Predicated region
  $region38: #{cross_pair_forward.31} parent=0 // pred_check
    _
  $region39: #{cross_pair_forward.31} parent=0 // pred_check_branch
    %262 = sbr.rel (0) target = $region41
  $region40: #{cross_pair_forward.31} parent=0 // pred_region
    _
  $region41: #{cross_pair_forward.31} parent=0 // pred_fallthru
    _
  // Predicated region
  $region42: #{cross_pair_forward.31} parent=0 // pred_check
    _
  $region43: #{cross_pair_forward.31} parent=0 // pred_check_branch
    %264 = sbr.rel (0) target = $region45
  $region44: #{cross_pair_forward.31} parent=0 // pred_region
    _
  $region45: #{cross_pair_forward.31} parent=0 // pred_fallthru
    _
  // Predicated region
  $region46: #{cross_pair_forward.31} parent=0 // pred_check
    _
  $region47: #{cross_pair_forward.31} parent=0 // pred_check_branch
    %266 = sbr.rel (0) target = $region49
  $region48: #{cross_pair_forward.31} parent=0 // pred_region
    _
  $region49: #{cross_pair_forward.31} parent=0 // pred_fallthru
    _

// kernel: cross_pair_forward.32
$region0: #{cross_pair_forward.32}
  #allocation0 [shape = 'u32[]', space=smem, size = 0x4, offset = 0x4, fixed_abs, tag = 'smem constant byte address 0x4 - core index']
  #allocation1 [shape = 'u32[144,128]{1,0:T(1,128)}', space=vmem, size = 0x12000, scoped, tag = 'internal scratch']
  #allocation2 [shape = 'f32[32,64]{1,0:T(8,128)}', space=vmem, size = 0x4000, scoped, tag = 'scratch operand']
  %s0 = inlined_call_operand.vmem [shape: bf16[32,32], index: 0, kind: input, shape index: {}]
  %s1 = inlined_call_operand.vmem [shape: bf16[32,64], index: 1, kind: input, shape index: {}]
  %s2 = inlined_call_operand.vmem [shape: f32[1,64], index: 2, kind: input, shape index: {}]
  %s3 = inlined_call_operand.vmem [shape: bf16[32,64], index: 3, kind: output, shape index: {}]
  %s4 = sld [smem:[#allocation0]]
  $region30: #{cross_pair_forward.32} parent=0
    _
  %s6 = ssub.s32 1, %s4
  %s7 = scalar_select 0, %s6, %s4
  // Predicated region
  $region2: #{cross_pair_forward.32} parent=0 // pred_check
    _
  $region3: #{cross_pair_forward.32} parent=0 // pred_check_branch
    %9 = sbr.rel (0) target = $region5
  $region4: #{cross_pair_forward.32} parent=0 // pred_region
    _
  $region5: #{cross_pair_forward.32} parent=0 // pred_fallthru
    _
  // Predicated region
  $region6: #{cross_pair_forward.32} parent=0 // pred_check
    _
  $region7: #{cross_pair_forward.32} parent=0 // pred_check_branch
    %11 = sbr.rel (0) target = $region9
  $region8: #{cross_pair_forward.32} parent=0 // pred_region
    _
  $region9: #{cross_pair_forward.32} parent=0 // pred_fallthru
    _
  // Predicated region
  $region10: #{cross_pair_forward.32} parent=0 // pred_check
    _
  $region11: #{cross_pair_forward.32} parent=0 // pred_check_branch
    %13 = sbr.rel (0) target = $region13
  $region12: #{cross_pair_forward.32} parent=0 // pred_region
    _
  $region13: #{cross_pair_forward.32} parent=0 // pred_fallthru
    _
  %p15 = scmp.eq.s32.totalorder 0, 0
  // Predicated region
  $region14: #{cross_pair_forward.32} parent=0 // pred_check
    %p16 = pneg %p15
  $region15: #{cross_pair_forward.32} parent=0 // pred_check_branch
    %18 = sbr.rel (%p16) target = $region17
  $region16: #{cross_pair_forward.32} parent=0 // pred_region
    %vm19 = vcmask 523264
    %20 = vst.msk [vmem:[#allocation2] sm:$0xff] %vm19, 0.0
    %21 = vst.msk [vmem:[#allocation2 + $0x8] sm:$0xff] %vm19, 0.0
    %22 = vst.msk [vmem:[#allocation2 + $0x10] sm:$0xff] %vm19, 0.0
    %23 = vst.msk [vmem:[#allocation2 + $0x18] sm:$0xff] %vm19, 0.0
  $region17: #{cross_pair_forward.32} parent=0 // pred_fallthru
    _
  %v24 = vld [vmem:[#allocation2] sm:$0xff]
  %v25 = vld [vmem:[#allocation2 + $0x8] sm:$0xff]
  %v26 = vld [vmem:[#allocation2 + $0x10] sm:$0xff]
  %v27 = vld [vmem:[#allocation2 + $0x18] sm:$0xff]
  %v28 = vld [vmem:[%s0] sm:$0xf]
  %v29 = vld [vmem:[%s0 + $0x4] sm:$0xf]
  %v30 = vld [vmem:[%s0 + $0x8] sm:$0xf]
  %v31 = vld [vmem:[%s0 + $0xc] sm:$0xf]
  %v32 = vld [vmem:[%s1] sm:$0xf]
  %v33 = vld [vmem:[%s1 + $0x4] sm:$0xf]
  %v34 = vld [vmem:[%s1 + $0x8] sm:$0xf]
  %v35 = vld [vmem:[%s1 + $0xc] sm:$0xf]
  %v40 = vunpack.c.l.b16 %v28
  %v41 = vunpack.c.l.b16 %v29
  %v42 = vunpack.c.l.b16 %v30
  %v43 = vunpack.c.l.b16 %v31
  %v44 = vpack.c.b16 %v41, %v40
  %v45 = vpack.c.b16 %v43, %v42
  %v50 = vunpack.c.l.b16 %v32
  %v51 = vunpack.c.l.b16 %v33
  %v52 = vunpack.c.l.b16 %v34
  %v53 = vunpack.c.l.b16 %v35
  %v54 = vpack.c.b16 %v51, %v50
  %v55 = vpack.c.b16 %v53, %v52
  %vm58 = vcmask 261120
  %v60 = vsel %vm58, %v44, 0
  %v63 = vsel %vm58, %v45, 0
  %65 = vmatprep.subr.bf16.mxu0 0
  %66 = vmatpush1.bf16.msra.mxu0 %v54
  %67 = vmatprep.subr.bf16.mxu0 0
  %68 = vmatpush1.bf16.msra.mxu0 %v55
  %69 = vmatprep.subr.bf16.mxu0 0
  %70 = vmatpush1.bf16.msra.mxu0 0
  %71 = vmatprep.subr.bf16.mxu0 0
  %72 = vmatpush1.bf16.msra.mxu0 0
  %73 = vmatprep.subr.bf16.mxu0 0
  %74 = vmatpush1.bf16.msra.mxu0 0
  %75 = vmatprep.subr.bf16.mxu0 0
  %76 = vmatpush1.bf16.msra.mxu0 0
  %77 = vmatprep.subr.bf16.mxu0 0
  %78 = vmatpush1.bf16.msra.mxu0 0
  %79 = vmatprep.subr.bf16.mxu0 0
  %80 = vmatpush1.bf16.msra.mxu0 0
  %81 = vmatprep.subr.bf16.mxu0 0
  %82 = vmatpush1.bf16.msra.mxu0 0
  %83 = vmatprep.subr.bf16.mxu0 0
  %84 = vmatpush1.bf16.msra.mxu0 0
  %85 = vmatprep.subr.bf16.mxu0 0
  %86 = vmatpush1.bf16.msra.mxu0 0
  %87 = vmatprep.subr.bf16.mxu0 0
  %88 = vmatpush1.bf16.msra.mxu0 0
  %89 = vmatprep.subr.bf16.mxu0 0
  %90 = vmatpush1.bf16.msra.mxu0 0
  %91 = vmatprep.subr.bf16.mxu0 0
  %92 = vmatpush1.bf16.msra.mxu0 0
  %93 = vmatprep.subr.bf16.mxu0 0
  %94 = vmatpush1.bf16.msra.mxu0 0
  %95 = vmatprep.subr.bf16.mxu0 0
  %96 = vmatpush1.bf16.msra.mxu0 0
  %97 = vmatprep.mubr.bf16.mxu0 0
  %98 = vmatmul.mubr.bf16.gmra.mrb[0].mxu0 %v60
  %v99 = vpop.f32.mrb[0].mxu0
  %v100 = vadd.f32 0.0, %v99
  %v101 = vpop.f32.mrb[0].mxu0
  %v102 = vpop.f32.mrb[0].mxu0
  %v103 = vadd.f32 0.0, %v102
  %v104 = vpop.f32.mrb[0].mxu0
  %105 = vmatprep.mubr.bf16.mxu0 0
  %106 = vmatmul.mubr.bf16.gmra.mrb[0].mxu0 %v63
  %v107 = vpop.f32.mrb[0].mxu0
  %v108 = vadd.f32 0.0, %v107
  %v109 = vpop.f32.mrb[0].mxu0
  %v110 = vpop.f32.mrb[0].mxu0
  %v111 = vadd.f32 0.0, %v110
  %v112 = vpop.f32.mrb[0].mxu0
  %113 = vdwg.mxu0
  %v114 = vadd.f32 %v24, %v100
  %v115 = vadd.f32 %v25, %v103
  %v116 = vadd.f32 %v26, %v108
  %v117 = vadd.f32 %v27, %v111
  %vm118 = vcmask 523264
  %119 = vst.msk [vmem:[#allocation2] sm:$0xff] %vm118, %v114
  %120 = vst.msk [vmem:[#allocation2 + $0x8] sm:$0xff] %vm118, %v115
  %121 = vst.msk [vmem:[#allocation2 + $0x10] sm:$0xff] %vm118, %v116
  %122 = vst.msk [vmem:[#allocation2 + $0x18] sm:$0xff] %vm118, %v117
  // Predicated region
  $region18: #{cross_pair_forward.32} parent=0 // pred_check
    %p123 = pneg %p15
  $region19: #{cross_pair_forward.32} parent=0 // pred_check_branch
    %125 = sbr.rel (%p123) target = $region21
  $region20: #{cross_pair_forward.32} parent=0 // pred_region
    %v126 = vld [vmem:[#allocation2] sm:$0xff]
    %v127 = vld [vmem:[#allocation2 + $0x8] sm:$0xff]
    %v128 = vld [vmem:[#allocation2 + $0x10] sm:$0xff]
    %v129 = vld [vmem:[#allocation2 + $0x18] sm:$0xff]
    %v130 = vld [vmem:[%s2] sm:$0x1]
    %v132 = vlaneseq
    %v133 = vshrl.u32 %v132, 7
    %v134 = vsub.s32 0, %v133
    %v135 = vrot.slane %v130, %v134
    %v137 = vadd.f32 %v126, %v135
    %v138 = vadd.f32 %v127, %v135
    %v139 = vadd.f32 %v128, %v135
    %v140 = vadd.f32 %v129, %v135
    %v141 = vmul.f32 %v137, 0.70710677
    %v142 = vmul.f32 %v138, 0.70710677
    %v143 = vmul.f32 %v139, 0.70710677
    %v144 = vmul.f32 %v140, 0.70710677
    %vm145 = vcmp.ge.f32.partialorder %v141, 0.0
    %vm146 = vcmp.ge.f32.partialorder %v142, 0.0
    %vm147 = vcmp.ge.f32.partialorder %v143, 0.0
    %vm148 = vcmp.ge.f32.partialorder %v144, 0.0
    %v149 = vsel %vm145, 1.0, -1.0
    %v150 = vsel %vm146, 1.0, -1.0
    %v151 = vsel %vm147, 1.0, -1.0
    %v152 = vsel %vm148, 1.0, -1.0
    %v153 = vmul.f32 %v141, %v149
    %v154 = vmul.f32 %v142, %v150
    %v155 = vmul.f32 %v143, %v151
    %v156 = vmul.f32 %v144, %v152
    %v157 = vmul.f32 %v153, 0.3275911
    %v158 = vmul.f32 %v154, 0.3275911
    %v159 = vmul.f32 %v155, 0.3275911
    %v160 = vmul.f32 %v156, 0.3275911
    %v161 = vadd.f32 %v157, 1.0
    %v162 = vadd.f32 %v158, 1.0
    %v163 = vadd.f32 %v159, 1.0
    %v164 = vadd.f32 %v160, 1.0
    %v165 = vrcp.pop %v161
    %v166 = vmul.f32 1.0, %v165
    %v167 = vrcp.pop %v162
    %v168 = vmul.f32 1.0, %v167
    %v169 = vrcp.pop %v163
    %v170 = vmul.f32 1.0, %v169
    %v171 = vrcp.pop %v164
    %v172 = vmul.f32 1.0, %v171
    %v173 = vmul.f32 %v166, 1.0614054
    %v174 = vmul.f32 %v168, 1.0614054
    %v175 = vmul.f32 %v170, 1.0614054
    %v176 = vmul.f32 %v172, 1.0614054
    %v177 = vsub.f32 %v173, 1.4531521
    %v178 = vsub.f32 %v174, 1.4531521
    %v179 = vsub.f32 %v175, 1.4531521
    %v180 = vsub.f32 %v176, 1.4531521
    %v181 = vmul.f32 %v177, %v166
    %v182 = vmul.f32 %v178, %v168
    %v183 = vmul.f32 %v179, %v170
    %v184 = vmul.f32 %v180, %v172
    %v185 = vadd.f32 %v181, 1.4214138
    %v186 = vadd.f32 %v182, 1.4214138
    %v187 = vadd.f32 %v183, 1.4214138
    %v188 = vadd.f32 %v184, 1.4214138
    %v189 = vmul.f32 %v185, %v166
    %v190 = vmul.f32 %v186, %v168
    %v191 = vmul.f32 %v187, %v170
    %v192 = vmul.f32 %v188, %v172
    %v193 = vsub.f32 %v189, 0.28449672
    %v194 = vsub.f32 %v190, 0.28449672
    %v195 = vsub.f32 %v191, 0.28449672
    %v196 = vsub.f32 %v192, 0.28449672
    %v197 = vmul.f32 %v193, %v166
    %v198 = vmul.f32 %v194, %v168
    %v199 = vmul.f32 %v195, %v170
    %v200 = vmul.f32 %v196, %v172
    %v201 = vadd.f32 %v197, 0.2548296
    %v202 = vadd.f32 %v198, 0.2548296
    %v203 = vadd.f32 %v199, 0.2548296
    %v204 = vadd.f32 %v200, 0.2548296
    %v205 = vmul.f32 %v201, %v166
    %v206 = vmul.f32 %v202, %v168
    %v207 = vmul.f32 %v203, %v170
    %v208 = vmul.f32 %v204, %v172
    %v209 = vsub.f32 0.0, %v153
    %v210 = vsub.f32 0.0, %v154
    %v211 = vsub.f32 0.0, %v155
    %v212 = vsub.f32 0.0, %v156
    %v213 = vmul.f32 %v209, %v153
    %v214 = vmul.f32 %v210, %v154
    %v215 = vmul.f32 %v211, %v155
    %v216 = vmul.f32 %v212, %v156
    %v217 = vmul.f32 %v213, 1.442695
    %v218 = vpow.pop %v217
    %v219 = vmul.f32 %v214, 1.442695
    %v220 = vpow.pop %v219
    %v221 = vmul.f32 %v215, 1.442695
    %v222 = vpow.pop %v221
    %v223 = vmul.f32 %v216, 1.442695
    %v224 = vpow.pop %v223
    %v225 = vmul.f32 %v205, %v218
    %v226 = vmul.f32 %v206, %v220
    %v227 = vmul.f32 %v207, %v222
    %v228 = vmul.f32 %v208, %v224
    %v229 = vsub.f32 1.0, %v225
    %v230 = vsub.f32 1.0, %v226
    %v231 = vsub.f32 1.0, %v227
    %v232 = vsub.f32 1.0, %v228
    %v233 = vmul.f32 %v149, %v229
    %v234 = vmul.f32 %v150, %v230
    %v235 = vmul.f32 %v151, %v231
    %v236 = vmul.f32 %v152, %v232
    %v237 = vmul.f32 %v137, 0.5
    %v238 = vmul.f32 %v138, 0.5
    %v239 = vmul.f32 %v139, 0.5
    %v240 = vmul.f32 %v140, 0.5
    %v241 = vadd.f32 %v233, 1.0
    %v242 = vadd.f32 %v234, 1.0
    %v243 = vadd.f32 %v235, 1.0
    %v244 = vadd.f32 %v236, 1.0
    %v245 = vmul.f32 %v237, %v241
    %v246 = vmul.f32 %v238, %v242
    %v247 = vmul.f32 %v239, %v243
    %v248 = vmul.f32 %v240, %v244
    %v249 = vpack.c.bf16 %v246, %v245
    %v250 = vpack.c.bf16 %v248, %v247
    %v253 = vunpack.c.l.b16 %v249
    %v254 = vunpack.c.h.b16 %v249
    %v255 = vunpack.c.l.b16 %v250
    %v256 = vunpack.c.h.b16 %v250
    %v257 = vpack.c.b16 %v253, %v253
    %v258 = vpack.c.b16 %v254, %v254
    %v259 = vpack.c.b16 %v255, %v255
    %v260 = vpack.c.b16 %v256, %v256
    %vm265 = vcmask 519168
    %266 = vst.msk [vmem:[%s3] sm:$0xf] %vm265, %v257
    %267 = vst.msk [vmem:[%s3 + $0x4] sm:$0xf] %vm265, %v258
    %268 = vst.msk [vmem:[%s3 + $0x8] sm:$0xf] %vm265, %v259
    %269 = vst.msk [vmem:[%s3 + $0xc] sm:$0xf] %vm265, %v260
  $region21: #{cross_pair_forward.32} parent=0 // pred_fallthru
    _
  // Predicated region
  $region22: #{cross_pair_forward.32} parent=0 // pred_check
    _
  $region23: #{cross_pair_forward.32} parent=0 // pred_check_branch
    %271 = sbr.rel (0) target = $region25
  $region24: #{cross_pair_forward.32} parent=0 // pred_region
    _
  $region25: #{cross_pair_forward.32} parent=0 // pred_fallthru
    _
  // Predicated region
  $region26: #{cross_pair_forward.32} parent=0 // pred_check
    _
  $region27: #{cross_pair_forward.32} parent=0 // pred_check_branch
    %273 = sbr.rel (0) target = $region29
  $region28: #{cross_pair_forward.32} parent=0 // pred_region
    _
  $region29: #{cross_pair_forward.32} parent=0 // pred_fallthru
    _

// kernel: cross_pair_forward.33
$region0: #{cross_pair_forward.33}
  #allocation0 [shape = 'u32[]', space=smem, size = 0x4, offset = 0x4, fixed_abs, tag = 'smem constant byte address 0x4 - core index']
  #allocation1 [shape = 'u32[144,128]{1,0:T(1,128)}', space=vmem, size = 0x12000, scoped, tag = 'internal scratch']
  #allocation2 [shape = 'f32[32,32]{1,0:T(8,128)}', space=vmem, size = 0x4000, scoped, tag = 'scratch operand']
  %s0 = inlined_call_operand.vmem [shape: bf16[32,64], index: 0, kind: input, shape index: {}]
  %s1 = inlined_call_operand.vmem [shape: bf16[64,32], index: 1, kind: input, shape index: {}]
  %s2 = inlined_call_operand.vmem [shape: f32[1,32], index: 2, kind: input, shape index: {}]
  %s3 = inlined_call_operand.vmem [shape: f32[32,32], index: 3, kind: input, shape index: {}]
  %s4 = inlined_call_operand.vmem [shape: f32[1,32], index: 4, kind: input, shape index: {}]
  %s5 = inlined_call_operand.vmem [shape: f32[1,32], index: 5, kind: input, shape index: {}]
  %s6 = inlined_call_operand.vmem [shape: f32[32,32], index: 6, kind: output, shape index: {0}]
  %s7 = inlined_call_operand.vmem [shape: bf16[32,32], index: 7, kind: output, shape index: {1}]
  %8 = xla_tuple %s6, %s7
  %s9 = sld [smem:[#allocation0]]
  $region50: #{cross_pair_forward.33} parent=0
    _
  %s11 = ssub.s32 1, %s9
  %s12 = scalar_select 0, %s11, %s9
  // Predicated region
  $region2: #{cross_pair_forward.33} parent=0 // pred_check
    _
  $region3: #{cross_pair_forward.33} parent=0 // pred_check_branch
    %14 = sbr.rel (0) target = $region5
  $region4: #{cross_pair_forward.33} parent=0 // pred_region
    _
  $region5: #{cross_pair_forward.33} parent=0 // pred_fallthru
    _
  // Predicated region
  $region6: #{cross_pair_forward.33} parent=0 // pred_check
    _
  $region7: #{cross_pair_forward.33} parent=0 // pred_check_branch
    %16 = sbr.rel (0) target = $region9
  $region8: #{cross_pair_forward.33} parent=0 // pred_region
    _
  $region9: #{cross_pair_forward.33} parent=0 // pred_fallthru
    _
  // Predicated region
  $region10: #{cross_pair_forward.33} parent=0 // pred_check
    _
  $region11: #{cross_pair_forward.33} parent=0 // pred_check_branch
    %18 = sbr.rel (0) target = $region13
  $region12: #{cross_pair_forward.33} parent=0 // pred_region
    _
  $region13: #{cross_pair_forward.33} parent=0 // pred_fallthru
    _
  // Predicated region
  $region14: #{cross_pair_forward.33} parent=0 // pred_check
    _
  $region15: #{cross_pair_forward.33} parent=0 // pred_check_branch
    %20 = sbr.rel (0) target = $region17
  $region16: #{cross_pair_forward.33} parent=0 // pred_region
    _
  $region17: #{cross_pair_forward.33} parent=0 // pred_fallthru
    _
  // Predicated region
  $region18: #{cross_pair_forward.33} parent=0 // pred_check
    _
  $region19: #{cross_pair_forward.33} parent=0 // pred_check_branch
    %22 = sbr.rel (0) target = $region21
  $region20: #{cross_pair_forward.33} parent=0 // pred_region
    _
  $region21: #{cross_pair_forward.33} parent=0 // pred_fallthru
    _
  // Predicated region
  $region22: #{cross_pair_forward.33} parent=0 // pred_check
    _
  $region23: #{cross_pair_forward.33} parent=0 // pred_check_branch
    %24 = sbr.rel (0) target = $region25
  $region24: #{cross_pair_forward.33} parent=0 // pred_region
    _
  $region25: #{cross_pair_forward.33} parent=0 // pred_fallthru
    _
  %p26 = scmp.eq.s32.totalorder 0, 0
  // Predicated region
  $region26: #{cross_pair_forward.33} parent=0 // pred_check
    %p27 = pneg %p26
  $region27: #{cross_pair_forward.33} parent=0 // pred_check_branch
    %29 = sbr.rel (%p27) target = $region29
  $region28: #{cross_pair_forward.33} parent=0 // pred_region
    %vm30 = vcmask 261120
    %31 = vst.msk [vmem:[#allocation2] sm:$0xff] %vm30, 0.0
    %32 = vst.msk [vmem:[#allocation2 + $0x8] sm:$0xff] %vm30, 0.0
    %33 = vst.msk [vmem:[#allocation2 + $0x10] sm:$0xff] %vm30, 0.0
    %34 = vst.msk [vmem:[#allocation2 + $0x18] sm:$0xff] %vm30, 0.0
  $region29: #{cross_pair_forward.33} parent=0 // pred_fallthru
    _
  %v35 = vld [vmem:[#allocation2] sm:$0xff]
  %v36 = vld [vmem:[#allocation2 + $0x8] sm:$0xff]
  %v37 = vld [vmem:[#allocation2 + $0x10] sm:$0xff]
  %v38 = vld [vmem:[#allocation2 + $0x18] sm:$0xff]
  %v39 = vld [vmem:[%s0] sm:$0xf]
  %v40 = vld [vmem:[%s0 + $0x4] sm:$0xf]
  %v41 = vld [vmem:[%s0 + $0x8] sm:$0xf]
  %v42 = vld [vmem:[%s0 + $0xc] sm:$0xf]
  %v43 = vld [vmem:[%s1] sm:$0xf]
  %v44 = vld [vmem:[%s1 + $0x4] sm:$0xf]
  %v45 = vld [vmem:[%s1 + $0x8] sm:$0xf]
  %v46 = vld [vmem:[%s1 + $0xc] sm:$0xf]
  %v47 = vld [vmem:[%s1 + $0x10] sm:$0xf]
  %v48 = vld [vmem:[%s1 + $0x14] sm:$0xf]
  %v49 = vld [vmem:[%s1 + $0x18] sm:$0xf]
  %v50 = vld [vmem:[%s1 + $0x1c] sm:$0xf]
  %v55 = vunpack.c.l.b16 %v39
  %v56 = vunpack.c.l.b16 %v40
  %v57 = vunpack.c.l.b16 %v41
  %v58 = vunpack.c.l.b16 %v42
  %v59 = vpack.c.b16 %v56, %v55
  %v60 = vpack.c.b16 %v58, %v57
  %v69 = vunpack.c.l.b16 %v43
  %v70 = vunpack.c.l.b16 %v44
  %v71 = vunpack.c.l.b16 %v45
  %v72 = vunpack.c.l.b16 %v46
  %v73 = vunpack.c.l.b16 %v47
  %v74 = vunpack.c.l.b16 %v48
  %v75 = vunpack.c.l.b16 %v49
  %v76 = vunpack.c.l.b16 %v50
  %v77 = vpack.c.b16 %v70, %v69
  %v78 = vpack.c.b16 %v72, %v71
  %v79 = vpack.c.b16 %v74, %v73
  %v80 = vpack.c.b16 %v76, %v75
  %vm85 = vcmask 523264
  %v87 = vsel %vm85, %v59, 0
  %v90 = vsel %vm85, %v60, 0
  %92 = vmatprep.subr.bf16.mxu0 0
  %93 = vmatpush1.bf16.msra.mxu0 %v77
  %94 = vmatprep.subr.bf16.mxu0 0
  %95 = vmatpush1.bf16.msra.mxu0 %v78
  %96 = vmatprep.subr.bf16.mxu0 0
  %97 = vmatpush1.bf16.msra.mxu0 %v79
  %98 = vmatprep.subr.bf16.mxu0 0
  %99 = vmatpush1.bf16.msra.mxu0 %v80
  %100 = vmatprep.subr.bf16.mxu0 0
  %101 = vmatpush1.bf16.msra.mxu0 0
  %102 = vmatprep.subr.bf16.mxu0 0
  %103 = vmatpush1.bf16.msra.mxu0 0
  %104 = vmatprep.subr.bf16.mxu0 0
  %105 = vmatpush1.bf16.msra.mxu0 0
  %106 = vmatprep.subr.bf16.mxu0 0
  %107 = vmatpush1.bf16.msra.mxu0 0
  %108 = vmatprep.subr.bf16.mxu0 0
  %109 = vmatpush1.bf16.msra.mxu0 0
  %110 = vmatprep.subr.bf16.mxu0 0
  %111 = vmatpush1.bf16.msra.mxu0 0
  %112 = vmatprep.subr.bf16.mxu0 0
  %113 = vmatpush1.bf16.msra.mxu0 0
  %114 = vmatprep.subr.bf16.mxu0 0
  %115 = vmatpush1.bf16.msra.mxu0 0
  %116 = vmatprep.subr.bf16.mxu0 0
  %117 = vmatpush1.bf16.msra.mxu0 0
  %118 = vmatprep.subr.bf16.mxu0 0
  %119 = vmatpush1.bf16.msra.mxu0 0
  %120 = vmatprep.subr.bf16.mxu0 0
  %121 = vmatpush1.bf16.msra.mxu0 0
  %122 = vmatprep.subr.bf16.mxu0 0
  %123 = vmatpush1.bf16.msra.mxu0 0
  %124 = vmatprep.mubr.bf16.mxu0 0
  %125 = vmatmul.mubr.bf16.gmra.mrb[0].mxu0 %v87
  %v126 = vpop.f32.mrb[0].mxu0
  %v127 = vadd.f32 0.0, %v126
  %v128 = vpop.f32.mrb[0].mxu0
  %v129 = vpop.f32.mrb[0].mxu0
  %v130 = vadd.f32 0.0, %v129
  %v131 = vpop.f32.mrb[0].mxu0
  %132 = vmatprep.mubr.bf16.mxu0 0
  %133 = vmatmul.mubr.bf16.gmra.mrb[0].mxu0 %v90
  %v134 = vpop.f32.mrb[0].mxu0
  %v135 = vadd.f32 0.0, %v134
  %v136 = vpop.f32.mrb[0].mxu0
  %v137 = vpop.f32.mrb[0].mxu0
  %v138 = vadd.f32 0.0, %v137
  %v139 = vpop.f32.mrb[0].mxu0
  %140 = vdwg.mxu0
  %v141 = vadd.f32 %v35, %v127
  %v142 = vadd.f32 %v36, %v130
  %v143 = vadd.f32 %v37, %v135
  %v144 = vadd.f32 %v38, %v138
  %vm145 = vcmask 261120
  %146 = vst.msk [vmem:[#allocation2] sm:$0xff] %vm145, %v141
  %147 = vst.msk [vmem:[#allocation2 + $0x8] sm:$0xff] %vm145, %v142
  %148 = vst.msk [vmem:[#allocation2 + $0x10] sm:$0xff] %vm145, %v143
  %149 = vst.msk [vmem:[#allocation2 + $0x18] sm:$0xff] %vm145, %v144
  // Predicated region
  $region30: #{cross_pair_forward.33} parent=0 // pred_check
    %p150 = pneg %p26
  $region31: #{cross_pair_forward.33} parent=0 // pred_check_branch
    %152 = sbr.rel (%p150) target = $region33
  $region32: #{cross_pair_forward.33} parent=0 // pred_region
    %v153 = vld [vmem:[#allocation2] sm:$0xff]
    %v154 = vld [vmem:[#allocation2 + $0x8] sm:$0xff]
    %v155 = vld [vmem:[#allocation2 + $0x10] sm:$0xff]
    %v156 = vld [vmem:[#allocation2 + $0x18] sm:$0xff]
    %v157 = vld [vmem:[%s2] sm:$0x1]
    %v159 = vlaneseq
    %v160 = vshrl.u32 %v159, 7
    %v161 = vsub.s32 0, %v160
    %v162 = vrot.slane %v157, %v161
    %v164 = vadd.f32 %v153, %v162
    %v165 = vadd.f32 %v154, %v162
    %v166 = vadd.f32 %v155, %v162
    %v167 = vadd.f32 %v156, %v162
    %v168 = vld [vmem:[%s3] sm:$0xff]
    %v169 = vld [vmem:[%s3 + $0x8] sm:$0xff]
    %v170 = vld [vmem:[%s3 + $0x10] sm:$0xff]
    %v171 = vld [vmem:[%s3 + $0x18] sm:$0xff]
    %v172 = vadd.f32 %v164, %v168
    %v173 = vadd.f32 %v165, %v169
    %v174 = vadd.f32 %v166, %v170
    %v175 = vadd.f32 %v167, %v171
    %v176 = vsel %vm145, %v172, 0.0
    %177 = vadd.xlane.f32.xlu0 %v176
    %v178 = vpop.xlane.xlu0 %177
    %v179 = vsel %vm145, %v173, 0.0
    %180 = vadd.xlane.f32.xlu0 %v179
    %v181 = vpop.xlane.xlu0 %180
    %v182 = vsel %vm145, %v174, 0.0
    %183 = vadd.xlane.f32.xlu0 %v182
    %v184 = vpop.xlane.xlu0 %183
    %v185 = vsel %vm145, %v175, 0.0
    %186 = vadd.xlane.f32.xlu0 %v185
    %v187 = vpop.xlane.xlu0 %186
    %v188 = vrcp.pop 32.0
    %v189 = vmul.f32 %v178, %v188
    %v190 = vmul.f32 %v181, %v188
    %v191 = vmul.f32 %v184, %v188
    %v192 = vmul.f32 %v187, %v188
    %v193 = vsub.f32 %v172, %v189
    %v194 = vsub.f32 %v173, %v190
    %v195 = vsub.f32 %v174, %v191
    %v196 = vsub.f32 %v175, %v192
    %v197 = vmul.f32 %v193, %v193
    %v198 = vmul.f32 %v194, %v194
    %v199 = vmul.f32 %v195, %v195
    %v200 = vmul.f32 %v196, %v196
    %v201 = vsel %vm145, %v197, 0.0
    %202 = vadd.xlane.f32.xlu0 %v201
    %v203 = vpop.xlane.xlu0 %202
    %v204 = vsel %vm145, %v198, 0.0
    %205 = vadd.xlane.f32.xlu0 %v204
    %v206 = vpop.xlane.xlu0 %205
    %v207 = vsel %vm145, %v199, 0.0
    %208 = vadd.xlane.f32.xlu0 %v207
    %v209 = vpop.xlane.xlu0 %208
    %v210 = vsel %vm145, %v200, 0.0
    %211 = vadd.xlane.f32.xlu0 %v210
    %v212 = vpop.xlane.xlu0 %211
    %v213 = vmul.f32 %v203, %v188
    %v214 = vmul.f32 %v206, %v188
    %v215 = vmul.f32 %v209, %v188
    %v216 = vmul.f32 %v212, %v188
    %v217 = vadd.f32 %v213, 1e-12
    %v218 = vadd.f32 %v214, 1e-12
    %v219 = vadd.f32 %v215, 1e-12
    %v220 = vadd.f32 %v216, 1e-12
    %v221 = vrsqrt.pop %v217
    %v222 = vrsqrt.pop %v218
    %v223 = vrsqrt.pop %v219
    %v224 = vrsqrt.pop %v220
    %v225 = vmul.f32 %v193, %v221
    %v226 = vmul.f32 %v194, %v222
    %v227 = vmul.f32 %v195, %v223
    %v228 = vmul.f32 %v196, %v224
    %v229 = vld [vmem:[%s4] sm:$0x1]
    %v231 = vlaneseq
    %v232 = vshrl.u32 %v231, 7
    %v233 = vsub.s32 0, %v232
    %v234 = vrot.slane %v229, %v233
    %v236 = vmul.f32 %v225, %v234
    %v237 = vmul.f32 %v226, %v234
    %v238 = vmul.f32 %v227, %v234
    %v239 = vmul.f32 %v228, %v234
    %v240 = vld [vmem:[%s5] sm:$0x1]
    %v242 = vlaneseq
    %v243 = vshrl.u32 %v242, 7
    %v244 = vsub.s32 0, %v243
    %v245 = vrot.slane %v240, %v244
    %v247 = vadd.f32 %v236, %v245
    %v248 = vadd.f32 %v237, %v245
    %v249 = vadd.f32 %v238, %v245
    %v250 = vadd.f32 %v239, %v245
    %251 = vst.msk [vmem:[%s6] sm:$0xff] %vm145, %v247
    %252 = vst.msk [vmem:[%s6 + $0x8] sm:$0xff] %vm145, %v248
    %253 = vst.msk [vmem:[%s6 + $0x10] sm:$0xff] %vm145, %v249
    %254 = vst.msk [vmem:[%s6 + $0x18] sm:$0xff] %vm145, %v250
    %v255 = vpack.c.bf16 %v248, %v247
    %v256 = vpack.c.bf16 %v250, %v249
    %v259 = vunpack.c.l.b16 %v255
    %v260 = vunpack.c.h.b16 %v255
    %v261 = vunpack.c.l.b16 %v256
    %v262 = vunpack.c.h.b16 %v256
    %v263 = vpack.c.b16 %v259, %v259
    %v264 = vpack.c.b16 %v260, %v260
    %v265 = vpack.c.b16 %v261, %v261
    %v266 = vpack.c.b16 %v262, %v262
    %vm271 = vcmask 257024
    %272 = vst.msk [vmem:[%s7] sm:$0xf] %vm271, %v263
    %273 = vst.msk [vmem:[%s7 + $0x4] sm:$0xf] %vm271, %v264
    %274 = vst.msk [vmem:[%s7 + $0x8] sm:$0xf] %vm271, %v265
    %275 = vst.msk [vmem:[%s7 + $0xc] sm:$0xf] %vm271, %v266
  $region33: #{cross_pair_forward.33} parent=0 // pred_fallthru
    _
  // Predicated region
  $region34: #{cross_pair_forward.33} parent=0 // pred_check
    _
  $region35: #{cross_pair_forward.33} parent=0 // pred_check_branch
    %277 = sbr.rel (0) target = $region37
  $region36: #{cross_pair_forward.33} parent=0 // pred_region
    _
  $region37: #{cross_pair_forward.33} parent=0 // pred_fallthru
    _
  // Predicated region
  $region38: #{cross_pair_forward.33} parent=0 // pred_check
    _
  $region39: #{cross_pair_forward.33} parent=0 // pred_check_branch
    %279 = sbr.rel (0) target = $region41
  $region40: #{cross_pair_forward.33} parent=0 // pred_region
    _
  $region41: #{cross_pair_forward.33} parent=0 // pred_fallthru
    _
  // Predicated region
  $region42: #{cross_pair_forward.33} parent=0 // pred_check
    _
  $region43: #{cross_pair_forward.33} parent=0 // pred_check_branch
    %281 = sbr.rel (0) target = $region45
  $region44: #{cross_pair_forward.33} parent=0 // pred_region
    _
  $region45: #{cross_pair_forward.33} parent=0 // pred_fallthru
    _
  // Predicated region
  $region46: #{cross_pair_forward.33} parent=0 // pred_check
    _
  $region47: #{cross_pair_forward.33} parent=0 // pred_check_branch
    %283 = sbr.rel (0) target = $region49
  $region48: #{cross_pair_forward.33} parent=0 // pred_region
    _
  $region49: #{cross_pair_forward.33} parent=0 // pred_fallthru
    _

// kernel: cross_pair_forward.51
$region0: #{cross_pair_forward.51}
  #allocation0 [shape = 'u32[]', space=smem, size = 0x4, offset = 0x4, fixed_abs, tag = 'smem constant byte address 0x4 - core index']
  #allocation1 [shape = 'u32[144,128]{1,0:T(1,128)}', space=vmem, size = 0x12000, scoped, tag = 'internal scratch']
  #allocation2 [shape = 'f32[16,32]{1,0:T(8,128)}', space=vmem, size = 0x2000, scoped, tag = 'scratch operand']
  %s0 = inlined_call_operand.vmem [shape: bf16[16,64], index: 0, kind: input, shape index: {}]
  %s1 = inlined_call_operand.vmem [shape: bf16[64,32], index: 1, kind: input, shape index: {}]
  %s2 = inlined_call_operand.vmem [shape: f32[1,32], index: 2, kind: input, shape index: {}]
  %s3 = inlined_call_operand.vmem [shape: f32[16,32], index: 3, kind: input, shape index: {}]
  %s4 = inlined_call_operand.vmem [shape: f32[1,32], index: 4, kind: input, shape index: {}]
  %s5 = inlined_call_operand.vmem [shape: f32[1,32], index: 5, kind: input, shape index: {}]
  %s6 = inlined_call_operand.hbm [shape: f32[16,32], index: 6, kind: output, shape index: {0}]
  %s7 = inlined_call_operand.hbm [shape: bf16[16,32], index: 7, kind: output, shape index: {1}]
  %8 = xla_tuple %s6, %s7
  %s9 = sld [smem:[#allocation0]]
  $region50: #{cross_pair_forward.51} parent=0
    _
  %s11 = ssub.s32 1, %s9
  %s12 = scalar_select 0, %s11, %s9
  $region1: #{cross_pair_forward.51} parent=0
    #allocation3 [shape = 'u8[8192]{0}', space=vmem, size = 0x2000, scoped, tag = 'output window, operand 0, single buffered']
    #allocation4 [shape = 's32[1]{0}', space=sflag, size = 0x4, scoped, tag = 'scoped memory for cross_pair_forward.51']
    #allocation5 [shape = 'u8[4096]{0}', space=vmem, size = 0x1000, scoped, tag = 'output window, operand 1, single buffered']
    #allocation6 [shape = 's32[1]{0}', space=sflag, size = 0x4, scoped, tag = 'scoped memory for cross_pair_forward.51']
    %13 = vsyncpa [#allocation4], 0
    %14 = vsyncpa [#allocation6], 0
    // Predicated region
    $region2: #{cross_pair_forward.51} parent=1 // pred_check
      _
    $region3: #{cross_pair_forward.51} parent=1 // pred_check_branch
      %16 = sbr.rel (0) target = $region5
    $region4: #{cross_pair_forward.51} parent=1 // pred_region
      _
    $region5: #{cross_pair_forward.51} parent=1 // pred_fallthru
      _
    // Predicated region
    $region6: #{cross_pair_forward.51} parent=1 // pred_check
      _
    $region7: #{cross_pair_forward.51} parent=1 // pred_check_branch
      %18 = sbr.rel (0) target = $region9
    $region8: #{cross_pair_forward.51} parent=1 // pred_region
      _
    $region9: #{cross_pair_forward.51} parent=1 // pred_fallthru
      _
    // Predicated region
    $region10: #{cross_pair_forward.51} parent=1 // pred_check
      _
    $region11: #{cross_pair_forward.51} parent=1 // pred_check_branch
      %20 = sbr.rel (0) target = $region13
    $region12: #{cross_pair_forward.51} parent=1 // pred_region
      _
    $region13: #{cross_pair_forward.51} parent=1 // pred_fallthru
      _
    // Predicated region
    $region14: #{cross_pair_forward.51} parent=1 // pred_check
      _
    $region15: #{cross_pair_forward.51} parent=1 // pred_check_branch
      %22 = sbr.rel (0) target = $region17
    $region16: #{cross_pair_forward.51} parent=1 // pred_region
      _
    $region17: #{cross_pair_forward.51} parent=1 // pred_fallthru
      _
    // Predicated region
    $region18: #{cross_pair_forward.51} parent=1 // pred_check
      _
    $region19: #{cross_pair_forward.51} parent=1 // pred_check_branch
      %24 = sbr.rel (0) target = $region21
    $region20: #{cross_pair_forward.51} parent=1 // pred_region
      _
    $region21: #{cross_pair_forward.51} parent=1 // pred_fallthru
      _
    // Predicated region
    $region22: #{cross_pair_forward.51} parent=1 // pred_check
      _
    $region23: #{cross_pair_forward.51} parent=1 // pred_check_branch
      %26 = sbr.rel (0) target = $region25
    $region24: #{cross_pair_forward.51} parent=1 // pred_region
      _
    $region25: #{cross_pair_forward.51} parent=1 // pred_fallthru
      _
    %p28 = scmp.eq.s32.totalorder 0, 0
    // Predicated region
    $region26: #{cross_pair_forward.51} parent=1 // pred_check
      %p29 = pneg %p28
    $region27: #{cross_pair_forward.51} parent=1 // pred_check_branch
      %31 = sbr.rel (%p29) target = $region29
    $region28: #{cross_pair_forward.51} parent=1 // pred_region
      %vm32 = vcmask 261120
      %33 = vst.msk [vmem:[#allocation2] sm:$0xff] %vm32, 0.0
      %34 = vst.msk [vmem:[#allocation2 + $0x8] sm:$0xff] %vm32, 0.0
    $region29: #{cross_pair_forward.51} parent=1 // pred_fallthru
      _
    %v35 = vld [vmem:[#allocation2] sm:$0xff]
    %v36 = vld [vmem:[#allocation2 + $0x8] sm:$0xff]
    %v37 = vld [vmem:[%s0] sm:$0xf]
    %v38 = vld [vmem:[%s0 + $0x4] sm:$0xf]
    %v39 = vld [vmem:[%s1] sm:$0xf]
    %v40 = vld [vmem:[%s1 + $0x4] sm:$0xf]
    %v41 = vld [vmem:[%s1 + $0x8] sm:$0xf]
    %v42 = vld [vmem:[%s1 + $0xc] sm:$0xf]
    %v43 = vld [vmem:[%s1 + $0x10] sm:$0xf]
    %v44 = vld [vmem:[%s1 + $0x14] sm:$0xf]
    %v45 = vld [vmem:[%s1 + $0x18] sm:$0xf]
    %v46 = vld [vmem:[%s1 + $0x1c] sm:$0xf]
    %v49 = vunpack.c.l.b16 %v37
    %v50 = vunpack.c.l.b16 %v38
    %v51 = vpack.c.b16 %v50, %v49
    %v60 = vunpack.c.l.b16 %v39
    %v61 = vunpack.c.l.b16 %v40
    %v62 = vunpack.c.l.b16 %v41
    %v63 = vunpack.c.l.b16 %v42
    %v64 = vunpack.c.l.b16 %v43
    %v65 = vunpack.c.l.b16 %v44
    %v66 = vunpack.c.l.b16 %v45
    %v67 = vunpack.c.l.b16 %v46
    %v68 = vpack.c.b16 %v61, %v60
    %v69 = vpack.c.b16 %v63, %v62
    %v70 = vpack.c.b16 %v65, %v64
    %v71 = vpack.c.b16 %v67, %v66
    %vm76 = vcmask 523264
    %v78 = vsel %vm76, %v51, 0
    %80 = vmatprep.subr.bf16.mxu0 0
    %81 = vmatpush1.bf16.msra.mxu0 %v68
    %82 = vmatprep.subr.bf16.mxu0 0
    %83 = vmatpush1.bf16.msra.mxu0 %v69
    %84 = vmatprep.subr.bf16.mxu0 0
    %85 = vmatpush1.bf16.msra.mxu0 %v70
    %86 = vmatprep.subr.bf16.mxu0 0
    %87 = vmatpush1.bf16.msra.mxu0 %v71
    %88 = vmatprep.subr.bf16.mxu0 0
    %89 = vmatpush1.bf16.msra.mxu0 0
    %90 = vmatprep.subr.bf16.mxu0 0
    %91 = vmatpush1.bf16.msra.mxu0 0
    %92 = vmatprep.subr.bf16.mxu0 0
    %93 = vmatpush1.bf16.msra.mxu0 0
    %94 = vmatprep.subr.bf16.mxu0 0
    %95 = vmatpush1.bf16.msra.mxu0 0
    %96 = vmatprep.subr.bf16.mxu0 0
    %97 = vmatpush1.bf16.msra.mxu0 0
    %98 = vmatprep.subr.bf16.mxu0 0
    %99 = vmatpush1.bf16.msra.mxu0 0
    %100 = vmatprep.subr.bf16.mxu0 0
    %101 = vmatpush1.bf16.msra.mxu0 0
    %102 = vmatprep.subr.bf16.mxu0 0
    %103 = vmatpush1.bf16.msra.mxu0 0
    %104 = vmatprep.subr.bf16.mxu0 0
    %105 = vmatpush1.bf16.msra.mxu0 0
    %106 = vmatprep.subr.bf16.mxu0 0
    %107 = vmatpush1.bf16.msra.mxu0 0
    %108 = vmatprep.subr.bf16.mxu0 0
    %109 = vmatpush1.bf16.msra.mxu0 0
    %110 = vmatprep.subr.bf16.mxu0 0
    %111 = vmatpush1.bf16.msra.mxu0 0
    %112 = vmatprep.mubr.bf16.mxu0 0
    %113 = vmatmul.mubr.bf16.gmra.mrb[0].mxu0 %v78
    %v114 = vpop.f32.mrb[0].mxu0
    %v115 = vadd.f32 0.0, %v114
    %v116 = vpop.f32.mrb[0].mxu0
    %v117 = vpop.f32.mrb[0].mxu0
    %v118 = vadd.f32 0.0, %v117
    %v119 = vpop.f32.mrb[0].mxu0
    %120 = vdwg.mxu0
    %v121 = vadd.f32 %v35, %v115
    %v122 = vadd.f32 %v36, %v118
    %vm123 = vcmask 261120
    %124 = vst.msk [vmem:[#allocation2] sm:$0xff] %vm123, %v121
    %125 = vst.msk [vmem:[#allocation2 + $0x8] sm:$0xff] %vm123, %v122
    // Predicated region
    $region30: #{cross_pair_forward.51} parent=1 // pred_check
      %p126 = pneg %p28
    $region31: #{cross_pair_forward.51} parent=1 // pred_check_branch
      %128 = sbr.rel (%p126) target = $region33
    $region32: #{cross_pair_forward.51} parent=1 // pred_region
      %v129 = vld [vmem:[#allocation2] sm:$0xff]
      %v130 = vld [vmem:[#allocation2 + $0x8] sm:$0xff]
      %v131 = vld [vmem:[%s2] sm:$0x1]
      %v133 = vlaneseq
      %v134 = vshrl.u32 %v133, 7
      %v135 = vsub.s32 0, %v134
      %v136 = vrot.slane %v131, %v135
      %v138 = vadd.f32 %v129, %v136
      %v139 = vadd.f32 %v130, %v136
      %v140 = vld [vmem:[%s3] sm:$0xff]
      %v141 = vld [vmem:[%s3 + $0x8] sm:$0xff]
      %v142 = vadd.f32 %v138, %v140
      %v143 = vadd.f32 %v139, %v141
      %v144 = vsel %vm123, %v142, 0.0
      %145 = vadd.xlane.f32.xlu0 %v144
      %v146 = vpop.xlane.xlu0 %145
      %v147 = vsel %vm123, %v143, 0.0
      %148 = vadd.xlane.f32.xlu0 %v147
      %v149 = vpop.xlane.xlu0 %148
      %v150 = vrcp.pop 32.0
      %v151 = vmul.f32 %v146, %v150
      %v152 = vmul.f32 %v149, %v150
      %v153 = vsub.f32 %v142, %v151
      %v154 = vsub.f32 %v143, %v152
      %v155 = vmul.f32 %v153, %v153
      %v156 = vmul.f32 %v154, %v154
      %v157 = vsel %vm123, %v155, 0.0
      %158 = vadd.xlane.f32.xlu0 %v157
      %v159 = vpop.xlane.xlu0 %158
      %v160 = vsel %vm123, %v156, 0.0
      %161 = vadd.xlane.f32.xlu0 %v160
      %v162 = vpop.xlane.xlu0 %161
      %v163 = vmul.f32 %v159, %v150
      %v164 = vmul.f32 %v162, %v150
      %v165 = vadd.f32 %v163, 1e-12
      %v166 = vadd.f32 %v164, 1e-12
      %v167 = vrsqrt.pop %v165
      %v168 = vrsqrt.pop %v166
      %v169 = vmul.f32 %v153, %v167
      %v170 = vmul.f32 %v154, %v168
      %v171 = vld [vmem:[%s4] sm:$0x1]
      %v173 = vlaneseq
      %v174 = vshrl.u32 %v173, 7
      %v175 = vsub.s32 0, %v174
      %v176 = vrot.slane %v171, %v175
      %v178 = vmul.f32 %v169, %v176
      %v179 = vmul.f32 %v170, %v176
      %v180 = vld [vmem:[%s5] sm:$0x1]
      %v182 = vlaneseq
      %v183 = vshrl.u32 %v182, 7
      %v184 = vsub.s32 0, %v183
      %v185 = vrot.slane %v180, %v184
      %v187 = vadd.f32 %v178, %v185
      %v188 = vadd.f32 %v179, %v185
      %189 = vst.msk [vmem:[#allocation3] sm:$0xff] %vm123, %v187
      %190 = vst.msk [vmem:[#allocation3 + $0x8] sm:$0xff] %vm123, %v188
      %v191 = vpack.c.bf16 %v188, %v187
      %v193 = vunpack.c.l.b16 %v191
      %v194 = vunpack.c.h.b16 %v191
      %v195 = vpack.c.b16 %v193, %v193
      %v196 = vpack.c.b16 %v194, %v194
      %vm199 = vcmask 257024
      %200 = vst.msk [vmem:[#allocation5] sm:$0xf] %vm199, %v195
      %201 = vst.msk [vmem:[#allocation5 + $0x4] sm:$0xf] %vm199, %v196
    $region33: #{cross_pair_forward.51} parent=1 // pred_fallthru
      _
    // Predicated region
    $region34: #{cross_pair_forward.51} parent=1 // pred_check
      _
    $region35: #{cross_pair_forward.51} parent=1 // pred_check_branch
      %203 = sbr.rel (0) target = $region37
    $region36: #{cross_pair_forward.51} parent=1 // pred_region
      %s205 = ssub.s32 256, 256
      %206 = vsyncadd [#allocation4], %s205
      %s207 = sshll.u32 [#allocation3], 4
      %s208 = int_to_ptr.vmem [resolvable:$true] %s207
      %213 = dma.vmem_to_hbm [thread:$0]  %s208, 256, %s6, [#allocation4], 128, 128, 8
    $region37: #{cross_pair_forward.51} parent=1 // pred_fallthru
      _
    // Predicated region
    $region38: #{cross_pair_forward.51} parent=1 // pred_check
      _
    $region39: #{cross_pair_forward.51} parent=1 // pred_check_branch
      %215 = sbr.rel (0) target = $region41
    $region40: #{cross_pair_forward.51} parent=1 // pred_region
      %s217 = ssub.s32 128, 128
      %218 = vsyncadd [#allocation6], %s217
      %s219 = sshll.u32 [#allocation5], 4
      %s220 = int_to_ptr.vmem [resolvable:$true] %s219
      %225 = dma.vmem_to_hbm [thread:$0]  %s220, 128, %s7, [#allocation6], 64, 64, 4
    $region41: #{cross_pair_forward.51} parent=1 // pred_fallthru
      _
    // Predicated region
    $region42: #{cross_pair_forward.51} parent=1 // pred_check
      _
    $region43: #{cross_pair_forward.51} parent=1 // pred_check_branch
      %227 = sbr.rel (0) target = $region45
    $region44: #{cross_pair_forward.51} parent=1 // pred_region
      %228 = dma.done [#allocation4], 256
    $region45: #{cross_pair_forward.51} parent=1 // pred_fallthru
      _
    // Predicated region
    $region46: #{cross_pair_forward.51} parent=1 // pred_check
      _
    $region47: #{cross_pair_forward.51} parent=1 // pred_check_branch
      %230 = sbr.rel (0) target = $region49
    $region48: #{cross_pair_forward.51} parent=1 // pred_region
      %231 = dma.done [#allocation6], 128
    $region49: #{cross_pair_forward.51} parent=1 // pred_fallthru
      _
    %232 = vsyncpa [#allocation4], 1
    %233 = vsyncpa [#allocation6], 1

// kernel: cross_pair_forward.45
$region0: #{cross_pair_forward.45}
  #allocation0 [shape = 'u32[]', space=smem, size = 0x4, offset = 0x4, fixed_abs, tag = 'smem constant byte address 0x4 - core index']
  #allocation1 [shape = 'u32[144,128]{1,0:T(1,128)}', space=vmem, size = 0x12000, scoped, tag = 'internal scratch']
  #allocation2 [shape = 'f32[32,32]{1,0:T(8,128)}', space=vmem, size = 0x4000, scoped, tag = 'scratch operand']
  %s0 = inlined_call_operand.vmem [shape: bf16[32,64], index: 0, kind: input, shape index: {}]
  %s1 = inlined_call_operand.vmem [shape: bf16[64,32], index: 1, kind: input, shape index: {}]
  %s2 = inlined_call_operand.vmem [shape: f32[1,32], index: 2, kind: input, shape index: {}]
  %s3 = inlined_call_operand.vmem [shape: f32[32,32], index: 3, kind: input, shape index: {}]
  %s4 = inlined_call_operand.vmem [shape: f32[1,32], index: 4, kind: input, shape index: {}]
  %s5 = inlined_call_operand.vmem [shape: f32[1,32], index: 5, kind: input, shape index: {}]
  %s6 = inlined_call_operand.hbm [shape: f32[32,32], index: 6, kind: output, shape index: {0}]
  %s7 = inlined_call_operand.hbm [shape: bf16[32,32], index: 7, kind: output, shape index: {1}]
  %8 = xla_tuple %s6, %s7
  %s9 = sld [smem:[#allocation0]]
  $region50: #{cross_pair_forward.45} parent=0
    _
  %s11 = ssub.s32 1, %s9
  %s12 = scalar_select 0, %s11, %s9
  $region1: #{cross_pair_forward.45} parent=0
    #allocation3 [shape = 'u8[16384]{0}', space=vmem, size = 0x4000, scoped, tag = 'output window, operand 0, single buffered']
    #allocation4 [shape = 's32[1]{0}', space=sflag, size = 0x4, scoped, tag = 'scoped memory for cross_pair_forward.45']
    #allocation5 [shape = 'u8[8192]{0}', space=vmem, size = 0x2000, scoped, tag = 'output window, operand 1, single buffered']
    #allocation6 [shape = 's32[1]{0}', space=sflag, size = 0x4, scoped, tag = 'scoped memory for cross_pair_forward.45']
    %13 = vsyncpa [#allocation4], 0
    %14 = vsyncpa [#allocation6], 0
    // Predicated region
    $region2: #{cross_pair_forward.45} parent=1 // pred_check
      _
    $region3: #{cross_pair_forward.45} parent=1 // pred_check_branch
      %16 = sbr.rel (0) target = $region5
    $region4: #{cross_pair_forward.45} parent=1 // pred_region
      _
    $region5: #{cross_pair_forward.45} parent=1 // pred_fallthru
      _
    // Predicated region
    $region6: #{cross_pair_forward.45} parent=1 // pred_check
      _
    $region7: #{cross_pair_forward.45} parent=1 // pred_check_branch
      %18 = sbr.rel (0) target = $region9
    $region8: #{cross_pair_forward.45} parent=1 // pred_region
      _
    $region9: #{cross_pair_forward.45} parent=1 // pred_fallthru
      _
    // Predicated region
    $region10: #{cross_pair_forward.45} parent=1 // pred_check
      _
    $region11: #{cross_pair_forward.45} parent=1 // pred_check_branch
      %20 = sbr.rel (0) target = $region13
    $region12: #{cross_pair_forward.45} parent=1 // pred_region
      _
    $region13: #{cross_pair_forward.45} parent=1 // pred_fallthru
      _
    // Predicated region
    $region14: #{cross_pair_forward.45} parent=1 // pred_check
      _
    $region15: #{cross_pair_forward.45} parent=1 // pred_check_branch
      %22 = sbr.rel (0) target = $region17
    $region16: #{cross_pair_forward.45} parent=1 // pred_region
      _
    $region17: #{cross_pair_forward.45} parent=1 // pred_fallthru
      _
    // Predicated region
    $region18: #{cross_pair_forward.45} parent=1 // pred_check
      _
    $region19: #{cross_pair_forward.45} parent=1 // pred_check_branch
      %24 = sbr.rel (0) target = $region21
    $region20: #{cross_pair_forward.45} parent=1 // pred_region
      _
    $region21: #{cross_pair_forward.45} parent=1 // pred_fallthru
      _
    // Predicated region
    $region22: #{cross_pair_forward.45} parent=1 // pred_check
      _
    $region23: #{cross_pair_forward.45} parent=1 // pred_check_branch
      %26 = sbr.rel (0) target = $region25
    $region24: #{cross_pair_forward.45} parent=1 // pred_region
      _
    $region25: #{cross_pair_forward.45} parent=1 // pred_fallthru
      _
    %p28 = scmp.eq.s32.totalorder 0, 0
    // Predicated region
    $region26: #{cross_pair_forward.45} parent=1 // pred_check
      %p29 = pneg %p28
    $region27: #{cross_pair_forward.45} parent=1 // pred_check_branch
      %31 = sbr.rel (%p29) target = $region29
    $region28: #{cross_pair_forward.45} parent=1 // pred_region
      %vm32 = vcmask 261120
      %33 = vst.msk [vmem:[#allocation2] sm:$0xff] %vm32, 0.0
      %34 = vst.msk [vmem:[#allocation2 + $0x8] sm:$0xff] %vm32, 0.0
      %35 = vst.msk [vmem:[#allocation2 + $0x10] sm:$0xff] %vm32, 0.0
      %36 = vst.msk [vmem:[#allocation2 + $0x18] sm:$0xff] %vm32, 0.0
    $region29: #{cross_pair_forward.45} parent=1 // pred_fallthru
      _
    %v37 = vld [vmem:[#allocation2] sm:$0xff]
    %v38 = vld [vmem:[#allocation2 + $0x8] sm:$0xff]
    %v39 = vld [vmem:[#allocation2 + $0x10] sm:$0xff]
    %v40 = vld [vmem:[#allocation2 + $0x18] sm:$0xff]
    %v41 = vld [vmem:[%s0] sm:$0xf]
    %v42 = vld [vmem:[%s0 + $0x4] sm:$0xf]
    %v43 = vld [vmem:[%s0 + $0x8] sm:$0xf]
    %v44 = vld [vmem:[%s0 + $0xc] sm:$0xf]
    %v45 = vld [vmem:[%s1] sm:$0xf]
    %v46 = vld [vmem:[%s1 + $0x4] sm:$0xf]
    %v47 = vld [vmem:[%s1 + $0x8] sm:$0xf]
    %v48 = vld [vmem:[%s1 + $0xc] sm:$0xf]
    %v49 = vld [vmem:[%s1 + $0x10] sm:$0xf]
    %v50 = vld [vmem:[%s1 + $0x14] sm:$0xf]
    %v51 = vld [vmem:[%s1 + $0x18] sm:$0xf]
    %v52 = vld [vmem:[%s1 + $0x1c] sm:$0xf]
    %v57 = vunpack.c.l.b16 %v41
    %v58 = vunpack.c.l.b16 %v42
    %v59 = vunpack.c.l.b16 %v43
    %v60 = vunpack.c.l.b16 %v44
    %v61 = vpack.c.b16 %v58, %v57
    %v62 = vpack.c.b16 %v60, %v59
    %v71 = vunpack.c.l.b16 %v45
    %v72 = vunpack.c.l.b16 %v46
    %v73 = vunpack.c.l.b16 %v47
    %v74 = vunpack.c.l.b16 %v48
    %v75 = vunpack.c.l.b16 %v49
    %v76 = vunpack.c.l.b16 %v50
    %v77 = vunpack.c.l.b16 %v51
    %v78 = vunpack.c.l.b16 %v52
    %v79 = vpack.c.b16 %v72, %v71
    %v80 = vpack.c.b16 %v74, %v73
    %v81 = vpack.c.b16 %v76, %v75
    %v82 = vpack.c.b16 %v78, %v77
    %vm87 = vcmask 523264
    %v89 = vsel %vm87, %v61, 0
    %v92 = vsel %vm87, %v62, 0
    %94 = vmatprep.subr.bf16.mxu0 0
    %95 = vmatpush1.bf16.msra.mxu0 %v79
    %96 = vmatprep.subr.bf16.mxu0 0
    %97 = vmatpush1.bf16.msra.mxu0 %v80
    %98 = vmatprep.subr.bf16.mxu0 0
    %99 = vmatpush1.bf16.msra.mxu0 %v81
    %100 = vmatprep.subr.bf16.mxu0 0
    %101 = vmatpush1.bf16.msra.mxu0 %v82
    %102 = vmatprep.subr.bf16.mxu0 0
    %103 = vmatpush1.bf16.msra.mxu0 0
    %104 = vmatprep.subr.bf16.mxu0 0
    %105 = vmatpush1.bf16.msra.mxu0 0
    %106 = vmatprep.subr.bf16.mxu0 0
    %107 = vmatpush1.bf16.msra.mxu0 0
    %108 = vmatprep.subr.bf16.mxu0 0
    %109 = vmatpush1.bf16.msra.mxu0 0
    %110 = vmatprep.subr.bf16.mxu0 0
    %111 = vmatpush1.bf16.msra.mxu0 0
    %112 = vmatprep.subr.bf16.mxu0 0
    %113 = vmatpush1.bf16.msra.mxu0 0
    %114 = vmatprep.subr.bf16.mxu0 0
    %115 = vmatpush1.bf16.msra.mxu0 0
    %116 = vmatprep.subr.bf16.mxu0 0
    %117 = vmatpush1.bf16.msra.mxu0 0
    %118 = vmatprep.subr.bf16.mxu0 0
    %119 = vmatpush1.bf16.msra.mxu0 0
    %120 = vmatprep.subr.bf16.mxu0 0
    %121 = vmatpush1.bf16.msra.mxu0 0
    %122 = vmatprep.subr.bf16.mxu0 0
    %123 = vmatpush1.bf16.msra.mxu0 0
    %124 = vmatprep.subr.bf16.mxu0 0
    %125 = vmatpush1.bf16.msra.mxu0 0
    %126 = vmatprep.mubr.bf16.mxu0 0
    %127 = vmatmul.mubr.bf16.gmra.mrb[0].mxu0 %v89
    %v128 = vpop.f32.mrb[0].mxu0
    %v129 = vadd.f32 0.0, %v128
    %v130 = vpop.f32.mrb[0].mxu0
    %v131 = vpop.f32.mrb[0].mxu0
    %v132 = vadd.f32 0.0, %v131
    %v133 = vpop.f32.mrb[0].mxu0
    %134 = vmatprep.mubr.bf16.mxu0 0
    %135 = vmatmul.mubr.bf16.gmra.mrb[0].mxu0 %v92
    %v136 = vpop.f32.mrb[0].mxu0
    %v137 = vadd.f32 0.0, %v136
    %v138 = vpop.f32.mrb[0].mxu0
    %v139 = vpop.f32.mrb[0].mxu0
    %v140 = vadd.f32 0.0, %v139
    %v141 = vpop.f32.mrb[0].mxu0
    %142 = vdwg.mxu0
    %v143 = vadd.f32 %v37, %v129
    %v144 = vadd.f32 %v38, %v132
    %v145 = vadd.f32 %v39, %v137
    %v146 = vadd.f32 %v40, %v140
    %vm147 = vcmask 261120
    %148 = vst.msk [vmem:[#allocation2] sm:$0xff] %vm147, %v143
    %149 = vst.msk [vmem:[#allocation2 + $0x8] sm:$0xff] %vm147, %v144
    %150 = vst.msk [vmem:[#allocation2 + $0x10] sm:$0xff] %vm147, %v145
    %151 = vst.msk [vmem:[#allocation2 + $0x18] sm:$0xff] %vm147, %v146
    // Predicated region
    $region30: #{cross_pair_forward.45} parent=1 // pred_check
      %p152 = pneg %p28
    $region31: #{cross_pair_forward.45} parent=1 // pred_check_branch
      %154 = sbr.rel (%p152) target = $region33
    $region32: #{cross_pair_forward.45} parent=1 // pred_region
      %v155 = vld [vmem:[#allocation2] sm:$0xff]
      %v156 = vld [vmem:[#allocation2 + $0x8] sm:$0xff]
      %v157 = vld [vmem:[#allocation2 + $0x10] sm:$0xff]
      %v158 = vld [vmem:[#allocation2 + $0x18] sm:$0xff]
      %v159 = vld [vmem:[%s2] sm:$0x1]
      %v161 = vlaneseq
      %v162 = vshrl.u32 %v161, 7
      %v163 = vsub.s32 0, %v162
      %v164 = vrot.slane %v159, %v163
      %v166 = vadd.f32 %v155, %v164
      %v167 = vadd.f32 %v156, %v164
      %v168 = vadd.f32 %v157, %v164
      %v169 = vadd.f32 %v158, %v164
      %v170 = vld [vmem:[%s3] sm:$0xff]
      %v171 = vld [vmem:[%s3 + $0x8] sm:$0xff]
      %v172 = vld [vmem:[%s3 + $0x10] sm:$0xff]
      %v173 = vld [vmem:[%s3 + $0x18] sm:$0xff]
      %v174 = vadd.f32 %v166, %v170
      %v175 = vadd.f32 %v167, %v171
      %v176 = vadd.f32 %v168, %v172
      %v177 = vadd.f32 %v169, %v173
      %v178 = vsel %vm147, %v174, 0.0
      %179 = vadd.xlane.f32.xlu0 %v178
      %v180 = vpop.xlane.xlu0 %179
      %v181 = vsel %vm147, %v175, 0.0
      %182 = vadd.xlane.f32.xlu0 %v181
      %v183 = vpop.xlane.xlu0 %182
      %v184 = vsel %vm147, %v176, 0.0
      %185 = vadd.xlane.f32.xlu0 %v184
      %v186 = vpop.xlane.xlu0 %185
      %v187 = vsel %vm147, %v177, 0.0
      %188 = vadd.xlane.f32.xlu0 %v187
      %v189 = vpop.xlane.xlu0 %188
      %v190 = vrcp.pop 32.0
      %v191 = vmul.f32 %v180, %v190
      %v192 = vmul.f32 %v183, %v190
      %v193 = vmul.f32 %v186, %v190
      %v194 = vmul.f32 %v189, %v190
      %v195 = vsub.f32 %v174, %v191
      %v196 = vsub.f32 %v175, %v192
      %v197 = vsub.f32 %v176, %v193
      %v198 = vsub.f32 %v177, %v194
      %v199 = vmul.f32 %v195, %v195
      %v200 = vmul.f32 %v196, %v196
      %v201 = vmul.f32 %v197, %v197
      %v202 = vmul.f32 %v198, %v198
      %v203 = vsel %vm147, %v199, 0.0
      %204 = vadd.xlane.f32.xlu0 %v203
      %v205 = vpop.xlane.xlu0 %204
      %v206 = vsel %vm147, %v200, 0.0
      %207 = vadd.xlane.f32.xlu0 %v206
      %v208 = vpop.xlane.xlu0 %207
      %v209 = vsel %vm147, %v201, 0.0
      %210 = vadd.xlane.f32.xlu0 %v209
      %v211 = vpop.xlane.xlu0 %210
      %v212 = vsel %vm147, %v202, 0.0
      %213 = vadd.xlane.f32.xlu0 %v212
      %v214 = vpop.xlane.xlu0 %213
      %v215 = vmul.f32 %v205, %v190
      %v216 = vmul.f32 %v208, %v190
      %v217 = vmul.f32 %v211, %v190
      %v218 = vmul.f32 %v214, %v190
      %v219 = vadd.f32 %v215, 1e-12
      %v220 = vadd.f32 %v216, 1e-12
      %v221 = vadd.f32 %v217, 1e-12
      %v222 = vadd.f32 %v218, 1e-12
      %v223 = vrsqrt.pop %v219
      %v224 = vrsqrt.pop %v220
      %v225 = vrsqrt.pop %v221
      %v226 = vrsqrt.pop %v222
      %v227 = vmul.f32 %v195, %v223
      %v228 = vmul.f32 %v196, %v224
      %v229 = vmul.f32 %v197, %v225
      %v230 = vmul.f32 %v198, %v226
      %v231 = vld [vmem:[%s4] sm:$0x1]
      %v233 = vlaneseq
      %v234 = vshrl.u32 %v233, 7
      %v235 = vsub.s32 0, %v234
      %v236 = vrot.slane %v231, %v235
      %v238 = vmul.f32 %v227, %v236
      %v239 = vmul.f32 %v228, %v236
      %v240 = vmul.f32 %v229, %v236
      %v241 = vmul.f32 %v230, %v236
      %v242 = vld [vmem:[%s5] sm:$0x1]
      %v244 = vlaneseq
      %v245 = vshrl.u32 %v244, 7
      %v246 = vsub.s32 0, %v245
      %v247 = vrot.slane %v242, %v246
      %v249 = vadd.f32 %v238, %v247
      %v250 = vadd.f32 %v239, %v247
      %v251 = vadd.f32 %v240, %v247
      %v252 = vadd.f32 %v241, %v247
      %253 = vst.msk [vmem:[#allocation3] sm:$0xff] %vm147, %v249
      %254 = vst.msk [vmem:[#allocation3 + $0x8] sm:$0xff] %vm147, %v250
      %255 = vst.msk [vmem:[#allocation3 + $0x10] sm:$0xff] %vm147, %v251
      %256 = vst.msk [vmem:[#allocation3 + $0x18] sm:$0xff] %vm147, %v252
      %v257 = vpack.c.bf16 %v250, %v249
      %v258 = vpack.c.bf16 %v252, %v251
      %v261 = vunpack.c.l.b16 %v257
      %v262 = vunpack.c.h.b16 %v257
      %v263 = vunpack.c.l.b16 %v258
      %v264 = vunpack.c.h.b16 %v258
      %v265 = vpack.c.b16 %v261, %v261
      %v266 = vpack.c.b16 %v262, %v262
      %v267 = vpack.c.b16 %v263, %v263
      %v268 = vpack.c.b16 %v264, %v264
      %vm273 = vcmask 257024
      %274 = vst.msk [vmem:[#allocation5] sm:$0xf] %vm273, %v265
      %275 = vst.msk [vmem:[#allocation5 + $0x4] sm:$0xf] %vm273, %v266
      %276 = vst.msk [vmem:[#allocation5 + $0x8] sm:$0xf] %vm273, %v267
      %277 = vst.msk [vmem:[#allocation5 + $0xc] sm:$0xf] %vm273, %v268
    $region33: #{cross_pair_forward.45} parent=1 // pred_fallthru
      _
    // Predicated region
    $region34: #{cross_pair_forward.45} parent=1 // pred_check
      _
    $region35: #{cross_pair_forward.45} parent=1 // pred_check_branch
      %279 = sbr.rel (0) target = $region37
    $region36: #{cross_pair_forward.45} parent=1 // pred_region
      %s281 = ssub.s32 512, 512
      %282 = vsyncadd [#allocation4], %s281
      %s283 = sshll.u32 [#allocation3], 4
      %s284 = int_to_ptr.vmem [resolvable:$true] %s283
      %289 = dma.vmem_to_hbm [thread:$0]  %s284, 512, %s6, [#allocation4], 128, 128, 8
    $region37: #{cross_pair_forward.45} parent=1 // pred_fallthru
      _
    // Predicated region
    $region38: #{cross_pair_forward.45} parent=1 // pred_check
      _
    $region39: #{cross_pair_forward.45} parent=1 // pred_check_branch
      %291 = sbr.rel (0) target = $region41
    $region40: #{cross_pair_forward.45} parent=1 // pred_region
      %s293 = ssub.s32 256, 256
      %294 = vsyncadd [#allocation6], %s293
      %s295 = sshll.u32 [#allocation5], 4
      %s296 = int_to_ptr.vmem [resolvable:$true] %s295
      %301 = dma.vmem_to_hbm [thread:$0]  %s296, 256, %s7, [#allocation6], 64, 64, 4
    $region41: #{cross_pair_forward.45} parent=1 // pred_fallthru
      _
    // Predicated region
    $region42: #{cross_pair_forward.45} parent=1 // pred_check
      _
    $region43: #{cross_pair_forward.45} parent=1 // pred_check_branch
      %303 = sbr.rel (0) target = $region45
    $region44: #{cross_pair_forward.45} parent=1 // pred_region
      %304 = dma.done [#allocation4], 512
    $region45: #{cross_pair_forward.45} parent=1 // pred_fallthru
      _
    // Predicated region
    $region46: #{cross_pair_forward.45} parent=1 // pred_check
      _
    $region47: #{cross_pair_forward.45} parent=1 // pred_check_branch
      %306 = sbr.rel (0) target = $region49
    $region48: #{cross_pair_forward.45} parent=1 // pred_region
      %307 = dma.done [#allocation6], 256
    $region49: #{cross_pair_forward.45} parent=1 // pred_fallthru
      _
    %308 = vsyncpa [#allocation4], 1
    %309 = vsyncpa [#allocation6], 1

// kernel: cross_pair_forward.48
$region0: #{cross_pair_forward.48}
  #allocation0 [shape = 'u32[]', space=smem, size = 0x4, offset = 0x4, fixed_abs, tag = 'smem constant byte address 0x4 - core index']
  #allocation1 [shape = 'u32[144,128]{1,0:T(1,128)}', space=vmem, size = 0x12000, scoped, tag = 'internal scratch']
  %s0 = inlined_call_operand.vmem [shape: bf16[2,8,32], index: 0, kind: input, shape index: {}]
  %s1 = inlined_call_operand.vmem [shape: bf16[2,16,64], index: 1, kind: input, shape index: {}]
  %s2 = inlined_call_operand.vmem [shape: f32[2,1,16], index: 2, kind: input, shape index: {}]
  %s3 = inlined_call_operand.vmem [shape: bf16[2,8,32], index: 3, kind: output, shape index: {0}]
  %s4 = inlined_call_operand.vmem [shape: f32[2,4,16,8], index: 4, kind: output, shape index: {1}]
  %5 = xla_tuple %s3, %s4
  %s6 = sld [smem:[#allocation0]]
  $region53: #{cross_pair_forward.48} parent=0
    _
  %s8 = ssub.s32 1, %s6
  %s9 = scalar_select 0, %s8, %s6
  loop: start=0, step=1, limit=4
  $region2: #{cross_pair_forward.48} parent=0 // loop_pre_header
    _
  $region3: #{cross_pair_forward.48} parent=0 // loop_header
    %s11 = sphi 0, %s15
    %p12 = scmp.ge.s32.totalorder %s11, 4
    %s18 = sphi 0, %s37
    %s19 = sphi 0, %s33
    %s20 = sphi 0, %s29
    %s21 = sphi 0, %s18
    %s22 = sphi 0, %s19
    %s23 = sphi 0, %s20
    %s24 = sphi 0, %s21
    %s25 = sphi 0, %s22
    %s26 = sphi 0, %s23
    %s44 = sphi 0, %s46
    %s47 = sphi 0, %s44
    %s48 = sphi 0, %s47
    %s64 = sphi 0, %s48
    %s72 = sphi 0, %s74
    %s75 = sphi 0, %s72
    %s76 = sphi 0, %s75
    %s92 = sphi 0, %s76
    %s98 = sphi 0, %s100
    %s101 = sphi 0, %s98
    %s102 = sphi 0, %s101
    %s118 = sphi 0, %s102
    %s128 = sphi 0, %s130
    %s131 = sphi 0, %s128
    %s132 = sphi 0, %s131
    %s148 = sphi 0, %s132
    %s158 = sphi 0, %s160
    %s161 = sphi 0, %s158
    %s162 = sphi 0, %s161
    %s178 = sphi 0, %s162
  $region4: #{cross_pair_forward.48} parent=0 // loop_header_branch
    %14 = sbr.rel (%p12) target = $region8
  $region5: #{cross_pair_forward.48} parent=0 // loop_body
    %s16 = ssub.s32 %s11, 1
    %s17 = ssub.s32 %s11, 2
    %s27 = sadd.s32 1, %s20
    %p28 = scmp.ge.s32.totalorder %s27, 1
    %s29 = scalar_select %p28, 0, %s27
    %s30 = sadd.s32 1, %s19
    %s31 = scalar_select %p28, %s30, %s19
    %p32 = scmp.ge.s32.totalorder %s31, 1
    %s33 = scalar_select %p32, 0, %s31
    %s34 = sadd.s32 1, %s18
    %s35 = scalar_select %p32, %s34, %s18
    %p36 = scmp.ge.s32.totalorder %s35, 2
    %s37 = scalar_select %p36, 0, %s35
    %s38 = ssub.s32 %s18, %s37
    %s39 = ssub.s32 %s20, %s29
    %s40 = sor.u32 %s38, %s39
    %s41 = ssub.s32 %s19, %s33
    %s42 = sor.u32 %s40, %s41
    %p43 = scmp.eq.s32.totalorder %s42, 0
    %s45 = sadd.s32 %s44, 1
    %s46 = scalar_select %p43, %s44, %s45
    %p49 = pneg %p43
    %p50 = scmp.eq.s32.totalorder %s11, 1
    %p51 = por %p49, %p50
    %p52 = scmp.ne.s32.totalorder %s44, %s47
    %p53 = scmp.eq.s32.totalorder %s11, 0
    %p54 = por %p52, %p53
    %p55 = scmp.ne.s32.totalorder %s44, %s47
    %p56 = scmp.eq.s32.totalorder %s16, 1
    %p57 = por %p55, %p56
    %p58 = scmp.ne.s32.totalorder %s47, %s48
    %p59 = scmp.eq.s32.totalorder %s16, 0
    %p60 = por %p58, %p59
    %p61 = scmp.ne.s32.totalorder %s47, %s48
    %p62 = scmp.eq.s32.totalorder %s17, 1
    %p63 = por %p61, %p62
    %p65 = scmp.ne.s32.totalorder %s48, %s64
    %p66 = scmp.eq.s32.totalorder %s17, 0
    %p67 = por %p65, %p66
    %s68 = ssub.s32 %s18, %s37
    %s69 = ssub.s32 %s19, %s33
    %s70 = sor.u32 %s68, %s69
    %p71 = scmp.eq.s32.totalorder %s70, 0
    %s73 = sadd.s32 %s72, 1
    %s74 = scalar_select %p71, %s72, %s73
    %p77 = pneg %p71
    %p78 = scmp.eq.s32.totalorder %s11, 1
    %p79 = por %p77, %p78
    %p80 = scmp.ne.s32.totalorder %s72, %s75
    %p81 = scmp.eq.s32.totalorder %s11, 0
    %p82 = por %p80, %p81
    %p83 = scmp.ne.s32.totalorder %s72, %s75
    %p84 = scmp.eq.s32.totalorder %s16, 1
    %p85 = por %p83, %p84
    %p86 = scmp.ne.s32.totalorder %s75, %s76
    %p87 = scmp.eq.s32.totalorder %s16, 0
    %p88 = por %p86, %p87
    %p89 = scmp.ne.s32.totalorder %s75, %s76
    %p90 = scmp.eq.s32.totalorder %s17, 1
    %p91 = por %p89, %p90
    %p93 = scmp.ne.s32.totalorder %s76, %s92
    %p94 = scmp.eq.s32.totalorder %s17, 0
    %p95 = por %p93, %p94
    %s96 = ssub.s32 %s18, %s37
    %p97 = scmp.eq.s32.totalorder %s96, 0
    %s99 = sadd.s32 %s98, 1
    %s100 = scalar_select %p97, %s98, %s99
    %p103 = pneg %p97
    %p104 = scmp.eq.s32.totalorder %s11, 1
    %p105 = por %p103, %p104
    %p106 = scmp.ne.s32.totalorder %s98, %s101
    %p107 = scmp.eq.s32.totalorder %s11, 0
    %p108 = por %p106, %p107
    %p109 = scmp.ne.s32.totalorder %s98, %s101
    %p110 = scmp.eq.s32.totalorder %s16, 1
    %p111 = por %p109, %p110
    %p112 = scmp.ne.s32.totalorder %s101, %s102
    %p113 = scmp.eq.s32.totalorder %s16, 0
    %p114 = por %p112, %p113
    %p115 = scmp.ne.s32.totalorder %s101, %s102
    %p116 = scmp.eq.s32.totalorder %s17, 1
    %p117 = por %p115, %p116
    %p119 = scmp.ne.s32.totalorder %s102, %s118
    %p120 = scmp.eq.s32.totalorder %s17, 0
    %p121 = por %p119, %p120
    %s122 = ssub.s32 %s18, %s37
    %s123 = ssub.s32 %s20, %s29
    %s124 = sor.u32 %s122, %s123
    %s125 = ssub.s32 %s19, %s33
    %s126 = sor.u32 %s124, %s125
    %p127 = scmp.eq.s32.totalorder %s126, 0
    %s129 = sadd.s32 %s128, 1
    %s130 = scalar_select %p127, %s128, %s129
    %p133 = pneg %p127
    %p134 = scmp.eq.s32.totalorder %s11, 1
    %p135 = por %p133, %p134
    %p136 = scmp.ne.s32.totalorder %s128, %s131
    %p137 = scmp.eq.s32.totalorder %s11, 0
    %p138 = por %p136, %p137
    %p139 = scmp.ne.s32.totalorder %s128, %s131
    %p140 = scmp.eq.s32.totalorder %s16, 1
    %p141 = por %p139, %p140
    %p142 = scmp.ne.s32.totalorder %s131, %s132
    %p143 = scmp.eq.s32.totalorder %s16, 0
    %p144 = por %p142, %p143
    %p145 = scmp.ne.s32.totalorder %s131, %s132
    %p146 = scmp.eq.s32.totalorder %s17, 1
    %p147 = por %p145, %p146
    %p149 = scmp.ne.s32.totalorder %s132, %s148
    %p150 = scmp.eq.s32.totalorder %s17, 0
    %p151 = por %p149, %p150
    %s152 = ssub.s32 %s18, %s37
    %s153 = ssub.s32 %s19, %s33
    %s154 = sor.u32 %s152, %s153
    %s155 = ssub.s32 %s20, %s29
    %s156 = sor.u32 %s154, %s155
    %p157 = scmp.eq.s32.totalorder %s156, 0
    %s159 = sadd.s32 %s158, 1
    %s160 = scalar_select %p157, %s158, %s159
    %p163 = pneg %p157
    %p164 = scmp.eq.s32.totalorder %s11, 1
    %p165 = por %p163, %p164
    %p166 = scmp.ne.s32.totalorder %s158, %s161
    %p167 = scmp.eq.s32.totalorder %s11, 0
    %p168 = por %p166, %p167
    %p169 = scmp.ne.s32.totalorder %s158, %s161
    %p170 = scmp.eq.s32.totalorder %s16, 1
    %p171 = por %p169, %p170
    %p172 = scmp.ne.s32.totalorder %s161, %s162
    %p173 = scmp.eq.s32.totalorder %s16, 0
    %p174 = por %p172, %p173
    %p175 = scmp.ne.s32.totalorder %s161, %s162
    %p176 = scmp.eq.s32.totalorder %s17, 1
    %p177 = por %p175, %p176
    %p179 = scmp.ne.s32.totalorder %s162, %s178
    %p180 = scmp.eq.s32.totalorder %s17, 0
    %p181 = por %p179, %p180
    %p182 = scmp.le.s32.totalorder 1, %s11
    %p183 = scmp.lt.s32.totalorder %s11, 3
    %p184 = pnand %p182, %p183
    %p185 = pneg %p184
    // Predicated region
    $region9: #{cross_pair_forward.48} parent=5 // pred_check
      _
    $region10: #{cross_pair_forward.48} parent=5 // pred_check_branch
      %187 = sbr.rel (%p184) target = $region12
    $region11: #{cross_pair_forward.48} parent=5 // pred_region
      %s188 = ssub.s32 %s11, 1
    $region12: #{cross_pair_forward.48} parent=5 // pred_fallthru
      _
    %p189 = scmp.lt.s32.totalorder %s11, 2
    // Predicated region
    $region13: #{cross_pair_forward.48} parent=5 // pred_check
      %p190 = pneg %p189
    $region14: #{cross_pair_forward.48} parent=5 // pred_check_branch
      %192 = sbr.rel (%p190) target = $region16
    $region15: #{cross_pair_forward.48} parent=5 // pred_region
      // Predicated region
      $region17: #{cross_pair_forward.48} parent=15 // pred_check
        %p193 = pneg %p54
      $region18: #{cross_pair_forward.48} parent=15 // pred_check_branch
        %195 = sbr.rel (%p193) target = $region20
      $region19: #{cross_pair_forward.48} parent=15 // pred_region
        %p196 = scmp.lt.s32.totalorder %s18, 1
        %s197 = scalar_select %p196, %s18, 1
        %p198 = scmp.lt.s32.totalorder %s20, 0
        %s199 = scalar_select %p198, %s20, 0
        %p200 = scmp.lt.s32.totalorder %s19, 0
        %s201 = scalar_select %p200, %s19, 0
        %s202 = sadd.s32 %s201, %s199
        %s203 = sadd.s32 %s202, %s197
        %s204 = smul.addr %s203, 4
        %s205 = scalar_lea.vmem %s0, %s204
      $region20: #{cross_pair_forward.48} parent=15 // pred_fallthru
        _
      // Predicated region
      $region21: #{cross_pair_forward.48} parent=15 // pred_check
        %p206 = pneg %p82
      $region22: #{cross_pair_forward.48} parent=15 // pred_check_branch
        %208 = sbr.rel (%p206) target = $region24
      $region23: #{cross_pair_forward.48} parent=15 // pred_region
        %p209 = scmp.lt.s32.totalorder %s18, 1
        %s210 = scalar_select %p209, %s18, 1
        %p211 = scmp.lt.s32.totalorder %s19, 0
        %s212 = scalar_select %p211, %s19, 0
        %s213 = smul.addr %s210, 2
        %s214 = sadd.s32 %s212, %s213
        %s215 = smul.addr %s214, 4
        %s216 = scalar_lea.vmem %s1, %s215
      $region24: #{cross_pair_forward.48} parent=15 // pred_fallthru
        _
      // Predicated region
      $region25: #{cross_pair_forward.48} parent=15 // pred_check
        %p217 = pneg %p108
      $region26: #{cross_pair_forward.48} parent=15 // pred_check_branch
        %219 = sbr.rel (%p217) target = $region28
      $region27: #{cross_pair_forward.48} parent=15 // pred_region
        %p220 = scmp.lt.s32.totalorder %s18, 1
        %s221 = scalar_select %p220, %s18, 1
        %s222 = scalar_lea.vmem %s2, %s221
      $region28: #{cross_pair_forward.48} parent=15 // pred_fallthru
        _
    $region16: #{cross_pair_forward.48} parent=5 // pred_fallthru
      _
    %p223 = scmp.le.s32.totalorder 1, %s11
    %p224 = scmp.lt.s32.totalorder %s11, 3
    %p225 = pnand %p223, %p224
    %p226 = pneg %p225
    // Predicated region
    $region29: #{cross_pair_forward.48} parent=5 // pred_check
      _
    $region30: #{cross_pair_forward.48} parent=5 // pred_check_branch
      %228 = sbr.rel (%p225) target = $region32
    $region31: #{cross_pair_forward.48} parent=5 // pred_region
      %s229 = ssub.s32 %s11, 1
      %p230 = scmp.lt.s32.totalorder %s21, 1
      %s231 = scalar_select %p230, %s21, 1
      %p232 = scmp.lt.s32.totalorder %s23, 0
      %s233 = scalar_select %p232, %s23, 0
      %p234 = scmp.lt.s32.totalorder %s22, 0
      %s235 = scalar_select %p234, %s22, 0
      %s236 = sadd.s32 %s235, %s233
      %s237 = sadd.s32 %s236, %s231
      %s238 = smul.addr %s237, 4
      %s239 = scalar_lea.vmem %s0, %s238
      %p240 = pneg %p60
      %p241 = pneg %p57
      %p242 = scmp.lt.s32.totalorder %s21, 1
      %s243 = scalar_select %p242, %s21, 1
      %p244 = scmp.lt.s32.totalorder %s22, 0
      %s245 = scalar_select %p244, %s22, 0
      %s246 = smul.addr %s243, 2
      %s247 = sadd.s32 %s245, %s246
      %s248 = smul.addr %s247, 4
      %s249 = scalar_lea.vmem %s1, %s248
      %p250 = pneg %p88
      %p251 = pneg %p85
      %p252 = scmp.lt.s32.totalorder %s21, 1
      %s253 = scalar_select %p252, %s21, 1
      %s254 = scalar_lea.vmem %s2, %s253
      %p255 = pneg %p114
      %p256 = pneg %p111
      %p257 = pneg %p144
      %p258 = pneg %p141
      %p259 = scmp.lt.s32.totalorder %s21, 1
      %s260 = scalar_select %p259, %s21, 1
      %p261 = scmp.lt.s32.totalorder %s23, 0
      %s262 = scalar_select %p261, %s23, 0
      %p263 = scmp.lt.s32.totalorder %s22, 0
      %s264 = scalar_select %p263, %s22, 0
      %s265 = sadd.s32 %s264, %s262
      %s266 = sadd.s32 %s265, %s260
      %s267 = smul.addr %s266, 4
      %s268 = scalar_lea.vmem %s3, %s267
      %p269 = pneg %p174
      %p270 = pneg %p171
      %s271 = smul.u32 4, %s22
      %p272 = scmp.lt.s32.totalorder %s21, 1
      %s273 = scalar_select %p272, %s21, 1
      %p274 = scmp.lt.s32.totalorder %s271, 3
      %s275 = scalar_select %p274, %s271, 3
      %p276 = scmp.lt.s32.totalorder %s23, 0
      %s277 = scalar_select %p276, %s23, 0
      %s278 = smul.addr %s275, 2
      %s279 = sadd.s32 %s277, %s278
      %s280 = smul.addr %s273, 8
      %s281 = sadd.s32 %s279, %s280
      %s282 = smul.addr %s281, 8
      %s283 = scalar_lea.vmem %s4, %s282
      %p284 = scmp.lt.s32.totalorder %s21, 1
      %s285 = scalar_select %p284, %s21, 1
      %p286 = scmp.lt.s32.totalorder %s23, 0
      %s287 = scalar_select %p286, %s23, 0
      %p288 = scmp.lt.s32.totalorder %s22, 0
      %s289 = scalar_select %p288, %s22, 0
      %s290 = sadd.s32 %s289, %s287
      %s291 = sadd.s32 %s290, %s285
      %s292 = smul.addr %s291, 4
      %s293 = scalar_lea.vmem %s0, %s292
      %p294 = scmp.lt.s32.totalorder %s21, 1
      %s295 = scalar_select %p294, %s21, 1
      %p296 = scmp.lt.s32.totalorder %s22, 0
      %s297 = scalar_select %p296, %s22, 0
      %s298 = smul.addr %s295, 2
      %s299 = sadd.s32 %s297, %s298
      %s300 = smul.addr %s299, 4
      %s301 = scalar_lea.vmem %s1, %s300
      %p302 = scmp.lt.s32.totalorder %s21, 1
      %s303 = scalar_select %p302, %s21, 1
      %s304 = scalar_lea.vmem %s2, %s303
      %p305 = scmp.lt.s32.totalorder %s21, 1
      %s306 = scalar_select %p305, %s21, 1
      %p307 = scmp.lt.s32.totalorder %s23, 0
      %s308 = scalar_select %p307, %s23, 0
      %p309 = scmp.lt.s32.totalorder %s22, 0
      %s310 = scalar_select %p309, %s22, 0
      %s311 = sadd.s32 %s310, %s308
      %s312 = sadd.s32 %s311, %s306
      %s313 = smul.addr %s312, 4
      %s314 = scalar_lea.vmem %s3, %s313
      %s315 = smul.u32 4, %s22
      %p316 = scmp.lt.s32.totalorder %s21, 1
      %s317 = scalar_select %p316, %s21, 1
      %p318 = scmp.lt.s32.totalorder %s315, 3
      %s319 = scalar_select %p318, %s315, 3
      %p320 = scmp.lt.s32.totalorder %s23, 0
      %s321 = scalar_select %p320, %s23, 0
      %s322 = smul.addr %s319, 2
      %s323 = sadd.s32 %s321, %s322
      %s324 = smul.addr %s317, 8
      %s325 = sadd.s32 %s323, %s324
      %s326 = smul.addr %s325, 8
      %s327 = scalar_lea.vmem %s4, %s326
      %s328 = smul.u32 4, %s22
      %v330 = vld [vmem:[%s293] sm:$0xf]
      %v331 = vld [vmem:[%s301] sm:$0xf]
      %v332 = vld [vmem:[%s301 + $0x4] sm:$0xf]
      %v333 = vld [vmem:[%s304] sm:$0x1]
      %v336 = vunpack.c.l.b16 %v331
      %v337 = vunpack.c.l.b16 %v332
      %v338 = vpack.c.b16 %v337, %v336
      %vm339 = vcmask 64512
      %v341 = vsel %vm339, %v330, 0
      %v344 = vsel %vm339, %v338, 0
      %346 = vmatprep.subr.bf16.mxu0 0
      %347 = vmatpush1.bf16.xpose.msra.mxu0 %v344
      %348 = vmatprep.subr.bf16.mxu0 0
      %349 = vmatpush1.bf16.xpose.msra.mxu0 0
      %350 = vmatprep.subr.bf16.mxu0 0
      %351 = vmatpush1.bf16.xpose.msra.mxu0 0
      %352 = vmatprep.subr.bf16.mxu0 0
      %353 = vmatpush1.bf16.xpose.msra.mxu0 0
      %354 = vmatprep.subr.bf16.mxu0 0
      %355 = vmatpush1.bf16.xpose.msra.mxu0 0
      %356 = vmatprep.subr.bf16.mxu0 0
      %357 = vmatpush1.bf16.xpose.msra.mxu0 0
      %358 = vmatprep.subr.bf16.mxu0 0
      %359 = vmatpush1.bf16.xpose.msra.mxu0 0
      %360 = vmatprep.subr.bf16.mxu0 0
      %361 = vmatpush1.bf16.xpose.msra.mxu0 0
      %362 = vmatprep.subr.bf16.mxu0 0
      %363 = vmatpush1.bf16.xpose.msra.mxu0 0
      %364 = vmatprep.subr.bf16.mxu0 0
      %365 = vmatpush1.bf16.xpose.msra.mxu0 0
      %366 = vmatprep.subr.bf16.mxu0 0
      %367 = vmatpush1.bf16.xpose.msra.mxu0 0
      %368 = vmatprep.subr.bf16.mxu0 0
      %369 = vmatpush1.bf16.xpose.msra.mxu0 0
      %370 = vmatprep.subr.bf16.mxu0 0
      %371 = vmatpush1.bf16.xpose.msra.mxu0 0
      %372 = vmatprep.subr.bf16.mxu0 0
      %373 = vmatpush1.bf16.xpose.msra.mxu0 0
      %374 = vmatprep.subr.bf16.mxu0 0
      %375 = vmatpush1.bf16.xpose.msra.mxu0 0
      %376 = vmatprep.subr.bf16.mxu0 0
      %377 = vmatpush1.bf16.xpose.msra.mxu0 0
      %378 = vmatprep.mubr.bf16.mxu0 0
      %379 = vmatmul.mubr.bf16.gmra.mrb[0].mxu0 %v341
      %v380 = vpop.f32.mrb[0].mxu0
      %v381 = vadd.f32 0.0, %v380
      %v382 = vpop.f32.mrb[0].mxu0
      %v383 = vpop.f32.mrb[0].mxu0
      %v384 = vpop.f32.mrb[0].mxu0
      %385 = vdwg.mxu0
      %v386 = vmul.f32 %v381, 0.35355338
      %387 = vxpose.xlu0.b32.start [1/16] %v386, 128
      %388 = vxpose.xlu0.b32.cont [2/16] 0.0, 128
      %389 = vxpose.xlu0.b32.cont [3/16] 0.0, 128
      %390 = vxpose.xlu0.b32.cont [4/16] 0.0, 128
      %391 = vxpose.xlu0.b32.cont [5/16] 0.0, 128
      %392 = vxpose.xlu0.b32.cont [6/16] 0.0, 128
      %393 = vxpose.xlu0.b32.cont [7/16] 0.0, 128
      %394 = vxpose.xlu0.b32.cont [8/16] 0.0, 128
      %395 = vxpose.xlu0.b32.cont [9/16] 0.0, 128
      %396 = vxpose.xlu0.b32.cont [10/16] 0.0, 128
      %397 = vxpose.xlu0.b32.cont [11/16] 0.0, 128
      %398 = vxpose.xlu0.b32.cont [12/16] 0.0, 128
      %399 = vxpose.xlu0.b32.cont [13/16] 0.0, 128
      %400 = vxpose.xlu0.b32.cont [14/16] 0.0, 128
      %401 = vxpose.xlu0.b32.cont [15/16] 0.0, 128
      %402 = vxpose.xlu0.b32.end [16/16] 0.0, 128
      %v403 = vpop.trf.xlu0
      %v404 = vpop.trf.xlu0
      %v405 = vpop.trf.xlu0
      %v406 = vpop.trf.xlu0
      %v407 = vpop.trf.xlu0
      %v408 = vpop.trf.xlu0
      %v409 = vpop.trf.xlu0
      %v410 = vpop.trf.xlu0
      %v411 = vpop.trf.xlu0
      %v412 = vpop.trf.xlu0
      %v413 = vpop.trf.xlu0
      %v414 = vpop.trf.xlu0
      %v415 = vpop.trf.xlu0
      %v416 = vpop.trf.xlu0
      %v417 = vpop.trf.xlu0
      %v418 = vpop.trf.xlu0
      %419 = vst.msk [vmem:[%s327] sm:$0xff] %vm339, %v403
      %420 = vst.msk [vmem:[%s327 + $0x8] sm:$0xff] %vm339, %v404
      %v422 = vlaneseq
      %v423 = vshrl.u32 %v422, 7
      %v424 = vsub.s32 0, %v423
      %v425 = vrot.slane %v333, %v424
      %v427 = vadd.f32 %v386, %v425
      %vm428 = vcmask 130048
      %v429 = vsel %vm428, %v427, -inf
      %430 = vmax.xlane.f32.xlu0 %v429
      %v431 = vpop.xlane.xlu0 %430
      %v432 = vsub.f32 %v427, %v431
      %v433 = vmul.f32 %v432, 1.442695
      %v434 = vpow.pop %v433
      %v435 = vsel %vm428, %v434, 0.0
      %436 = vadd.xlane.f32.xlu0 %v435
      %v437 = vpop.xlane.xlu0 %436
      %v438 = vrcp.pop %v437
      %v439 = vmul.f32 %v434, %v438
      %v440 = vpack.c.bf16 %v439, %v439
      %441 = vrot.lane.b32.xlu0 %v338, 120
      %v442 = vpop.permute.xlu0 %441
      %v445 = vsel %vm428, %v440, 0
      %447 = vmatprep.subr.bf16.mxu0 0
      %448 = vmatpush1.bf16.msra.mxu0 %v442
      %449 = vmatprep.subr.bf16.mxu0 0
      %450 = vmatpush1.bf16.msra.mxu0 0
      %451 = vmatprep.subr.bf16.mxu0 0
      %452 = vmatpush1.bf16.msra.mxu0 0
      %453 = vmatprep.subr.bf16.mxu0 0
      %454 = vmatpush1.bf16.msra.mxu0 0
      %455 = vmatprep.subr.bf16.mxu0 0
      %456 = vmatpush1.bf16.msra.mxu0 0
      %457 = vmatprep.subr.bf16.mxu0 0
      %458 = vmatpush1.bf16.msra.mxu0 0
      %459 = vmatprep.subr.bf16.mxu0 0
      %460 = vmatpush1.bf16.msra.mxu0 0
      %461 = vmatprep.subr.bf16.mxu0 0
      %462 = vmatpush1.bf16.msra.mxu0 0
      %463 = vmatprep.subr.bf16.mxu0 0
      %464 = vmatpush1.bf16.msra.mxu0 0
      %465 = vmatprep.subr.bf16.mxu0 0
      %466 = vmatpush1.bf16.msra.mxu0 0
      %467 = vmatprep.subr.bf16.mxu0 0
      %468 = vmatpush1.bf16.msra.mxu0 0
      %469 = vmatprep.subr.bf16.mxu0 0
      %470 = vmatpush1.bf16.msra.mxu0 0
      %471 = vmatprep.subr.bf16.mxu0 0
      %472 = vmatpush1.bf16.msra.mxu0 0
      %473 = vmatprep.subr.bf16.mxu0 0
      %474 = vmatpush1.bf16.msra.mxu0 0
      %475 = vmatprep.subr.bf16.mxu0 0
      %476 = vmatpush1.bf16.msra.mxu0 0
      %477 = vmatprep.subr.bf16.mxu0 0
      %478 = vmatpush1.bf16.msra.mxu0 0
      %479 = vmatprep.mubr.bf16.mxu0 0
      %480 = vmatmul.mubr.bf16.gmra.mrb[0].mxu0 %v445
      %v481 = vpop.f32.mrb[0].mxu0
      %v482 = vadd.f32 0.0, %v481
      %v483 = vpop.f32.mrb[0].mxu0
      %v484 = vpop.f32.mrb[0].mxu0
      %v485 = vpop.f32.mrb[0].mxu0
      %486 = vdwg.mxu0
      %v488 = vunpack.c.l.b16 %v330
      %v489 = vpack.c.b16 %v488, %v488
      %490 = vrot.lane.b32.xlu0 %v489, 120
      %v491 = vpop.permute.xlu0 %490
      %492 = vrot.lane.b32.xlu0 %v338, 112
      %v493 = vpop.permute.xlu0 %492
      %v495 = vsel %vm339, %v491, 0
      %v498 = vsel %vm339, %v493, 0
      %500 = vmatprep.subr.bf16.mxu0 0
      %501 = vmatpush1.bf16.xpose.msra.mxu0 %v498
      %502 = vmatprep.subr.bf16.mxu0 0
      %503 = vmatpush1.bf16.xpose.msra.mxu0 0
      %504 = vmatprep.subr.bf16.mxu0 0
      %505 = vmatpush1.bf16.xpose.msra.mxu0 0
      %506 = vmatprep.subr.bf16.mxu0 0
      %507 = vmatpush1.bf16.xpose.msra.mxu0 0
      %508 = vmatprep.subr.bf16.mxu0 0
      %509 = vmatpush1.bf16.xpose.msra.mxu0 0
      %510 = vmatprep.subr.bf16.mxu0 0
      %511 = vmatpush1.bf16.xpose.msra.mxu0 0
      %512 = vmatprep.subr.bf16.mxu0 0
      %513 = vmatpush1.bf16.xpose.msra.mxu0 0
      %514 = vmatprep.subr.bf16.mxu0 0
      %515 = vmatpush1.bf16.xpose.msra.mxu0 0
      %516 = vmatprep.subr.bf16.mxu0 0
      %517 = vmatpush1.bf16.xpose.msra.mxu0 0
      %518 = vmatprep.subr.bf16.mxu0 0
      %519 = vmatpush1.bf16.xpose.msra.mxu0 0
      %520 = vmatprep.subr.bf16.mxu0 0
      %521 = vmatpush1.bf16.xpose.msra.mxu0 0
      %522 = vmatprep.subr.bf16.mxu0 0
      %523 = vmatpush1.bf16.xpose.msra.mxu0 0
      %524 = vmatprep.subr.bf16.mxu0 0
      %525 = vmatpush1.bf16.xpose.msra.mxu0 0
      %526 = vmatprep.subr.bf16.mxu0 0
      %527 = vmatpush1.bf16.xpose.msra.mxu0 0
      %528 = vmatprep.subr.bf16.mxu0 0
      %529 = vmatpush1.bf16.xpose.msra.mxu0 0
      %530 = vmatprep.subr.bf16.mxu0 0
      %531 = vmatpush1.bf16.xpose.msra.mxu0 0
      %532 = vmatprep.mubr.bf16.mxu0 0
      %533 = vmatmul.mubr.bf16.gmra.mrb[0].mxu0 %v495
      %v534 = vpop.f32.mrb[0].mxu0
      %v535 = vadd.f32 0.0, %v534
      %v536 = vpop.f32.mrb[0].mxu0
      %v537 = vpop.f32.mrb[0].mxu0
      %v538 = vpop.f32.mrb[0].mxu0
      %539 = vdwg.mxu0
      %v540 = vmul.f32 %v535, 0.35355338
      %541 = vxpose.xlu0.b32.start [1/16] %v540, 128
      %542 = vxpose.xlu0.b32.cont [2/16] 0.0, 128
      %543 = vxpose.xlu0.b32.cont [3/16] 0.0, 128
      %544 = vxpose.xlu0.b32.cont [4/16] 0.0, 128
      %545 = vxpose.xlu0.b32.cont [5/16] 0.0, 128
      %546 = vxpose.xlu0.b32.cont [6/16] 0.0, 128
      %547 = vxpose.xlu0.b32.cont [7/16] 0.0, 128
      %548 = vxpose.xlu0.b32.cont [8/16] 0.0, 128
      %549 = vxpose.xlu0.b32.cont [9/16] 0.0, 128
      %550 = vxpose.xlu0.b32.cont [10/16] 0.0, 128
      %551 = vxpose.xlu0.b32.cont [11/16] 0.0, 128
      %552 = vxpose.xlu0.b32.cont [12/16] 0.0, 128
      %553 = vxpose.xlu0.b32.cont [13/16] 0.0, 128
      %554 = vxpose.xlu0.b32.cont [14/16] 0.0, 128
      %555 = vxpose.xlu0.b32.cont [15/16] 0.0, 128
      %556 = vxpose.xlu0.b32.end [16/16] 0.0, 128
      %v557 = vpop.trf.xlu0
      %v558 = vpop.trf.xlu0
      %v559 = vpop.trf.xlu0
      %v560 = vpop.trf.xlu0
      %v561 = vpop.trf.xlu0
      %v562 = vpop.trf.xlu0
      %v563 = vpop.trf.xlu0
      %v564 = vpop.trf.xlu0
      %v565 = vpop.trf.xlu0
      %v566 = vpop.trf.xlu0
      %v567 = vpop.trf.xlu0
      %v568 = vpop.trf.xlu0
      %v569 = vpop.trf.xlu0
      %v570 = vpop.trf.xlu0
      %v571 = vpop.trf.xlu0
      %v572 = vpop.trf.xlu0
      %s573 = scalar_lea.vmem %s327, 16
      %574 = vst.msk [vmem:[%s573] sm:$0xff] %vm339, %v557
      %575 = vst.msk [vmem:[%s573 + $0x8] sm:$0xff] %vm339, %v558
      %v576 = vadd.f32 %v540, %v425
      %v577 = vsel %vm428, %v576, -inf
      %578 = vmax.xlane.f32.xlu0 %v577
      %v579 = vpop.xlane.xlu0 %578
      %v580 = vsub.f32 %v576, %v579
      %v581 = vmul.f32 %v580, 1.442695
      %v582 = vpow.pop %v581
      %v583 = vsel %vm428, %v582, 0.0
      %584 = vadd.xlane.f32.xlu0 %v583
      %v585 = vpop.xlane.xlu0 %584
      %v586 = vrcp.pop %v585
      %v587 = vmul.f32 %v582, %v586
      %v588 = vpack.c.bf16 %v587, %v587
      %589 = vrot.lane.b32.xlu0 %v338, 104
      %v590 = vpop.permute.xlu0 %589
      %v593 = vsel %vm428, %v588, 0
      %595 = vmatprep.subr.bf16.mxu0 0
      %596 = vmatpush1.bf16.msra.mxu0 %v590
      %597 = vmatprep.subr.bf16.mxu0 0
      %598 = vmatpush1.bf16.msra.mxu0 0
      %599 = vmatprep.subr.bf16.mxu0 0
      %600 = vmatpush1.bf16.msra.mxu0 0
      %601 = vmatprep.subr.bf16.mxu0 0
      %602 = vmatpush1.bf16.msra.mxu0 0
      %603 = vmatprep.subr.bf16.mxu0 0
      %604 = vmatpush1.bf16.msra.mxu0 0
      %605 = vmatprep.subr.bf16.mxu0 0
      %606 = vmatpush1.bf16.msra.mxu0 0
      %607 = vmatprep.subr.bf16.mxu0 0
      %608 = vmatpush1.bf16.msra.mxu0 0
      %609 = vmatprep.subr.bf16.mxu0 0
      %610 = vmatpush1.bf16.msra.mxu0 0
      %611 = vmatprep.subr.bf16.mxu0 0
      %612 = vmatpush1.bf16.msra.mxu0 0
      %613 = vmatprep.subr.bf16.mxu0 0
      %614 = vmatpush1.bf16.msra.mxu0 0
      %615 = vmatprep.subr.bf16.mxu0 0
      %616 = vmatpush1.bf16.msra.mxu0 0
      %617 = vmatprep.subr.bf16.mxu0 0
      %618 = vmatpush1.bf16.msra.mxu0 0
      %619 = vmatprep.subr.bf16.mxu0 0
      %620 = vmatpush1.bf16.msra.mxu0 0
      %621 = vmatprep.subr.bf16.mxu0 0
      %622 = vmatpush1.bf16.msra.mxu0 0
      %623 = vmatprep.subr.bf16.mxu0 0
      %624 = vmatpush1.bf16.msra.mxu0 0
      %625 = vmatprep.subr.bf16.mxu0 0
      %626 = vmatpush1.bf16.msra.mxu0 0
      %627 = vmatprep.mubr.bf16.mxu0 0
      %628 = vmatmul.mubr.bf16.gmra.mrb[0].mxu0 %v593
      %v629 = vpop.f32.mrb[0].mxu0
      %v630 = vadd.f32 0.0, %v629
      %v631 = vpop.f32.mrb[0].mxu0
      %v632 = vpop.f32.mrb[0].mxu0
      %v633 = vpop.f32.mrb[0].mxu0
      %634 = vdwg.mxu0
      %635 = vrot.lane.b32.xlu0 %v489, 112
      %v636 = vpop.permute.xlu0 %635
      %637 = vrot.lane.b32.xlu0 %v338, 96
      %v638 = vpop.permute.xlu0 %637
      %v640 = vsel %vm339, %v636, 0
      %v643 = vsel %vm339, %v638, 0
      %645 = vmatprep.subr.bf16.mxu0 0
      %646 = vmatpush1.bf16.xpose.msra.mxu0 %v643
      %647 = vmatprep.subr.bf16.mxu0 0
      %648 = vmatpush1.bf16.xpose.msra.mxu0 0
      %649 = vmatprep.subr.bf16.mxu0 0
      %650 = vmatpush1.bf16.xpose.msra.mxu0 0
      %651 = vmatprep.subr.bf16.mxu0 0
      %652 = vmatpush1.bf16.xpose.msra.mxu0 0
      %653 = vmatprep.subr.bf16.mxu0 0
      %654 = vmatpush1.bf16.xpose.msra.mxu0 0
      %655 = vmatprep.subr.bf16.mxu0 0
      %656 = vmatpush1.bf16.xpose.msra.mxu0 0
      %657 = vmatprep.subr.bf16.mxu0 0
      %658 = vmatpush1.bf16.xpose.msra.mxu0 0
      %659 = vmatprep.subr.bf16.mxu0 0
      %660 = vmatpush1.bf16.xpose.msra.mxu0 0
      %661 = vmatprep.subr.bf16.mxu0 0
      %662 = vmatpush1.bf16.xpose.msra.mxu0 0
      %663 = vmatprep.subr.bf16.mxu0 0
      %664 = vmatpush1.bf16.xpose.msra.mxu0 0
      %665 = vmatprep.subr.bf16.mxu0 0
      %666 = vmatpush1.bf16.xpose.msra.mxu0 0
      %667 = vmatprep.subr.bf16.mxu0 0
      %668 = vmatpush1.bf16.xpose.msra.mxu0 0
      %669 = vmatprep.subr.bf16.mxu0 0
      %670 = vmatpush1.bf16.xpose.msra.mxu0 0
      %671 = vmatprep.subr.bf16.mxu0 0
      %672 = vmatpush1.bf16.xpose.msra.mxu0 0
      %673 = vmatprep.subr.bf16.mxu0 0
      %674 = vmatpush1.bf16.xpose.msra.mxu0 0
      %675 = vmatprep.subr.bf16.mxu0 0
      %676 = vmatpush1.bf16.xpose.msra.mxu0 0
      %677 = vmatprep.mubr.bf16.mxu0 0
      %678 = vmatmul.mubr.bf16.gmra.mrb[0].mxu0 %v640
      %v679 = vpop.f32.mrb[0].mxu0
      %v680 = vadd.f32 0.0, %v679
      %v681 = vpop.f32.mrb[0].mxu0
      %v682 = vpop.f32.mrb[0].mxu0
      %v683 = vpop.f32.mrb[0].mxu0
      %684 = vdwg.mxu0
      %v685 = vmul.f32 %v680, 0.35355338
      %686 = vxpose.xlu0.b32.start [1/16] %v685, 128
      %687 = vxpose.xlu0.b32.cont [2/16] 0.0, 128
      %688 = vxpose.xlu0.b32.cont [3/16] 0.0, 128
      %689 = vxpose.xlu0.b32.cont [4/16] 0.0, 128
      %690 = vxpose.xlu0.b32.cont [5/16] 0.0, 128
      %691 = vxpose.xlu0.b32.cont [6/16] 0.0, 128
      %692 = vxpose.xlu0.b32.cont [7/16] 0.0, 128
      %693 = vxpose.xlu0.b32.cont [8/16] 0.0, 128
      %694 = vxpose.xlu0.b32.cont [9/16] 0.0, 128
      %695 = vxpose.xlu0.b32.cont [10/16] 0.0, 128
      %696 = vxpose.xlu0.b32.cont [11/16] 0.0, 128
      %697 = vxpose.xlu0.b32.cont [12/16] 0.0, 128
      %698 = vxpose.xlu0.b32.cont [13/16] 0.0, 128
      %699 = vxpose.xlu0.b32.cont [14/16] 0.0, 128
      %700 = vxpose.xlu0.b32.cont [15/16] 0.0, 128
      %701 = vxpose.xlu0.b32.end [16/16] 0.0, 128
      %v702 = vpop.trf.xlu0
      %v703 = vpop.trf.xlu0
      %v704 = vpop.trf.xlu0
      %v705 = vpop.trf.xlu0
      %v706 = vpop.trf.xlu0
      %v707 = vpop.trf.xlu0
      %v708 = vpop.trf.xlu0
      %v709 = vpop.trf.xlu0
      %v710 = vpop.trf.xlu0
      %v711 = vpop.trf.xlu0
      %v712 = vpop.trf.xlu0
      %v713 = vpop.trf.xlu0
      %v714 = vpop.trf.xlu0
      %v715 = vpop.trf.xlu0
      %v716 = vpop.trf.xlu0
      %v717 = vpop.trf.xlu0
      %s718 = scalar_lea.vmem %s327, 32
      %719 = vst.msk [vmem:[%s718] sm:$0xff] %vm339, %v702
      %720 = vst.msk [vmem:[%s718 + $0x8] sm:$0xff] %vm339, %v703
      %v721 = vadd.f32 %v685, %v425
      %v722 = vsel %vm428, %v721, -inf
      %723 = vmax.xlane.f32.xlu0 %v722
      %v724 = vpop.xlane.xlu0 %723
      %v725 = vsub.f32 %v721, %v724
      %v726 = vmul.f32 %v725, 1.442695
      %v727 = vpow.pop %v726
      %v728 = vsel %vm428, %v727, 0.0
      %729 = vadd.xlane.f32.xlu0 %v728
      %v730 = vpop.xlane.xlu0 %729
      %v731 = vrcp.pop %v730
      %v732 = vmul.f32 %v727, %v731
      %v733 = vpack.c.bf16 %v732, %v732
      %734 = vrot.lane.b32.xlu0 %v338, 88
      %v735 = vpop.permute.xlu0 %734
      %v738 = vsel %vm428, %v733, 0
      %740 = vmatprep.subr.bf16.mxu0 0
      %741 = vmatpush1.bf16.msra.mxu0 %v735
      %742 = vmatprep.subr.bf16.mxu0 0
      %743 = vmatpush1.bf16.msra.mxu0 0
      %744 = vmatprep.subr.bf16.mxu0 0
      %745 = vmatpush1.bf16.msra.mxu0 0
      %746 = vmatprep.subr.bf16.mxu0 0
      %747 = vmatpush1.bf16.msra.mxu0 0
      %748 = vmatprep.subr.bf16.mxu0 0
      %749 = vmatpush1.bf16.msra.mxu0 0
      %750 = vmatprep.subr.bf16.mxu0 0
      %751 = vmatpush1.bf16.msra.mxu0 0
      %752 = vmatprep.subr.bf16.mxu0 0
      %753 = vmatpush1.bf16.msra.mxu0 0
      %754 = vmatprep.subr.bf16.mxu0 0
      %755 = vmatpush1.bf16.msra.mxu0 0
      %756 = vmatprep.subr.bf16.mxu0 0
      %757 = vmatpush1.bf16.msra.mxu0 0
      %758 = vmatprep.subr.bf16.mxu0 0
      %759 = vmatpush1.bf16.msra.mxu0 0
      %760 = vmatprep.subr.bf16.mxu0 0
      %761 = vmatpush1.bf16.msra.mxu0 0
      %762 = vmatprep.subr.bf16.mxu0 0
      %763 = vmatpush1.bf16.msra.mxu0 0
      %764 = vmatprep.subr.bf16.mxu0 0
      %765 = vmatpush1.bf16.msra.mxu0 0
      %766 = vmatprep.subr.bf16.mxu0 0
      %767 = vmatpush1.bf16.msra.mxu0 0
      %768 = vmatprep.subr.bf16.mxu0 0
      %769 = vmatpush1.bf16.msra.mxu0 0
      %770 = vmatprep.subr.bf16.mxu0 0
      %771 = vmatpush1.bf16.msra.mxu0 0
      %772 = vmatprep.mubr.bf16.mxu0 0
      %773 = vmatmul.mubr.bf16.gmra.mrb[0].mxu0 %v738
      %v774 = vpop.f32.mrb[0].mxu0
      %v775 = vadd.f32 0.0, %v774
      %v776 = vpop.f32.mrb[0].mxu0
      %v777 = vpop.f32.mrb[0].mxu0
      %v778 = vpop.f32.mrb[0].mxu0
      %779 = vdwg.mxu0
      %780 = vrot.lane.b32.xlu0 %v489, 104
      %v781 = vpop.permute.xlu0 %780
      %782 = vrot.lane.b32.xlu0 %v338, 80
      %v783 = vpop.permute.xlu0 %782
      %v785 = vsel %vm339, %v781, 0
      %v788 = vsel %vm339, %v783, 0
      %790 = vmatprep.subr.bf16.mxu0 0
      %791 = vmatpush1.bf16.xpose.msra.mxu0 %v788
      %792 = vmatprep.subr.bf16.mxu0 0
      %793 = vmatpush1.bf16.xpose.msra.mxu0 0
      %794 = vmatprep.subr.bf16.mxu0 0
      %795 = vmatpush1.bf16.xpose.msra.mxu0 0
      %796 = vmatprep.subr.bf16.mxu0 0
      %797 = vmatpush1.bf16.xpose.msra.mxu0 0
      %798 = vmatprep.subr.bf16.mxu0 0
      %799 = vmatpush1.bf16.xpose.msra.mxu0 0
      %800 = vmatprep.subr.bf16.mxu0 0
      %801 = vmatpush1.bf16.xpose.msra.mxu0 0
      %802 = vmatprep.subr.bf16.mxu0 0
      %803 = vmatpush1.bf16.xpose.msra.mxu0 0
      %804 = vmatprep.subr.bf16.mxu0 0
      %805 = vmatpush1.bf16.xpose.msra.mxu0 0
      %806 = vmatprep.subr.bf16.mxu0 0
      %807 = vmatpush1.bf16.xpose.msra.mxu0 0
      %808 = vmatprep.subr.bf16.mxu0 0
      %809 = vmatpush1.bf16.xpose.msra.mxu0 0
      %810 = vmatprep.subr.bf16.mxu0 0
      %811 = vmatpush1.bf16.xpose.msra.mxu0 0
      %812 = vmatprep.subr.bf16.mxu0 0
      %813 = vmatpush1.bf16.xpose.msra.mxu0 0
      %814 = vmatprep.subr.bf16.mxu0 0
      %815 = vmatpush1.bf16.xpose.msra.mxu0 0
      %816 = vmatprep.subr.bf16.mxu0 0
      %817 = vmatpush1.bf16.xpose.msra.mxu0 0
      %818 = vmatprep.subr.bf16.mxu0 0
      %819 = vmatpush1.bf16.xpose.msra.mxu0 0
      %820 = vmatprep.subr.bf16.mxu0 0
      %821 = vmatpush1.bf16.xpose.msra.mxu0 0
      %822 = vmatprep.mubr.bf16.mxu0 0
      %823 = vmatmul.mubr.bf16.gmra.mrb[0].mxu0 %v785
      %v824 = vpop.f32.mrb[0].mxu0
      %v825 = vadd.f32 0.0, %v824
      %v826 = vpop.f32.mrb[0].mxu0
      %v827 = vpop.f32.mrb[0].mxu0
      %v828 = vpop.f32.mrb[0].mxu0
      %829 = vdwg.mxu0
      %v830 = vmul.f32 %v825, 0.35355338
      %831 = vxpose.xlu0.b32.start [1/16] %v830, 128
      %832 = vxpose.xlu0.b32.cont [2/16] 0.0, 128
      %833 = vxpose.xlu0.b32.cont [3/16] 0.0, 128
      %834 = vxpose.xlu0.b32.cont [4/16] 0.0, 128
      %835 = vxpose.xlu0.b32.cont [5/16] 0.0, 128
      %836 = vxpose.xlu0.b32.cont [6/16] 0.0, 128
      %837 = vxpose.xlu0.b32.cont [7/16] 0.0, 128
      %838 = vxpose.xlu0.b32.cont [8/16] 0.0, 128
      %839 = vxpose.xlu0.b32.cont [9/16] 0.0, 128
      %840 = vxpose.xlu0.b32.cont [10/16] 0.0, 128
      %841 = vxpose.xlu0.b32.cont [11/16] 0.0, 128
      %842 = vxpose.xlu0.b32.cont [12/16] 0.0, 128
      %843 = vxpose.xlu0.b32.cont [13/16] 0.0, 128
      %844 = vxpose.xlu0.b32.cont [14/16] 0.0, 128
      %845 = vxpose.xlu0.b32.cont [15/16] 0.0, 128
      %846 = vxpose.xlu0.b32.end [16/16] 0.0, 128
      %v847 = vpop.trf.xlu0
      %v848 = vpop.trf.xlu0
      %v849 = vpop.trf.xlu0
      %v850 = vpop.trf.xlu0
      %v851 = vpop.trf.xlu0
      %v852 = vpop.trf.xlu0
      %v853 = vpop.trf.xlu0
      %v854 = vpop.trf.xlu0
      %v855 = vpop.trf.xlu0
      %v856 = vpop.trf.xlu0
      %v857 = vpop.trf.xlu0
      %v858 = vpop.trf.xlu0
      %v859 = vpop.trf.xlu0
      %v860 = vpop.trf.xlu0
      %v861 = vpop.trf.xlu0
      %v862 = vpop.trf.xlu0
      %s863 = scalar_lea.vmem %s327, 48
      %864 = vst.msk [vmem:[%s863] sm:$0xff] %vm339, %v847
      %865 = vst.msk [vmem:[%s863 + $0x8] sm:$0xff] %vm339, %v848
      %v866 = vadd.f32 %v830, %v425
      %v867 = vsel %vm428, %v866, -inf
      %868 = vmax.xlane.f32.xlu0 %v867
      %v869 = vpop.xlane.xlu0 %868
      %v870 = vsub.f32 %v866, %v869
      %v871 = vmul.f32 %v870, 1.442695
      %v872 = vpow.pop %v871
      %v873 = vsel %vm428, %v872, 0.0
      %874 = vadd.xlane.f32.xlu0 %v873
      %v875 = vpop.xlane.xlu0 %874
      %v876 = vrcp.pop %v875
      %v877 = vmul.f32 %v872, %v876
      %v878 = vpack.c.bf16 %v877, %v877
      %879 = vrot.lane.b32.xlu0 %v338, 72
      %v880 = vpop.permute.xlu0 %879
      %v883 = vsel %vm428, %v878, 0
      %885 = vmatprep.subr.bf16.mxu0 0
      %886 = vmatpush1.bf16.msra.mxu0 %v880
      %887 = vmatprep.subr.bf16.mxu0 0
      %888 = vmatpush1.bf16.msra.mxu0 0
      %889 = vmatprep.subr.bf16.mxu0 0
      %890 = vmatpush1.bf16.msra.mxu0 0
      %891 = vmatprep.subr.bf16.mxu0 0
      %892 = vmatpush1.bf16.msra.mxu0 0
      %893 = vmatprep.subr.bf16.mxu0 0
      %894 = vmatpush1.bf16.msra.mxu0 0
      %895 = vmatprep.subr.bf16.mxu0 0
      %896 = vmatpush1.bf16.msra.mxu0 0
      %897 = vmatprep.subr.bf16.mxu0 0
      %898 = vmatpush1.bf16.msra.mxu0 0
      %899 = vmatprep.subr.bf16.mxu0 0
      %900 = vmatpush1.bf16.msra.mxu0 0
      %901 = vmatprep.subr.bf16.mxu0 0
      %902 = vmatpush1.bf16.msra.mxu0 0
      %903 = vmatprep.subr.bf16.mxu0 0
      %904 = vmatpush1.bf16.msra.mxu0 0
      %905 = vmatprep.subr.bf16.mxu0 0
      %906 = vmatpush1.bf16.msra.mxu0 0
      %907 = vmatprep.subr.bf16.mxu0 0
      %908 = vmatpush1.bf16.msra.mxu0 0
      %909 = vmatprep.subr.bf16.mxu0 0
      %910 = vmatpush1.bf16.msra.mxu0 0
      %911 = vmatprep.subr.bf16.mxu0 0
      %912 = vmatpush1.bf16.msra.mxu0 0
      %913 = vmatprep.subr.bf16.mxu0 0
      %914 = vmatpush1.bf16.msra.mxu0 0
      %915 = vmatprep.subr.bf16.mxu0 0
      %916 = vmatpush1.bf16.msra.mxu0 0
      %917 = vmatprep.mubr.bf16.mxu0 0
      %918 = vmatmul.mubr.bf16.gmra.mrb[0].mxu0 %v883
      %v919 = vpop.f32.mrb[0].mxu0
      %v920 = vadd.f32 0.0, %v919
      %v921 = vpop.f32.mrb[0].mxu0
      %v922 = vpop.f32.mrb[0].mxu0
      %v923 = vpop.f32.mrb[0].mxu0
      %924 = vdwg.mxu0
      %926 = vrot.lane.b32.xlu0 %v630, 8
      %v927 = vpop.permute.xlu0 %926
      %930 = vrot.lane.b32.xlu0 %v775, 16
      %v931 = vpop.permute.xlu0 %930
      %934 = vrot.lane.b32.xlu0 %v920, 24
      %v935 = vpop.permute.xlu0 %934
      %v937 = vsel %vm339, %v482, %v927
      %v938 = vsel %vm428, %v937, %v931
      %vm939 = vcmask 195584
      %v940 = vsel %vm939, %v938, %v935
      %v941 = vpack.c.bf16 %v940, %v940
      %vm942 = vcmask 257024
      %943 = vst.msk [vmem:[%s314] sm:$0xf] %vm942, %v941
      %p944 = scmp.lt.s32.totalorder %s21, 1
      %s945 = scalar_select %p944, %s21, 1
      %p946 = scmp.lt.s32.totalorder %s23, 0
      %s947 = scalar_select %p946, %s23, 0
      %p948 = scmp.lt.s32.totalorder %s22, 0
      %s949 = scalar_select %p948, %s22, 0
      %s950 = sadd.s32 %s949, %s947
      %s951 = sadd.s32 %s950, %s945
      %s952 = smul.addr %s951, 4
      %s953 = scalar_lea.vmem %s3, %s952
      %s954 = smul.u32 4, %s22
      %p955 = scmp.lt.s32.totalorder %s21, 1
      %s956 = scalar_select %p955, %s21, 1
      %p957 = scmp.lt.s32.totalorder %s954, 3
      %s958 = scalar_select %p957, %s954, 3
      %p959 = scmp.lt.s32.totalorder %s23, 0
      %s960 = scalar_select %p959, %s23, 0
      %s961 = smul.addr %s958, 2
      %s962 = sadd.s32 %s960, %s961
      %s963 = smul.addr %s956, 8
      %s964 = sadd.s32 %s962, %s963
      %s965 = smul.addr %s964, 8
      %s966 = scalar_lea.vmem %s4, %s965
      // Predicated region
      $region33: #{cross_pair_forward.48} parent=31 // pred_check
        %p967 = pneg %p141
      $region34: #{cross_pair_forward.48} parent=31 // pred_check_branch
        %969 = sbr.rel (%p967) target = $region36
      $region35: #{cross_pair_forward.48} parent=31 // pred_region
        _
      $region36: #{cross_pair_forward.48} parent=31 // pred_fallthru
        _
      // Predicated region
      $region37: #{cross_pair_forward.48} parent=31 // pred_check
        %p970 = pneg %p171
      $region38: #{cross_pair_forward.48} parent=31 // pred_check_branch
        %972 = sbr.rel (%p970) target = $region40
      $region39: #{cross_pair_forward.48} parent=31 // pred_region
        %s973 = smul.u32 4, %s22
      $region40: #{cross_pair_forward.48} parent=31 // pred_fallthru
        _
    $region32: #{cross_pair_forward.48} parent=5 // pred_fallthru
      _
    %p974 = scmp.le.s32.totalorder 2, %s11
    // Predicated region
    $region41: #{cross_pair_forward.48} parent=5 // pred_check
      %p975 = pneg %p974
    $region42: #{cross_pair_forward.48} parent=5 // pred_check_branch
      %977 = sbr.rel (%p975) target = $region44
    $region43: #{cross_pair_forward.48} parent=5 // pred_region
      %s978 = ssub.s32 %s11, 2
      // Predicated region
      $region45: #{cross_pair_forward.48} parent=43 // pred_check
        %p979 = pneg %p147
      $region46: #{cross_pair_forward.48} parent=43 // pred_check_branch
        %981 = sbr.rel (%p979) target = $region48
      $region47: #{cross_pair_forward.48} parent=43 // pred_region
        %p982 = scmp.lt.s32.totalorder %s24, 1
        %s983 = scalar_select %p982, %s24, 1
        %p984 = scmp.lt.s32.totalorder %s26, 0
        %s985 = scalar_select %p984, %s26, 0
        %p986 = scmp.lt.s32.totalorder %s25, 0
        %s987 = scalar_select %p986, %s25, 0
        %s988 = sadd.s32 %s987, %s985
        %s989 = sadd.s32 %s988, %s983
        %s990 = smul.addr %s989, 4
        %s991 = scalar_lea.vmem %s3, %s990
      $region48: #{cross_pair_forward.48} parent=43 // pred_fallthru
        _
      // Predicated region
      $region49: #{cross_pair_forward.48} parent=43 // pred_check
        %p992 = pneg %p177
      $region50: #{cross_pair_forward.48} parent=43 // pred_check_branch
        %994 = sbr.rel (%p992) target = $region52
      $region51: #{cross_pair_forward.48} parent=43 // pred_region
        %s995 = smul.u32 4, %s25
        %p996 = scmp.lt.s32.totalorder %s24, 1
        %s997 = scalar_select %p996, %s24, 1
        %p998 = scmp.lt.s32.totalorder %s995, 3
        %s999 = scalar_select %p998, %s995, 3
        %p1000 = scmp.lt.s32.totalorder %s26, 0
        %s1001 = scalar_select %p1000, %s26, 0
        %s1002 = smul.addr %s999, 2
        %s1003 = sadd.s32 %s1001, %s1002
        %s1004 = smul.addr %s997, 8
        %s1005 = sadd.s32 %s1003, %s1004
        %s1006 = smul.addr %s1005, 8
        %s1007 = scalar_lea.vmem %s4, %s1006
      $region52: #{cross_pair_forward.48} parent=43 // pred_fallthru
        _
    $region44: #{cross_pair_forward.48} parent=5 // pred_fallthru
      _
  $region6: #{cross_pair_forward.48} parent=0 // loop_footer
    %s15 = sadd.s32 1, %s11
  $region7: #{cross_pair_forward.48} parent=0 // loop_footer_branch
    %10 = sbr.rel target = $region3
  $region8: #{cross_pair_forward.48} parent=0 // loop_exit
    _

// kernel: cross_pair_forward.42
$region0: #{cross_pair_forward.42}
  #allocation0 [shape = 'u32[]', space=smem, size = 0x4, offset = 0x4, fixed_abs, tag = 'smem constant byte address 0x4 - core index']
  #allocation1 [shape = 'u32[144,128]{1,0:T(1,128)}', space=vmem, size = 0x12000, scoped, tag = 'internal scratch']
  %s0 = inlined_call_operand.vmem [shape: bf16[2,16,32], index: 0, kind: input, shape index: {}]
  %s1 = inlined_call_operand.vmem [shape: bf16[2,8,64], index: 1, kind: input, shape index: {}]
  %s2 = inlined_call_operand.vmem [shape: f32[2,1,8], index: 2, kind: input, shape index: {}]
  %s3 = inlined_call_operand.vmem [shape: bf16[2,16,32], index: 3, kind: output, shape index: {0}]
  %s4 = inlined_call_operand.vmem [shape: f32[2,4,16,8], index: 4, kind: output, shape index: {1}]
  %5 = xla_tuple %s3, %s4
  %s6 = sld [smem:[#allocation0]]
  $region53: #{cross_pair_forward.42} parent=0
    _
  %s8 = ssub.s32 1, %s6
  %s9 = scalar_select 0, %s8, %s6
  loop: start=0, step=1, limit=4
  $region2: #{cross_pair_forward.42} parent=0 // loop_pre_header
    _
  $region3: #{cross_pair_forward.42} parent=0 // loop_header
    %s11 = sphi 0, %s15
    %p12 = scmp.ge.s32.totalorder %s11, 4
    %s18 = sphi 0, %s37
    %s19 = sphi 0, %s33
    %s20 = sphi 0, %s29
    %s21 = sphi 0, %s18
    %s22 = sphi 0, %s19
    %s23 = sphi 0, %s20
    %s24 = sphi 0, %s21
    %s25 = sphi 0, %s22
    %s26 = sphi 0, %s23
    %s44 = sphi 0, %s46
    %s47 = sphi 0, %s44
    %s48 = sphi 0, %s47
    %s64 = sphi 0, %s48
    %s72 = sphi 0, %s74
    %s75 = sphi 0, %s72
    %s76 = sphi 0, %s75
    %s92 = sphi 0, %s76
    %s98 = sphi 0, %s100
    %s101 = sphi 0, %s98
    %s102 = sphi 0, %s101
    %s118 = sphi 0, %s102
    %s128 = sphi 0, %s130
    %s131 = sphi 0, %s128
    %s132 = sphi 0, %s131
    %s148 = sphi 0, %s132
    %s158 = sphi 0, %s160
    %s161 = sphi 0, %s158
    %s162 = sphi 0, %s161
    %s178 = sphi 0, %s162
  $region4: #{cross_pair_forward.42} parent=0 // loop_header_branch
    %14 = sbr.rel (%p12) target = $region8
  $region5: #{cross_pair_forward.42} parent=0 // loop_body
    %s16 = ssub.s32 %s11, 1
    %s17 = ssub.s32 %s11, 2
    %s27 = sadd.s32 1, %s20
    %p28 = scmp.ge.s32.totalorder %s27, 1
    %s29 = scalar_select %p28, 0, %s27
    %s30 = sadd.s32 1, %s19
    %s31 = scalar_select %p28, %s30, %s19
    %p32 = scmp.ge.s32.totalorder %s31, 1
    %s33 = scalar_select %p32, 0, %s31
    %s34 = sadd.s32 1, %s18
    %s35 = scalar_select %p32, %s34, %s18
    %p36 = scmp.ge.s32.totalorder %s35, 2
    %s37 = scalar_select %p36, 0, %s35
    %s38 = ssub.s32 %s18, %s37
    %s39 = ssub.s32 %s20, %s29
    %s40 = sor.u32 %s38, %s39
    %s41 = ssub.s32 %s19, %s33
    %s42 = sor.u32 %s40, %s41
    %p43 = scmp.eq.s32.totalorder %s42, 0
    %s45 = sadd.s32 %s44, 1
    %s46 = scalar_select %p43, %s44, %s45
    %p49 = pneg %p43
    %p50 = scmp.eq.s32.totalorder %s11, 1
    %p51 = por %p49, %p50
    %p52 = scmp.ne.s32.totalorder %s44, %s47
    %p53 = scmp.eq.s32.totalorder %s11, 0
    %p54 = por %p52, %p53
    %p55 = scmp.ne.s32.totalorder %s44, %s47
    %p56 = scmp.eq.s32.totalorder %s16, 1
    %p57 = por %p55, %p56
    %p58 = scmp.ne.s32.totalorder %s47, %s48
    %p59 = scmp.eq.s32.totalorder %s16, 0
    %p60 = por %p58, %p59
    %p61 = scmp.ne.s32.totalorder %s47, %s48
    %p62 = scmp.eq.s32.totalorder %s17, 1
    %p63 = por %p61, %p62
    %p65 = scmp.ne.s32.totalorder %s48, %s64
    %p66 = scmp.eq.s32.totalorder %s17, 0
    %p67 = por %p65, %p66
    %s68 = ssub.s32 %s18, %s37
    %s69 = ssub.s32 %s19, %s33
    %s70 = sor.u32 %s68, %s69
    %p71 = scmp.eq.s32.totalorder %s70, 0
    %s73 = sadd.s32 %s72, 1
    %s74 = scalar_select %p71, %s72, %s73
    %p77 = pneg %p71
    %p78 = scmp.eq.s32.totalorder %s11, 1
    %p79 = por %p77, %p78
    %p80 = scmp.ne.s32.totalorder %s72, %s75
    %p81 = scmp.eq.s32.totalorder %s11, 0
    %p82 = por %p80, %p81
    %p83 = scmp.ne.s32.totalorder %s72, %s75
    %p84 = scmp.eq.s32.totalorder %s16, 1
    %p85 = por %p83, %p84
    %p86 = scmp.ne.s32.totalorder %s75, %s76
    %p87 = scmp.eq.s32.totalorder %s16, 0
    %p88 = por %p86, %p87
    %p89 = scmp.ne.s32.totalorder %s75, %s76
    %p90 = scmp.eq.s32.totalorder %s17, 1
    %p91 = por %p89, %p90
    %p93 = scmp.ne.s32.totalorder %s76, %s92
    %p94 = scmp.eq.s32.totalorder %s17, 0
    %p95 = por %p93, %p94
    %s96 = ssub.s32 %s18, %s37
    %p97 = scmp.eq.s32.totalorder %s96, 0
    %s99 = sadd.s32 %s98, 1
    %s100 = scalar_select %p97, %s98, %s99
    %p103 = pneg %p97
    %p104 = scmp.eq.s32.totalorder %s11, 1
    %p105 = por %p103, %p104
    %p106 = scmp.ne.s32.totalorder %s98, %s101
    %p107 = scmp.eq.s32.totalorder %s11, 0
    %p108 = por %p106, %p107
    %p109 = scmp.ne.s32.totalorder %s98, %s101
    %p110 = scmp.eq.s32.totalorder %s16, 1
    %p111 = por %p109, %p110
    %p112 = scmp.ne.s32.totalorder %s101, %s102
    %p113 = scmp.eq.s32.totalorder %s16, 0
    %p114 = por %p112, %p113
    %p115 = scmp.ne.s32.totalorder %s101, %s102
    %p116 = scmp.eq.s32.totalorder %s17, 1
    %p117 = por %p115, %p116
    %p119 = scmp.ne.s32.totalorder %s102, %s118
    %p120 = scmp.eq.s32.totalorder %s17, 0
    %p121 = por %p119, %p120
    %s122 = ssub.s32 %s18, %s37
    %s123 = ssub.s32 %s20, %s29
    %s124 = sor.u32 %s122, %s123
    %s125 = ssub.s32 %s19, %s33
    %s126 = sor.u32 %s124, %s125
    %p127 = scmp.eq.s32.totalorder %s126, 0
    %s129 = sadd.s32 %s128, 1
    %s130 = scalar_select %p127, %s128, %s129
    %p133 = pneg %p127
    %p134 = scmp.eq.s32.totalorder %s11, 1
    %p135 = por %p133, %p134
    %p136 = scmp.ne.s32.totalorder %s128, %s131
    %p137 = scmp.eq.s32.totalorder %s11, 0
    %p138 = por %p136, %p137
    %p139 = scmp.ne.s32.totalorder %s128, %s131
    %p140 = scmp.eq.s32.totalorder %s16, 1
    %p141 = por %p139, %p140
    %p142 = scmp.ne.s32.totalorder %s131, %s132
    %p143 = scmp.eq.s32.totalorder %s16, 0
    %p144 = por %p142, %p143
    %p145 = scmp.ne.s32.totalorder %s131, %s132
    %p146 = scmp.eq.s32.totalorder %s17, 1
    %p147 = por %p145, %p146
    %p149 = scmp.ne.s32.totalorder %s132, %s148
    %p150 = scmp.eq.s32.totalorder %s17, 0
    %p151 = por %p149, %p150
    %s152 = ssub.s32 %s18, %s37
    %s153 = ssub.s32 %s19, %s33
    %s154 = sor.u32 %s152, %s153
    %s155 = ssub.s32 %s20, %s29
    %s156 = sor.u32 %s154, %s155
    %p157 = scmp.eq.s32.totalorder %s156, 0
    %s159 = sadd.s32 %s158, 1
    %s160 = scalar_select %p157, %s158, %s159
    %p163 = pneg %p157
    %p164 = scmp.eq.s32.totalorder %s11, 1
    %p165 = por %p163, %p164
    %p166 = scmp.ne.s32.totalorder %s158, %s161
    %p167 = scmp.eq.s32.totalorder %s11, 0
    %p168 = por %p166, %p167
    %p169 = scmp.ne.s32.totalorder %s158, %s161
    %p170 = scmp.eq.s32.totalorder %s16, 1
    %p171 = por %p169, %p170
    %p172 = scmp.ne.s32.totalorder %s161, %s162
    %p173 = scmp.eq.s32.totalorder %s16, 0
    %p174 = por %p172, %p173
    %p175 = scmp.ne.s32.totalorder %s161, %s162
    %p176 = scmp.eq.s32.totalorder %s17, 1
    %p177 = por %p175, %p176
    %p179 = scmp.ne.s32.totalorder %s162, %s178
    %p180 = scmp.eq.s32.totalorder %s17, 0
    %p181 = por %p179, %p180
    %p182 = scmp.le.s32.totalorder 1, %s11
    %p183 = scmp.lt.s32.totalorder %s11, 3
    %p184 = pnand %p182, %p183
    %p185 = pneg %p184
    // Predicated region
    $region9: #{cross_pair_forward.42} parent=5 // pred_check
      _
    $region10: #{cross_pair_forward.42} parent=5 // pred_check_branch
      %187 = sbr.rel (%p184) target = $region12
    $region11: #{cross_pair_forward.42} parent=5 // pred_region
      %s188 = ssub.s32 %s11, 1
    $region12: #{cross_pair_forward.42} parent=5 // pred_fallthru
      _
    %p189 = scmp.lt.s32.totalorder %s11, 2
    // Predicated region
    $region13: #{cross_pair_forward.42} parent=5 // pred_check
      %p190 = pneg %p189
    $region14: #{cross_pair_forward.42} parent=5 // pred_check_branch
      %192 = sbr.rel (%p190) target = $region16
    $region15: #{cross_pair_forward.42} parent=5 // pred_region
      // Predicated region
      $region17: #{cross_pair_forward.42} parent=15 // pred_check
        %p193 = pneg %p54
      $region18: #{cross_pair_forward.42} parent=15 // pred_check_branch
        %195 = sbr.rel (%p193) target = $region20
      $region19: #{cross_pair_forward.42} parent=15 // pred_region
        %s196 = smul.u32 2, %s20
        %p197 = scmp.lt.s32.totalorder %s18, 1
        %s198 = scalar_select %p197, %s18, 1
        %p199 = scmp.lt.s32.totalorder %s196, 1
        %s200 = scalar_select %p199, %s196, 1
        %p201 = scmp.lt.s32.totalorder %s19, 0
        %s202 = scalar_select %p201, %s19, 0
        %s203 = sadd.s32 %s202, %s200
        %s204 = smul.addr %s198, 2
        %s205 = sadd.s32 %s203, %s204
        %s206 = smul.addr %s205, 4
        %s207 = scalar_lea.vmem %s0, %s206
        %s208 = smul.u32 2, %s20
      $region20: #{cross_pair_forward.42} parent=15 // pred_fallthru
        _
      // Predicated region
      $region21: #{cross_pair_forward.42} parent=15 // pred_check
        %p209 = pneg %p82
      $region22: #{cross_pair_forward.42} parent=15 // pred_check_branch
        %211 = sbr.rel (%p209) target = $region24
      $region23: #{cross_pair_forward.42} parent=15 // pred_region
        %p212 = scmp.lt.s32.totalorder %s18, 1
        %s213 = scalar_select %p212, %s18, 1
        %p214 = scmp.lt.s32.totalorder %s19, 0
        %s215 = scalar_select %p214, %s19, 0
        %s216 = sadd.s32 %s215, %s213
        %s217 = smul.addr %s216, 4
        %s218 = scalar_lea.vmem %s1, %s217
      $region24: #{cross_pair_forward.42} parent=15 // pred_fallthru
        _
      // Predicated region
      $region25: #{cross_pair_forward.42} parent=15 // pred_check
        %p219 = pneg %p108
      $region26: #{cross_pair_forward.42} parent=15 // pred_check_branch
        %221 = sbr.rel (%p219) target = $region28
      $region27: #{cross_pair_forward.42} parent=15 // pred_region
        %p222 = scmp.lt.s32.totalorder %s18, 1
        %s223 = scalar_select %p222, %s18, 1
        %s224 = scalar_lea.vmem %s2, %s223
      $region28: #{cross_pair_forward.42} parent=15 // pred_fallthru
        _
    $region16: #{cross_pair_forward.42} parent=5 // pred_fallthru
      _
    %p225 = scmp.le.s32.totalorder 1, %s11
    %p226 = scmp.lt.s32.totalorder %s11, 3
    %p227 = pnand %p225, %p226
    %p228 = pneg %p227
    // Predicated region
    $region29: #{cross_pair_forward.42} parent=5 // pred_check
      _
    $region30: #{cross_pair_forward.42} parent=5 // pred_check_branch
      %230 = sbr.rel (%p227) target = $region32
    $region31: #{cross_pair_forward.42} parent=5 // pred_region
      %s231 = ssub.s32 %s11, 1
      %s232 = smul.u32 2, %s23
      %p233 = scmp.lt.s32.totalorder %s21, 1
      %s234 = scalar_select %p233, %s21, 1
      %p235 = scmp.lt.s32.totalorder %s232, 1
      %s236 = scalar_select %p235, %s232, 1
      %p237 = scmp.lt.s32.totalorder %s22, 0
      %s238 = scalar_select %p237, %s22, 0
      %s239 = sadd.s32 %s238, %s236
      %s240 = smul.addr %s234, 2
      %s241 = sadd.s32 %s239, %s240
      %s242 = smul.addr %s241, 4
      %s243 = scalar_lea.vmem %s0, %s242
      %p244 = pneg %p60
      %p245 = pneg %p57
      %p246 = scmp.lt.s32.totalorder %s21, 1
      %s247 = scalar_select %p246, %s21, 1
      %p248 = scmp.lt.s32.totalorder %s22, 0
      %s249 = scalar_select %p248, %s22, 0
      %s250 = sadd.s32 %s249, %s247
      %s251 = smul.addr %s250, 4
      %s252 = scalar_lea.vmem %s1, %s251
      %p253 = pneg %p88
      %p254 = pneg %p85
      %p255 = scmp.lt.s32.totalorder %s21, 1
      %s256 = scalar_select %p255, %s21, 1
      %s257 = scalar_lea.vmem %s2, %s256
      %p258 = pneg %p114
      %p259 = pneg %p111
      %p260 = pneg %p144
      %p261 = pneg %p141
      %s262 = smul.u32 2, %s23
      %p263 = scmp.lt.s32.totalorder %s21, 1
      %s264 = scalar_select %p263, %s21, 1
      %p265 = scmp.lt.s32.totalorder %s262, 1
      %s266 = scalar_select %p265, %s262, 1
      %p267 = scmp.lt.s32.totalorder %s22, 0
      %s268 = scalar_select %p267, %s22, 0
      %s269 = sadd.s32 %s268, %s266
      %s270 = smul.addr %s264, 2
      %s271 = sadd.s32 %s269, %s270
      %s272 = smul.addr %s271, 4
      %s273 = scalar_lea.vmem %s3, %s272
      %p274 = pneg %p174
      %p275 = pneg %p171
      %s276 = smul.u32 4, %s22
      %s277 = smul.u32 2, %s23
      %p278 = scmp.lt.s32.totalorder %s21, 1
      %s279 = scalar_select %p278, %s21, 1
      %p280 = scmp.lt.s32.totalorder %s276, 3
      %s281 = scalar_select %p280, %s276, 3
      %p282 = scmp.lt.s32.totalorder %s277, 1
      %s283 = scalar_select %p282, %s277, 1
      %s284 = smul.addr %s281, 2
      %s285 = sadd.s32 %s283, %s284
      %s286 = smul.addr %s279, 8
      %s287 = sadd.s32 %s285, %s286
      %s288 = smul.addr %s287, 8
      %s289 = scalar_lea.vmem %s4, %s288
      %s290 = smul.u32 2, %s23
      %p291 = scmp.lt.s32.totalorder %s21, 1
      %s292 = scalar_select %p291, %s21, 1
      %p293 = scmp.lt.s32.totalorder %s290, 1
      %s294 = scalar_select %p293, %s290, 1
      %p295 = scmp.lt.s32.totalorder %s22, 0
      %s296 = scalar_select %p295, %s22, 0
      %s297 = sadd.s32 %s296, %s294
      %s298 = smul.addr %s292, 2
      %s299 = sadd.s32 %s297, %s298
      %s300 = smul.addr %s299, 4
      %s301 = scalar_lea.vmem %s0, %s300
      %s302 = smul.u32 2, %s23
      %p303 = scmp.lt.s32.totalorder %s21, 1
      %s304 = scalar_select %p303, %s21, 1
      %p305 = scmp.lt.s32.totalorder %s22, 0
      %s306 = scalar_select %p305, %s22, 0
      %s307 = sadd.s32 %s306, %s304
      %s308 = smul.addr %s307, 4
      %s309 = scalar_lea.vmem %s1, %s308
      %p310 = scmp.lt.s32.totalorder %s21, 1
      %s311 = scalar_select %p310, %s21, 1
      %s312 = scalar_lea.vmem %s2, %s311
      %s313 = smul.u32 2, %s23
      %p314 = scmp.lt.s32.totalorder %s21, 1
      %s315 = scalar_select %p314, %s21, 1
      %p316 = scmp.lt.s32.totalorder %s313, 1
      %s317 = scalar_select %p316, %s313, 1
      %p318 = scmp.lt.s32.totalorder %s22, 0
      %s319 = scalar_select %p318, %s22, 0
      %s320 = sadd.s32 %s319, %s317
      %s321 = smul.addr %s315, 2
      %s322 = sadd.s32 %s320, %s321
      %s323 = smul.addr %s322, 4
      %s324 = scalar_lea.vmem %s3, %s323
      %s325 = smul.u32 2, %s23
      %s326 = smul.u32 4, %s22
      %s327 = smul.u32 2, %s23
      %p328 = scmp.lt.s32.totalorder %s21, 1
      %s329 = scalar_select %p328, %s21, 1
      %p330 = scmp.lt.s32.totalorder %s326, 3
      %s331 = scalar_select %p330, %s326, 3
      %p332 = scmp.lt.s32.totalorder %s327, 1
      %s333 = scalar_select %p332, %s327, 1
      %s334 = smul.addr %s331, 2
      %s335 = sadd.s32 %s333, %s334
      %s336 = smul.addr %s329, 8
      %s337 = sadd.s32 %s335, %s336
      %s338 = smul.addr %s337, 8
      %s339 = scalar_lea.vmem %s4, %s338
      %s340 = smul.u32 4, %s22
      %s341 = smul.u32 2, %s23
      %v343 = vld [vmem:[%s301] sm:$0xf]
      %v344 = vld [vmem:[%s301 + $0x4] sm:$0xf]
      %v345 = vld [vmem:[%s309] sm:$0xf]
      %v346 = vld [vmem:[%s312] sm:$0x1]
      %v349 = vunpack.c.l.b16 %v343
      %v350 = vunpack.c.l.b16 %v344
      %v351 = vpack.c.b16 %v350, %v349
      %vm352 = vcmask 64512
      %v354 = vsel %vm352, %v351, 0
      %v357 = vsel %vm352, %v345, 0
      %359 = vmatprep.subr.bf16.mxu0 0
      %360 = vmatpush1.bf16.xpose.msra.mxu0 %v357
      %361 = vmatprep.subr.bf16.mxu0 0
      %362 = vmatpush1.bf16.xpose.msra.mxu0 0
      %363 = vmatprep.subr.bf16.mxu0 0
      %364 = vmatpush1.bf16.xpose.msra.mxu0 0
      %365 = vmatprep.subr.bf16.mxu0 0
      %366 = vmatpush1.bf16.xpose.msra.mxu0 0
      %367 = vmatprep.subr.bf16.mxu0 0
      %368 = vmatpush1.bf16.xpose.msra.mxu0 0
      %369 = vmatprep.subr.bf16.mxu0 0
      %370 = vmatpush1.bf16.xpose.msra.mxu0 0
      %371 = vmatprep.subr.bf16.mxu0 0
      %372 = vmatpush1.bf16.xpose.msra.mxu0 0
      %373 = vmatprep.subr.bf16.mxu0 0
      %374 = vmatpush1.bf16.xpose.msra.mxu0 0
      %375 = vmatprep.subr.bf16.mxu0 0
      %376 = vmatpush1.bf16.xpose.msra.mxu0 0
      %377 = vmatprep.subr.bf16.mxu0 0
      %378 = vmatpush1.bf16.xpose.msra.mxu0 0
      %379 = vmatprep.subr.bf16.mxu0 0
      %380 = vmatpush1.bf16.xpose.msra.mxu0 0
      %381 = vmatprep.subr.bf16.mxu0 0
      %382 = vmatpush1.bf16.xpose.msra.mxu0 0
      %383 = vmatprep.subr.bf16.mxu0 0
      %384 = vmatpush1.bf16.xpose.msra.mxu0 0
      %385 = vmatprep.subr.bf16.mxu0 0
      %386 = vmatpush1.bf16.xpose.msra.mxu0 0
      %387 = vmatprep.subr.bf16.mxu0 0
      %388 = vmatpush1.bf16.xpose.msra.mxu0 0
      %389 = vmatprep.subr.bf16.mxu0 0
      %390 = vmatpush1.bf16.xpose.msra.mxu0 0
      %391 = vmatprep.mubr.bf16.mxu0 0
      %392 = vmatmul.mubr.bf16.gmra.mrb[0].mxu0 %v354
      %v393 = vpop.f32.mrb[0].mxu0
      %v394 = vadd.f32 0.0, %v393
      %v395 = vpop.f32.mrb[0].mxu0
      %v396 = vpop.f32.mrb[0].mxu0
      %v397 = vadd.f32 0.0, %v396
      %v398 = vpop.f32.mrb[0].mxu0
      %399 = vdwg.mxu0
      %v400 = vmul.f32 %v394, 0.35355338
      %v401 = vmul.f32 %v397, 0.35355338
      %402 = vst.msk [vmem:[%s339] sm:$0xff] %vm352, %v400
      %403 = vst.msk [vmem:[%s339 + $0x8] sm:$0xff] %vm352, %v401
      %v405 = vlaneseq
      %v406 = vshrl.u32 %v405, 7
      %v407 = vsub.s32 0, %v406
      %v408 = vrot.slane %v346, %v407
      %v410 = vadd.f32 %v400, %v408
      %v411 = vadd.f32 %v401, %v408
      %v412 = vsel %vm352, %v410, -inf
      %413 = vmax.xlane.f32.xlu0 %v412
      %v414 = vpop.xlane.xlu0 %413
      %v415 = vsel %vm352, %v411, -inf
      %416 = vmax.xlane.f32.xlu0 %v415
      %v417 = vpop.xlane.xlu0 %416
      %v418 = vsub.f32 %v410, %v414
      %v419 = vsub.f32 %v411, %v417
      %v420 = vmul.f32 %v418, 1.442695
      %v421 = vpow.pop %v420
      %v422 = vmul.f32 %v419, 1.442695
      %v423 = vpow.pop %v422
      %v424 = vsel %vm352, %v421, 0.0
      %425 = vadd.xlane.f32.xlu0 %v424
      %v426 = vpop.xlane.xlu0 %425
      %v427 = vsel %vm352, %v423, 0.0
      %428 = vadd.xlane.f32.xlu0 %v427
      %v429 = vpop.xlane.xlu0 %428
      %v430 = vrcp.pop %v426
      %v431 = vrcp.pop %v429
      %v432 = vmul.f32 %v421, %v430
      %v433 = vmul.f32 %v423, %v431
      %v434 = vpack.c.bf16 %v433, %v432
      %v436 = vunpack.c.l.b16 %v345
      %v437 = vpack.c.b16 %v436, %v436
      %438 = vrot.lane.b32.xlu0 %v437, 120
      %v439 = vpop.permute.xlu0 %438
      %v441 = vsel %vm352, %v434, 0
      %vm443 = vcmask 1043456
      %v445 = vsel %vm443, %v439, 0
      %447 = vmatprep.subr.bf16.mxu0 0
      %448 = vmatpush1.bf16.msra.mxu0 %v445
      %449 = vmatprep.subr.bf16.mxu0 0
      %450 = vmatpush1.bf16.msra.mxu0 0
      %451 = vmatprep.subr.bf16.mxu0 0
      %452 = vmatpush1.bf16.msra.mxu0 0
      %453 = vmatprep.subr.bf16.mxu0 0
      %454 = vmatpush1.bf16.msra.mxu0 0
      %455 = vmatprep.subr.bf16.mxu0 0
      %456 = vmatpush1.bf16.msra.mxu0 0
      %457 = vmatprep.subr.bf16.mxu0 0
      %458 = vmatpush1.bf16.msra.mxu0 0
      %459 = vmatprep.subr.bf16.mxu0 0
      %460 = vmatpush1.bf16.msra.mxu0 0
      %461 = vmatprep.subr.bf16.mxu0 0
      %462 = vmatpush1.bf16.msra.mxu0 0
      %463 = vmatprep.subr.bf16.mxu0 0
      %464 = vmatpush1.bf16.msra.mxu0 0
      %465 = vmatprep.subr.bf16.mxu0 0
      %466 = vmatpush1.bf16.msra.mxu0 0
      %467 = vmatprep.subr.bf16.mxu0 0
      %468 = vmatpush1.bf16.msra.mxu0 0
      %469 = vmatprep.subr.bf16.mxu0 0
      %470 = vmatpush1.bf16.msra.mxu0 0
      %471 = vmatprep.subr.bf16.mxu0 0
      %472 = vmatpush1.bf16.msra.mxu0 0
      %473 = vmatprep.subr.bf16.mxu0 0
      %474 = vmatpush1.bf16.msra.mxu0 0
      %475 = vmatprep.subr.bf16.mxu0 0
      %476 = vmatpush1.bf16.msra.mxu0 0
      %477 = vmatprep.subr.bf16.mxu0 0
      %478 = vmatpush1.bf16.msra.mxu0 0
      %479 = vmatprep.mubr.bf16.mxu0 0
      %480 = vmatmul.mubr.bf16.gmra.mrb[0].mxu0 %v441
      %v481 = vpop.f32.mrb[0].mxu0
      %v482 = vadd.f32 0.0, %v481
      %v483 = vpop.f32.mrb[0].mxu0
      %v484 = vpop.f32.mrb[0].mxu0
      %v485 = vadd.f32 0.0, %v484
      %v486 = vpop.f32.mrb[0].mxu0
      %487 = vdwg.mxu0
      %488 = vrot.lane.b32.xlu0 %v351, 120
      %v489 = vpop.permute.xlu0 %488
      %490 = vrot.lane.b32.xlu0 %v437, 112
      %v491 = vpop.permute.xlu0 %490
      %v493 = vsel %vm352, %v489, 0
      %v496 = vsel %vm352, %v491, 0
      %498 = vmatprep.subr.bf16.mxu0 0
      %499 = vmatpush1.bf16.xpose.msra.mxu0 %v496
      %500 = vmatprep.subr.bf16.mxu0 0
      %501 = vmatpush1.bf16.xpose.msra.mxu0 0
      %502 = vmatprep.subr.bf16.mxu0 0
      %503 = vmatpush1.bf16.xpose.msra.mxu0 0
      %504 = vmatprep.subr.bf16.mxu0 0
      %505 = vmatpush1.bf16.xpose.msra.mxu0 0
      %506 = vmatprep.subr.bf16.mxu0 0
      %507 = vmatpush1.bf16.xpose.msra.mxu0 0
      %508 = vmatprep.subr.bf16.mxu0 0
      %509 = vmatpush1.bf16.xpose.msra.mxu0 0
      %510 = vmatprep.subr.bf16.mxu0 0
      %511 = vmatpush1.bf16.xpose.msra.mxu0 0
      %512 = vmatprep.subr.bf16.mxu0 0
      %513 = vmatpush1.bf16.xpose.msra.mxu0 0
      %514 = vmatprep.subr.bf16.mxu0 0
      %515 = vmatpush1.bf16.xpose.msra.mxu0 0
      %516 = vmatprep.subr.bf16.mxu0 0
      %517 = vmatpush1.bf16.xpose.msra.mxu0 0
      %518 = vmatprep.subr.bf16.mxu0 0
      %519 = vmatpush1.bf16.xpose.msra.mxu0 0
      %520 = vmatprep.subr.bf16.mxu0 0
      %521 = vmatpush1.bf16.xpose.msra.mxu0 0
      %522 = vmatprep.subr.bf16.mxu0 0
      %523 = vmatpush1.bf16.xpose.msra.mxu0 0
      %524 = vmatprep.subr.bf16.mxu0 0
      %525 = vmatpush1.bf16.xpose.msra.mxu0 0
      %526 = vmatprep.subr.bf16.mxu0 0
      %527 = vmatpush1.bf16.xpose.msra.mxu0 0
      %528 = vmatprep.subr.bf16.mxu0 0
      %529 = vmatpush1.bf16.xpose.msra.mxu0 0
      %530 = vmatprep.mubr.bf16.mxu0 0
      %531 = vmatmul.mubr.bf16.gmra.mrb[0].mxu0 %v493
      %v532 = vpop.f32.mrb[0].mxu0
      %v533 = vadd.f32 0.0, %v532
      %v534 = vpop.f32.mrb[0].mxu0
      %v535 = vpop.f32.mrb[0].mxu0
      %v536 = vadd.f32 0.0, %v535
      %v537 = vpop.f32.mrb[0].mxu0
      %538 = vdwg.mxu0
      %v539 = vmul.f32 %v533, 0.35355338
      %v540 = vmul.f32 %v536, 0.35355338
      %s541 = scalar_lea.vmem %s339, 16
      %542 = vst.msk [vmem:[%s541] sm:$0xff] %vm352, %v539
      %543 = vst.msk [vmem:[%s541 + $0x8] sm:$0xff] %vm352, %v540
      %v544 = vadd.f32 %v539, %v408
      %v545 = vadd.f32 %v540, %v408
      %v546 = vsel %vm352, %v544, -inf
      %547 = vmax.xlane.f32.xlu0 %v546
      %v548 = vpop.xlane.xlu0 %547
      %v549 = vsel %vm352, %v545, -inf
      %550 = vmax.xlane.f32.xlu0 %v549
      %v551 = vpop.xlane.xlu0 %550
      %v552 = vsub.f32 %v544, %v548
      %v553 = vsub.f32 %v545, %v551
      %v554 = vmul.f32 %v552, 1.442695
      %v555 = vpow.pop %v554
      %v556 = vmul.f32 %v553, 1.442695
      %v557 = vpow.pop %v556
      %v558 = vsel %vm352, %v555, 0.0
      %559 = vadd.xlane.f32.xlu0 %v558
      %v560 = vpop.xlane.xlu0 %559
      %v561 = vsel %vm352, %v557, 0.0
      %562 = vadd.xlane.f32.xlu0 %v561
      %v563 = vpop.xlane.xlu0 %562
      %v564 = vrcp.pop %v560
      %v565 = vrcp.pop %v563
      %v566 = vmul.f32 %v555, %v564
      %v567 = vmul.f32 %v557, %v565
      %v568 = vpack.c.bf16 %v567, %v566
      %569 = vrot.lane.b32.xlu0 %v437, 104
      %v570 = vpop.permute.xlu0 %569
      %v572 = vsel %vm352, %v568, 0
      %v575 = vsel %vm443, %v570, 0
      %577 = vmatprep.subr.bf16.mxu0 0
      %578 = vmatpush1.bf16.msra.mxu0 %v575
      %579 = vmatprep.subr.bf16.mxu0 0
      %580 = vmatpush1.bf16.msra.mxu0 0
      %581 = vmatprep.subr.bf16.mxu0 0
      %582 = vmatpush1.bf16.msra.mxu0 0
      %583 = vmatprep.subr.bf16.mxu0 0
      %584 = vmatpush1.bf16.msra.mxu0 0
      %585 = vmatprep.subr.bf16.mxu0 0
      %586 = vmatpush1.bf16.msra.mxu0 0
      %587 = vmatprep.subr.bf16.mxu0 0
      %588 = vmatpush1.bf16.msra.mxu0 0
      %589 = vmatprep.subr.bf16.mxu0 0
      %590 = vmatpush1.bf16.msra.mxu0 0
      %591 = vmatprep.subr.bf16.mxu0 0
      %592 = vmatpush1.bf16.msra.mxu0 0
      %593 = vmatprep.subr.bf16.mxu0 0
      %594 = vmatpush1.bf16.msra.mxu0 0
      %595 = vmatprep.subr.bf16.mxu0 0
      %596 = vmatpush1.bf16.msra.mxu0 0
      %597 = vmatprep.subr.bf16.mxu0 0
      %598 = vmatpush1.bf16.msra.mxu0 0
      %599 = vmatprep.subr.bf16.mxu0 0
      %600 = vmatpush1.bf16.msra.mxu0 0
      %601 = vmatprep.subr.bf16.mxu0 0
      %602 = vmatpush1.bf16.msra.mxu0 0
      %603 = vmatprep.subr.bf16.mxu0 0
      %604 = vmatpush1.bf16.msra.mxu0 0
      %605 = vmatprep.subr.bf16.mxu0 0
      %606 = vmatpush1.bf16.msra.mxu0 0
      %607 = vmatprep.subr.bf16.mxu0 0
      %608 = vmatpush1.bf16.msra.mxu0 0
      %609 = vmatprep.mubr.bf16.mxu0 0
      %610 = vmatmul.mubr.bf16.gmra.mrb[0].mxu0 %v572
      %v611 = vpop.f32.mrb[0].mxu0
      %v612 = vadd.f32 0.0, %v611
      %v613 = vpop.f32.mrb[0].mxu0
      %v614 = vpop.f32.mrb[0].mxu0
      %v615 = vadd.f32 0.0, %v614
      %v616 = vpop.f32.mrb[0].mxu0
      %617 = vdwg.mxu0
      %618 = vrot.lane.b32.xlu0 %v351, 112
      %v619 = vpop.permute.xlu0 %618
      %620 = vrot.lane.b32.xlu0 %v437, 96
      %v621 = vpop.permute.xlu0 %620
      %v623 = vsel %vm352, %v619, 0
      %v626 = vsel %vm352, %v621, 0
      %628 = vmatprep.subr.bf16.mxu0 0
      %629 = vmatpush1.bf16.xpose.msra.mxu0 %v626
      %630 = vmatprep.subr.bf16.mxu0 0
      %631 = vmatpush1.bf16.xpose.msra.mxu0 0
      %632 = vmatprep.subr.bf16.mxu0 0
      %633 = vmatpush1.bf16.xpose.msra.mxu0 0
      %634 = vmatprep.subr.bf16.mxu0 0
      %635 = vmatpush1.bf16.xpose.msra.mxu0 0
      %636 = vmatprep.subr.bf16.mxu0 0
      %637 = vmatpush1.bf16.xpose.msra.mxu0 0
      %638 = vmatprep.subr.bf16.mxu0 0
      %639 = vmatpush1.bf16.xpose.msra.mxu0 0
      %640 = vmatprep.subr.bf16.mxu0 0
      %641 = vmatpush1.bf16.xpose.msra.mxu0 0
      %642 = vmatprep.subr.bf16.mxu0 0
      %643 = vmatpush1.bf16.xpose.msra.mxu0 0
      %644 = vmatprep.subr.bf16.mxu0 0
      %645 = vmatpush1.bf16.xpose.msra.mxu0 0
      %646 = vmatprep.subr.bf16.mxu0 0
      %647 = vmatpush1.bf16.xpose.msra.mxu0 0
      %648 = vmatprep.subr.bf16.mxu0 0
      %649 = vmatpush1.bf16.xpose.msra.mxu0 0
      %650 = vmatprep.subr.bf16.mxu0 0
      %651 = vmatpush1.bf16.xpose.msra.mxu0 0
      %652 = vmatprep.subr.bf16.mxu0 0
      %653 = vmatpush1.bf16.xpose.msra.mxu0 0
      %654 = vmatprep.subr.bf16.mxu0 0
      %655 = vmatpush1.bf16.xpose.msra.mxu0 0
      %656 = vmatprep.subr.bf16.mxu0 0
      %657 = vmatpush1.bf16.xpose.msra.mxu0 0
      %658 = vmatprep.subr.bf16.mxu0 0
      %659 = vmatpush1.bf16.xpose.msra.mxu0 0
      %660 = vmatprep.mubr.bf16.mxu0 0
      %661 = vmatmul.mubr.bf16.gmra.mrb[0].mxu0 %v623
      %v662 = vpop.f32.mrb[0].mxu0
      %v663 = vadd.f32 0.0, %v662
      %v664 = vpop.f32.mrb[0].mxu0
      %v665 = vpop.f32.mrb[0].mxu0
      %v666 = vadd.f32 0.0, %v665
      %v667 = vpop.f32.mrb[0].mxu0
      %668 = vdwg.mxu0
      %v669 = vmul.f32 %v663, 0.35355338
      %v670 = vmul.f32 %v666, 0.35355338
      %s671 = scalar_lea.vmem %s339, 32
      %672 = vst.msk [vmem:[%s671] sm:$0xff] %vm352, %v669
      %673 = vst.msk [vmem:[%s671 + $0x8] sm:$0xff] %vm352, %v670
      %v674 = vadd.f32 %v669, %v408
      %v675 = vadd.f32 %v670, %v408
      %v676 = vsel %vm352, %v674, -inf
      %677 = vmax.xlane.f32.xlu0 %v676
      %v678 = vpop.xlane.xlu0 %677
      %v679 = vsel %vm352, %v675, -inf
      %680 = vmax.xlane.f32.xlu0 %v679
      %v681 = vpop.xlane.xlu0 %680
      %v682 = vsub.f32 %v674, %v678
      %v683 = vsub.f32 %v675, %v681
      %v684 = vmul.f32 %v682, 1.442695
      %v685 = vpow.pop %v684
      %v686 = vmul.f32 %v683, 1.442695
      %v687 = vpow.pop %v686
      %v688 = vsel %vm352, %v685, 0.0
      %689 = vadd.xlane.f32.xlu0 %v688
      %v690 = vpop.xlane.xlu0 %689
      %v691 = vsel %vm352, %v687, 0.0
      %692 = vadd.xlane.f32.xlu0 %v691
      %v693 = vpop.xlane.xlu0 %692
      %v694 = vrcp.pop %v690
      %v695 = vrcp.pop %v693
      %v696 = vmul.f32 %v685, %v694
      %v697 = vmul.f32 %v687, %v695
      %v698 = vpack.c.bf16 %v697, %v696
      %699 = vrot.lane.b32.xlu0 %v437, 88
      %v700 = vpop.permute.xlu0 %699
      %v702 = vsel %vm352, %v698, 0
      %v705 = vsel %vm443, %v700, 0
      %707 = vmatprep.subr.bf16.mxu0 0
      %708 = vmatpush1.bf16.msra.mxu0 %v705
      %709 = vmatprep.subr.bf16.mxu0 0
      %710 = vmatpush1.bf16.msra.mxu0 0
      %711 = vmatprep.subr.bf16.mxu0 0
      %712 = vmatpush1.bf16.msra.mxu0 0
      %713 = vmatprep.subr.bf16.mxu0 0
      %714 = vmatpush1.bf16.msra.mxu0 0
      %715 = vmatprep.subr.bf16.mxu0 0
      %716 = vmatpush1.bf16.msra.mxu0 0
      %717 = vmatprep.subr.bf16.mxu0 0
      %718 = vmatpush1.bf16.msra.mxu0 0
      %719 = vmatprep.subr.bf16.mxu0 0
      %720 = vmatpush1.bf16.msra.mxu0 0
      %721 = vmatprep.subr.bf16.mxu0 0
      %722 = vmatpush1.bf16.msra.mxu0 0
      %723 = vmatprep.subr.bf16.mxu0 0
      %724 = vmatpush1.bf16.msra.mxu0 0
      %725 = vmatprep.subr.bf16.mxu0 0
      %726 = vmatpush1.bf16.msra.mxu0 0
      %727 = vmatprep.subr.bf16.mxu0 0
      %728 = vmatpush1.bf16.msra.mxu0 0
      %729 = vmatprep.subr.bf16.mxu0 0
      %730 = vmatpush1.bf16.msra.mxu0 0
      %731 = vmatprep.subr.bf16.mxu0 0
      %732 = vmatpush1.bf16.msra.mxu0 0
      %733 = vmatprep.subr.bf16.mxu0 0
      %734 = vmatpush1.bf16.msra.mxu0 0
      %735 = vmatprep.subr.bf16.mxu0 0
      %736 = vmatpush1.bf16.msra.mxu0 0
      %737 = vmatprep.subr.bf16.mxu0 0
      %738 = vmatpush1.bf16.msra.mxu0 0
      %739 = vmatprep.mubr.bf16.mxu0 0
      %740 = vmatmul.mubr.bf16.gmra.mrb[0].mxu0 %v702
      %v741 = vpop.f32.mrb[0].mxu0
      %v742 = vadd.f32 0.0, %v741
      %v743 = vpop.f32.mrb[0].mxu0
      %v744 = vpop.f32.mrb[0].mxu0
      %v745 = vadd.f32 0.0, %v744
      %v746 = vpop.f32.mrb[0].mxu0
      %747 = vdwg.mxu0
      %748 = vrot.lane.b32.xlu0 %v351, 104
      %v749 = vpop.permute.xlu0 %748
      %750 = vrot.lane.b32.xlu0 %v437, 80
      %v751 = vpop.permute.xlu0 %750
      %v753 = vsel %vm352, %v749, 0
      %v756 = vsel %vm352, %v751, 0
      %758 = vmatprep.subr.bf16.mxu0 0
      %759 = vmatpush1.bf16.xpose.msra.mxu0 %v756
      %760 = vmatprep.subr.bf16.mxu0 0
      %761 = vmatpush1.bf16.xpose.msra.mxu0 0
      %762 = vmatprep.subr.bf16.mxu0 0
      %763 = vmatpush1.bf16.xpose.msra.mxu0 0
      %764 = vmatprep.subr.bf16.mxu0 0
      %765 = vmatpush1.bf16.xpose.msra.mxu0 0
      %766 = vmatprep.subr.bf16.mxu0 0
      %767 = vmatpush1.bf16.xpose.msra.mxu0 0
      %768 = vmatprep.subr.bf16.mxu0 0
      %769 = vmatpush1.bf16.xpose.msra.mxu0 0
      %770 = vmatprep.subr.bf16.mxu0 0
      %771 = vmatpush1.bf16.xpose.msra.mxu0 0
      %772 = vmatprep.subr.bf16.mxu0 0
      %773 = vmatpush1.bf16.xpose.msra.mxu0 0
      %774 = vmatprep.subr.bf16.mxu0 0
      %775 = vmatpush1.bf16.xpose.msra.mxu0 0
      %776 = vmatprep.subr.bf16.mxu0 0
      %777 = vmatpush1.bf16.xpose.msra.mxu0 0
      %778 = vmatprep.subr.bf16.mxu0 0
      %779 = vmatpush1.bf16.xpose.msra.mxu0 0
      %780 = vmatprep.subr.bf16.mxu0 0
      %781 = vmatpush1.bf16.xpose.msra.mxu0 0
      %782 = vmatprep.subr.bf16.mxu0 0
      %783 = vmatpush1.bf16.xpose.msra.mxu0 0
      %784 = vmatprep.subr.bf16.mxu0 0
      %785 = vmatpush1.bf16.xpose.msra.mxu0 0
      %786 = vmatprep.subr.bf16.mxu0 0
      %787 = vmatpush1.bf16.xpose.msra.mxu0 0
      %788 = vmatprep.subr.bf16.mxu0 0
      %789 = vmatpush1.bf16.xpose.msra.mxu0 0
      %790 = vmatprep.mubr.bf16.mxu0 0
      %791 = vmatmul.mubr.bf16.gmra.mrb[0].mxu0 %v753
      %v792 = vpop.f32.mrb[0].mxu0
      %v793 = vadd.f32 0.0, %v792
      %v794 = vpop.f32.mrb[0].mxu0
      %v795 = vpop.f32.mrb[0].mxu0
      %v796 = vadd.f32 0.0, %v795
      %v797 = vpop.f32.mrb[0].mxu0
      %798 = vdwg.mxu0
      %v799 = vmul.f32 %v793, 0.35355338
      %v800 = vmul.f32 %v796, 0.35355338
      %s801 = scalar_lea.vmem %s339, 48
      %802 = vst.msk [vmem:[%s801] sm:$0xff] %vm352, %v799
      %803 = vst.msk [vmem:[%s801 + $0x8] sm:$0xff] %vm352, %v800
      %v804 = vadd.f32 %v799, %v408
      %v805 = vadd.f32 %v800, %v408
      %v806 = vsel %vm352, %v804, -inf
      %807 = vmax.xlane.f32.xlu0 %v806
      %v808 = vpop.xlane.xlu0 %807
      %v809 = vsel %vm352, %v805, -inf
      %810 = vmax.xlane.f32.xlu0 %v809
      %v811 = vpop.xlane.xlu0 %810
      %v812 = vsub.f32 %v804, %v808
      %v813 = vsub.f32 %v805, %v811
      %v814 = vmul.f32 %v812, 1.442695
      %v815 = vpow.pop %v814
      %v816 = vmul.f32 %v813, 1.442695
      %v817 = vpow.pop %v816
      %v818 = vsel %vm352, %v815, 0.0
      %819 = vadd.xlane.f32.xlu0 %v818
      %v820 = vpop.xlane.xlu0 %819
      %v821 = vsel %vm352, %v817, 0.0
      %822 = vadd.xlane.f32.xlu0 %v821
      %v823 = vpop.xlane.xlu0 %822
      %v824 = vrcp.pop %v820
      %v825 = vrcp.pop %v823
      %v826 = vmul.f32 %v815, %v824
      %v827 = vmul.f32 %v817, %v825
      %v828 = vpack.c.bf16 %v827, %v826
      %829 = vrot.lane.b32.xlu0 %v437, 72
      %v830 = vpop.permute.xlu0 %829
      %v832 = vsel %vm352, %v828, 0
      %v835 = vsel %vm443, %v830, 0
      %837 = vmatprep.subr.bf16.mxu0 0
      %838 = vmatpush1.bf16.msra.mxu0 %v835
      %839 = vmatprep.subr.bf16.mxu0 0
      %840 = vmatpush1.bf16.msra.mxu0 0
      %841 = vmatprep.subr.bf16.mxu0 0
      %842 = vmatpush1.bf16.msra.mxu0 0
      %843 = vmatprep.subr.bf16.mxu0 0
      %844 = vmatpush1.bf16.msra.mxu0 0
      %845 = vmatprep.subr.bf16.mxu0 0
      %846 = vmatpush1.bf16.msra.mxu0 0
      %847 = vmatprep.subr.bf16.mxu0 0
      %848 = vmatpush1.bf16.msra.mxu0 0
      %849 = vmatprep.subr.bf16.mxu0 0
      %850 = vmatpush1.bf16.msra.mxu0 0
      %851 = vmatprep.subr.bf16.mxu0 0
      %852 = vmatpush1.bf16.msra.mxu0 0
      %853 = vmatprep.subr.bf16.mxu0 0
      %854 = vmatpush1.bf16.msra.mxu0 0
      %855 = vmatprep.subr.bf16.mxu0 0
      %856 = vmatpush1.bf16.msra.mxu0 0
      %857 = vmatprep.subr.bf16.mxu0 0
      %858 = vmatpush1.bf16.msra.mxu0 0
      %859 = vmatprep.subr.bf16.mxu0 0
      %860 = vmatpush1.bf16.msra.mxu0 0
      %861 = vmatprep.subr.bf16.mxu0 0
      %862 = vmatpush1.bf16.msra.mxu0 0
      %863 = vmatprep.subr.bf16.mxu0 0
      %864 = vmatpush1.bf16.msra.mxu0 0
      %865 = vmatprep.subr.bf16.mxu0 0
      %866 = vmatpush1.bf16.msra.mxu0 0
      %867 = vmatprep.subr.bf16.mxu0 0
      %868 = vmatpush1.bf16.msra.mxu0 0
      %869 = vmatprep.mubr.bf16.mxu0 0
      %870 = vmatmul.mubr.bf16.gmra.mrb[0].mxu0 %v832
      %v871 = vpop.f32.mrb[0].mxu0
      %v872 = vadd.f32 0.0, %v871
      %v873 = vpop.f32.mrb[0].mxu0
      %v874 = vpop.f32.mrb[0].mxu0
      %v875 = vadd.f32 0.0, %v874
      %v876 = vpop.f32.mrb[0].mxu0
      %877 = vdwg.mxu0
      %880 = vrot.lane.b32.xlu0 %v612, 8
      %v881 = vpop.permute.xlu0 %880
      %882 = vrot.lane.b32.xlu0 %v615, 8
      %v883 = vpop.permute.xlu0 %882
      %888 = vrot.lane.b32.xlu0 %v742, 16
      %v889 = vpop.permute.xlu0 %888
      %890 = vrot.lane.b32.xlu0 %v745, 16
      %v891 = vpop.permute.xlu0 %890
      %896 = vrot.lane.b32.xlu0 %v872, 24
      %v897 = vpop.permute.xlu0 %896
      %898 = vrot.lane.b32.xlu0 %v875, 24
      %v899 = vpop.permute.xlu0 %898
      %v902 = vsel %vm352, %v482, %v881
      %v903 = vsel %vm352, %v485, %v883
      %vm904 = vcmask 130048
      %v905 = vsel %vm904, %v902, %v889
      %v906 = vsel %vm904, %v903, %v891
      %vm907 = vcmask 195584
      %v908 = vsel %vm907, %v905, %v897
      %v909 = vsel %vm907, %v906, %v899
      %v910 = vpack.c.bf16 %v909, %v908
      %v912 = vunpack.c.l.b16 %v910
      %v913 = vunpack.c.h.b16 %v910
      %v914 = vpack.c.b16 %v912, %v912
      %v915 = vpack.c.b16 %v913, %v913
      %vm918 = vcmask 257024
      %919 = vst.msk [vmem:[%s324] sm:$0xf] %vm918, %v914
      %920 = vst.msk [vmem:[%s324 + $0x4] sm:$0xf] %vm918, %v915
      %s921 = smul.u32 2, %s23
      %p922 = scmp.lt.s32.totalorder %s21, 1
      %s923 = scalar_select %p922, %s21, 1
      %p924 = scmp.lt.s32.totalorder %s921, 1
      %s925 = scalar_select %p924, %s921, 1
      %p926 = scmp.lt.s32.totalorder %s22, 0
      %s927 = scalar_select %p926, %s22, 0
      %s928 = sadd.s32 %s927, %s925
      %s929 = smul.addr %s923, 2
      %s930 = sadd.s32 %s928, %s929
      %s931 = smul.addr %s930, 4
      %s932 = scalar_lea.vmem %s3, %s931
      %s933 = smul.u32 4, %s22
      %s934 = smul.u32 2, %s23
      %p935 = scmp.lt.s32.totalorder %s21, 1
      %s936 = scalar_select %p935, %s21, 1
      %p937 = scmp.lt.s32.totalorder %s933, 3
      %s938 = scalar_select %p937, %s933, 3
      %p939 = scmp.lt.s32.totalorder %s934, 1
      %s940 = scalar_select %p939, %s934, 1
      %s941 = smul.addr %s938, 2
      %s942 = sadd.s32 %s940, %s941
      %s943 = smul.addr %s936, 8
      %s944 = sadd.s32 %s942, %s943
      %s945 = smul.addr %s944, 8
      %s946 = scalar_lea.vmem %s4, %s945
      // Predicated region
      $region33: #{cross_pair_forward.42} parent=31 // pred_check
        %p947 = pneg %p141
      $region34: #{cross_pair_forward.42} parent=31 // pred_check_branch
        %949 = sbr.rel (%p947) target = $region36
      $region35: #{cross_pair_forward.42} parent=31 // pred_region
        %s950 = smul.u32 2, %s23
      $region36: #{cross_pair_forward.42} parent=31 // pred_fallthru
        _
      // Predicated region
      $region37: #{cross_pair_forward.42} parent=31 // pred_check
        %p951 = pneg %p171
      $region38: #{cross_pair_forward.42} parent=31 // pred_check_branch
        %953 = sbr.rel (%p951) target = $region40
      $region39: #{cross_pair_forward.42} parent=31 // pred_region
        %s954 = smul.u32 4, %s22
        %s955 = smul.u32 2, %s23
      $region40: #{cross_pair_forward.42} parent=31 // pred_fallthru
        _
    $region32: #{cross_pair_forward.42} parent=5 // pred_fallthru
      _
    %p956 = scmp.le.s32.totalorder 2, %s11
    // Predicated region
    $region41: #{cross_pair_forward.42} parent=5 // pred_check
      %p957 = pneg %p956
    $region42: #{cross_pair_forward.42} parent=5 // pred_check_branch
      %959 = sbr.rel (%p957) target = $region44
    $region43: #{cross_pair_forward.42} parent=5 // pred_region
      %s960 = ssub.s32 %s11, 2
      // Predicated region
      $region45: #{cross_pair_forward.42} parent=43 // pred_check
        %p961 = pneg %p147
      $region46: #{cross_pair_forward.42} parent=43 // pred_check_branch
        %963 = sbr.rel (%p961) target = $region48
      $region47: #{cross_pair_forward.42} parent=43 // pred_region
        %s964 = smul.u32 2, %s26
        %p965 = scmp.lt.s32.totalorder %s24, 1
        %s966 = scalar_select %p965, %s24, 1
        %p967 = scmp.lt.s32.totalorder %s964, 1
        %s968 = scalar_select %p967, %s964, 1
        %p969 = scmp.lt.s32.totalorder %s25, 0
        %s970 = scalar_select %p969, %s25, 0
        %s971 = sadd.s32 %s970, %s968
        %s972 = smul.addr %s966, 2
        %s973 = sadd.s32 %s971, %s972
        %s974 = smul.addr %s973, 4
        %s975 = scalar_lea.vmem %s3, %s974
      $region48: #{cross_pair_forward.42} parent=43 // pred_fallthru
        _
      // Predicated region
      $region49: #{cross_pair_forward.42} parent=43 // pred_check
        %p976 = pneg %p177
      $region50: #{cross_pair_forward.42} parent=43 // pred_check_branch
        %978 = sbr.rel (%p976) target = $region52
      $region51: #{cross_pair_forward.42} parent=43 // pred_region
        %s979 = smul.u32 4, %s25
        %s980 = smul.u32 2, %s26
        %p981 = scmp.lt.s32.totalorder %s24, 1
        %s982 = scalar_select %p981, %s24, 1
        %p983 = scmp.lt.s32.totalorder %s979, 3
        %s984 = scalar_select %p983, %s979, 3
        %p985 = scmp.lt.s32.totalorder %s980, 1
        %s986 = scalar_select %p985, %s980, 1
        %s987 = smul.addr %s984, 2
        %s988 = sadd.s32 %s986, %s987
        %s989 = smul.addr %s982, 8
        %s990 = sadd.s32 %s988, %s989
        %s991 = smul.addr %s990, 8
        %s992 = scalar_lea.vmem %s4, %s991
      $region52: #{cross_pair_forward.42} parent=43 // pred_fallthru
        _
    $region44: #{cross_pair_forward.42} parent=5 // pred_fallthru
      _
  $region6: #{cross_pair_forward.42} parent=0 // loop_footer
    %s15 = sadd.s32 1, %s11
  $region7: #{cross_pair_forward.42} parent=0 // loop_footer_branch
    %10 = sbr.rel target = $region3
  $region8: #{cross_pair_forward.42} parent=0 // loop_exit
    _

</llo_original>
